<compile_context>
chip_gen: v5e
topology: v5e:2x2
jax: 0.10.0
libtpu: 0.0.40
codegen_flags: <defaults>
</compile_context>

<pallas_src>
import math

import jax
import jax.numpy as jnp
from jax.experimental import pallas as pl
from jax.experimental.pallas import tpu as pltpu

# ----------------------- synthetic Config (matches module structure) -----------------------
EMB = 32                                    # config.emb_size / FeatureEmbed embed_size
MAXJOINS = 3                                # config.maxjoins
TYPES = 8                                   # config.types
COLUMNS = 12                                # config.columns
TABLES = 22
OPS = 6
POS = 4
HEIGHTSIZE = 10                             # config.heightsize
FFN_DIM = 64                                # config.ffn_dim
HEAD_SIZE = 4                               # config.head_size (number of heads)
NUM_LAYERS = 2                              # config.num_layers
HEIGHT_SIZE = EMB // 2                      # 16
FILTER_DIM = 2 * EMB + EMB // 8 + 1         # 69
JOIN_IN = 2 * MAXJOINS * EMB                # 192
JOIN_HID = 3 * EMB                          # 96
FEAT_DIM = 7 * EMB + 2 * (EMB // 8) + 1     # 233  (use_hist=False branch)
HIDDEN = FEAT_DIM + HEIGHT_SIZE             # 249  == config.hidden_dim
ATT_SIZE = HIDDEN // HEAD_SIZE              # 62
SCALE = ATT_SIZE ** (-0.5)
FEAT_COLS = 10 + MAXJOINS + 5               # 18 raw feature columns per node
FC_HIDDEN = 256                             # RLlib TorchFC default fcnet_hiddens
NUM_OUTPUTS = 8
FLOAT_MIN = float(jnp.finfo(jnp.float32).min)
LN_EPS = 1e-5

# lane-aligned padded dims (padded weight entries are zero -> identical math)
HIDDEN_PAD = 256                            # 249 -> 256
ATT_PAD = 64                                # per-head width 62 -> 64
QKV_SEG = HEAD_SIZE * ATT_PAD               # 256 (width of each of q/k/v inside fused QKV)
FILTER_PAD = 128                            # 69 -> 128
JOIN_HID_PAD = 128                          # 96 -> 128
FFN_PAD = 128                               # 64 -> 128
MISC_DIM = 2 * EMB + EMB // 8               # 68 = type(32)+table(32)+pos(4)
OUT_PAD = 128                               # 8 logits -> 128-lane output block
MISC_DIM = 2 * EMB + EMB // 8


# ----------------------------------- kernel helpers -----------------------------------
def _leaky(v):
    return jnp.where(v >= 0, v, 0.01 * v)


def _layernorm_pad(v, g, b, valid):
    # LayerNorm over the first HIDDEN (=249) lanes of a 256-wide vector whose padded
    # lanes are exactly zero; output padded lanes stay zero (gamma/beta padded with 0).
    mu = jnp.sum(v, axis=-1, keepdims=True) * (1.0 / HIDDEN)
    d = (v - mu) * valid
    var = jnp.sum(d * d, axis=-1, keepdims=True) * (1.0 / HIDDEN)
    return d * jax.lax.rsqrt(var + LN_EPS) * g + b


# ----------------------------------- fused Pallas kernel -----------------------------------
def fused_forward_kernel(
        # per-batch-block data
        filt_ref, join_ref, mh_ref, bias_ref, side_ref,
        # FeatureEmbed weights
        wf1_ref, bf1_ref, wf2_ref, bf2_ref,
        wj1_ref, bj1_ref, wj2_ref, bj2_ref,
        wpf_ref, wpj_ref, wpm_ref, bp_ref,
        # stacked encoder-layer weights (leading axis = layer)
        ln1g_ref, ln1b_ref, wqkv_ref, bqkv_ref, wo_ref, bo_ref,
        ln2g_ref, ln2b_ref, w1_ref, b1_ref, w2_ref, b2_ref,
        # head (final LN + TorchFC)
        lng_ref, lnb_ref, fw1_ref, fb1_ref, fw2_ref, fb2_ref, wl_ref, bl_ref,
        out_ref):
    f32 = jnp.float32
    bf16 = jnp.bfloat16
    BT = filt_ref.shape[0]                   # samples per grid step
    S = filt_ref.shape[2]                    # plan nodes per sample
    R = BT * S                               # stacked rows

    lane = jax.lax.broadcasted_iota(jnp.int32, (1, HIDDEN_PAD), 1)
    valid = (lane < HIDDEN).astype(f32)                         # real hidden lanes
    hmask = (lane >= FEAT_DIM).astype(f32)                      # height-embedding lanes

    side = side_ref[...]                                        # (BT, S+2, 256) packed side inputs

    # ---------------- FeatureEmbed ----------------
    # filter MLP over all BT*3*S filter slots at once
    filt = filt_ref[...].reshape(BT * 3 * S, FILTER_PAD)
    h = _leaky(jnp.dot(filt.astype(bf16), wf1_ref[...], preferred_element_type=f32) + bf1_ref[...])
    h = _leaky(jnp.dot(h.astype(bf16), wf2_ref[...], preferred_element_type=f32) + bf2_ref[...])
    h4 = h.reshape(BT, 3, S, FILTER_PAD)
    w = side[:, 0:S, 0:3]                                        # pre-normalized mask weights
    filt_avg = (h4[:, 0] * w[:, :, 0:1]
                + h4[:, 1] * w[:, :, 1:2]
                + h4[:, 2] * w[:, :, 2:3]).reshape(R, FILTER_PAD)

    # join MLP (input padded 192 -> 256 lanes)
    j = _leaky(jnp.dot(join_ref[...].reshape(R, HIDDEN_PAD).astype(bf16), wj1_ref[...],
                       preferred_element_type=f32) + bj1_ref[...])
    j = _leaky(jnp.dot(j.astype(bf16), wj2_ref[...], preferred_element_type=f32) + bj2_ref[...])

    # project(cat(type, filter, join, table, pos)) == sum of per-segment partial matmuls.
    # mh packs misc(type|table|pos) at lanes 0:68 and height emb at lanes 233:249.
    mh = mh_ref[...].reshape(R, HIDDEN_PAD)
    proj = (jnp.dot(filt_avg.astype(bf16), wpf_ref[...], preferred_element_type=f32)
            + jnp.dot(j.astype(bf16), wpj_ref[...], preferred_element_type=f32)
            + jnp.dot(mh.astype(bf16), wpm_ref[...], preferred_element_type=f32)
            + bp_ref[...])
    x = _leaky(proj) + mh * hmask                                # (R, 256), pad lanes == 0

    bias = bias_ref[...]                                         # (BT, S, S), shared by all heads

    # ---------------- encoder layers (unrolled) ----------------
    for l in range(NUM_LAYERS):
        y = _layernorm_pad(x, ln1g_ref[l], ln1b_ref[l], valid)
        qkv = (jnp.dot(y.astype(bf16), wqkv_ref[l], preferred_element_type=f32)
               + bqkv_ref[l]).reshape(BT, S, 3 * QKV_SEG)        # fused QKV
        ctx_heads = []
        for hh in range(HEAD_SIZE):                              # heads on 64-lane boundaries
            q_h = qkv[:, :, hh * ATT_PAD:(hh + 1) * ATT_PAD] * SCALE
            k_h = qkv[:, :, QKV_SEG + hh * ATT_PAD:QKV_SEG + (hh + 1) * ATT_PAD]
            v_h = qkv[:, :, 2 * QKV_SEG + hh * ATT_PAD:2 * QKV_SEG + (hh + 1) * ATT_PAD]
            s = jnp.einsum('bqd,bkd->bqk', q_h, k_h, preferred_element_type=f32)  # (BT,S,S)
            s = s * bias                                         # multiplicative attn_bias
            s = s - jnp.max(s, axis=-1, keepdims=True)
            p = jnp.exp(s)
            p = p * pl.reciprocal(jnp.sum(p, axis=-1, keepdims=True), approx=True)
            ctx_heads.append(jnp.einsum('bqk,bkd->bqd', p, v_h, preferred_element_type=f32))
        ctx = jnp.concatenate(ctx_heads, axis=-1).reshape(R, HIDDEN_PAD)
        x = x + jnp.dot(ctx.astype(bf16), wo_ref[l], preferred_element_type=f32) + bo_ref[l]

        y = _layernorm_pad(x, ln2g_ref[l], ln2b_ref[l], valid)
        h1 = jnp.dot(y.astype(bf16), w1_ref[l], preferred_element_type=f32) + b1_ref[l]
        h1 = 0.5 * h1 * (1.0 + jax.lax.erf(h1 * (1.0 / math.sqrt(2.0))))   # exact GELU
        x = x + jnp.dot(h1.astype(bf16), w2_ref[l], preferred_element_type=f32) + b2_ref[l]

    # ---------------- head: final LN on node-0 rows, TorchFC, action-mask clamp ----------------
    x0 = x.reshape(BT, S, HIDDEN_PAD)[:, 0, :]                   # (BT, 256) pooled tokens
    x0 = _layernorm_pad(x0, lng_ref[...], lnb_ref[...], valid)
    xin = x0 + side[:, S, :]                                     # steps injected at lane HIDDEN
    h1 = jnp.tanh(jnp.dot(xin.astype(bf16), fw1_ref[...], preferred_element_type=f32) + fb1_ref[...])
    h2 = jnp.tanh(jnp.dot(h1.astype(bf16), fw2_ref[...], preferred_element_type=f32) + fb2_ref[...])
    logits = jnp.dot(h2.astype(bf16), wl_ref[...], preferred_element_type=f32) + bl_ref[...]
    out_ref[...] = (logits + side[:, S + 1, 0:OUT_PAD]).reshape(BT, 1, OUT_PAD)


# ----------------------------------- wrapper (glue) -----------------------------------
def _choose_bt(batch, seq):
    # >=128 stacked LHS rows per grid step, but keep >=2 grid steps for v7x's 2 TensorCores.
    bt = max(1, min(batch, 128 // max(1, seq)))
    while bt > 1 and pl.cdiv(batch, bt) < 2:
        bt = max(1, bt // 2)
    return bt


def _block_spec(arr, bt):
    nd = arr.ndim
    return pl.BlockSpec((bt,) + arr.shape[1:], lambda b, _nd=nd: (b,) + (0,) * (_nd - 1))


def _const_spec(arr):
    nd = arr.ndim
    return pl.BlockSpec(arr.shape, lambda b, _nd=nd: (0,) * _nd)


def custom_model_forward(params, x, attn_bias, heights, steps, action_mask):
    """CustomModel.forward policy branch (dropouts = inference no-ops)."""
    B, S, _ = x.shape
    n = B * S
    fp = params['feat']
    f32 = jnp.float32

    x_flat = x.reshape(n, FEAT_COLS)
    typeId = x_flat[:, 0].astype(jnp.int32)
    join = x_flat[:, 1:1 + MAXJOINS].astype(jnp.int32)
    off = 1 + MAXJOINS
    fcols = x_flat[:, off:off + 3].astype(jnp.int32)
    fops = x_flat[:, off + 3:off + 6].astype(jnp.int32)
    fvals = x_flat[:, off + 6:off + 9]
    fmask = x_flat[:, off + 9:off + 12]
    posId = x_flat[:, off + 12].astype(jnp.int32)
    table = x_flat[:, off + 13].astype(jnp.int32)

    # embedding gathers stay in JAX (data-dependent); everything else in the fused kernel
    typeEmb = jnp.take(fp['type_emb'], typeId, axis=0)                            # (n, 32)
    tableEmb = jnp.take(fp['table_emb'], table, axis=0)                           # (n, 32)
    posEmb = jnp.take(fp['pos_emb'], posId, axis=0)                               # (n, 4)
    heightEmb = jnp.take(params['height_emb'], heights.astype(jnp.int32), axis=0)  # (B, S, 16)

    # misc(type|table|pos) + height packed into ONE (B,S,256) array:
    # lanes 0:68 = misc, lanes 233:249 = height, rest 0.
    misc = jnp.concatenate([typeEmb, tableEmb, posEmb], axis=-1).reshape(B, S, MISC_DIM)
    mh = jnp.zeros((B, S, HIDDEN_PAD), f32)
    mh = mh.at[:, :, :MISC_DIM].set(misc)
    mh = mh.at[:, :, FEAT_DIM:HIDDEN].set(heightEmb)

    joinEmb = jnp.take(fp['column_emb'], join, axis=0).reshape(B, S, JOIN_IN)     # (B, S, 192)
    joinEmb = jnp.pad(joinEmb, ((0, 0), (0, 0), (0, HIDDEN_PAD - JOIN_IN)))       # lane-dense 256

    colEmb = jnp.take(fp['column_emb'], fcols, axis=0)                            # (n, 3, 64)
    opEmb = jnp.take(fp['op_emb'], fops, axis=0)                                  # (n, 3, 4)
    filt = jnp.concatenate([colEmb, opEmb, fvals[..., None]], axis=-1)            # (n, 3, 69)
    filt = jnp.pad(filt, ((0, 0), (0, 0), (0, FILTER_PAD - FILTER_DIM)))          # (n, 3, 128)
    filt = filt.reshape(B, S, 3, FILTER_PAD).transpose(0, 2, 1, 3)                # (B, 3, S, 128)

    bias = attn_bias[:, 1:, 1:]                                                   # (B, S, S)

    # packed "side" array: normalized filter-mask weights, steps lane, clamped log(action_mask)
    fmask3 = fmask.reshape(B, S, 3)
    wnorm = (fmask3 != 0).astype(f32) / (jnp.sum(fmask3, axis=-1, keepdims=True) + 1e-10)
    inf_mask = jnp.maximum(jnp.log(action_mask), FLOAT_MIN)
    side = jnp.zeros((B, S + 2, HIDDEN_PAD), f32)
    side = side.at[:, :S, 0:3].set(wnorm)
    side = side.at[:, S, HIDDEN].set(steps[:, 0])
    side = side.at[:, S + 1, :NUM_OUTPUTS].set(inf_mask)

    # batch blocking
    BT = _choose_bt(B, S)
    B_pad = pl.cdiv(B, BT) * BT

    def padb(a):
        return a if B_pad == B else jnp.pad(a, ((0, B_pad - B),) + ((0, 0),) * (a.ndim - 1))

    data = tuple(padb(a) for a in (filt, joinEmb, mh, bias, side))

    lp = params['layers']
    hp = params['head']
    weights = (fp['wf1'], fp['bf1'], fp['wf2'], fp['bf2'],
               fp['wj1'], fp['bj1'], fp['wj2'], fp['bj2'],
               fp['wpf'], fp['wpj'], fp['wpm'], fp['bp'],
               lp['ln1_g'], lp['ln1_b'], lp['wqkv'], lp['bqkv'], lp['wo'], lp['bo'],
               lp['ln2_g'], lp['ln2_b'], lp['w1'], lp['b1'], lp['w2'], lp['b2'],
               hp['final_ln_g'], hp['final_ln_b'],
               hp['fc_w1'], hp['fc_b1'], hp['fc_w2'], hp['fc_b2'],
               hp['logits_w'], hp['logits_b'])

    out = pl.pallas_call(
        fused_forward_kernel,
        grid=(B_pad // BT,),
        in_specs=[_block_spec(a, BT) for a in data] + [_const_spec(w) for w in weights],
        out_specs=pl.BlockSpec((BT, 1, OUT_PAD), lambda b: (b, 0, 0)),
        out_shape=jax.ShapeDtypeStruct((B_pad, 1, OUT_PAD), jnp.float32),
        compiler_params=pltpu.CompilerParams(dimension_semantics=("parallel",)),
    )(*data, *weights)
    return out.reshape(B_pad, OUT_PAD)[:B, :NUM_OUTPUTS]


# --------------------------------- deterministic params ---------------------------------
def _linear(key, fin, fout):
    kw, kb = jax.random.split(key)
    w = jax.random.normal(kw, (fin, fout), jnp.float32) / jnp.sqrt(float(fin))
    b = jax.random.normal(kb, (1, fout), jnp.float32) * 0.01
    return w, b


def _pad2(w, rows, cols):
    return jnp.zeros((rows, cols), w.dtype).at[:w.shape[0], :w.shape[1]].set(w)


def init_params(key):
    bf16 = jnp.bfloat16
    keys = iter(jax.random.split(key, 64))
    feat = {
        'type_emb': 0.1 * jax.random.normal(next(keys), (TYPES, EMB), jnp.float32),
        'table_emb': 0.1 * jax.random.normal(next(keys), (TABLES, EMB), jnp.float32),
        'column_emb': 0.1 * jax.random.normal(next(keys), (COLUMNS, 2 * EMB), jnp.float32),
        'op_emb': 0.1 * jax.random.normal(next(keys), (OPS, EMB // 8), jnp.float32),
        'pos_emb': 0.1 * jax.random.normal(next(keys), (POS, EMB // 8), jnp.float32),
    }
    wf1, bf1_ = _linear(next(keys), FILTER_DIM, FILTER_DIM)
    wf2, bf2_ = _linear(next(keys), FILTER_DIM, FILTER_DIM)
    wj1, bj1 = _linear(next(keys), JOIN_IN, JOIN_HID)
    wj2, bj2 = _linear(next(keys), JOIN_HID, JOIN_HID)
    wp, bp = _linear(next(keys), FEAT_DIM, FEAT_DIM)
    feat['wf1'] = _pad2(wf1, FILTER_PAD, FILTER_PAD).astype(bf16)
    feat['bf1'] = _pad2(bf1_, 1, FILTER_PAD)
    feat['wf2'] = _pad2(wf2, FILTER_PAD, FILTER_PAD).astype(bf16)
    feat['bf2'] = _pad2(bf2_, 1, FILTER_PAD)
    feat['wj1'] = _pad2(wj1, HIDDEN_PAD, JOIN_HID_PAD).astype(bf16)   # join input padded 192->256
    feat['bj1'] = _pad2(bj1, 1, JOIN_HID_PAD)
    feat['wj2'] = _pad2(wj2, JOIN_HID_PAD, JOIN_HID_PAD).astype(bf16)
    feat['bj2'] = _pad2(bj2, 1, JOIN_HID_PAD)
    # project weight split by input segment:
    #   type rows 0:32, filter rows 32:101, join rows 101:197, table rows 197:229, pos rows 229:233
    wpf = jnp.zeros((FILTER_PAD, HIDDEN_PAD), jnp.float32)
    wpf = wpf.at[:FILTER_DIM, :FEAT_DIM].set(wp[EMB:EMB + FILTER_DIM])
    wpj = jnp.zeros((JOIN_HID_PAD, HIDDEN_PAD), jnp.float32)
    wpj = wpj.at[:JOIN_HID, :FEAT_DIM].set(wp[EMB + FILTER_DIM:EMB + FILTER_DIM + JOIN_HID])
    wpm = jnp.zeros((HIDDEN_PAD, HIDDEN_PAD), jnp.float32)           # acts on packed misc+height lanes
    wpm = wpm.at[0:EMB, :FEAT_DIM].set(wp[0:EMB])                                       # type rows
    wpm = wpm.at[EMB:2 * EMB, :FEAT_DIM].set(wp[EMB + FILTER_DIM + JOIN_HID:
                                                EMB + FILTER_DIM + JOIN_HID + EMB])     # table rows
    wpm = wpm.at[2 * EMB:MISC_DIM, :FEAT_DIM].set(wp[FEAT_DIM - POS:FEAT_DIM])          # pos rows
    feat['wpf'] = wpf.astype(bf16)
    feat['wpj'] = wpj.astype(bf16)
    feat['wpm'] = wpm.astype(bf16)
    feat['bp'] = _pad2(bp, 1, HIDDEN_PAD)

    height_emb = 0.1 * jax.random.normal(next(keys), (HEIGHTSIZE, HEIGHT_SIZE), jnp.float32)
    height_emb = height_emb.at[0].set(0.0)                            # padding_idx=0

    ln_g = _pad2(jnp.ones((1, HIDDEN), jnp.float32), 1, HIDDEN_PAD)
    ln_b = jnp.zeros((1, HIDDEN_PAD), jnp.float32)

    def pad_qkv(w, b):
        wpad = jnp.zeros((HIDDEN_PAD, QKV_SEG), jnp.float32)
        bpad = jnp.zeros((1, QKV_SEG), jnp.float32)
        for h in range(HEAD_SIZE):
            wpad = wpad.at[:HIDDEN, h * ATT_PAD:h * ATT_PAD + ATT_SIZE].set(
                w[:, h * ATT_SIZE:(h + 1) * ATT_SIZE])
            bpad = bpad.at[:, h * ATT_PAD:h * ATT_PAD + ATT_SIZE].set(
                b[:, h * ATT_SIZE:(h + 1) * ATT_SIZE])
        return wpad, bpad

    def pad_wo(w):
        wpad = jnp.zeros((HIDDEN_PAD, HIDDEN_PAD), jnp.float32)
        for h in range(HEAD_SIZE):
            wpad = wpad.at[h * ATT_PAD:h * ATT_PAD + ATT_SIZE, :HIDDEN].set(
                w[h * ATT_SIZE:(h + 1) * ATT_SIZE, :])
        return wpad

    per_layer = []
    for _ in range(NUM_LAYERS):
        wq, bq = _linear(next(keys), HIDDEN, HEAD_SIZE * ATT_SIZE)
        wk, bk = _linear(next(keys), HIDDEN, HEAD_SIZE * ATT_SIZE)
        wv, bv = _linear(next(keys), HIDDEN, HEAD_SIZE * ATT_SIZE)
        wo, bo = _linear(next(keys), HEAD_SIZE * ATT_SIZE, HIDDEN)
        w1, b1 = _linear(next(keys), HIDDEN, FFN_DIM)
        w2, b2 = _linear(next(keys), FFN_DIM, HIDDEN)
        wqp, bqp = pad_qkv(wq, bq)
        wkp, bkp = pad_qkv(wk, bk)
        wvp, bvp = pad_qkv(wv, bv)
        per_layer.append(dict(
            ln1_g=ln_g, ln1_b=ln_b, ln2_g=ln_g, ln2_b=ln_b,
            wqkv=jnp.concatenate([wqp, wkp, wvp], axis=1).astype(bf16),   # fused QKV (256, 768)
            bqkv=jnp.concatenate([bqp, bkp, bvp], axis=1),
            wo=pad_wo(wo).astype(bf16), bo=_pad2(bo, 1, HIDDEN_PAD),
            w1=_pad2(w1, HIDDEN_PAD, FFN_PAD).astype(bf16), b1=_pad2(b1, 1, FFN_PAD),
            w2=_pad2(w2, FFN_PAD, HIDDEN_PAD).astype(bf16), b2=_pad2(b2, 1, HIDDEN_PAD)))
    layers = {k: jnp.stack([d[k] for d in per_layer], axis=0) for k in per_layer[0]}

    fw1, fb1 = _linear(next(keys), HIDDEN + 1, FC_HIDDEN)
    fw2, fb2 = _linear(next(keys), FC_HIDDEN, FC_HIDDEN)
    wl, bl = _linear(next(keys), FC_HIDDEN, NUM_OUTPUTS)
    head = {
        'final_ln_g': ln_g, 'final_ln_b': ln_b,
        'fc_w1': _pad2(fw1, HIDDEN_PAD, FC_HIDDEN).astype(bf16), 'fc_b1': fb1,   # row 249 = steps weight
        'fc_w2': fw2.astype(bf16), 'fc_b2': fb2,
        'logits_w': _pad2(wl, FC_HIDDEN, OUT_PAD).astype(bf16),
        'logits_b': _pad2(bl, 1, OUT_PAD),
    }
    # TODO(synk): TorchFC value_function() critic branch is not implemented (not used in forward output).

    return {'feat': feat, 'height_emb': height_emb, 'layers': layers, 'head': head}


# --------------------------------------- main ---------------------------------------
if __name__ == "__main__":
    key = jax.random.PRNGKey(0)
    B, S = 2, 8                                # batch, number of plan nodes
    ks = jax.random.split(key, 13)
    f32 = jnp.float32

    typeId = jax.random.randint(ks[0], (B, S, 1), 0, TYPES).astype(f32)
    join = jax.random.randint(ks[1], (B, S, MAXJOINS), 0, COLUMNS).astype(f32)
    fcols = jax.random.randint(ks[2], (B, S, 3), 0, COLUMNS).astype(f32)
    fops = jax.random.randint(ks[3], (B, S, 3), 0, OPS).astype(f32)
    fvals = jax.random.uniform(ks[4], (B, S, 3), f32)
    fmask = jax.random.bernoulli(ks[5], 0.7, (B, S, 3)).astype(f32)
    posId = jax.random.randint(ks[6], (B, S, 1), 0, POS).astype(f32)
    table = jax.random.randint(ks[7], (B, S, 1), 0, TABLES).astype(f32)
    # per-node raw feature vector, layout matches torch.split((1, maxjoins, 9, 3, 1, 1))
    x = jnp.concatenate([typeId, join, fcols, fops, fvals, fmask, posId, table], axis=-1)

    attn_bias = jax.random.uniform(ks[8], (B, S + 1, S + 1), f32, 0.5, 1.5)
    heights = jax.random.randint(ks[9], (B, S), 0, HEIGHTSIZE)
    steps = jax.random.uniform(ks[10], (B, 1), f32)
    action_mask = jax.random.bernoulli(ks[11], 0.6, (B, NUM_OUTPUTS)).astype(f32)

    params = init_params(ks[12])

    fwd = jax.jit(custom_model_forward)
    out = fwd(params, x, attn_bias, heights, steps, action_mask)
    out = jax.block_until_ready(out)
    assert out.shape == (B, NUM_OUTPUTS)
    print("KERNEL_OK")
</pallas_src>

<mosaic_0001>
module attributes {stable_mosaic.version = 11 : i64} {
  func.func @fused_forward_kernel(%arg0: i32, %arg1: memref<1x3x8x128xf32, #tpu.memory_space<vmem>>, %arg2: memref<1x8x256xf32, #tpu.memory_space<vmem>>, %arg3: memref<1x8x256xf32, #tpu.memory_space<vmem>>, %arg4: memref<1x8x8xf32, #tpu.memory_space<vmem>>, %arg5: memref<1x10x256xf32, #tpu.memory_space<vmem>>, %arg6: memref<128x128xbf16, #tpu.memory_space<vmem>>, %arg7: memref<1x128xf32, #tpu.memory_space<vmem>>, %arg8: memref<128x128xbf16, #tpu.memory_space<vmem>>, %arg9: memref<1x128xf32, #tpu.memory_space<vmem>>, %arg10: memref<256x128xbf16, #tpu.memory_space<vmem>>, %arg11: memref<1x128xf32, #tpu.memory_space<vmem>>, %arg12: memref<128x128xbf16, #tpu.memory_space<vmem>>, %arg13: memref<1x128xf32, #tpu.memory_space<vmem>>, %arg14: memref<128x256xbf16, #tpu.memory_space<vmem>>, %arg15: memref<128x256xbf16, #tpu.memory_space<vmem>>, %arg16: memref<256x256xbf16, #tpu.memory_space<vmem>>, %arg17: memref<1x256xf32, #tpu.memory_space<vmem>>, %arg18: memref<2x1x256xf32, #tpu.memory_space<vmem>>, %arg19: memref<2x1x256xf32, #tpu.memory_space<vmem>>, %arg20: memref<2x256x768xbf16, #tpu.memory_space<vmem>>, %arg21: memref<2x1x768xf32, #tpu.memory_space<vmem>>, %arg22: memref<2x256x256xbf16, #tpu.memory_space<vmem>>, %arg23: memref<2x1x256xf32, #tpu.memory_space<vmem>>, %arg24: memref<2x1x256xf32, #tpu.memory_space<vmem>>, %arg25: memref<2x1x256xf32, #tpu.memory_space<vmem>>, %arg26: memref<2x256x128xbf16, #tpu.memory_space<vmem>>, %arg27: memref<2x1x128xf32, #tpu.memory_space<vmem>>, %arg28: memref<2x128x256xbf16, #tpu.memory_space<vmem>>, %arg29: memref<2x1x256xf32, #tpu.memory_space<vmem>>, %arg30: memref<1x256xf32, #tpu.memory_space<vmem>>, %arg31: memref<1x256xf32, #tpu.memory_space<vmem>>, %arg32: memref<256x256xbf16, #tpu.memory_space<vmem>>, %arg33: memref<1x256xf32, #tpu.memory_space<vmem>>, %arg34: memref<256x256xbf16, #tpu.memory_space<vmem>>, %arg35: memref<1x256xf32, #tpu.memory_space<vmem>>, %arg36: memref<256x128xbf16, #tpu.memory_space<vmem>>, %arg37: memref<1x128xf32, #tpu.memory_space<vmem>>, %arg38: memref<1x1x128xf32, #tpu.memory_space<vmem>>) attributes {dimension_semantics = [#tpu.dimension_semantics<parallel>], iteration_bounds = array<i64: 2>, scalar_prefetch = 0 : i64, scratch_operands = 0 : i64, tpu.core_type = #tpu.core_type<tc>, window_params = [{transform_indices = @transform_0, window_bounds = array<i64: 1, 3, 8, 128>}, {transform_indices = @transform_1, window_bounds = array<i64: 1, 8, 256>}, {transform_indices = @transform_2, window_bounds = array<i64: 1, 8, 256>}, {transform_indices = @transform_3, window_bounds = array<i64: 1, 8, 8>}, {transform_indices = @transform_4, window_bounds = array<i64: 1, 10, 256>}, {pipeline_mode = #tpu.pipeline_mode<synchronous>, transform_indices = @transform_5, window_bounds = array<i64: 128, 128>}, {pipeline_mode = #tpu.pipeline_mode<synchronous>, transform_indices = @transform_6, window_bounds = array<i64: 1, 128>}, {pipeline_mode = #tpu.pipeline_mode<synchronous>, transform_indices = @transform_7, window_bounds = array<i64: 128, 128>}, {pipeline_mode = #tpu.pipeline_mode<synchronous>, transform_indices = @transform_8, window_bounds = array<i64: 1, 128>}, {pipeline_mode = #tpu.pipeline_mode<synchronous>, transform_indices = @transform_9, window_bounds = array<i64: 256, 128>}, {pipeline_mode = #tpu.pipeline_mode<synchronous>, transform_indices = @transform_10, window_bounds = array<i64: 1, 128>}, {pipeline_mode = #tpu.pipeline_mode<synchronous>, transform_indices = @transform_11, window_bounds = array<i64: 128, 128>}, {pipeline_mode = #tpu.pipeline_mode<synchronous>, transform_indices = @transform_12, window_bounds = array<i64: 1, 128>}, {pipeline_mode = #tpu.pipeline_mode<synchronous>, transform_indices = @transform_13, window_bounds = array<i64: 128, 256>}, {pipeline_mode = #tpu.pipeline_mode<synchronous>, transform_indices = @transform_14, window_bounds = array<i64: 128, 256>}, {pipeline_mode = #tpu.pipeline_mode<synchronous>, transform_indices = @transform_15, window_bounds = array<i64: 256, 256>}, {pipeline_mode = #tpu.pipeline_mode<synchronous>, transform_indices = @transform_16, window_bounds = array<i64: 1, 256>}, {pipeline_mode = #tpu.pipeline_mode<synchronous>, transform_indices = @transform_17, window_bounds = array<i64: 2, 1, 256>}, {pipeline_mode = #tpu.pipeline_mode<synchronous>, transform_indices = @transform_18, window_bounds = array<i64: 2, 1, 256>}, {pipeline_mode = #tpu.pipeline_mode<synchronous>, transform_indices = @transform_19, window_bounds = array<i64: 2, 256, 768>}, {pipeline_mode = #tpu.pipeline_mode<synchronous>, transform_indices = @transform_20, window_bounds = array<i64: 2, 1, 768>}, {pipeline_mode = #tpu.pipeline_mode<synchronous>, transform_indices = @transform_21, window_bounds = array<i64: 2, 256, 256>}, {pipeline_mode = #tpu.pipeline_mode<synchronous>, transform_indices = @transform_22, window_bounds = array<i64: 2, 1, 256>}, {pipeline_mode = #tpu.pipeline_mode<synchronous>, transform_indices = @transform_23, window_bounds = array<i64: 2, 1, 256>}, {pipeline_mode = #tpu.pipeline_mode<synchronous>, transform_indices = @transform_24, window_bounds = array<i64: 2, 1, 256>}, {pipeline_mode = #tpu.pipeline_mode<synchronous>, transform_indices = @transform_25, window_bounds = array<i64: 2, 256, 128>}, {pipeline_mode = #tpu.pipeline_mode<synchronous>, transform_indices = @transform_26, window_bounds = array<i64: 2, 1, 128>}, {pipeline_mode = #tpu.pipeline_mode<synchronous>, transform_indices = @transform_27, window_bounds = array<i64: 2, 128, 256>}, {pipeline_mode = #tpu.pipeline_mode<synchronous>, transform_indices = @transform_28, window_bounds = array<i64: 2, 1, 256>}, {pipeline_mode = #tpu.pipeline_mode<synchronous>, transform_indices = @transform_29, window_bounds = array<i64: 1, 256>}, {pipeline_mode = #tpu.pipeline_mode<synchronous>, transform_indices = @transform_30, window_bounds = array<i64: 1, 256>}, {pipeline_mode = #tpu.pipeline_mode<synchronous>, transform_indices = @transform_31, window_bounds = array<i64: 256, 256>}, {pipeline_mode = #tpu.pipeline_mode<synchronous>, transform_indices = @transform_32, window_bounds = array<i64: 1, 256>}, {pipeline_mode = #tpu.pipeline_mode<synchronous>, transform_indices = @transform_33, window_bounds = array<i64: 256, 256>}, {pipeline_mode = #tpu.pipeline_mode<synchronous>, transform_indices = @transform_34, window_bounds = array<i64: 1, 256>}, {pipeline_mode = #tpu.pipeline_mode<synchronous>, transform_indices = @transform_35, window_bounds = array<i64: 256, 128>}, {pipeline_mode = #tpu.pipeline_mode<synchronous>, transform_indices = @transform_36, window_bounds = array<i64: 1, 128>}, {transform_indices = @transform_37, window_bounds = array<i64: 1, 1, 128>}]} {
    %0 = tpu.iota {dimensions = array<i32: 1>} : vector<1x256xi32>
    %c249_i32 = arith.constant 249 : i32
    %1 = vector.broadcast %c249_i32 : i32 to vector<1x256xi32>
    %2 = arith.cmpi slt, %0, %1 : vector<1x256xi32>
    %3 = arith.extui %2 : vector<1x256xi1> to vector<1x256xi32>
    %4 = arith.sitofp %3 : vector<1x256xi32> to vector<1x256xf32>
    %c233_i32 = arith.constant 233 : i32
    %5 = vector.broadcast %c233_i32 : i32 to vector<1x256xi32>
    %6 = arith.cmpi sge, %0, %5 : vector<1x256xi32>
    %7 = arith.extui %6 : vector<1x256xi1> to vector<1x256xi32>
    %8 = arith.sitofp %7 : vector<1x256xi32> to vector<1x256xf32>
    %c0 = arith.constant 0 : index
    %c0_0 = arith.constant 0 : index
    %c0_1 = arith.constant 0 : index
    %9 = vector.load %arg5[%c0, %c0_0, %c0_1] : memref<1x10x256xf32, #tpu.memory_space<vmem>>, vector<1x10x256xf32>
    %c0_2 = arith.constant 0 : index
    %c0_3 = arith.constant 0 : index
    %c0_4 = arith.constant 0 : index
    %c0_5 = arith.constant 0 : index
    %10 = vector.load %arg1[%c0_2, %c0_3, %c0_4, %c0_5] : memref<1x3x8x128xf32, #tpu.memory_space<vmem>>, vector<1x3x8x128xf32>
    %11 = vector.shape_cast %10 : vector<1x3x8x128xf32> to vector<24x128xf32>
    %12 = arith.truncf %11 : vector<24x128xf32> to vector<24x128xbf16>
    %c0_6 = arith.constant 0 : index
    %c0_7 = arith.constant 0 : index
    %13 = vector.load %arg6[%c0_6, %c0_7] : memref<128x128xbf16, #tpu.memory_space<vmem>>, vector<128x128xbf16>
    %cst = arith.constant dense<0.000000e+00> : vector<24x128xf32>
    %14 = tpu.matmul %12, %13, %cst {dimension_numbers = #tpu.dot_dimension_numbers<[1], [0], [0], [1], [0, 0, 1, 1], [], []>} : vector<24x128xbf16>, vector<128x128xbf16>, vector<24x128xf32> -> vector<24x128xf32>
    %c0_8 = arith.constant 0 : index
    %c0_9 = arith.constant 0 : index
    %15 = vector.load %arg7[%c0_8, %c0_9] : memref<1x128xf32, #tpu.memory_space<vmem>>, vector<1x128xf32>
    %16 = vector.broadcast %15 : vector<1x128xf32> to vector<24x128xf32>
    %17 = arith.addf %14, %16 : vector<24x128xf32>
    %cst_10 = arith.constant 0.000000e+00 : f32
    %18 = vector.broadcast %cst_10 : f32 to vector<24x128xf32>
    %19 = arith.cmpf oge, %17, %18 : vector<24x128xf32>
    %cst_11 = arith.constant 0.00999999977 : f32
    %20 = vector.broadcast %cst_11 : f32 to vector<24x128xf32>
    %21 = arith.mulf %20, %17 : vector<24x128xf32>
    %22 = arith.select %19, %17, %21 : vector<24x128xi1>, vector<24x128xf32>
    %23 = arith.truncf %22 : vector<24x128xf32> to vector<24x128xbf16>
    %c0_12 = arith.constant 0 : index
    %c0_13 = arith.constant 0 : index
    %24 = vector.load %arg8[%c0_12, %c0_13] : memref<128x128xbf16, #tpu.memory_space<vmem>>, vector<128x128xbf16>
    %cst_14 = arith.constant dense<0.000000e+00> : vector<24x128xf32>
    %25 = tpu.matmul %23, %24, %cst_14 {dimension_numbers = #tpu.dot_dimension_numbers<[1], [0], [0], [1], [0, 0, 1, 1], [], []>} : vector<24x128xbf16>, vector<128x128xbf16>, vector<24x128xf32> -> vector<24x128xf32>
    %c0_15 = arith.constant 0 : index
    %c0_16 = arith.constant 0 : index
    %26 = vector.load %arg9[%c0_15, %c0_16] : memref<1x128xf32, #tpu.memory_space<vmem>>, vector<1x128xf32>
    %27 = vector.broadcast %26 : vector<1x128xf32> to vector<24x128xf32>
    %28 = arith.addf %25, %27 : vector<24x128xf32>
    %cst_17 = arith.constant 0.000000e+00 : f32
    %29 = vector.broadcast %cst_17 : f32 to vector<24x128xf32>
    %30 = arith.cmpf oge, %28, %29 : vector<24x128xf32>
    %cst_18 = arith.constant 0.00999999977 : f32
    %31 = vector.broadcast %cst_18 : f32 to vector<24x128xf32>
    %32 = arith.mulf %31, %28 : vector<24x128xf32>
    %33 = arith.select %30, %28, %32 : vector<24x128xi1>, vector<24x128xf32>
    %34 = vector.shape_cast %33 : vector<24x128xf32> to vector<1x3x8x128xf32>
    %35 = vector.extract_strided_slice %9 {offsets = [0, 0, 0], sizes = [1, 8, 3], strides = [1, 1, 1]} : vector<1x10x256xf32> to vector<1x8x3xf32>
    %36 = vector.extract_strided_slice %34 {offsets = [0, 0, 0, 0], sizes = [1, 1, 8, 128], strides = [1, 1, 1, 1]} : vector<1x3x8x128xf32> to vector<1x1x8x128xf32>
    %37 = vector.shape_cast %36 : vector<1x1x8x128xf32> to vector<1x8x128xf32>
    %38 = vector.extract_strided_slice %35 {offsets = [0, 0, 0], sizes = [1, 8, 1], strides = [1, 1, 1]} : vector<1x8x3xf32> to vector<1x8x1xf32>
    %39 = vector.broadcast %38 : vector<1x8x1xf32> to vector<1x8x128xf32>
    %40 = arith.mulf %37, %39 : vector<1x8x128xf32>
    %41 = vector.extract_strided_slice %34 {offsets = [0, 1, 0, 0], sizes = [1, 1, 8, 128], strides = [1, 1, 1, 1]} : vector<1x3x8x128xf32> to vector<1x1x8x128xf32>
    %42 = vector.shape_cast %41 : vector<1x1x8x128xf32> to vector<1x8x128xf32>
    %43 = vector.extract_strided_slice %35 {offsets = [0, 0, 1], sizes = [1, 8, 1], strides = [1, 1, 1]} : vector<1x8x3xf32> to vector<1x8x1xf32>
    %44 = vector.broadcast %43 : vector<1x8x1xf32> to vector<1x8x128xf32>
    %45 = arith.mulf %42, %44 : vector<1x8x128xf32>
    %46 = arith.addf %40, %45 : vector<1x8x128xf32>
    %47 = vector.extract_strided_slice %34 {offsets = [0, 2, 0, 0], sizes = [1, 1, 8, 128], strides = [1, 1, 1, 1]} : vector<1x3x8x128xf32> to vector<1x1x8x128xf32>
    %48 = vector.shape_cast %47 : vector<1x1x8x128xf32> to vector<1x8x128xf32>
    %49 = vector.extract_strided_slice %35 {offsets = [0, 0, 2], sizes = [1, 8, 1], strides = [1, 1, 1]} : vector<1x8x3xf32> to vector<1x8x1xf32>
    %50 = vector.broadcast %49 : vector<1x8x1xf32> to vector<1x8x128xf32>
    %51 = arith.mulf %48, %50 : vector<1x8x128xf32>
    %52 = arith.addf %46, %51 : vector<1x8x128xf32>
    %53 = vector.shape_cast %52 : vector<1x8x128xf32> to vector<8x128xf32>
    %c0_19 = arith.constant 0 : index
    %c0_20 = arith.constant 0 : index
    %c0_21 = arith.constant 0 : index
    %54 = vector.load %arg2[%c0_19, %c0_20, %c0_21] : memref<1x8x256xf32, #tpu.memory_space<vmem>>, vector<1x8x256xf32>
    %55 = vector.shape_cast %54 : vector<1x8x256xf32> to vector<8x256xf32>
    %56 = arith.truncf %55 : vector<8x256xf32> to vector<8x256xbf16>
    %c0_22 = arith.constant 0 : index
    %c0_23 = arith.constant 0 : index
    %57 = vector.load %arg10[%c0_22, %c0_23] : memref<256x128xbf16, #tpu.memory_space<vmem>>, vector<256x128xbf16>
    %cst_24 = arith.constant dense<0.000000e+00> : vector<8x128xf32>
    %58 = tpu.matmul %56, %57, %cst_24 {dimension_numbers = #tpu.dot_dimension_numbers<[1], [0], [0], [1], [0, 0, 1, 1], [], []>} : vector<8x256xbf16>, vector<256x128xbf16>, vector<8x128xf32> -> vector<8x128xf32>
    %c0_25 = arith.constant 0 : index
    %c0_26 = arith.constant 0 : index
    %59 = vector.load %arg11[%c0_25, %c0_26] : memref<1x128xf32, #tpu.memory_space<vmem>>, vector<1x128xf32>
    %60 = vector.broadcast %59 : vector<1x128xf32> to vector<8x128xf32>
    %61 = arith.addf %58, %60 : vector<8x128xf32>
    %cst_27 = arith.constant 0.000000e+00 : f32
    %62 = vector.broadcast %cst_27 : f32 to vector<8x128xf32>
    %63 = arith.cmpf oge, %61, %62 : vector<8x128xf32>
    %cst_28 = arith.constant 0.00999999977 : f32
    %64 = vector.broadcast %cst_28 : f32 to vector<8x128xf32>
    %65 = arith.mulf %64, %61 : vector<8x128xf32>
    %66 = arith.select %63, %61, %65 : vector<8x128xi1>, vector<8x128xf32>
    %67 = arith.truncf %66 : vector<8x128xf32> to vector<8x128xbf16>
    %c0_29 = arith.constant 0 : index
    %c0_30 = arith.constant 0 : index
    %68 = vector.load %arg12[%c0_29, %c0_30] : memref<128x128xbf16, #tpu.memory_space<vmem>>, vector<128x128xbf16>
    %cst_31 = arith.constant dense<0.000000e+00> : vector<8x128xf32>
    %69 = tpu.matmul %67, %68, %cst_31 {dimension_numbers = #tpu.dot_dimension_numbers<[1], [0], [0], [1], [0, 0, 1, 1], [], []>} : vector<8x128xbf16>, vector<128x128xbf16>, vector<8x128xf32> -> vector<8x128xf32>
    %c0_32 = arith.constant 0 : index
    %c0_33 = arith.constant 0 : index
    %70 = vector.load %arg13[%c0_32, %c0_33] : memref<1x128xf32, #tpu.memory_space<vmem>>, vector<1x128xf32>
    %71 = vector.broadcast %70 : vector<1x128xf32> to vector<8x128xf32>
    %72 = arith.addf %69, %71 : vector<8x128xf32>
    %cst_34 = arith.constant 0.000000e+00 : f32
    %73 = vector.broadcast %cst_34 : f32 to vector<8x128xf32>
    %74 = arith.cmpf oge, %72, %73 : vector<8x128xf32>
    %cst_35 = arith.constant 0.00999999977 : f32
    %75 = vector.broadcast %cst_35 : f32 to vector<8x128xf32>
    %76 = arith.mulf %75, %72 : vector<8x128xf32>
    %77 = arith.select %74, %72, %76 : vector<8x128xi1>, vector<8x128xf32>
    %c0_36 = arith.constant 0 : index
    %c0_37 = arith.constant 0 : index
    %c0_38 = arith.constant 0 : index
    %78 = vector.load %arg3[%c0_36, %c0_37, %c0_38] : memref<1x8x256xf32, #tpu.memory_space<vmem>>, vector<1x8x256xf32>
    %79 = vector.shape_cast %78 : vector<1x8x256xf32> to vector<8x256xf32>
    %80 = arith.truncf %53 : vector<8x128xf32> to vector<8x128xbf16>
    %c0_39 = arith.constant 0 : index
    %c0_40 = arith.constant 0 : index
    %81 = vector.load %arg14[%c0_39, %c0_40] : memref<128x256xbf16, #tpu.memory_space<vmem>>, vector<128x256xbf16>
    %cst_41 = arith.constant dense<0.000000e+00> : vector<8x256xf32>
    %82 = tpu.matmul %80, %81, %cst_41 {dimension_numbers = #tpu.dot_dimension_numbers<[1], [0], [0], [1], [0, 0, 1, 1], [], []>} : vector<8x128xbf16>, vector<128x256xbf16>, vector<8x256xf32> -> vector<8x256xf32>
    %83 = arith.truncf %77 : vector<8x128xf32> to vector<8x128xbf16>
    %c0_42 = arith.constant 0 : index
    %c0_43 = arith.constant 0 : index
    %84 = vector.load %arg15[%c0_42, %c0_43] : memref<128x256xbf16, #tpu.memory_space<vmem>>, vector<128x256xbf16>
    %cst_44 = arith.constant dense<0.000000e+00> : vector<8x256xf32>
    %85 = tpu.matmul %83, %84, %cst_44 {dimension_numbers = #tpu.dot_dimension_numbers<[1], [0], [0], [1], [0, 0, 1, 1], [], []>} : vector<8x128xbf16>, vector<128x256xbf16>, vector<8x256xf32> -> vector<8x256xf32>
    %86 = arith.addf %82, %85 : vector<8x256xf32>
    %87 = arith.truncf %79 : vector<8x256xf32> to vector<8x256xbf16>
    %c0_45 = arith.constant 0 : index
    %c0_46 = arith.constant 0 : index
    %88 = vector.load %arg16[%c0_45, %c0_46] : memref<256x256xbf16, #tpu.memory_space<vmem>>, vector<256x256xbf16>
    %cst_47 = arith.constant dense<0.000000e+00> : vector<8x256xf32>
    %89 = tpu.matmul %87, %88, %cst_47 {dimension_numbers = #tpu.dot_dimension_numbers<[1], [0], [0], [1], [0, 0, 1, 1], [], []>} : vector<8x256xbf16>, vector<256x256xbf16>, vector<8x256xf32> -> vector<8x256xf32>
    %90 = arith.addf %86, %89 : vector<8x256xf32>
    %c0_48 = arith.constant 0 : index
    %c0_49 = arith.constant 0 : index
    %91 = vector.load %arg17[%c0_48, %c0_49] : memref<1x256xf32, #tpu.memory_space<vmem>>, vector<1x256xf32>
    %92 = vector.broadcast %91 : vector<1x256xf32> to vector<8x256xf32>
    %93 = arith.addf %90, %92 : vector<8x256xf32>
    %cst_50 = arith.constant 0.000000e+00 : f32
    %94 = vector.broadcast %cst_50 : f32 to vector<8x256xf32>
    %95 = arith.cmpf oge, %93, %94 : vector<8x256xf32>
    %cst_51 = arith.constant 0.00999999977 : f32
    %96 = vector.broadcast %cst_51 : f32 to vector<8x256xf32>
    %97 = arith.mulf %96, %93 : vector<8x256xf32>
    %98 = arith.select %95, %93, %97 : vector<8x256xi1>, vector<8x256xf32>
    %99 = vector.broadcast %8 : vector<1x256xf32> to vector<8x256xf32>
    %100 = arith.mulf %79, %99 : vector<8x256xf32>
    %101 = arith.addf %98, %100 : vector<8x256xf32>
    %c0_52 = arith.constant 0 : index
    %c0_53 = arith.constant 0 : index
    %c0_54 = arith.constant 0 : index
    %102 = vector.load %arg4[%c0_52, %c0_53, %c0_54] : memref<1x8x8xf32, #tpu.memory_space<vmem>>, vector<1x8x8xf32>
    %c0_55 = arith.constant 0 : index
    %c0_56 = arith.constant 0 : index
    %c0_57 = arith.constant 0 : index
    %103 = vector.load %arg18[%c0_55, %c0_56, %c0_57] : memref<2x1x256xf32, #tpu.memory_space<vmem>>, vector<1x1x256xf32>
    %104 = vector.shape_cast %103 : vector<1x1x256xf32> to vector<1x256xf32>
    %c0_58 = arith.constant 0 : index
    %c0_59 = arith.constant 0 : index
    %c0_60 = arith.constant 0 : index
    %105 = vector.load %arg19[%c0_58, %c0_59, %c0_60] : memref<2x1x256xf32, #tpu.memory_space<vmem>>, vector<1x1x256xf32>
    %106 = vector.shape_cast %105 : vector<1x1x256xf32> to vector<1x256xf32>
    %cst_61 = arith.constant dense<0.000000e+00> : vector<8xf32>
    %107 = vector.multi_reduction <add>, %101, %cst_61 [1] : vector<8x256xf32> to vector<8xf32>
    %108 = vector.shape_cast %107 : vector<8xf32> to vector<8x1xf32>
    %cst_62 = arith.constant 0.00401606411 : f32
    %109 = vector.broadcast %cst_62 : f32 to vector<8x1xf32>
    %110 = arith.mulf %108, %109 : vector<8x1xf32>
    %111 = vector.broadcast %110 : vector<8x1xf32> to vector<8x256xf32>
    %112 = arith.subf %101, %111 : vector<8x256xf32>
    %113 = vector.broadcast %4 : vector<1x256xf32> to vector<8x256xf32>
    %114 = arith.mulf %112, %113 : vector<8x256xf32>
    %115 = arith.mulf %114, %114 : vector<8x256xf32>
    %cst_63 = arith.constant dense<0.000000e+00> : vector<8xf32>
    %116 = vector.multi_reduction <add>, %115, %cst_63 [1] : vector<8x256xf32> to vector<8xf32>
    %117 = vector.shape_cast %116 : vector<8xf32> to vector<8x1xf32>
    %cst_64 = arith.constant 0.00401606411 : f32
    %118 = vector.broadcast %cst_64 : f32 to vector<8x1xf32>
    %119 = arith.mulf %117, %118 : vector<8x1xf32>
    %cst_65 = arith.constant 9.99999974E-6 : f32
    %120 = vector.broadcast %cst_65 : f32 to vector<8x1xf32>
    %121 = arith.addf %119, %120 : vector<8x1xf32>
    %122 = math.rsqrt %121 : vector<8x1xf32>
    %123 = vector.broadcast %122 : vector<8x1xf32> to vector<8x256xf32>
    %124 = arith.mulf %114, %123 : vector<8x256xf32>
    %125 = vector.broadcast %104 : vector<1x256xf32> to vector<8x256xf32>
    %126 = arith.mulf %124, %125 : vector<8x256xf32>
    %127 = vector.broadcast %106 : vector<1x256xf32> to vector<8x256xf32>
    %128 = arith.addf %126, %127 : vector<8x256xf32>
    %129 = arith.truncf %128 : vector<8x256xf32> to vector<8x256xbf16>
    %c0_66 = arith.constant 0 : index
    %c0_67 = arith.constant 0 : index
    %c0_68 = arith.constant 0 : index
    %130 = vector.load %arg20[%c0_66, %c0_67, %c0_68] : memref<2x256x768xbf16, #tpu.memory_space<vmem>>, vector<1x256x768xbf16>
    %131 = vector.shape_cast %130 : vector<1x256x768xbf16> to vector<256x768xbf16>
    %cst_69 = arith.constant dense<0.000000e+00> : vector<8x768xf32>
    %132 = tpu.matmul %129, %131, %cst_69 {dimension_numbers = #tpu.dot_dimension_numbers<[1], [0], [0], [1], [0, 0, 1, 1], [], []>} : vector<8x256xbf16>, vector<256x768xbf16>, vector<8x768xf32> -> vector<8x768xf32>
    %c0_70 = arith.constant 0 : index
    %c0_71 = arith.constant 0 : index
    %c0_72 = arith.constant 0 : index
    %133 = vector.load %arg21[%c0_70, %c0_71, %c0_72] : memref<2x1x768xf32, #tpu.memory_space<vmem>>, vector<1x1x768xf32>
    %134 = vector.shape_cast %133 : vector<1x1x768xf32> to vector<1x768xf32>
    %135 = vector.broadcast %134 : vector<1x768xf32> to vector<8x768xf32>
    %136 = arith.addf %132, %135 : vector<8x768xf32>
    %137 = vector.shape_cast %136 : vector<8x768xf32> to vector<1x8x768xf32>
    %138 = vector.extract_strided_slice %137 {offsets = [0, 0, 0], sizes = [1, 8, 64], strides = [1, 1, 1]} : vector<1x8x768xf32> to vector<1x8x64xf32>
    %cst_73 = arith.constant 0.127000123 : f32
    %139 = vector.broadcast %cst_73 : f32 to vector<1x8x64xf32>
    %140 = arith.mulf %138, %139 : vector<1x8x64xf32>
    %141 = vector.extract_strided_slice %137 {offsets = [0, 0, 256], sizes = [1, 8, 64], strides = [1, 1, 1]} : vector<1x8x768xf32> to vector<1x8x64xf32>
    %142 = vector.extract_strided_slice %137 {offsets = [0, 0, 512], sizes = [1, 8, 64], strides = [1, 1, 1]} : vector<1x8x768xf32> to vector<1x8x64xf32>
    "tpu.trace_start"() <{level = 10 : i32, message = "bqd,bkd->bqk"}> : () -> ()
    %cst_74 = arith.constant dense<0.000000e+00> : vector<1x8x8xf32>
    %143 = tpu.matmul %140, %141, %cst_74 {dimension_numbers = #tpu.dot_dimension_numbers<[2], [2], [1], [1], [0, 0, 0, 1, 1, 1], [0], [0]>} : vector<1x8x64xf32>, vector<1x8x64xf32>, vector<1x8x8xf32> -> vector<1x8x8xf32>
    "tpu.trace_stop"() : () -> ()
    %144 = arith.mulf %143, %102 : vector<1x8x8xf32>
    %cst_75 = arith.constant dense<0xFF800000> : vector<1x8xf32>
    %145 = vector.multi_reduction <maximumf>, %144, %cst_75 [2] : vector<1x8x8xf32> to vector<1x8xf32>
    %146 = vector.shape_cast %145 : vector<1x8xf32> to vector<1x8x1xf32>
    %147 = vector.broadcast %146 : vector<1x8x1xf32> to vector<1x8x8xf32>
    %148 = arith.subf %144, %147 : vector<1x8x8xf32>
    %149 = math.exp %148 : vector<1x8x8xf32>
    %cst_76 = arith.constant dense<0.000000e+00> : vector<1x8xf32>
    %150 = vector.multi_reduction <add>, %149, %cst_76 [2] : vector<1x8x8xf32> to vector<1x8xf32>
    %151 = vector.shape_cast %150 : vector<1x8xf32> to vector<1x8x1xf32>
    %152 = tpu.reciprocal %151 {approx = true} : vector<1x8x1xf32> -> vector<1x8x1xf32>
    %153 = vector.broadcast %152 : vector<1x8x1xf32> to vector<1x8x8xf32>
    %154 = arith.mulf %149, %153 : vector<1x8x8xf32>
    "tpu.trace_start"() <{level = 10 : i32, message = "bqk,bkd->bqd"}> : () -> ()
    %cst_77 = arith.constant dense<0.000000e+00> : vector<1x8x64xf32>
    %155 = tpu.matmul %154, %142, %cst_77 {dimension_numbers = #tpu.dot_dimension_numbers<[2], [1], [1], [2], [0, 0, 0, 1, 1, 2], [0], [0]>} : vector<1x8x8xf32>, vector<1x8x64xf32>, vector<1x8x64xf32> -> vector<1x8x64xf32>
    "tpu.trace_stop"() : () -> ()
    %156 = vector.extract_strided_slice %137 {offsets = [0, 0, 64], sizes = [1, 8, 64], strides = [1, 1, 1]} : vector<1x8x768xf32> to vector<1x8x64xf32>
    %cst_78 = arith.constant 0.127000123 : f32
    %157 = vector.broadcast %cst_78 : f32 to vector<1x8x64xf32>
    %158 = arith.mulf %156, %157 : vector<1x8x64xf32>
    %159 = vector.extract_strided_slice %137 {offsets = [0, 0, 320], sizes = [1, 8, 64], strides = [1, 1, 1]} : vector<1x8x768xf32> to vector<1x8x64xf32>
    %160 = vector.extract_strided_slice %137 {offsets = [0, 0, 576], sizes = [1, 8, 64], strides = [1, 1, 1]} : vector<1x8x768xf32> to vector<1x8x64xf32>
    "tpu.trace_start"() <{level = 10 : i32, message = "bqd,bkd->bqk"}> : () -> ()
    %cst_79 = arith.constant dense<0.000000e+00> : vector<1x8x8xf32>
    %161 = tpu.matmul %158, %159, %cst_79 {dimension_numbers = #tpu.dot_dimension_numbers<[2], [2], [1], [1], [0, 0, 0, 1, 1, 1], [0], [0]>} : vector<1x8x64xf32>, vector<1x8x64xf32>, vector<1x8x8xf32> -> vector<1x8x8xf32>
    "tpu.trace_stop"() : () -> ()
    %162 = arith.mulf %161, %102 : vector<1x8x8xf32>
    %cst_80 = arith.constant dense<0xFF800000> : vector<1x8xf32>
    %163 = vector.multi_reduction <maximumf>, %162, %cst_80 [2] : vector<1x8x8xf32> to vector<1x8xf32>
    %164 = vector.shape_cast %163 : vector<1x8xf32> to vector<1x8x1xf32>
    %165 = vector.broadcast %164 : vector<1x8x1xf32> to vector<1x8x8xf32>
    %166 = arith.subf %162, %165 : vector<1x8x8xf32>
    %167 = math.exp %166 : vector<1x8x8xf32>
    %cst_81 = arith.constant dense<0.000000e+00> : vector<1x8xf32>
    %168 = vector.multi_reduction <add>, %167, %cst_81 [2] : vector<1x8x8xf32> to vector<1x8xf32>
    %169 = vector.shape_cast %168 : vector<1x8xf32> to vector<1x8x1xf32>
    %170 = tpu.reciprocal %169 {approx = true} : vector<1x8x1xf32> -> vector<1x8x1xf32>
    %171 = vector.broadcast %170 : vector<1x8x1xf32> to vector<1x8x8xf32>
    %172 = arith.mulf %167, %171 : vector<1x8x8xf32>
    "tpu.trace_start"() <{level = 10 : i32, message = "bqk,bkd->bqd"}> : () -> ()
    %cst_82 = arith.constant dense<0.000000e+00> : vector<1x8x64xf32>
    %173 = tpu.matmul %172, %160, %cst_82 {dimension_numbers = #tpu.dot_dimension_numbers<[2], [1], [1], [2], [0, 0, 0, 1, 1, 2], [0], [0]>} : vector<1x8x8xf32>, vector<1x8x64xf32>, vector<1x8x64xf32> -> vector<1x8x64xf32>
    "tpu.trace_stop"() : () -> ()
    %174 = vector.extract_strided_slice %137 {offsets = [0, 0, 128], sizes = [1, 8, 64], strides = [1, 1, 1]} : vector<1x8x768xf32> to vector<1x8x64xf32>
    %cst_83 = arith.constant 0.127000123 : f32
    %175 = vector.broadcast %cst_83 : f32 to vector<1x8x64xf32>
    %176 = arith.mulf %174, %175 : vector<1x8x64xf32>
    %177 = vector.extract_strided_slice %137 {offsets = [0, 0, 384], sizes = [1, 8, 64], strides = [1, 1, 1]} : vector<1x8x768xf32> to vector<1x8x64xf32>
    %178 = vector.extract_strided_slice %137 {offsets = [0, 0, 640], sizes = [1, 8, 64], strides = [1, 1, 1]} : vector<1x8x768xf32> to vector<1x8x64xf32>
    "tpu.trace_start"() <{level = 10 : i32, message = "bqd,bkd->bqk"}> : () -> ()
    %cst_84 = arith.constant dense<0.000000e+00> : vector<1x8x8xf32>
    %179 = tpu.matmul %176, %177, %cst_84 {dimension_numbers = #tpu.dot_dimension_numbers<[2], [2], [1], [1], [0, 0, 0, 1, 1, 1], [0], [0]>} : vector<1x8x64xf32>, vector<1x8x64xf32>, vector<1x8x8xf32> -> vector<1x8x8xf32>
    "tpu.trace_stop"() : () -> ()
    %180 = arith.mulf %179, %102 : vector<1x8x8xf32>
    %cst_85 = arith.constant dense<0xFF800000> : vector<1x8xf32>
    %181 = vector.multi_reduction <maximumf>, %180, %cst_85 [2] : vector<1x8x8xf32> to vector<1x8xf32>
    %182 = vector.shape_cast %181 : vector<1x8xf32> to vector<1x8x1xf32>
    %183 = vector.broadcast %182 : vector<1x8x1xf32> to vector<1x8x8xf32>
    %184 = arith.subf %180, %183 : vector<1x8x8xf32>
    %185 = math.exp %184 : vector<1x8x8xf32>
    %cst_86 = arith.constant dense<0.000000e+00> : vector<1x8xf32>
    %186 = vector.multi_reduction <add>, %185, %cst_86 [2] : vector<1x8x8xf32> to vector<1x8xf32>
    %187 = vector.shape_cast %186 : vector<1x8xf32> to vector<1x8x1xf32>
    %188 = tpu.reciprocal %187 {approx = true} : vector<1x8x1xf32> -> vector<1x8x1xf32>
    %189 = vector.broadcast %188 : vector<1x8x1xf32> to vector<1x8x8xf32>
    %190 = arith.mulf %185, %189 : vector<1x8x8xf32>
    "tpu.trace_start"() <{level = 10 : i32, message = "bqk,bkd->bqd"}> : () -> ()
    %cst_87 = arith.constant dense<0.000000e+00> : vector<1x8x64xf32>
    %191 = tpu.matmul %190, %178, %cst_87 {dimension_numbers = #tpu.dot_dimension_numbers<[2], [1], [1], [2], [0, 0, 0, 1, 1, 2], [0], [0]>} : vector<1x8x8xf32>, vector<1x8x64xf32>, vector<1x8x64xf32> -> vector<1x8x64xf32>
    "tpu.trace_stop"() : () -> ()
    %192 = vector.extract_strided_slice %137 {offsets = [0, 0, 192], sizes = [1, 8, 64], strides = [1, 1, 1]} : vector<1x8x768xf32> to vector<1x8x64xf32>
    %cst_88 = arith.constant 0.127000123 : f32
    %193 = vector.broadcast %cst_88 : f32 to vector<1x8x64xf32>
    %194 = arith.mulf %192, %193 : vector<1x8x64xf32>
    %195 = vector.extract_strided_slice %137 {offsets = [0, 0, 448], sizes = [1, 8, 64], strides = [1, 1, 1]} : vector<1x8x768xf32> to vector<1x8x64xf32>
    %196 = vector.extract_strided_slice %137 {offsets = [0, 0, 704], sizes = [1, 8, 64], strides = [1, 1, 1]} : vector<1x8x768xf32> to vector<1x8x64xf32>
    "tpu.trace_start"() <{level = 10 : i32, message = "bqd,bkd->bqk"}> : () -> ()
    %cst_89 = arith.constant dense<0.000000e+00> : vector<1x8x8xf32>
    %197 = tpu.matmul %194, %195, %cst_89 {dimension_numbers = #tpu.dot_dimension_numbers<[2], [2], [1], [1], [0, 0, 0, 1, 1, 1], [0], [0]>} : vector<1x8x64xf32>, vector<1x8x64xf32>, vector<1x8x8xf32> -> vector<1x8x8xf32>
    "tpu.trace_stop"() : () -> ()
    %198 = arith.mulf %197, %102 : vector<1x8x8xf32>
    %cst_90 = arith.constant dense<0xFF800000> : vector<1x8xf32>
    %199 = vector.multi_reduction <maximumf>, %198, %cst_90 [2] : vector<1x8x8xf32> to vector<1x8xf32>
    %200 = vector.shape_cast %199 : vector<1x8xf32> to vector<1x8x1xf32>
    %201 = vector.broadcast %200 : vector<1x8x1xf32> to vector<1x8x8xf32>
    %202 = arith.subf %198, %201 : vector<1x8x8xf32>
    %203 = math.exp %202 : vector<1x8x8xf32>
    %cst_91 = arith.constant dense<0.000000e+00> : vector<1x8xf32>
    %204 = vector.multi_reduction <add>, %203, %cst_91 [2] : vector<1x8x8xf32> to vector<1x8xf32>
    %205 = vector.shape_cast %204 : vector<1x8xf32> to vector<1x8x1xf32>
    %206 = tpu.reciprocal %205 {approx = true} : vector<1x8x1xf32> -> vector<1x8x1xf32>
    %207 = vector.broadcast %206 : vector<1x8x1xf32> to vector<1x8x8xf32>
    %208 = arith.mulf %203, %207 : vector<1x8x8xf32>
    "tpu.trace_start"() <{level = 10 : i32, message = "bqk,bkd->bqd"}> : () -> ()
    %cst_92 = arith.constant dense<0.000000e+00> : vector<1x8x64xf32>
    %209 = tpu.matmul %208, %196, %cst_92 {dimension_numbers = #tpu.dot_dimension_numbers<[2], [1], [1], [2], [0, 0, 0, 1, 1, 2], [0], [0]>} : vector<1x8x8xf32>, vector<1x8x64xf32>, vector<1x8x64xf32> -> vector<1x8x64xf32>
    "tpu.trace_stop"() : () -> ()
    %210 = tpu.concatenate %155, %173, %191, %209 in 2 : vector<1x8x64xf32>, vector<1x8x64xf32>, vector<1x8x64xf32>, vector<1x8x64xf32> -> vector<1x8x256xf32>
    %211 = vector.shape_cast %210 : vector<1x8x256xf32> to vector<8x256xf32>
    %212 = arith.truncf %211 : vector<8x256xf32> to vector<8x256xbf16>
    %c0_93 = arith.constant 0 : index
    %c0_94 = arith.constant 0 : index
    %c0_95 = arith.constant 0 : index
    %213 = vector.load %arg22[%c0_93, %c0_94, %c0_95] : memref<2x256x256xbf16, #tpu.memory_space<vmem>>, vector<1x256x256xbf16>
    %214 = vector.shape_cast %213 : vector<1x256x256xbf16> to vector<256x256xbf16>
    %cst_96 = arith.constant dense<0.000000e+00> : vector<8x256xf32>
    %215 = tpu.matmul %212, %214, %cst_96 {dimension_numbers = #tpu.dot_dimension_numbers<[1], [0], [0], [1], [0, 0, 1, 1], [], []>} : vector<8x256xbf16>, vector<256x256xbf16>, vector<8x256xf32> -> vector<8x256xf32>
    %216 = arith.addf %101, %215 : vector<8x256xf32>
    %c0_97 = arith.constant 0 : index
    %c0_98 = arith.constant 0 : index
    %c0_99 = arith.constant 0 : index
    %217 = vector.load %arg23[%c0_97, %c0_98, %c0_99] : memref<2x1x256xf32, #tpu.memory_space<vmem>>, vector<1x1x256xf32>
    %218 = vector.shape_cast %217 : vector<1x1x256xf32> to vector<1x256xf32>
    %219 = vector.broadcast %218 : vector<1x256xf32> to vector<8x256xf32>
    %220 = arith.addf %216, %219 : vector<8x256xf32>
    %c0_100 = arith.constant 0 : index
    %c0_101 = arith.constant 0 : index
    %c0_102 = arith.constant 0 : index
    %221 = vector.load %arg24[%c0_100, %c0_101, %c0_102] : memref<2x1x256xf32, #tpu.memory_space<vmem>>, vector<1x1x256xf32>
    %222 = vector.shape_cast %221 : vector<1x1x256xf32> to vector<1x256xf32>
    %c0_103 = arith.constant 0 : index
    %c0_104 = arith.constant 0 : index
    %c0_105 = arith.constant 0 : index
    %223 = vector.load %arg25[%c0_103, %c0_104, %c0_105] : memref<2x1x256xf32, #tpu.memory_space<vmem>>, vector<1x1x256xf32>
    %224 = vector.shape_cast %223 : vector<1x1x256xf32> to vector<1x256xf32>
    %cst_106 = arith.constant dense<0.000000e+00> : vector<8xf32>
    %225 = vector.multi_reduction <add>, %220, %cst_106 [1] : vector<8x256xf32> to vector<8xf32>
    %226 = vector.shape_cast %225 : vector<8xf32> to vector<8x1xf32>
    %cst_107 = arith.constant 0.00401606411 : f32
    %227 = vector.broadcast %cst_107 : f32 to vector<8x1xf32>
    %228 = arith.mulf %226, %227 : vector<8x1xf32>
    %229 = vector.broadcast %228 : vector<8x1xf32> to vector<8x256xf32>
    %230 = arith.subf %220, %229 : vector<8x256xf32>
    %231 = vector.broadcast %4 : vector<1x256xf32> to vector<8x256xf32>
    %232 = arith.mulf %230, %231 : vector<8x256xf32>
    %233 = arith.mulf %232, %232 : vector<8x256xf32>
    %cst_108 = arith.constant dense<0.000000e+00> : vector<8xf32>
    %234 = vector.multi_reduction <add>, %233, %cst_108 [1] : vector<8x256xf32> to vector<8xf32>
    %235 = vector.shape_cast %234 : vector<8xf32> to vector<8x1xf32>
    %cst_109 = arith.constant 0.00401606411 : f32
    %236 = vector.broadcast %cst_109 : f32 to vector<8x1xf32>
    %237 = arith.mulf %235, %236 : vector<8x1xf32>
    %cst_110 = arith.constant 9.99999974E-6 : f32
    %238 = vector.broadcast %cst_110 : f32 to vector<8x1xf32>
    %239 = arith.addf %237, %238 : vector<8x1xf32>
    %240 = math.rsqrt %239 : vector<8x1xf32>
    %241 = vector.broadcast %240 : vector<8x1xf32> to vector<8x256xf32>
    %242 = arith.mulf %232, %241 : vector<8x256xf32>
    %243 = vector.broadcast %222 : vector<1x256xf32> to vector<8x256xf32>
    %244 = arith.mulf %242, %243 : vector<8x256xf32>
    %245 = vector.broadcast %224 : vector<1x256xf32> to vector<8x256xf32>
    %246 = arith.addf %244, %245 : vector<8x256xf32>
    %247 = arith.truncf %246 : vector<8x256xf32> to vector<8x256xbf16>
    %c0_111 = arith.constant 0 : index
    %c0_112 = arith.constant 0 : index
    %c0_113 = arith.constant 0 : index
    %248 = vector.load %arg26[%c0_111, %c0_112, %c0_113] : memref<2x256x128xbf16, #tpu.memory_space<vmem>>, vector<1x256x128xbf16>
    %249 = vector.shape_cast %248 : vector<1x256x128xbf16> to vector<256x128xbf16>
    %cst_114 = arith.constant dense<0.000000e+00> : vector<8x128xf32>
    %250 = tpu.matmul %247, %249, %cst_114 {dimension_numbers = #tpu.dot_dimension_numbers<[1], [0], [0], [1], [0, 0, 1, 1], [], []>} : vector<8x256xbf16>, vector<256x128xbf16>, vector<8x128xf32> -> vector<8x128xf32>
    %c0_115 = arith.constant 0 : index
    %c0_116 = arith.constant 0 : index
    %c0_117 = arith.constant 0 : index
    %251 = vector.load %arg27[%c0_115, %c0_116, %c0_117] : memref<2x1x128xf32, #tpu.memory_space<vmem>>, vector<1x1x128xf32>
    %252 = vector.shape_cast %251 : vector<1x1x128xf32> to vector<1x128xf32>
    %253 = vector.broadcast %252 : vector<1x128xf32> to vector<8x128xf32>
    %254 = arith.addf %250, %253 : vector<8x128xf32>
    %cst_118 = arith.constant 5.000000e-01 : f32
    %255 = vector.broadcast %cst_118 : f32 to vector<8x128xf32>
    %256 = arith.mulf %255, %254 : vector<8x128xf32>
    %cst_119 = arith.constant 0.707106769 : f32
    %257 = vector.broadcast %cst_119 : f32 to vector<8x128xf32>
    %258 = arith.mulf %254, %257 : vector<8x128xf32>
    %259 = math.erf %258 : vector<8x128xf32>
    %cst_120 = arith.constant 1.000000e+00 : f32
    %260 = vector.broadcast %cst_120 : f32 to vector<8x128xf32>
    %261 = arith.addf %260, %259 : vector<8x128xf32>
    %262 = arith.mulf %256, %261 : vector<8x128xf32>
    %263 = arith.truncf %262 : vector<8x128xf32> to vector<8x128xbf16>
    %c0_121 = arith.constant 0 : index
    %c0_122 = arith.constant 0 : index
    %c0_123 = arith.constant 0 : index
    %264 = vector.load %arg28[%c0_121, %c0_122, %c0_123] : memref<2x128x256xbf16, #tpu.memory_space<vmem>>, vector<1x128x256xbf16>
    %265 = vector.shape_cast %264 : vector<1x128x256xbf16> to vector<128x256xbf16>
    %cst_124 = arith.constant dense<0.000000e+00> : vector<8x256xf32>
    %266 = tpu.matmul %263, %265, %cst_124 {dimension_numbers = #tpu.dot_dimension_numbers<[1], [0], [0], [1], [0, 0, 1, 1], [], []>} : vector<8x128xbf16>, vector<128x256xbf16>, vector<8x256xf32> -> vector<8x256xf32>
    %267 = arith.addf %220, %266 : vector<8x256xf32>
    %c0_125 = arith.constant 0 : index
    %c0_126 = arith.constant 0 : index
    %c0_127 = arith.constant 0 : index
    %268 = vector.load %arg29[%c0_125, %c0_126, %c0_127] : memref<2x1x256xf32, #tpu.memory_space<vmem>>, vector<1x1x256xf32>
    %269 = vector.shape_cast %268 : vector<1x1x256xf32> to vector<1x256xf32>
    %270 = vector.broadcast %269 : vector<1x256xf32> to vector<8x256xf32>
    %271 = arith.addf %267, %270 : vector<8x256xf32>
    %c1 = arith.constant 1 : index
    %c0_128 = arith.constant 0 : index
    %c0_129 = arith.constant 0 : index
    %272 = vector.load %arg18[%c1, %c0_128, %c0_129] : memref<2x1x256xf32, #tpu.memory_space<vmem>>, vector<1x1x256xf32>
    %273 = vector.shape_cast %272 : vector<1x1x256xf32> to vector<1x256xf32>
    %c1_130 = arith.constant 1 : index
    %c0_131 = arith.constant 0 : index
    %c0_132 = arith.constant 0 : index
    %274 = vector.load %arg19[%c1_130, %c0_131, %c0_132] : memref<2x1x256xf32, #tpu.memory_space<vmem>>, vector<1x1x256xf32>
    %275 = vector.shape_cast %274 : vector<1x1x256xf32> to vector<1x256xf32>
    %cst_133 = arith.constant dense<0.000000e+00> : vector<8xf32>
    %276 = vector.multi_reduction <add>, %271, %cst_133 [1] : vector<8x256xf32> to vector<8xf32>
    %277 = vector.shape_cast %276 : vector<8xf32> to vector<8x1xf32>
    %cst_134 = arith.constant 0.00401606411 : f32
    %278 = vector.broadcast %cst_134 : f32 to vector<8x1xf32>
    %279 = arith.mulf %277, %278 : vector<8x1xf32>
    %280 = vector.broadcast %279 : vector<8x1xf32> to vector<8x256xf32>
    %281 = arith.subf %271, %280 : vector<8x256xf32>
    %282 = vector.broadcast %4 : vector<1x256xf32> to vector<8x256xf32>
    %283 = arith.mulf %281, %282 : vector<8x256xf32>
    %284 = arith.mulf %283, %283 : vector<8x256xf32>
    %cst_135 = arith.constant dense<0.000000e+00> : vector<8xf32>
    %285 = vector.multi_reduction <add>, %284, %cst_135 [1] : vector<8x256xf32> to vector<8xf32>
    %286 = vector.shape_cast %285 : vector<8xf32> to vector<8x1xf32>
    %cst_136 = arith.constant 0.00401606411 : f32
    %287 = vector.broadcast %cst_136 : f32 to vector<8x1xf32>
    %288 = arith.mulf %286, %287 : vector<8x1xf32>
    %cst_137 = arith.constant 9.99999974E-6 : f32
    %289 = vector.broadcast %cst_137 : f32 to vector<8x1xf32>
    %290 = arith.addf %288, %289 : vector<8x1xf32>
    %291 = math.rsqrt %290 : vector<8x1xf32>
    %292 = vector.broadcast %291 : vector<8x1xf32> to vector<8x256xf32>
    %293 = arith.mulf %283, %292 : vector<8x256xf32>
    %294 = vector.broadcast %273 : vector<1x256xf32> to vector<8x256xf32>
    %295 = arith.mulf %293, %294 : vector<8x256xf32>
    %296 = vector.broadcast %275 : vector<1x256xf32> to vector<8x256xf32>
    %297 = arith.addf %295, %296 : vector<8x256xf32>
    %298 = arith.truncf %297 : vector<8x256xf32> to vector<8x256xbf16>
    %c1_138 = arith.constant 1 : index
    %c0_139 = arith.constant 0 : index
    %c0_140 = arith.constant 0 : index
    %299 = vector.load %arg20[%c1_138, %c0_139, %c0_140] : memref<2x256x768xbf16, #tpu.memory_space<vmem>>, vector<1x256x768xbf16>
    %300 = vector.shape_cast %299 : vector<1x256x768xbf16> to vector<256x768xbf16>
    %cst_141 = arith.constant dense<0.000000e+00> : vector<8x768xf32>
    %301 = tpu.matmul %298, %300, %cst_141 {dimension_numbers = #tpu.dot_dimension_numbers<[1], [0], [0], [1], [0, 0, 1, 1], [], []>} : vector<8x256xbf16>, vector<256x768xbf16>, vector<8x768xf32> -> vector<8x768xf32>
    %c1_142 = arith.constant 1 : index
    %c0_143 = arith.constant 0 : index
    %c0_144 = arith.constant 0 : index
    %302 = vector.load %arg21[%c1_142, %c0_143, %c0_144] : memref<2x1x768xf32, #tpu.memory_space<vmem>>, vector<1x1x768xf32>
    %303 = vector.shape_cast %302 : vector<1x1x768xf32> to vector<1x768xf32>
    %304 = vector.broadcast %303 : vector<1x768xf32> to vector<8x768xf32>
    %305 = arith.addf %301, %304 : vector<8x768xf32>
    %306 = vector.shape_cast %305 : vector<8x768xf32> to vector<1x8x768xf32>
    %307 = vector.extract_strided_slice %306 {offsets = [0, 0, 0], sizes = [1, 8, 64], strides = [1, 1, 1]} : vector<1x8x768xf32> to vector<1x8x64xf32>
    %cst_145 = arith.constant 0.127000123 : f32
    %308 = vector.broadcast %cst_145 : f32 to vector<1x8x64xf32>
    %309 = arith.mulf %307, %308 : vector<1x8x64xf32>
    %310 = vector.extract_strided_slice %306 {offsets = [0, 0, 256], sizes = [1, 8, 64], strides = [1, 1, 1]} : vector<1x8x768xf32> to vector<1x8x64xf32>
    %311 = vector.extract_strided_slice %306 {offsets = [0, 0, 512], sizes = [1, 8, 64], strides = [1, 1, 1]} : vector<1x8x768xf32> to vector<1x8x64xf32>
    "tpu.trace_start"() <{level = 10 : i32, message = "bqd,bkd->bqk"}> : () -> ()
    %cst_146 = arith.constant dense<0.000000e+00> : vector<1x8x8xf32>
    %312 = tpu.matmul %309, %310, %cst_146 {dimension_numbers = #tpu.dot_dimension_numbers<[2], [2], [1], [1], [0, 0, 0, 1, 1, 1], [0], [0]>} : vector<1x8x64xf32>, vector<1x8x64xf32>, vector<1x8x8xf32> -> vector<1x8x8xf32>
    "tpu.trace_stop"() : () -> ()
    %313 = arith.mulf %312, %102 : vector<1x8x8xf32>
    %cst_147 = arith.constant dense<0xFF800000> : vector<1x8xf32>
    %314 = vector.multi_reduction <maximumf>, %313, %cst_147 [2] : vector<1x8x8xf32> to vector<1x8xf32>
    %315 = vector.shape_cast %314 : vector<1x8xf32> to vector<1x8x1xf32>
    %316 = vector.broadcast %315 : vector<1x8x1xf32> to vector<1x8x8xf32>
    %317 = arith.subf %313, %316 : vector<1x8x8xf32>
    %318 = math.exp %317 : vector<1x8x8xf32>
    %cst_148 = arith.constant dense<0.000000e+00> : vector<1x8xf32>
    %319 = vector.multi_reduction <add>, %318, %cst_148 [2] : vector<1x8x8xf32> to vector<1x8xf32>
    %320 = vector.shape_cast %319 : vector<1x8xf32> to vector<1x8x1xf32>
    %321 = tpu.reciprocal %320 {approx = true} : vector<1x8x1xf32> -> vector<1x8x1xf32>
    %322 = vector.broadcast %321 : vector<1x8x1xf32> to vector<1x8x8xf32>
    %323 = arith.mulf %318, %322 : vector<1x8x8xf32>
    "tpu.trace_start"() <{level = 10 : i32, message = "bqk,bkd->bqd"}> : () -> ()
    %cst_149 = arith.constant dense<0.000000e+00> : vector<1x8x64xf32>
    %324 = tpu.matmul %323, %311, %cst_149 {dimension_numbers = #tpu.dot_dimension_numbers<[2], [1], [1], [2], [0, 0, 0, 1, 1, 2], [0], [0]>} : vector<1x8x8xf32>, vector<1x8x64xf32>, vector<1x8x64xf32> -> vector<1x8x64xf32>
    "tpu.trace_stop"() : () -> ()
    %325 = vector.extract_strided_slice %306 {offsets = [0, 0, 64], sizes = [1, 8, 64], strides = [1, 1, 1]} : vector<1x8x768xf32> to vector<1x8x64xf32>
    %cst_150 = arith.constant 0.127000123 : f32
    %326 = vector.broadcast %cst_150 : f32 to vector<1x8x64xf32>
    %327 = arith.mulf %325, %326 : vector<1x8x64xf32>
    %328 = vector.extract_strided_slice %306 {offsets = [0, 0, 320], sizes = [1, 8, 64], strides = [1, 1, 1]} : vector<1x8x768xf32> to vector<1x8x64xf32>
    %329 = vector.extract_strided_slice %306 {offsets = [0, 0, 576], sizes = [1, 8, 64], strides = [1, 1, 1]} : vector<1x8x768xf32> to vector<1x8x64xf32>
    "tpu.trace_start"() <{level = 10 : i32, message = "bqd,bkd->bqk"}> : () -> ()
    %cst_151 = arith.constant dense<0.000000e+00> : vector<1x8x8xf32>
    %330 = tpu.matmul %327, %328, %cst_151 {dimension_numbers = #tpu.dot_dimension_numbers<[2], [2], [1], [1], [0, 0, 0, 1, 1, 1], [0], [0]>} : vector<1x8x64xf32>, vector<1x8x64xf32>, vector<1x8x8xf32> -> vector<1x8x8xf32>
    "tpu.trace_stop"() : () -> ()
    %331 = arith.mulf %330, %102 : vector<1x8x8xf32>
    %cst_152 = arith.constant dense<0xFF800000> : vector<1x8xf32>
    %332 = vector.multi_reduction <maximumf>, %331, %cst_152 [2] : vector<1x8x8xf32> to vector<1x8xf32>
    %333 = vector.shape_cast %332 : vector<1x8xf32> to vector<1x8x1xf32>
    %334 = vector.broadcast %333 : vector<1x8x1xf32> to vector<1x8x8xf32>
    %335 = arith.subf %331, %334 : vector<1x8x8xf32>
    %336 = math.exp %335 : vector<1x8x8xf32>
    %cst_153 = arith.constant dense<0.000000e+00> : vector<1x8xf32>
    %337 = vector.multi_reduction <add>, %336, %cst_153 [2] : vector<1x8x8xf32> to vector<1x8xf32>
    %338 = vector.shape_cast %337 : vector<1x8xf32> to vector<1x8x1xf32>
    %339 = tpu.reciprocal %338 {approx = true} : vector<1x8x1xf32> -> vector<1x8x1xf32>
    %340 = vector.broadcast %339 : vector<1x8x1xf32> to vector<1x8x8xf32>
    %341 = arith.mulf %336, %340 : vector<1x8x8xf32>
    "tpu.trace_start"() <{level = 10 : i32, message = "bqk,bkd->bqd"}> : () -> ()
    %cst_154 = arith.constant dense<0.000000e+00> : vector<1x8x64xf32>
    %342 = tpu.matmul %341, %329, %cst_154 {dimension_numbers = #tpu.dot_dimension_numbers<[2], [1], [1], [2], [0, 0, 0, 1, 1, 2], [0], [0]>} : vector<1x8x8xf32>, vector<1x8x64xf32>, vector<1x8x64xf32> -> vector<1x8x64xf32>
    "tpu.trace_stop"() : () -> ()
    %343 = vector.extract_strided_slice %306 {offsets = [0, 0, 128], sizes = [1, 8, 64], strides = [1, 1, 1]} : vector<1x8x768xf32> to vector<1x8x64xf32>
    %cst_155 = arith.constant 0.127000123 : f32
    %344 = vector.broadcast %cst_155 : f32 to vector<1x8x64xf32>
    %345 = arith.mulf %343, %344 : vector<1x8x64xf32>
    %346 = vector.extract_strided_slice %306 {offsets = [0, 0, 384], sizes = [1, 8, 64], strides = [1, 1, 1]} : vector<1x8x768xf32> to vector<1x8x64xf32>
    %347 = vector.extract_strided_slice %306 {offsets = [0, 0, 640], sizes = [1, 8, 64], strides = [1, 1, 1]} : vector<1x8x768xf32> to vector<1x8x64xf32>
    "tpu.trace_start"() <{level = 10 : i32, message = "bqd,bkd->bqk"}> : () -> ()
    %cst_156 = arith.constant dense<0.000000e+00> : vector<1x8x8xf32>
    %348 = tpu.matmul %345, %346, %cst_156 {dimension_numbers = #tpu.dot_dimension_numbers<[2], [2], [1], [1], [0, 0, 0, 1, 1, 1], [0], [0]>} : vector<1x8x64xf32>, vector<1x8x64xf32>, vector<1x8x8xf32> -> vector<1x8x8xf32>
    "tpu.trace_stop"() : () -> ()
    %349 = arith.mulf %348, %102 : vector<1x8x8xf32>
    %cst_157 = arith.constant dense<0xFF800000> : vector<1x8xf32>
    %350 = vector.multi_reduction <maximumf>, %349, %cst_157 [2] : vector<1x8x8xf32> to vector<1x8xf32>
    %351 = vector.shape_cast %350 : vector<1x8xf32> to vector<1x8x1xf32>
    %352 = vector.broadcast %351 : vector<1x8x1xf32> to vector<1x8x8xf32>
    %353 = arith.subf %349, %352 : vector<1x8x8xf32>
    %354 = math.exp %353 : vector<1x8x8xf32>
    %cst_158 = arith.constant dense<0.000000e+00> : vector<1x8xf32>
    %355 = vector.multi_reduction <add>, %354, %cst_158 [2] : vector<1x8x8xf32> to vector<1x8xf32>
    %356 = vector.shape_cast %355 : vector<1x8xf32> to vector<1x8x1xf32>
    %357 = tpu.reciprocal %356 {approx = true} : vector<1x8x1xf32> -> vector<1x8x1xf32>
    %358 = vector.broadcast %357 : vector<1x8x1xf32> to vector<1x8x8xf32>
    %359 = arith.mulf %354, %358 : vector<1x8x8xf32>
    "tpu.trace_start"() <{level = 10 : i32, message = "bqk,bkd->bqd"}> : () -> ()
    %cst_159 = arith.constant dense<0.000000e+00> : vector<1x8x64xf32>
    %360 = tpu.matmul %359, %347, %cst_159 {dimension_numbers = #tpu.dot_dimension_numbers<[2], [1], [1], [2], [0, 0, 0, 1, 1, 2], [0], [0]>} : vector<1x8x8xf32>, vector<1x8x64xf32>, vector<1x8x64xf32> -> vector<1x8x64xf32>
    "tpu.trace_stop"() : () -> ()
    %361 = vector.extract_strided_slice %306 {offsets = [0, 0, 192], sizes = [1, 8, 64], strides = [1, 1, 1]} : vector<1x8x768xf32> to vector<1x8x64xf32>
    %cst_160 = arith.constant 0.127000123 : f32
    %362 = vector.broadcast %cst_160 : f32 to vector<1x8x64xf32>
    %363 = arith.mulf %361, %362 : vector<1x8x64xf32>
    %364 = vector.extract_strided_slice %306 {offsets = [0, 0, 448], sizes = [1, 8, 64], strides = [1, 1, 1]} : vector<1x8x768xf32> to vector<1x8x64xf32>
    %365 = vector.extract_strided_slice %306 {offsets = [0, 0, 704], sizes = [1, 8, 64], strides = [1, 1, 1]} : vector<1x8x768xf32> to vector<1x8x64xf32>
    "tpu.trace_start"() <{level = 10 : i32, message = "bqd,bkd->bqk"}> : () -> ()
    %cst_161 = arith.constant dense<0.000000e+00> : vector<1x8x8xf32>
    %366 = tpu.matmul %363, %364, %cst_161 {dimension_numbers = #tpu.dot_dimension_numbers<[2], [2], [1], [1], [0, 0, 0, 1, 1, 1], [0], [0]>} : vector<1x8x64xf32>, vector<1x8x64xf32>, vector<1x8x8xf32> -> vector<1x8x8xf32>
    "tpu.trace_stop"() : () -> ()
    %367 = arith.mulf %366, %102 : vector<1x8x8xf32>
    %cst_162 = arith.constant dense<0xFF800000> : vector<1x8xf32>
    %368 = vector.multi_reduction <maximumf>, %367, %cst_162 [2] : vector<1x8x8xf32> to vector<1x8xf32>
    %369 = vector.shape_cast %368 : vector<1x8xf32> to vector<1x8x1xf32>
    %370 = vector.broadcast %369 : vector<1x8x1xf32> to vector<1x8x8xf32>
    %371 = arith.subf %367, %370 : vector<1x8x8xf32>
    %372 = math.exp %371 : vector<1x8x8xf32>
    %cst_163 = arith.constant dense<0.000000e+00> : vector<1x8xf32>
    %373 = vector.multi_reduction <add>, %372, %cst_163 [2] : vector<1x8x8xf32> to vector<1x8xf32>
    %374 = vector.shape_cast %373 : vector<1x8xf32> to vector<1x8x1xf32>
    %375 = tpu.reciprocal %374 {approx = true} : vector<1x8x1xf32> -> vector<1x8x1xf32>
    %376 = vector.broadcast %375 : vector<1x8x1xf32> to vector<1x8x8xf32>
    %377 = arith.mulf %372, %376 : vector<1x8x8xf32>
    "tpu.trace_start"() <{level = 10 : i32, message = "bqk,bkd->bqd"}> : () -> ()
    %cst_164 = arith.constant dense<0.000000e+00> : vector<1x8x64xf32>
    %378 = tpu.matmul %377, %365, %cst_164 {dimension_numbers = #tpu.dot_dimension_numbers<[2], [1], [1], [2], [0, 0, 0, 1, 1, 2], [0], [0]>} : vector<1x8x8xf32>, vector<1x8x64xf32>, vector<1x8x64xf32> -> vector<1x8x64xf32>
    "tpu.trace_stop"() : () -> ()
    %379 = tpu.concatenate %324, %342, %360, %378 in 2 : vector<1x8x64xf32>, vector<1x8x64xf32>, vector<1x8x64xf32>, vector<1x8x64xf32> -> vector<1x8x256xf32>
    %380 = vector.shape_cast %379 : vector<1x8x256xf32> to vector<8x256xf32>
    %381 = arith.truncf %380 : vector<8x256xf32> to vector<8x256xbf16>
    %c1_165 = arith.constant 1 : index
    %c0_166 = arith.constant 0 : index
    %c0_167 = arith.constant 0 : index
    %382 = vector.load %arg22[%c1_165, %c0_166, %c0_167] : memref<2x256x256xbf16, #tpu.memory_space<vmem>>, vector<1x256x256xbf16>
    %383 = vector.shape_cast %382 : vector<1x256x256xbf16> to vector<256x256xbf16>
    %cst_168 = arith.constant dense<0.000000e+00> : vector<8x256xf32>
    %384 = tpu.matmul %381, %383, %cst_168 {dimension_numbers = #tpu.dot_dimension_numbers<[1], [0], [0], [1], [0, 0, 1, 1], [], []>} : vector<8x256xbf16>, vector<256x256xbf16>, vector<8x256xf32> -> vector<8x256xf32>
    %385 = arith.addf %271, %384 : vector<8x256xf32>
    %c1_169 = arith.constant 1 : index
    %c0_170 = arith.constant 0 : index
    %c0_171 = arith.constant 0 : index
    %386 = vector.load %arg23[%c1_169, %c0_170, %c0_171] : memref<2x1x256xf32, #tpu.memory_space<vmem>>, vector<1x1x256xf32>
    %387 = vector.shape_cast %386 : vector<1x1x256xf32> to vector<1x256xf32>
    %388 = vector.broadcast %387 : vector<1x256xf32> to vector<8x256xf32>
    %389 = arith.addf %385, %388 : vector<8x256xf32>
    %c1_172 = arith.constant 1 : index
    %c0_173 = arith.constant 0 : index
    %c0_174 = arith.constant 0 : index
    %390 = vector.load %arg24[%c1_172, %c0_173, %c0_174] : memref<2x1x256xf32, #tpu.memory_space<vmem>>, vector<1x1x256xf32>
    %391 = vector.shape_cast %390 : vector<1x1x256xf32> to vector<1x256xf32>
    %c1_175 = arith.constant 1 : index
    %c0_176 = arith.constant 0 : index
    %c0_177 = arith.constant 0 : index
    %392 = vector.load %arg25[%c1_175, %c0_176, %c0_177] : memref<2x1x256xf32, #tpu.memory_space<vmem>>, vector<1x1x256xf32>
    %393 = vector.shape_cast %392 : vector<1x1x256xf32> to vector<1x256xf32>
    %cst_178 = arith.constant dense<0.000000e+00> : vector<8xf32>
    %394 = vector.multi_reduction <add>, %389, %cst_178 [1] : vector<8x256xf32> to vector<8xf32>
    %395 = vector.shape_cast %394 : vector<8xf32> to vector<8x1xf32>
    %cst_179 = arith.constant 0.00401606411 : f32
    %396 = vector.broadcast %cst_179 : f32 to vector<8x1xf32>
    %397 = arith.mulf %395, %396 : vector<8x1xf32>
    %398 = vector.broadcast %397 : vector<8x1xf32> to vector<8x256xf32>
    %399 = arith.subf %389, %398 : vector<8x256xf32>
    %400 = vector.broadcast %4 : vector<1x256xf32> to vector<8x256xf32>
    %401 = arith.mulf %399, %400 : vector<8x256xf32>
    %402 = arith.mulf %401, %401 : vector<8x256xf32>
    %cst_180 = arith.constant dense<0.000000e+00> : vector<8xf32>
    %403 = vector.multi_reduction <add>, %402, %cst_180 [1] : vector<8x256xf32> to vector<8xf32>
    %404 = vector.shape_cast %403 : vector<8xf32> to vector<8x1xf32>
    %cst_181 = arith.constant 0.00401606411 : f32
    %405 = vector.broadcast %cst_181 : f32 to vector<8x1xf32>
    %406 = arith.mulf %404, %405 : vector<8x1xf32>
    %cst_182 = arith.constant 9.99999974E-6 : f32
    %407 = vector.broadcast %cst_182 : f32 to vector<8x1xf32>
    %408 = arith.addf %406, %407 : vector<8x1xf32>
    %409 = math.rsqrt %408 : vector<8x1xf32>
    %410 = vector.broadcast %409 : vector<8x1xf32> to vector<8x256xf32>
    %411 = arith.mulf %401, %410 : vector<8x256xf32>
    %412 = vector.broadcast %391 : vector<1x256xf32> to vector<8x256xf32>
    %413 = arith.mulf %411, %412 : vector<8x256xf32>
    %414 = vector.broadcast %393 : vector<1x256xf32> to vector<8x256xf32>
    %415 = arith.addf %413, %414 : vector<8x256xf32>
    %416 = arith.truncf %415 : vector<8x256xf32> to vector<8x256xbf16>
    %c1_183 = arith.constant 1 : index
    %c0_184 = arith.constant 0 : index
    %c0_185 = arith.constant 0 : index
    %417 = vector.load %arg26[%c1_183, %c0_184, %c0_185] : memref<2x256x128xbf16, #tpu.memory_space<vmem>>, vector<1x256x128xbf16>
    %418 = vector.shape_cast %417 : vector<1x256x128xbf16> to vector<256x128xbf16>
    %cst_186 = arith.constant dense<0.000000e+00> : vector<8x128xf32>
    %419 = tpu.matmul %416, %418, %cst_186 {dimension_numbers = #tpu.dot_dimension_numbers<[1], [0], [0], [1], [0, 0, 1, 1], [], []>} : vector<8x256xbf16>, vector<256x128xbf16>, vector<8x128xf32> -> vector<8x128xf32>
    %c1_187 = arith.constant 1 : index
    %c0_188 = arith.constant 0 : index
    %c0_189 = arith.constant 0 : index
    %420 = vector.load %arg27[%c1_187, %c0_188, %c0_189] : memref<2x1x128xf32, #tpu.memory_space<vmem>>, vector<1x1x128xf32>
    %421 = vector.shape_cast %420 : vector<1x1x128xf32> to vector<1x128xf32>
    %422 = vector.broadcast %421 : vector<1x128xf32> to vector<8x128xf32>
    %423 = arith.addf %419, %422 : vector<8x128xf32>
    %cst_190 = arith.constant 5.000000e-01 : f32
    %424 = vector.broadcast %cst_190 : f32 to vector<8x128xf32>
    %425 = arith.mulf %424, %423 : vector<8x128xf32>
    %cst_191 = arith.constant 0.707106769 : f32
    %426 = vector.broadcast %cst_191 : f32 to vector<8x128xf32>
    %427 = arith.mulf %423, %426 : vector<8x128xf32>
    %428 = math.erf %427 : vector<8x128xf32>
    %cst_192 = arith.constant 1.000000e+00 : f32
    %429 = vector.broadcast %cst_192 : f32 to vector<8x128xf32>
    %430 = arith.addf %429, %428 : vector<8x128xf32>
    %431 = arith.mulf %425, %430 : vector<8x128xf32>
    %432 = arith.truncf %431 : vector<8x128xf32> to vector<8x128xbf16>
    %c1_193 = arith.constant 1 : index
    %c0_194 = arith.constant 0 : index
    %c0_195 = arith.constant 0 : index
    %433 = vector.load %arg28[%c1_193, %c0_194, %c0_195] : memref<2x128x256xbf16, #tpu.memory_space<vmem>>, vector<1x128x256xbf16>
    %434 = vector.shape_cast %433 : vector<1x128x256xbf16> to vector<128x256xbf16>
    %cst_196 = arith.constant dense<0.000000e+00> : vector<8x256xf32>
    %435 = tpu.matmul %432, %434, %cst_196 {dimension_numbers = #tpu.dot_dimension_numbers<[1], [0], [0], [1], [0, 0, 1, 1], [], []>} : vector<8x128xbf16>, vector<128x256xbf16>, vector<8x256xf32> -> vector<8x256xf32>
    %436 = arith.addf %389, %435 : vector<8x256xf32>
    %c1_197 = arith.constant 1 : index
    %c0_198 = arith.constant 0 : index
    %c0_199 = arith.constant 0 : index
    %437 = vector.load %arg29[%c1_197, %c0_198, %c0_199] : memref<2x1x256xf32, #tpu.memory_space<vmem>>, vector<1x1x256xf32>
    %438 = vector.shape_cast %437 : vector<1x1x256xf32> to vector<1x256xf32>
    %439 = vector.broadcast %438 : vector<1x256xf32> to vector<8x256xf32>
    %440 = arith.addf %436, %439 : vector<8x256xf32>
    %441 = vector.shape_cast %440 : vector<8x256xf32> to vector<1x8x256xf32>
    %442 = vector.extract_strided_slice %441 {offsets = [0, 0, 0], sizes = [1, 1, 256], strides = [1, 1, 1]} : vector<1x8x256xf32> to vector<1x1x256xf32>
    %443 = vector.shape_cast %442 : vector<1x1x256xf32> to vector<1x256xf32>
    %c0_200 = arith.constant 0 : index
    %c0_201 = arith.constant 0 : index
    %444 = vector.load %arg30[%c0_200, %c0_201] : memref<1x256xf32, #tpu.memory_space<vmem>>, vector<1x256xf32>
    %c0_202 = arith.constant 0 : index
    %c0_203 = arith.constant 0 : index
    %445 = vector.load %arg31[%c0_202, %c0_203] : memref<1x256xf32, #tpu.memory_space<vmem>>, vector<1x256xf32>
    %cst_204 = arith.constant dense<0.000000e+00> : vector<1xf32>
    %446 = vector.multi_reduction <add>, %443, %cst_204 [1] : vector<1x256xf32> to vector<1xf32>
    %447 = vector.shape_cast %446 : vector<1xf32> to vector<1x1xf32>
    %cst_205 = arith.constant 0.00401606411 : f32
    %448 = vector.broadcast %cst_205 : f32 to vector<1x1xf32>
    %449 = arith.mulf %447, %448 : vector<1x1xf32>
    %450 = vector.broadcast %449 : vector<1x1xf32> to vector<1x256xf32>
    %451 = arith.subf %443, %450 : vector<1x256xf32>
    %452 = arith.mulf %451, %4 : vector<1x256xf32>
    %453 = arith.mulf %452, %452 : vector<1x256xf32>
    %cst_206 = arith.constant dense<0.000000e+00> : vector<1xf32>
    %454 = vector.multi_reduction <add>, %453, %cst_206 [1] : vector<1x256xf32> to vector<1xf32>
    %455 = vector.shape_cast %454 : vector<1xf32> to vector<1x1xf32>
    %cst_207 = arith.constant 0.00401606411 : f32
    %456 = vector.broadcast %cst_207 : f32 to vector<1x1xf32>
    %457 = arith.mulf %455, %456 : vector<1x1xf32>
    %cst_208 = arith.constant 9.99999974E-6 : f32
    %458 = vector.broadcast %cst_208 : f32 to vector<1x1xf32>
    %459 = arith.addf %457, %458 : vector<1x1xf32>
    %460 = math.rsqrt %459 : vector<1x1xf32>
    %461 = vector.broadcast %460 : vector<1x1xf32> to vector<1x256xf32>
    %462 = arith.mulf %452, %461 : vector<1x256xf32>
    %463 = arith.mulf %462, %444 : vector<1x256xf32>
    %464 = arith.addf %463, %445 : vector<1x256xf32>
    %465 = vector.extract_strided_slice %9 {offsets = [0, 8, 0], sizes = [1, 1, 256], strides = [1, 1, 1]} : vector<1x10x256xf32> to vector<1x1x256xf32>
    %466 = vector.shape_cast %465 : vector<1x1x256xf32> to vector<1x256xf32>
    %467 = arith.addf %464, %466 : vector<1x256xf32>
    %468 = arith.truncf %467 : vector<1x256xf32> to vector<1x256xbf16>
    %c0_209 = arith.constant 0 : index
    %c0_210 = arith.constant 0 : index
    %469 = vector.load %arg32[%c0_209, %c0_210] : memref<256x256xbf16, #tpu.memory_space<vmem>>, vector<256x256xbf16>
    %cst_211 = arith.constant dense<0.000000e+00> : vector<1x256xf32>
    %470 = tpu.matmul %468, %469, %cst_211 {dimension_numbers = #tpu.dot_dimension_numbers<[1], [0], [0], [1], [0, 0, 1, 1], [], []>} : vector<1x256xbf16>, vector<256x256xbf16>, vector<1x256xf32> -> vector<1x256xf32>
    %c0_212 = arith.constant 0 : index
    %c0_213 = arith.constant 0 : index
    %471 = vector.load %arg33[%c0_212, %c0_213] : memref<1x256xf32, #tpu.memory_space<vmem>>, vector<1x256xf32>
    %472 = arith.addf %470, %471 : vector<1x256xf32>
    %473 = math.tanh %472 : vector<1x256xf32>
    %474 = arith.truncf %473 : vector<1x256xf32> to vector<1x256xbf16>
    %c0_214 = arith.constant 0 : index
    %c0_215 = arith.constant 0 : index
    %475 = vector.load %arg34[%c0_214, %c0_215] : memref<256x256xbf16, #tpu.memory_space<vmem>>, vector<256x256xbf16>
    %cst_216 = arith.constant dense<0.000000e+00> : vector<1x256xf32>
    %476 = tpu.matmul %474, %475, %cst_216 {dimension_numbers = #tpu.dot_dimension_numbers<[1], [0], [0], [1], [0, 0, 1, 1], [], []>} : vector<1x256xbf16>, vector<256x256xbf16>, vector<1x256xf32> -> vector<1x256xf32>
    %c0_217 = arith.constant 0 : index
    %c0_218 = arith.constant 0 : index
    %477 = vector.load %arg35[%c0_217, %c0_218] : memref<1x256xf32, #tpu.memory_space<vmem>>, vector<1x256xf32>
    %478 = arith.addf %476, %477 : vector<1x256xf32>
    %479 = math.tanh %478 : vector<1x256xf32>
    %480 = arith.truncf %479 : vector<1x256xf32> to vector<1x256xbf16>
    %c0_219 = arith.constant 0 : index
    %c0_220 = arith.constant 0 : index
    %481 = vector.load %arg36[%c0_219, %c0_220] : memref<256x128xbf16, #tpu.memory_space<vmem>>, vector<256x128xbf16>
    %cst_221 = arith.constant dense<0.000000e+00> : vector<1x128xf32>
    %482 = tpu.matmul %480, %481, %cst_221 {dimension_numbers = #tpu.dot_dimension_numbers<[1], [0], [0], [1], [0, 0, 1, 1], [], []>} : vector<1x256xbf16>, vector<256x128xbf16>, vector<1x128xf32> -> vector<1x128xf32>
    %c0_222 = arith.constant 0 : index
    %c0_223 = arith.constant 0 : index
    %483 = vector.load %arg37[%c0_222, %c0_223] : memref<1x128xf32, #tpu.memory_space<vmem>>, vector<1x128xf32>
    %484 = arith.addf %482, %483 : vector<1x128xf32>
    %485 = vector.extract_strided_slice %9 {offsets = [0, 9, 0], sizes = [1, 1, 128], strides = [1, 1, 1]} : vector<1x10x256xf32> to vector<1x1x128xf32>
    %486 = vector.shape_cast %485 : vector<1x1x128xf32> to vector<1x128xf32>
    %487 = arith.addf %484, %486 : vector<1x128xf32>
    %488 = vector.shape_cast %487 : vector<1x128xf32> to vector<1x1x128xf32>
    %c0_224 = arith.constant 0 : index
    %c0_225 = arith.constant 0 : index
    %c0_226 = arith.constant 0 : index
    %489 = vector.load %arg38[%c0_224, %c0_225, %c0_226] : memref<1x1x128xf32, #tpu.memory_space<vmem>>, vector<1x1x128xf32>
    tpu.vector_store %arg38[%c0_224, %c0_225, %c0_226], %488 {strides = array<i32>} : memref<1x1x128xf32, #tpu.memory_space<vmem>>, vector<1x1x128xf32>,
    return
  }
  func.func @transform_0(%arg0: i32) -> (i32, i32, i32, i32) {
    %c0_i32 = arith.constant 0 : i32
    %c0_i32_0 = arith.constant 0 : i32
    %c0_i32_1 = arith.constant 0 : i32
    %c0_i32_2 = arith.constant 0 : i32
    return %arg0, %c0_i32, %c0_i32_0, %c0_i32_1 : i32, i32, i32, i32
  }
  func.func @transform_1(%arg0: i32) -> (i32, i32, i32) {
    %c0_i32 = arith.constant 0 : i32
    %c0_i32_0 = arith.constant 0 : i32
    %c0_i32_1 = arith.constant 0 : i32
    return %arg0, %c0_i32, %c0_i32_0 : i32, i32, i32
  }
  func.func @transform_2(%arg0: i32) -> (i32, i32, i32) {
    %c0_i32 = arith.constant 0 : i32
    %c0_i32_0 = arith.constant 0 : i32
    %c0_i32_1 = arith.constant 0 : i32
    return %arg0, %c0_i32, %c0_i32_0 : i32, i32, i32
  }
  func.func @transform_3(%arg0: i32) -> (i32, i32, i32) {
    %c0_i32 = arith.constant 0 : i32
    %c0_i32_0 = arith.constant 0 : i32
    %c0_i32_1 = arith.constant 0 : i32
    return %arg0, %c0_i32, %c0_i32_0 : i32, i32, i32
  }
  func.func @transform_4(%arg0: i32) -> (i32, i32, i32) {
    %c0_i32 = arith.constant 0 : i32
    %c0_i32_0 = arith.constant 0 : i32
    %c0_i32_1 = arith.constant 0 : i32
    return %arg0, %c0_i32, %c0_i32_0 : i32, i32, i32
  }
  func.func @transform_5(%arg0: i32) -> (i32, i32) {
    %c0_i32 = arith.constant 0 : i32
    %c0_i32_0 = arith.constant 0 : i32
    %c0_i32_1 = arith.constant 0 : i32
    return %c0_i32, %c0_i32_0 : i32, i32
  }
  func.func @transform_6(%arg0: i32) -> (i32, i32) {
    %c0_i32 = arith.constant 0 : i32
    %c0_i32_0 = arith.constant 0 : i32
    %c0_i32_1 = arith.constant 0 : i32
    return %c0_i32, %c0_i32_0 : i32, i32
  }
  func.func @transform_7(%arg0: i32) -> (i32, i32) {
    %c0_i32 = arith.constant 0 : i32
    %c0_i32_0 = arith.constant 0 : i32
    %c0_i32_1 = arith.constant 0 : i32
    return %c0_i32, %c0_i32_0 : i32, i32
  }
  func.func @transform_8(%arg0: i32) -> (i32, i32) {
    %c0_i32 = arith.constant 0 : i32
    %c0_i32_0 = arith.constant 0 : i32
    %c0_i32_1 = arith.constant 0 : i32
    return %c0_i32, %c0_i32_0 : i32, i32
  }
  func.func @transform_9(%arg0: i32) -> (i32, i32) {
    %c0_i32 = arith.constant 0 : i32
    %c0_i32_0 = arith.constant 0 : i32
    %c0_i32_1 = arith.constant 0 : i32
    return %c0_i32, %c0_i32_0 : i32, i32
  }
  func.func @transform_10(%arg0: i32) -> (i32, i32) {
    %c0_i32 = arith.constant 0 : i32
    %c0_i32_0 = arith.constant 0 : i32
    %c0_i32_1 = arith.constant 0 : i32
    return %c0_i32, %c0_i32_0 : i32, i32
  }
  func.func @transform_11(%arg0: i32) -> (i32, i32) {
    %c0_i32 = arith.constant 0 : i32
    %c0_i32_0 = arith.constant 0 : i32
    %c0_i32_1 = arith.constant 0 : i32
    return %c0_i32, %c0_i32_0 : i32, i32
  }
  func.func @transform_12(%arg0: i32) -> (i32, i32) {
    %c0_i32 = arith.constant 0 : i32
    %c0_i32_0 = arith.constant 0 : i32
    %c0_i32_1 = arith.constant 0 : i32
    return %c0_i32, %c0_i32_0 : i32, i32
  }
  func.func @transform_13(%arg0: i32) -> (i32, i32) {
    %c0_i32 = arith.constant 0 : i32
    %c0_i32_0 = arith.constant 0 : i32
    %c0_i32_1 = arith.constant 0 : i32
    return %c0_i32, %c0_i32_0 : i32, i32
  }
  func.func @transform_14(%arg0: i32) -> (i32, i32) {
    %c0_i32 = arith.constant 0 : i32
    %c0_i32_0 = arith.constant 0 : i32
    %c0_i32_1 = arith.constant 0 : i32
    return %c0_i32, %c0_i32_0 : i32, i32
  }
  func.func @transform_15(%arg0: i32) -> (i32, i32) {
    %c0_i32 = arith.constant 0 : i32
    %c0_i32_0 = arith.constant 0 : i32
    %c0_i32_1 = arith.constant 0 : i32
    return %c0_i32, %c0_i32_0 : i32, i32
  }
  func.func @transform_16(%arg0: i32) -> (i32, i32) {
    %c0_i32 = arith.constant 0 : i32
    %c0_i32_0 = arith.constant 0 : i32
    %c0_i32_1 = arith.constant 0 : i32
    return %c0_i32, %c0_i32_0 : i32, i32
  }
  func.func @transform_17(%arg0: i32) -> (i32, i32, i32) {
    %c0_i32 = arith.constant 0 : i32
    %c0_i32_0 = arith.constant 0 : i32
    %c0_i32_1 = arith.constant 0 : i32
    %c0_i32_2 = arith.constant 0 : i32
    return %c0_i32, %c0_i32_0, %c0_i32_1 : i32, i32, i32
  }
  func.func @transform_18(%arg0: i32) -> (i32, i32, i32) {
    %c0_i32 = arith.constant 0 : i32
    %c0_i32_0 = arith.constant 0 : i32
    %c0_i32_1 = arith.constant 0 : i32
    %c0_i32_2 = arith.constant 0 : i32
    return %c0_i32, %c0_i32_0, %c0_i32_1 : i32, i32, i32
  }
  func.func @transform_19(%arg0: i32) -> (i32, i32, i32) {
    %c0_i32 = arith.constant 0 : i32
    %c0_i32_0 = arith.constant 0 : i32
    %c0_i32_1 = arith.constant 0 : i32
    %c0_i32_2 = arith.constant 0 : i32
    return %c0_i32, %c0_i32_0, %c0_i32_1 : i32, i32, i32
  }
  func.func @transform_20(%arg0: i32) -> (i32, i32, i32) {
    %c0_i32 = arith.constant 0 : i32
    %c0_i32_0 = arith.constant 0 : i32
    %c0_i32_1 = arith.constant 0 : i32
    %c0_i32_2 = arith.constant 0 : i32
    return %c0_i32, %c0_i32_0, %c0_i32_1 : i32, i32, i32
  }
  func.func @transform_21(%arg0: i32) -> (i32, i32, i32) {
    %c0_i32 = arith.constant 0 : i32
    %c0_i32_0 = arith.constant 0 : i32
    %c0_i32_1 = arith.constant 0 : i32
    %c0_i32_2 = arith.constant 0 : i32
    return %c0_i32, %c0_i32_0, %c0_i32_1 : i32, i32, i32
  }
  func.func @transform_22(%arg0: i32) -> (i32, i32, i32) {
    %c0_i32 = arith.constant 0 : i32
    %c0_i32_0 = arith.constant 0 : i32
    %c0_i32_1 = arith.constant 0 : i32
    %c0_i32_2 = arith.constant 0 : i32
    return %c0_i32, %c0_i32_0, %c0_i32_1 : i32, i32, i32
  }
  func.func @transform_23(%arg0: i32) -> (i32, i32, i32) {
    %c0_i32 = arith.constant 0 : i32
    %c0_i32_0 = arith.constant 0 : i32
    %c0_i32_1 = arith.constant 0 : i32
    %c0_i32_2 = arith.constant 0 : i32
    return %c0_i32, %c0_i32_0, %c0_i32_1 : i32, i32, i32
  }
  func.func @transform_24(%arg0: i32) -> (i32, i32, i32) {
    %c0_i32 = arith.constant 0 : i32
    %c0_i32_0 = arith.constant 0 : i32
    %c0_i32_1 = arith.constant 0 : i32
    %c0_i32_2 = arith.constant 0 : i32
    return %c0_i32, %c0_i32_0, %c0_i32_1 : i32, i32, i32
  }
  func.func @transform_25(%arg0: i32) -> (i32, i32, i32) {
    %c0_i32 = arith.constant 0 : i32
    %c0_i32_0 = arith.constant 0 : i32
    %c0_i32_1 = arith.constant 0 : i32
    %c0_i32_2 = arith.constant 0 : i32
    return %c0_i32, %c0_i32_0, %c0_i32_1 : i32, i32, i32
  }
  func.func @transform_26(%arg0: i32) -> (i32, i32, i32) {
    %c0_i32 = arith.constant 0 : i32
    %c0_i32_0 = arith.constant 0 : i32
    %c0_i32_1 = arith.constant 0 : i32
    %c0_i32_2 = arith.constant 0 : i32
    return %c0_i32, %c0_i32_0, %c0_i32_1 : i32, i32, i32
  }
  func.func @transform_27(%arg0: i32) -> (i32, i32, i32) {
    %c0_i32 = arith.constant 0 : i32
    %c0_i32_0 = arith.constant 0 : i32
    %c0_i32_1 = arith.constant 0 : i32
    %c0_i32_2 = arith.constant 0 : i32
    return %c0_i32, %c0_i32_0, %c0_i32_1 : i32, i32, i32
  }
  func.func @transform_28(%arg0: i32) -> (i32, i32, i32) {
    %c0_i32 = arith.constant 0 : i32
    %c0_i32_0 = arith.constant 0 : i32
    %c0_i32_1 = arith.constant 0 : i32
    %c0_i32_2 = arith.constant 0 : i32
    return %c0_i32, %c0_i32_0, %c0_i32_1 : i32, i32, i32
  }
  func.func @transform_29(%arg0: i32) -> (i32, i32) {
    %c0_i32 = arith.constant 0 : i32
    %c0_i32_0 = arith.constant 0 : i32
    %c0_i32_1 = arith.constant 0 : i32
    return %c0_i32, %c0_i32_0 : i32, i32
  }
  func.func @transform_30(%arg0: i32) -> (i32, i32) {
    %c0_i32 = arith.constant 0 : i32
    %c0_i32_0 = arith.constant 0 : i32
    %c0_i32_1 = arith.constant 0 : i32
    return %c0_i32, %c0_i32_0 : i32, i32
  }
  func.func @transform_31(%arg0: i32) -> (i32, i32) {
    %c0_i32 = arith.constant 0 : i32
    %c0_i32_0 = arith.constant 0 : i32
    %c0_i32_1 = arith.constant 0 : i32
    return %c0_i32, %c0_i32_0 : i32, i32
  }
  func.func @transform_32(%arg0: i32) -> (i32, i32) {
    %c0_i32 = arith.constant 0 : i32
    %c0_i32_0 = arith.constant 0 : i32
    %c0_i32_1 = arith.constant 0 : i32
    return %c0_i32, %c0_i32_0 : i32, i32
  }
  func.func @transform_33(%arg0: i32) -> (i32, i32) {
    %c0_i32 = arith.constant 0 : i32
    %c0_i32_0 = arith.constant 0 : i32
    %c0_i32_1 = arith.constant 0 : i32
    return %c0_i32, %c0_i32_0 : i32, i32
  }
  func.func @transform_34(%arg0: i32) -> (i32, i32) {
    %c0_i32 = arith.constant 0 : i32
    %c0_i32_0 = arith.constant 0 : i32
    %c0_i32_1 = arith.constant 0 : i32
    return %c0_i32, %c0_i32_0 : i32, i32
  }
  func.func @transform_35(%arg0: i32) -> (i32, i32) {
    %c0_i32 = arith.constant 0 : i32
    %c0_i32_0 = arith.constant 0 : i32
    %c0_i32_1 = arith.constant 0 : i32
    return %c0_i32, %c0_i32_0 : i32, i32
  }
  func.func @transform_36(%arg0: i32) -> (i32, i32) {
    %c0_i32 = arith.constant 0 : i32
    %c0_i32_0 = arith.constant 0 : i32
    %c0_i32_1 = arith.constant 0 : i32
    return %c0_i32, %c0_i32_0 : i32, i32
  }
  func.func @transform_37(%arg0: i32) -> (i32, i32, i32) {
    %c0_i32 = arith.constant 0 : i32
    %c0_i32_0 = arith.constant 0 : i32
    %c0_i32_1 = arith.constant 0 : i32
    return %arg0, %c0_i32, %c0_i32_0 : i32, i32, i32
  }
}

</mosaic_0001>

<llo_original>
// kernel: custom_model_forward.1
$region0: #{custom_model_forward.1}
  #allocation0 [shape = 'u32[]', space=smem, size = 0x4, offset = 0x4, fixed_abs, tag = 'smem constant byte address 0x4 - core index']
  #allocation1 [shape = 'u32[72,128]{1,0:T(1,128)}', space=vmem, size = 0x9000, scoped, tag = 'internal scratch']
  %s0 = inlined_call_operand.smem [shape: u32[38], index: -1, kind: input, shape index: {}]
  %s1 = sld [smem:[%s0]]
  %s2 = scalar_lea.smem %s0, 1
  %s3 = sld [smem:[%s2]]
  %s4 = scalar_lea.smem %s0, 2
  %s5 = sld [smem:[%s4]]
  %s6 = scalar_lea.smem %s0, 3
  %s7 = sld [smem:[%s6]]
  %s8 = scalar_lea.smem %s0, 4
  %s9 = sld [smem:[%s8]]
  %s10 = scalar_lea.smem %s0, 5
  %s11 = sld [smem:[%s10]]
  %s12 = scalar_lea.smem %s0, 6
  %s13 = sld [smem:[%s12]]
  %s14 = scalar_lea.smem %s0, 7
  %s15 = sld [smem:[%s14]]
  %s16 = scalar_lea.smem %s0, 8
  %s17 = sld [smem:[%s16]]
  %s18 = scalar_lea.smem %s0, 9
  %s19 = sld [smem:[%s18]]
  %s20 = scalar_lea.smem %s0, 10
  %s21 = sld [smem:[%s20]]
  %s22 = scalar_lea.smem %s0, 11
  %s23 = sld [smem:[%s22]]
  %s24 = scalar_lea.smem %s0, 12
  %s25 = sld [smem:[%s24]]
  %s26 = scalar_lea.smem %s0, 13
  %s27 = sld [smem:[%s26]]
  %s28 = scalar_lea.smem %s0, 14
  %s29 = sld [smem:[%s28]]
  %s30 = scalar_lea.smem %s0, 15
  %s31 = sld [smem:[%s30]]
  %s32 = scalar_lea.smem %s0, 16
  %s33 = sld [smem:[%s32]]
  %s34 = scalar_lea.smem %s0, 17
  %s35 = sld [smem:[%s34]]
  %s36 = scalar_lea.smem %s0, 18
  %s37 = sld [smem:[%s36]]
  %s38 = scalar_lea.smem %s0, 19
  %s39 = sld [smem:[%s38]]
  %s40 = scalar_lea.smem %s0, 20
  %s41 = sld [smem:[%s40]]
  %s42 = scalar_lea.smem %s0, 21
  %s43 = sld [smem:[%s42]]
  %s44 = scalar_lea.smem %s0, 22
  %s45 = sld [smem:[%s44]]
  %s46 = scalar_lea.smem %s0, 23
  %s47 = sld [smem:[%s46]]
  %s48 = scalar_lea.smem %s0, 24
  %s49 = sld [smem:[%s48]]
  %s50 = scalar_lea.smem %s0, 25
  %s51 = sld [smem:[%s50]]
  %s52 = scalar_lea.smem %s0, 26
  %s53 = sld [smem:[%s52]]
  %s54 = scalar_lea.smem %s0, 27
  %s55 = sld [smem:[%s54]]
  %s56 = scalar_lea.smem %s0, 28
  %s57 = sld [smem:[%s56]]
  %s58 = scalar_lea.smem %s0, 29
  %s59 = sld [smem:[%s58]]
  %s60 = scalar_lea.smem %s0, 30
  %s61 = sld [smem:[%s60]]
  %s62 = scalar_lea.smem %s0, 31
  %s63 = sld [smem:[%s62]]
  %s64 = scalar_lea.smem %s0, 32
  %s65 = sld [smem:[%s64]]
  %s66 = scalar_lea.smem %s0, 33
  %s67 = sld [smem:[%s66]]
  %s68 = scalar_lea.smem %s0, 34
  %s69 = sld [smem:[%s68]]
  %s70 = scalar_lea.smem %s0, 35
  %s71 = sld [smem:[%s70]]
  %s72 = scalar_lea.smem %s0, 36
  %s73 = sld [smem:[%s72]]
  %s74 = scalar_lea.smem %s0, 37
  %s75 = sld [smem:[%s74]]
  %s76 = sld [smem:[#allocation0]]
  $region181: #{custom_model_forward.1} parent=0
    _
  %s78 = ssub.s32 1, %s76
  %s79 = scalar_select 0, %s78, %s76
  $region1: #{custom_model_forward.1} parent=0
    #allocation2 [shape = 'u8[1024]{0}', space=vmem, size = 0x400, scoped, tag = 'output window, operand 0']
    #allocation3 [shape = 's32[2]{0}', space=sflag, size = 0x8, scoped, tag = 'scoped memory for custom_model_forward.1']
    %80 = vsyncpa [#allocation3], 0
    %s81 = scalar_lea.sflag [#allocation3], 1
    %82 = vsyncpa %s81, 0
    loop: start=0, step=1, limit=4
    $region2: #{custom_model_forward.1} parent=1 // loop_pre_header
      _
    $region3: #{custom_model_forward.1} parent=1 // loop_header
      %s84 = sphi 0, %s88
      %p85 = scmp.ge.s32.totalorder %s84, 4
      %s94 = sphi 0, %s96
      %s97 = sphi 0, %s94
      %s98 = sphi 0, %s97
      %s114 = sphi 0, %s98
      %s120 = sphi 0, %s122
      %s123 = sphi 0, %s120
      %s124 = sphi 0, %s123
      %s140 = sphi 0, %s124
      %s146 = sphi 0, %s148
      %s149 = sphi 0, %s146
      %s150 = sphi 0, %s149
      %s166 = sphi 0, %s150
      %s172 = sphi 0, %s174
      %s175 = sphi 0, %s172
      %s176 = sphi 0, %s175
      %s192 = sphi 0, %s176
      %s198 = sphi 0, %s200
      %s201 = sphi 0, %s198
      %s202 = sphi 0, %s201
      %s218 = sphi 0, %s202
      %s222 = sphi 0, %s222
      %s224 = sphi 0, %s222
      %s225 = sphi 0, %s224
      %s239 = sphi 0, %s225
      %s243 = sphi 0, %s243
      %s245 = sphi 0, %s243
      %s246 = sphi 0, %s245
      %s260 = sphi 0, %s246
      %s264 = sphi 0, %s264
      %s266 = sphi 0, %s264
      %s267 = sphi 0, %s266
      %s281 = sphi 0, %s267
      %s285 = sphi 0, %s285
      %s287 = sphi 0, %s285
      %s288 = sphi 0, %s287
      %s302 = sphi 0, %s288
      %s306 = sphi 0, %s306
      %s308 = sphi 0, %s306
      %s309 = sphi 0, %s308
      %s323 = sphi 0, %s309
      %s327 = sphi 0, %s327
      %s329 = sphi 0, %s327
      %s330 = sphi 0, %s329
      %s344 = sphi 0, %s330
      %s348 = sphi 0, %s348
      %s350 = sphi 0, %s348
      %s351 = sphi 0, %s350
      %s365 = sphi 0, %s351
      %s369 = sphi 0, %s369
      %s371 = sphi 0, %s369
      %s372 = sphi 0, %s371
      %s386 = sphi 0, %s372
      %s390 = sphi 0, %s390
      %s392 = sphi 0, %s390
      %s393 = sphi 0, %s392
      %s407 = sphi 0, %s393
      %s411 = sphi 0, %s411
      %s413 = sphi 0, %s411
      %s414 = sphi 0, %s413
      %s428 = sphi 0, %s414
      %s432 = sphi 0, %s432
      %s434 = sphi 0, %s432
      %s435 = sphi 0, %s434
      %s449 = sphi 0, %s435
      %s453 = sphi 0, %s453
      %s455 = sphi 0, %s453
      %s456 = sphi 0, %s455
      %s470 = sphi 0, %s456
      %s474 = sphi 0, %s474
      %s476 = sphi 0, %s474
      %s477 = sphi 0, %s476
      %s491 = sphi 0, %s477
      %s495 = sphi 0, %s495
      %s497 = sphi 0, %s495
      %s498 = sphi 0, %s497
      %s512 = sphi 0, %s498
      %s516 = sphi 0, %s516
      %s518 = sphi 0, %s516
      %s519 = sphi 0, %s518
      %s533 = sphi 0, %s519
      %s537 = sphi 0, %s537
      %s539 = sphi 0, %s537
      %s540 = sphi 0, %s539
      %s554 = sphi 0, %s540
      %s558 = sphi 0, %s558
      %s560 = sphi 0, %s558
      %s561 = sphi 0, %s560
      %s575 = sphi 0, %s561
      %s579 = sphi 0, %s579
      %s581 = sphi 0, %s579
      %s582 = sphi 0, %s581
      %s596 = sphi 0, %s582
      %s600 = sphi 0, %s600
      %s602 = sphi 0, %s600
      %s603 = sphi 0, %s602
      %s617 = sphi 0, %s603
      %s621 = sphi 0, %s621
      %s623 = sphi 0, %s621
      %s624 = sphi 0, %s623
      %s638 = sphi 0, %s624
      %s642 = sphi 0, %s642
      %s644 = sphi 0, %s642
      %s645 = sphi 0, %s644
      %s659 = sphi 0, %s645
      %s663 = sphi 0, %s663
      %s665 = sphi 0, %s663
      %s666 = sphi 0, %s665
      %s680 = sphi 0, %s666
      %s684 = sphi 0, %s684
      %s686 = sphi 0, %s684
      %s687 = sphi 0, %s686
      %s701 = sphi 0, %s687
      %s705 = sphi 0, %s705
      %s707 = sphi 0, %s705
      %s708 = sphi 0, %s707
      %s722 = sphi 0, %s708
      %s726 = sphi 0, %s726
      %s728 = sphi 0, %s726
      %s729 = sphi 0, %s728
      %s743 = sphi 0, %s729
      %s747 = sphi 0, %s747
      %s749 = sphi 0, %s747
      %s750 = sphi 0, %s749
      %s764 = sphi 0, %s750
      %s768 = sphi 0, %s768
      %s770 = sphi 0, %s768
      %s771 = sphi 0, %s770
      %s785 = sphi 0, %s771
      %s789 = sphi 0, %s789
      %s791 = sphi 0, %s789
      %s792 = sphi 0, %s791
      %s806 = sphi 0, %s792
      %s810 = sphi 0, %s810
      %s812 = sphi 0, %s810
      %s813 = sphi 0, %s812
      %s827 = sphi 0, %s813
      %s831 = sphi 0, %s831
      %s833 = sphi 0, %s831
      %s834 = sphi 0, %s833
      %s848 = sphi 0, %s834
      %s852 = sphi 0, %s852
      %s854 = sphi 0, %s852
      %s855 = sphi 0, %s854
      %s869 = sphi 0, %s855
      %s873 = sphi 0, %s873
      %s875 = sphi 0, %s873
      %s876 = sphi 0, %s875
      %s890 = sphi 0, %s876
      %s896 = sphi 0, %s898
      %s899 = sphi 0, %s896
      %s900 = sphi 0, %s899
      %s916 = sphi 0, %s900
    $region4: #{custom_model_forward.1} parent=1 // loop_header_branch
      %87 = sbr.rel (%p85) target = $region8
    $region5: #{custom_model_forward.1} parent=1 // loop_body
      %s89 = ssub.s32 %s84, 1
      %s90 = ssub.s32 %s84, 2
      %s91 = sadd.s32 %s84, 1
      %s92 = ssub.s32 %s84, %s91
      %p93 = scmp.eq.s32.totalorder %s92, 0
      %s95 = sadd.s32 %s94, 1
      %s96 = scalar_select %p93, %s94, %s95
      %p99 = pneg %p93
      %p100 = scmp.eq.s32.totalorder %s84, 1
      %p101 = por %p99, %p100
      %p102 = scmp.ne.s32.totalorder %s94, %s97
      %p103 = scmp.eq.s32.totalorder %s84, 0
      %p104 = por %p102, %p103
      %p105 = scmp.ne.s32.totalorder %s94, %s97
      %p106 = scmp.eq.s32.totalorder %s89, 1
      %p107 = por %p105, %p106
      %p108 = scmp.ne.s32.totalorder %s97, %s98
      %p109 = scmp.eq.s32.totalorder %s89, 0
      %p110 = por %p108, %p109
      %p111 = scmp.ne.s32.totalorder %s97, %s98
      %p112 = scmp.eq.s32.totalorder %s90, 1
      %p113 = por %p111, %p112
      %p115 = scmp.ne.s32.totalorder %s98, %s114
      %p116 = scmp.eq.s32.totalorder %s90, 0
      %p117 = por %p115, %p116
      %s118 = ssub.s32 %s84, %s91
      %p119 = scmp.eq.s32.totalorder %s118, 0
      %s121 = sadd.s32 %s120, 1
      %s122 = scalar_select %p119, %s120, %s121
      %p125 = pneg %p119
      %p126 = scmp.eq.s32.totalorder %s84, 1
      %p127 = por %p125, %p126
      %p128 = scmp.ne.s32.totalorder %s120, %s123
      %p129 = scmp.eq.s32.totalorder %s84, 0
      %p130 = por %p128, %p129
      %p131 = scmp.ne.s32.totalorder %s120, %s123
      %p132 = scmp.eq.s32.totalorder %s89, 1
      %p133 = por %p131, %p132
      %p134 = scmp.ne.s32.totalorder %s123, %s124
      %p135 = scmp.eq.s32.totalorder %s89, 0
      %p136 = por %p134, %p135
      %p137 = scmp.ne.s32.totalorder %s123, %s124
      %p138 = scmp.eq.s32.totalorder %s90, 1
      %p139 = por %p137, %p138
      %p141 = scmp.ne.s32.totalorder %s124, %s140
      %p142 = scmp.eq.s32.totalorder %s90, 0
      %p143 = por %p141, %p142
      %s144 = ssub.s32 %s84, %s91
      %p145 = scmp.eq.s32.totalorder %s144, 0
      %s147 = sadd.s32 %s146, 1
      %s148 = scalar_select %p145, %s146, %s147
      %p151 = pneg %p145
      %p152 = scmp.eq.s32.totalorder %s84, 1
      %p153 = por %p151, %p152
      %p154 = scmp.ne.s32.totalorder %s146, %s149
      %p155 = scmp.eq.s32.totalorder %s84, 0
      %p156 = por %p154, %p155
      %p157 = scmp.ne.s32.totalorder %s146, %s149
      %p158 = scmp.eq.s32.totalorder %s89, 1
      %p159 = por %p157, %p158
      %p160 = scmp.ne.s32.totalorder %s149, %s150
      %p161 = scmp.eq.s32.totalorder %s89, 0
      %p162 = por %p160, %p161
      %p163 = scmp.ne.s32.totalorder %s149, %s150
      %p164 = scmp.eq.s32.totalorder %s90, 1
      %p165 = por %p163, %p164
      %p167 = scmp.ne.s32.totalorder %s150, %s166
      %p168 = scmp.eq.s32.totalorder %s90, 0
      %p169 = por %p167, %p168
      %s170 = ssub.s32 %s84, %s91
      %p171 = scmp.eq.s32.totalorder %s170, 0
      %s173 = sadd.s32 %s172, 1
      %s174 = scalar_select %p171, %s172, %s173
      %p177 = pneg %p171
      %p178 = scmp.eq.s32.totalorder %s84, 1
      %p179 = por %p177, %p178
      %p180 = scmp.ne.s32.totalorder %s172, %s175
      %p181 = scmp.eq.s32.totalorder %s84, 0
      %p182 = por %p180, %p181
      %p183 = scmp.ne.s32.totalorder %s172, %s175
      %p184 = scmp.eq.s32.totalorder %s89, 1
      %p185 = por %p183, %p184
      %p186 = scmp.ne.s32.totalorder %s175, %s176
      %p187 = scmp.eq.s32.totalorder %s89, 0
      %p188 = por %p186, %p187
      %p189 = scmp.ne.s32.totalorder %s175, %s176
      %p190 = scmp.eq.s32.totalorder %s90, 1
      %p191 = por %p189, %p190
      %p193 = scmp.ne.s32.totalorder %s176, %s192
      %p194 = scmp.eq.s32.totalorder %s90, 0
      %p195 = por %p193, %p194
      %s196 = ssub.s32 %s84, %s91
      %p197 = scmp.eq.s32.totalorder %s196, 0
      %s199 = sadd.s32 %s198, 1
      %s200 = scalar_select %p197, %s198, %s199
      %p203 = pneg %p197
      %p204 = scmp.eq.s32.totalorder %s84, 1
      %p205 = por %p203, %p204
      %p206 = scmp.ne.s32.totalorder %s198, %s201
      %p207 = scmp.eq.s32.totalorder %s84, 0
      %p208 = por %p206, %p207
      %p209 = scmp.ne.s32.totalorder %s198, %s201
      %p210 = scmp.eq.s32.totalorder %s89, 1
      %p211 = por %p209, %p210
      %p212 = scmp.ne.s32.totalorder %s201, %s202
      %p213 = scmp.eq.s32.totalorder %s89, 0
      %p214 = por %p212, %p213
      %p215 = scmp.ne.s32.totalorder %s201, %s202
      %p216 = scmp.eq.s32.totalorder %s90, 1
      %p217 = por %p215, %p216
      %p219 = scmp.ne.s32.totalorder %s202, %s218
      %p220 = scmp.eq.s32.totalorder %s90, 0
      %p221 = por %p219, %p220
      %s223 = sadd.s32 %s222, 1
      %p226 = scmp.eq.s32.totalorder %s84, 1
      %p227 = scmp.ne.s32.totalorder %s222, %s224
      %p228 = scmp.eq.s32.totalorder %s84, 0
      %p229 = por %p227, %p228
      %p230 = scmp.ne.s32.totalorder %s222, %s224
      %p231 = scmp.eq.s32.totalorder %s89, 1
      %p232 = por %p230, %p231
      %p233 = scmp.ne.s32.totalorder %s224, %s225
      %p234 = scmp.eq.s32.totalorder %s89, 0
      %p235 = por %p233, %p234
      %p236 = scmp.ne.s32.totalorder %s224, %s225
      %p237 = scmp.eq.s32.totalorder %s90, 1
      %p238 = por %p236, %p237
      %p240 = scmp.ne.s32.totalorder %s225, %s239
      %p241 = scmp.eq.s32.totalorder %s90, 0
      %p242 = por %p240, %p241
      %s244 = sadd.s32 %s243, 1
      %p247 = scmp.eq.s32.totalorder %s84, 1
      %p248 = scmp.ne.s32.totalorder %s243, %s245
      %p249 = scmp.eq.s32.totalorder %s84, 0
      %p250 = por %p248, %p249
      %p251 = scmp.ne.s32.totalorder %s243, %s245
      %p252 = scmp.eq.s32.totalorder %s89, 1
      %p253 = por %p251, %p252
      %p254 = scmp.ne.s32.totalorder %s245, %s246
      %p255 = scmp.eq.s32.totalorder %s89, 0
      %p256 = por %p254, %p255
      %p257 = scmp.ne.s32.totalorder %s245, %s246
      %p258 = scmp.eq.s32.totalorder %s90, 1
      %p259 = por %p257, %p258
      %p261 = scmp.ne.s32.totalorder %s246, %s260
      %p262 = scmp.eq.s32.totalorder %s90, 0
      %p263 = por %p261, %p262
      %s265 = sadd.s32 %s264, 1
      %p268 = scmp.eq.s32.totalorder %s84, 1
      %p269 = scmp.ne.s32.totalorder %s264, %s266
      %p270 = scmp.eq.s32.totalorder %s84, 0
      %p271 = por %p269, %p270
      %p272 = scmp.ne.s32.totalorder %s264, %s266
      %p273 = scmp.eq.s32.totalorder %s89, 1
      %p274 = por %p272, %p273
      %p275 = scmp.ne.s32.totalorder %s266, %s267
      %p276 = scmp.eq.s32.totalorder %s89, 0
      %p277 = por %p275, %p276
      %p278 = scmp.ne.s32.totalorder %s266, %s267
      %p279 = scmp.eq.s32.totalorder %s90, 1
      %p280 = por %p278, %p279
      %p282 = scmp.ne.s32.totalorder %s267, %s281
      %p283 = scmp.eq.s32.totalorder %s90, 0
      %p284 = por %p282, %p283
      %s286 = sadd.s32 %s285, 1
      %p289 = scmp.eq.s32.totalorder %s84, 1
      %p290 = scmp.ne.s32.totalorder %s285, %s287
      %p291 = scmp.eq.s32.totalorder %s84, 0
      %p292 = por %p290, %p291
      %p293 = scmp.ne.s32.totalorder %s285, %s287
      %p294 = scmp.eq.s32.totalorder %s89, 1
      %p295 = por %p293, %p294
      %p296 = scmp.ne.s32.totalorder %s287, %s288
      %p297 = scmp.eq.s32.totalorder %s89, 0
      %p298 = por %p296, %p297
      %p299 = scmp.ne.s32.totalorder %s287, %s288
      %p300 = scmp.eq.s32.totalorder %s90, 1
      %p301 = por %p299, %p300
      %p303 = scmp.ne.s32.totalorder %s288, %s302
      %p304 = scmp.eq.s32.totalorder %s90, 0
      %p305 = por %p303, %p304
      %s307 = sadd.s32 %s306, 1
      %p310 = scmp.eq.s32.totalorder %s84, 1
      %p311 = scmp.ne.s32.totalorder %s306, %s308
      %p312 = scmp.eq.s32.totalorder %s84, 0
      %p313 = por %p311, %p312
      %p314 = scmp.ne.s32.totalorder %s306, %s308
      %p315 = scmp.eq.s32.totalorder %s89, 1
      %p316 = por %p314, %p315
      %p317 = scmp.ne.s32.totalorder %s308, %s309
      %p318 = scmp.eq.s32.totalorder %s89, 0
      %p319 = por %p317, %p318
      %p320 = scmp.ne.s32.totalorder %s308, %s309
      %p321 = scmp.eq.s32.totalorder %s90, 1
      %p322 = por %p320, %p321
      %p324 = scmp.ne.s32.totalorder %s309, %s323
      %p325 = scmp.eq.s32.totalorder %s90, 0
      %p326 = por %p324, %p325
      %s328 = sadd.s32 %s327, 1
      %p331 = scmp.eq.s32.totalorder %s84, 1
      %p332 = scmp.ne.s32.totalorder %s327, %s329
      %p333 = scmp.eq.s32.totalorder %s84, 0
      %p334 = por %p332, %p333
      %p335 = scmp.ne.s32.totalorder %s327, %s329
      %p336 = scmp.eq.s32.totalorder %s89, 1
      %p337 = por %p335, %p336
      %p338 = scmp.ne.s32.totalorder %s329, %s330
      %p339 = scmp.eq.s32.totalorder %s89, 0
      %p340 = por %p338, %p339
      %p341 = scmp.ne.s32.totalorder %s329, %s330
      %p342 = scmp.eq.s32.totalorder %s90, 1
      %p343 = por %p341, %p342
      %p345 = scmp.ne.s32.totalorder %s330, %s344
      %p346 = scmp.eq.s32.totalorder %s90, 0
      %p347 = por %p345, %p346
      %s349 = sadd.s32 %s348, 1
      %p352 = scmp.eq.s32.totalorder %s84, 1
      %p353 = scmp.ne.s32.totalorder %s348, %s350
      %p354 = scmp.eq.s32.totalorder %s84, 0
      %p355 = por %p353, %p354
      %p356 = scmp.ne.s32.totalorder %s348, %s350
      %p357 = scmp.eq.s32.totalorder %s89, 1
      %p358 = por %p356, %p357
      %p359 = scmp.ne.s32.totalorder %s350, %s351
      %p360 = scmp.eq.s32.totalorder %s89, 0
      %p361 = por %p359, %p360
      %p362 = scmp.ne.s32.totalorder %s350, %s351
      %p363 = scmp.eq.s32.totalorder %s90, 1
      %p364 = por %p362, %p363
      %p366 = scmp.ne.s32.totalorder %s351, %s365
      %p367 = scmp.eq.s32.totalorder %s90, 0
      %p368 = por %p366, %p367
      %s370 = sadd.s32 %s369, 1
      %p373 = scmp.eq.s32.totalorder %s84, 1
      %p374 = scmp.ne.s32.totalorder %s369, %s371
      %p375 = scmp.eq.s32.totalorder %s84, 0
      %p376 = por %p374, %p375
      %p377 = scmp.ne.s32.totalorder %s369, %s371
      %p378 = scmp.eq.s32.totalorder %s89, 1
      %p379 = por %p377, %p378
      %p380 = scmp.ne.s32.totalorder %s371, %s372
      %p381 = scmp.eq.s32.totalorder %s89, 0
      %p382 = por %p380, %p381
      %p383 = scmp.ne.s32.totalorder %s371, %s372
      %p384 = scmp.eq.s32.totalorder %s90, 1
      %p385 = por %p383, %p384
      %p387 = scmp.ne.s32.totalorder %s372, %s386
      %p388 = scmp.eq.s32.totalorder %s90, 0
      %p389 = por %p387, %p388
      %s391 = sadd.s32 %s390, 1
      %p394 = scmp.eq.s32.totalorder %s84, 1
      %p395 = scmp.ne.s32.totalorder %s390, %s392
      %p396 = scmp.eq.s32.totalorder %s84, 0
      %p397 = por %p395, %p396
      %p398 = scmp.ne.s32.totalorder %s390, %s392
      %p399 = scmp.eq.s32.totalorder %s89, 1
      %p400 = por %p398, %p399
      %p401 = scmp.ne.s32.totalorder %s392, %s393
      %p402 = scmp.eq.s32.totalorder %s89, 0
      %p403 = por %p401, %p402
      %p404 = scmp.ne.s32.totalorder %s392, %s393
      %p405 = scmp.eq.s32.totalorder %s90, 1
      %p406 = por %p404, %p405
      %p408 = scmp.ne.s32.totalorder %s393, %s407
      %p409 = scmp.eq.s32.totalorder %s90, 0
      %p410 = por %p408, %p409
      %s412 = sadd.s32 %s411, 1
      %p415 = scmp.eq.s32.totalorder %s84, 1
      %p416 = scmp.ne.s32.totalorder %s411, %s413
      %p417 = scmp.eq.s32.totalorder %s84, 0
      %p418 = por %p416, %p417
      %p419 = scmp.ne.s32.totalorder %s411, %s413
      %p420 = scmp.eq.s32.totalorder %s89, 1
      %p421 = por %p419, %p420
      %p422 = scmp.ne.s32.totalorder %s413, %s414
      %p423 = scmp.eq.s32.totalorder %s89, 0
      %p424 = por %p422, %p423
      %p425 = scmp.ne.s32.totalorder %s413, %s414
      %p426 = scmp.eq.s32.totalorder %s90, 1
      %p427 = por %p425, %p426
      %p429 = scmp.ne.s32.totalorder %s414, %s428
      %p430 = scmp.eq.s32.totalorder %s90, 0
      %p431 = por %p429, %p430
      %s433 = sadd.s32 %s432, 1
      %p436 = scmp.eq.s32.totalorder %s84, 1
      %p437 = scmp.ne.s32.totalorder %s432, %s434
      %p438 = scmp.eq.s32.totalorder %s84, 0
      %p439 = por %p437, %p438
      %p440 = scmp.ne.s32.totalorder %s432, %s434
      %p441 = scmp.eq.s32.totalorder %s89, 1
      %p442 = por %p440, %p441
      %p443 = scmp.ne.s32.totalorder %s434, %s435
      %p444 = scmp.eq.s32.totalorder %s89, 0
      %p445 = por %p443, %p444
      %p446 = scmp.ne.s32.totalorder %s434, %s435
      %p447 = scmp.eq.s32.totalorder %s90, 1
      %p448 = por %p446, %p447
      %p450 = scmp.ne.s32.totalorder %s435, %s449
      %p451 = scmp.eq.s32.totalorder %s90, 0
      %p452 = por %p450, %p451
      %s454 = sadd.s32 %s453, 1
      %p457 = scmp.eq.s32.totalorder %s84, 1
      %p458 = scmp.ne.s32.totalorder %s453, %s455
      %p459 = scmp.eq.s32.totalorder %s84, 0
      %p460 = por %p458, %p459
      %p461 = scmp.ne.s32.totalorder %s453, %s455
      %p462 = scmp.eq.s32.totalorder %s89, 1
      %p463 = por %p461, %p462
      %p464 = scmp.ne.s32.totalorder %s455, %s456
      %p465 = scmp.eq.s32.totalorder %s89, 0
      %p466 = por %p464, %p465
      %p467 = scmp.ne.s32.totalorder %s455, %s456
      %p468 = scmp.eq.s32.totalorder %s90, 1
      %p469 = por %p467, %p468
      %p471 = scmp.ne.s32.totalorder %s456, %s470
      %p472 = scmp.eq.s32.totalorder %s90, 0
      %p473 = por %p471, %p472
      %s475 = sadd.s32 %s474, 1
      %p478 = scmp.eq.s32.totalorder %s84, 1
      %p479 = scmp.ne.s32.totalorder %s474, %s476
      %p480 = scmp.eq.s32.totalorder %s84, 0
      %p481 = por %p479, %p480
      %p482 = scmp.ne.s32.totalorder %s474, %s476
      %p483 = scmp.eq.s32.totalorder %s89, 1
      %p484 = por %p482, %p483
      %p485 = scmp.ne.s32.totalorder %s476, %s477
      %p486 = scmp.eq.s32.totalorder %s89, 0
      %p487 = por %p485, %p486
      %p488 = scmp.ne.s32.totalorder %s476, %s477
      %p489 = scmp.eq.s32.totalorder %s90, 1
      %p490 = por %p488, %p489
      %p492 = scmp.ne.s32.totalorder %s477, %s491
      %p493 = scmp.eq.s32.totalorder %s90, 0
      %p494 = por %p492, %p493
      %s496 = sadd.s32 %s495, 1
      %p499 = scmp.eq.s32.totalorder %s84, 1
      %p500 = scmp.ne.s32.totalorder %s495, %s497
      %p501 = scmp.eq.s32.totalorder %s84, 0
      %p502 = por %p500, %p501
      %p503 = scmp.ne.s32.totalorder %s495, %s497
      %p504 = scmp.eq.s32.totalorder %s89, 1
      %p505 = por %p503, %p504
      %p506 = scmp.ne.s32.totalorder %s497, %s498
      %p507 = scmp.eq.s32.totalorder %s89, 0
      %p508 = por %p506, %p507
      %p509 = scmp.ne.s32.totalorder %s497, %s498
      %p510 = scmp.eq.s32.totalorder %s90, 1
      %p511 = por %p509, %p510
      %p513 = scmp.ne.s32.totalorder %s498, %s512
      %p514 = scmp.eq.s32.totalorder %s90, 0
      %p515 = por %p513, %p514
      %s517 = sadd.s32 %s516, 1
      %p520 = scmp.eq.s32.totalorder %s84, 1
      %p521 = scmp.ne.s32.totalorder %s516, %s518
      %p522 = scmp.eq.s32.totalorder %s84, 0
      %p523 = por %p521, %p522
      %p524 = scmp.ne.s32.totalorder %s516, %s518
      %p525 = scmp.eq.s32.totalorder %s89, 1
      %p526 = por %p524, %p525
      %p527 = scmp.ne.s32.totalorder %s518, %s519
      %p528 = scmp.eq.s32.totalorder %s89, 0
      %p529 = por %p527, %p528
      %p530 = scmp.ne.s32.totalorder %s518, %s519
      %p531 = scmp.eq.s32.totalorder %s90, 1
      %p532 = por %p530, %p531
      %p534 = scmp.ne.s32.totalorder %s519, %s533
      %p535 = scmp.eq.s32.totalorder %s90, 0
      %p536 = por %p534, %p535
      %s538 = sadd.s32 %s537, 1
      %p541 = scmp.eq.s32.totalorder %s84, 1
      %p542 = scmp.ne.s32.totalorder %s537, %s539
      %p543 = scmp.eq.s32.totalorder %s84, 0
      %p544 = por %p542, %p543
      %p545 = scmp.ne.s32.totalorder %s537, %s539
      %p546 = scmp.eq.s32.totalorder %s89, 1
      %p547 = por %p545, %p546
      %p548 = scmp.ne.s32.totalorder %s539, %s540
      %p549 = scmp.eq.s32.totalorder %s89, 0
      %p550 = por %p548, %p549
      %p551 = scmp.ne.s32.totalorder %s539, %s540
      %p552 = scmp.eq.s32.totalorder %s90, 1
      %p553 = por %p551, %p552
      %p555 = scmp.ne.s32.totalorder %s540, %s554
      %p556 = scmp.eq.s32.totalorder %s90, 0
      %p557 = por %p555, %p556
      %s559 = sadd.s32 %s558, 1
      %p562 = scmp.eq.s32.totalorder %s84, 1
      %p563 = scmp.ne.s32.totalorder %s558, %s560
      %p564 = scmp.eq.s32.totalorder %s84, 0
      %p565 = por %p563, %p564
      %p566 = scmp.ne.s32.totalorder %s558, %s560
      %p567 = scmp.eq.s32.totalorder %s89, 1
      %p568 = por %p566, %p567
      %p569 = scmp.ne.s32.totalorder %s560, %s561
      %p570 = scmp.eq.s32.totalorder %s89, 0
      %p571 = por %p569, %p570
      %p572 = scmp.ne.s32.totalorder %s560, %s561
      %p573 = scmp.eq.s32.totalorder %s90, 1
      %p574 = por %p572, %p573
      %p576 = scmp.ne.s32.totalorder %s561, %s575
      %p577 = scmp.eq.s32.totalorder %s90, 0
      %p578 = por %p576, %p577
      %s580 = sadd.s32 %s579, 1
      %p583 = scmp.eq.s32.totalorder %s84, 1
      %p584 = scmp.ne.s32.totalorder %s579, %s581
      %p585 = scmp.eq.s32.totalorder %s84, 0
      %p586 = por %p584, %p585
      %p587 = scmp.ne.s32.totalorder %s579, %s581
      %p588 = scmp.eq.s32.totalorder %s89, 1
      %p589 = por %p587, %p588
      %p590 = scmp.ne.s32.totalorder %s581, %s582
      %p591 = scmp.eq.s32.totalorder %s89, 0
      %p592 = por %p590, %p591
      %p593 = scmp.ne.s32.totalorder %s581, %s582
      %p594 = scmp.eq.s32.totalorder %s90, 1
      %p595 = por %p593, %p594
      %p597 = scmp.ne.s32.totalorder %s582, %s596
      %p598 = scmp.eq.s32.totalorder %s90, 0
      %p599 = por %p597, %p598
      %s601 = sadd.s32 %s600, 1
      %p604 = scmp.eq.s32.totalorder %s84, 1
      %p605 = scmp.ne.s32.totalorder %s600, %s602
      %p606 = scmp.eq.s32.totalorder %s84, 0
      %p607 = por %p605, %p606
      %p608 = scmp.ne.s32.totalorder %s600, %s602
      %p609 = scmp.eq.s32.totalorder %s89, 1
      %p610 = por %p608, %p609
      %p611 = scmp.ne.s32.totalorder %s602, %s603
      %p612 = scmp.eq.s32.totalorder %s89, 0
      %p613 = por %p611, %p612
      %p614 = scmp.ne.s32.totalorder %s602, %s603
      %p615 = scmp.eq.s32.totalorder %s90, 1
      %p616 = por %p614, %p615
      %p618 = scmp.ne.s32.totalorder %s603, %s617
      %p619 = scmp.eq.s32.totalorder %s90, 0
      %p620 = por %p618, %p619
      %s622 = sadd.s32 %s621, 1
      %p625 = scmp.eq.s32.totalorder %s84, 1
      %p626 = scmp.ne.s32.totalorder %s621, %s623
      %p627 = scmp.eq.s32.totalorder %s84, 0
      %p628 = por %p626, %p627
      %p629 = scmp.ne.s32.totalorder %s621, %s623
      %p630 = scmp.eq.s32.totalorder %s89, 1
      %p631 = por %p629, %p630
      %p632 = scmp.ne.s32.totalorder %s623, %s624
      %p633 = scmp.eq.s32.totalorder %s89, 0
      %p634 = por %p632, %p633
      %p635 = scmp.ne.s32.totalorder %s623, %s624
      %p636 = scmp.eq.s32.totalorder %s90, 1
      %p637 = por %p635, %p636
      %p639 = scmp.ne.s32.totalorder %s624, %s638
      %p640 = scmp.eq.s32.totalorder %s90, 0
      %p641 = por %p639, %p640
      %s643 = sadd.s32 %s642, 1
      %p646 = scmp.eq.s32.totalorder %s84, 1
      %p647 = scmp.ne.s32.totalorder %s642, %s644
      %p648 = scmp.eq.s32.totalorder %s84, 0
      %p649 = por %p647, %p648
      %p650 = scmp.ne.s32.totalorder %s642, %s644
      %p651 = scmp.eq.s32.totalorder %s89, 1
      %p652 = por %p650, %p651
      %p653 = scmp.ne.s32.totalorder %s644, %s645
      %p654 = scmp.eq.s32.totalorder %s89, 0
      %p655 = por %p653, %p654
      %p656 = scmp.ne.s32.totalorder %s644, %s645
      %p657 = scmp.eq.s32.totalorder %s90, 1
      %p658 = por %p656, %p657
      %p660 = scmp.ne.s32.totalorder %s645, %s659
      %p661 = scmp.eq.s32.totalorder %s90, 0
      %p662 = por %p660, %p661
      %s664 = sadd.s32 %s663, 1
      %p667 = scmp.eq.s32.totalorder %s84, 1
      %p668 = scmp.ne.s32.totalorder %s663, %s665
      %p669 = scmp.eq.s32.totalorder %s84, 0
      %p670 = por %p668, %p669
      %p671 = scmp.ne.s32.totalorder %s663, %s665
      %p672 = scmp.eq.s32.totalorder %s89, 1
      %p673 = por %p671, %p672
      %p674 = scmp.ne.s32.totalorder %s665, %s666
      %p675 = scmp.eq.s32.totalorder %s89, 0
      %p676 = por %p674, %p675
      %p677 = scmp.ne.s32.totalorder %s665, %s666
      %p678 = scmp.eq.s32.totalorder %s90, 1
      %p679 = por %p677, %p678
      %p681 = scmp.ne.s32.totalorder %s666, %s680
      %p682 = scmp.eq.s32.totalorder %s90, 0
      %p683 = por %p681, %p682
      %s685 = sadd.s32 %s684, 1
      %p688 = scmp.eq.s32.totalorder %s84, 1
      %p689 = scmp.ne.s32.totalorder %s684, %s686
      %p690 = scmp.eq.s32.totalorder %s84, 0
      %p691 = por %p689, %p690
      %p692 = scmp.ne.s32.totalorder %s684, %s686
      %p693 = scmp.eq.s32.totalorder %s89, 1
      %p694 = por %p692, %p693
      %p695 = scmp.ne.s32.totalorder %s686, %s687
      %p696 = scmp.eq.s32.totalorder %s89, 0
      %p697 = por %p695, %p696
      %p698 = scmp.ne.s32.totalorder %s686, %s687
      %p699 = scmp.eq.s32.totalorder %s90, 1
      %p700 = por %p698, %p699
      %p702 = scmp.ne.s32.totalorder %s687, %s701
      %p703 = scmp.eq.s32.totalorder %s90, 0
      %p704 = por %p702, %p703
      %s706 = sadd.s32 %s705, 1
      %p709 = scmp.eq.s32.totalorder %s84, 1
      %p710 = scmp.ne.s32.totalorder %s705, %s707
      %p711 = scmp.eq.s32.totalorder %s84, 0
      %p712 = por %p710, %p711
      %p713 = scmp.ne.s32.totalorder %s705, %s707
      %p714 = scmp.eq.s32.totalorder %s89, 1
      %p715 = por %p713, %p714
      %p716 = scmp.ne.s32.totalorder %s707, %s708
      %p717 = scmp.eq.s32.totalorder %s89, 0
      %p718 = por %p716, %p717
      %p719 = scmp.ne.s32.totalorder %s707, %s708
      %p720 = scmp.eq.s32.totalorder %s90, 1
      %p721 = por %p719, %p720
      %p723 = scmp.ne.s32.totalorder %s708, %s722
      %p724 = scmp.eq.s32.totalorder %s90, 0
      %p725 = por %p723, %p724
      %s727 = sadd.s32 %s726, 1
      %p730 = scmp.eq.s32.totalorder %s84, 1
      %p731 = scmp.ne.s32.totalorder %s726, %s728
      %p732 = scmp.eq.s32.totalorder %s84, 0
      %p733 = por %p731, %p732
      %p734 = scmp.ne.s32.totalorder %s726, %s728
      %p735 = scmp.eq.s32.totalorder %s89, 1
      %p736 = por %p734, %p735
      %p737 = scmp.ne.s32.totalorder %s728, %s729
      %p738 = scmp.eq.s32.totalorder %s89, 0
      %p739 = por %p737, %p738
      %p740 = scmp.ne.s32.totalorder %s728, %s729
      %p741 = scmp.eq.s32.totalorder %s90, 1
      %p742 = por %p740, %p741
      %p744 = scmp.ne.s32.totalorder %s729, %s743
      %p745 = scmp.eq.s32.totalorder %s90, 0
      %p746 = por %p744, %p745
      %s748 = sadd.s32 %s747, 1
      %p751 = scmp.eq.s32.totalorder %s84, 1
      %p752 = scmp.ne.s32.totalorder %s747, %s749
      %p753 = scmp.eq.s32.totalorder %s84, 0
      %p754 = por %p752, %p753
      %p755 = scmp.ne.s32.totalorder %s747, %s749
      %p756 = scmp.eq.s32.totalorder %s89, 1
      %p757 = por %p755, %p756
      %p758 = scmp.ne.s32.totalorder %s749, %s750
      %p759 = scmp.eq.s32.totalorder %s89, 0
      %p760 = por %p758, %p759
      %p761 = scmp.ne.s32.totalorder %s749, %s750
      %p762 = scmp.eq.s32.totalorder %s90, 1
      %p763 = por %p761, %p762
      %p765 = scmp.ne.s32.totalorder %s750, %s764
      %p766 = scmp.eq.s32.totalorder %s90, 0
      %p767 = por %p765, %p766
      %s769 = sadd.s32 %s768, 1
      %p772 = scmp.eq.s32.totalorder %s84, 1
      %p773 = scmp.ne.s32.totalorder %s768, %s770
      %p774 = scmp.eq.s32.totalorder %s84, 0
      %p775 = por %p773, %p774
      %p776 = scmp.ne.s32.totalorder %s768, %s770
      %p777 = scmp.eq.s32.totalorder %s89, 1
      %p778 = por %p776, %p777
      %p779 = scmp.ne.s32.totalorder %s770, %s771
      %p780 = scmp.eq.s32.totalorder %s89, 0
      %p781 = por %p779, %p780
      %p782 = scmp.ne.s32.totalorder %s770, %s771
      %p783 = scmp.eq.s32.totalorder %s90, 1
      %p784 = por %p782, %p783
      %p786 = scmp.ne.s32.totalorder %s771, %s785
      %p787 = scmp.eq.s32.totalorder %s90, 0
      %p788 = por %p786, %p787
      %s790 = sadd.s32 %s789, 1
      %p793 = scmp.eq.s32.totalorder %s84, 1
      %p794 = scmp.ne.s32.totalorder %s789, %s791
      %p795 = scmp.eq.s32.totalorder %s84, 0
      %p796 = por %p794, %p795
      %p797 = scmp.ne.s32.totalorder %s789, %s791
      %p798 = scmp.eq.s32.totalorder %s89, 1
      %p799 = por %p797, %p798
      %p800 = scmp.ne.s32.totalorder %s791, %s792
      %p801 = scmp.eq.s32.totalorder %s89, 0
      %p802 = por %p800, %p801
      %p803 = scmp.ne.s32.totalorder %s791, %s792
      %p804 = scmp.eq.s32.totalorder %s90, 1
      %p805 = por %p803, %p804
      %p807 = scmp.ne.s32.totalorder %s792, %s806
      %p808 = scmp.eq.s32.totalorder %s90, 0
      %p809 = por %p807, %p808
      %s811 = sadd.s32 %s810, 1
      %p814 = scmp.eq.s32.totalorder %s84, 1
      %p815 = scmp.ne.s32.totalorder %s810, %s812
      %p816 = scmp.eq.s32.totalorder %s84, 0
      %p817 = por %p815, %p816
      %p818 = scmp.ne.s32.totalorder %s810, %s812
      %p819 = scmp.eq.s32.totalorder %s89, 1
      %p820 = por %p818, %p819
      %p821 = scmp.ne.s32.totalorder %s812, %s813
      %p822 = scmp.eq.s32.totalorder %s89, 0
      %p823 = por %p821, %p822
      %p824 = scmp.ne.s32.totalorder %s812, %s813
      %p825 = scmp.eq.s32.totalorder %s90, 1
      %p826 = por %p824, %p825
      %p828 = scmp.ne.s32.totalorder %s813, %s827
      %p829 = scmp.eq.s32.totalorder %s90, 0
      %p830 = por %p828, %p829
      %s832 = sadd.s32 %s831, 1
      %p835 = scmp.eq.s32.totalorder %s84, 1
      %p836 = scmp.ne.s32.totalorder %s831, %s833
      %p837 = scmp.eq.s32.totalorder %s84, 0
      %p838 = por %p836, %p837
      %p839 = scmp.ne.s32.totalorder %s831, %s833
      %p840 = scmp.eq.s32.totalorder %s89, 1
      %p841 = por %p839, %p840
      %p842 = scmp.ne.s32.totalorder %s833, %s834
      %p843 = scmp.eq.s32.totalorder %s89, 0
      %p844 = por %p842, %p843
      %p845 = scmp.ne.s32.totalorder %s833, %s834
      %p846 = scmp.eq.s32.totalorder %s90, 1
      %p847 = por %p845, %p846
      %p849 = scmp.ne.s32.totalorder %s834, %s848
      %p850 = scmp.eq.s32.totalorder %s90, 0
      %p851 = por %p849, %p850
      %s853 = sadd.s32 %s852, 1
      %p856 = scmp.eq.s32.totalorder %s84, 1
      %p857 = scmp.ne.s32.totalorder %s852, %s854
      %p858 = scmp.eq.s32.totalorder %s84, 0
      %p859 = por %p857, %p858
      %p860 = scmp.ne.s32.totalorder %s852, %s854
      %p861 = scmp.eq.s32.totalorder %s89, 1
      %p862 = por %p860, %p861
      %p863 = scmp.ne.s32.totalorder %s854, %s855
      %p864 = scmp.eq.s32.totalorder %s89, 0
      %p865 = por %p863, %p864
      %p866 = scmp.ne.s32.totalorder %s854, %s855
      %p867 = scmp.eq.s32.totalorder %s90, 1
      %p868 = por %p866, %p867
      %p870 = scmp.ne.s32.totalorder %s855, %s869
      %p871 = scmp.eq.s32.totalorder %s90, 0
      %p872 = por %p870, %p871
      %s874 = sadd.s32 %s873, 1
      %p877 = scmp.eq.s32.totalorder %s84, 1
      %p878 = scmp.ne.s32.totalorder %s873, %s875
      %p879 = scmp.eq.s32.totalorder %s84, 0
      %p880 = por %p878, %p879
      %p881 = scmp.ne.s32.totalorder %s873, %s875
      %p882 = scmp.eq.s32.totalorder %s89, 1
      %p883 = por %p881, %p882
      %p884 = scmp.ne.s32.totalorder %s875, %s876
      %p885 = scmp.eq.s32.totalorder %s89, 0
      %p886 = por %p884, %p885
      %p887 = scmp.ne.s32.totalorder %s875, %s876
      %p888 = scmp.eq.s32.totalorder %s90, 1
      %p889 = por %p887, %p888
      %p891 = scmp.ne.s32.totalorder %s876, %s890
      %p892 = scmp.eq.s32.totalorder %s90, 0
      %p893 = por %p891, %p892
      %s894 = ssub.s32 %s84, %s91
      %p895 = scmp.eq.s32.totalorder %s894, 0
      %s897 = sadd.s32 %s896, 1
      %s898 = scalar_select %p895, %s896, %s897
      %p901 = pneg %p895
      %p902 = scmp.eq.s32.totalorder %s84, 1
      %p903 = por %p901, %p902
      %p904 = scmp.ne.s32.totalorder %s896, %s899
      %p905 = scmp.eq.s32.totalorder %s84, 0
      %p906 = por %p904, %p905
      %p907 = scmp.ne.s32.totalorder %s896, %s899
      %p908 = scmp.eq.s32.totalorder %s89, 1
      %p909 = por %p907, %p908
      %p910 = scmp.ne.s32.totalorder %s899, %s900
      %p911 = scmp.eq.s32.totalorder %s89, 0
      %p912 = por %p910, %p911
      %p913 = scmp.ne.s32.totalorder %s899, %s900
      %p914 = scmp.eq.s32.totalorder %s90, 1
      %p915 = por %p913, %p914
      %p917 = scmp.ne.s32.totalorder %s900, %s916
      %p918 = scmp.eq.s32.totalorder %s90, 0
      %p919 = por %p917, %p918
      %p920 = scmp.le.s32.totalorder 1, %s84
      %p921 = scmp.lt.s32.totalorder %s84, 3
      %p922 = pnand %p920, %p921
      %p923 = pneg %p922
      // Predicated region
      $region9: #{custom_model_forward.1} parent=5 // pred_check
        _
      $region10: #{custom_model_forward.1} parent=5 // pred_check_branch
        %925 = sbr.rel (%p922) target = $region12
      $region11: #{custom_model_forward.1} parent=5 // pred_region
        %s926 = ssub.s32 %s84, 1
        // Predicated region
        $region13: #{custom_model_forward.1} parent=11 // pred_check
          %p927 = pneg %p235
        $region14: #{custom_model_forward.1} parent=11 // pred_check_branch
          %929 = sbr.rel (%p927) target = $region16
        $region15: #{custom_model_forward.1} parent=11 // pred_region
          _
        $region16: #{custom_model_forward.1} parent=11 // pred_fallthru
          _
        // Predicated region
        $region17: #{custom_model_forward.1} parent=11 // pred_check
          %p930 = pneg %p256
        $region18: #{custom_model_forward.1} parent=11 // pred_check_branch
          %932 = sbr.rel (%p930) target = $region20
        $region19: #{custom_model_forward.1} parent=11 // pred_region
          _
        $region20: #{custom_model_forward.1} parent=11 // pred_fallthru
          _
        // Predicated region
        $region21: #{custom_model_forward.1} parent=11 // pred_check
          %p933 = pneg %p277
        $region22: #{custom_model_forward.1} parent=11 // pred_check_branch
          %935 = sbr.rel (%p933) target = $region24
        $region23: #{custom_model_forward.1} parent=11 // pred_region
          _
        $region24: #{custom_model_forward.1} parent=11 // pred_fallthru
          _
        // Predicated region
        $region25: #{custom_model_forward.1} parent=11 // pred_check
          %p936 = pneg %p298
        $region26: #{custom_model_forward.1} parent=11 // pred_check_branch
          %938 = sbr.rel (%p936) target = $region28
        $region27: #{custom_model_forward.1} parent=11 // pred_region
          _
        $region28: #{custom_model_forward.1} parent=11 // pred_fallthru
          _
        // Predicated region
        $region29: #{custom_model_forward.1} parent=11 // pred_check
          %p939 = pneg %p319
        $region30: #{custom_model_forward.1} parent=11 // pred_check_branch
          %941 = sbr.rel (%p939) target = $region32
        $region31: #{custom_model_forward.1} parent=11 // pred_region
          _
        $region32: #{custom_model_forward.1} parent=11 // pred_fallthru
          _
        // Predicated region
        $region33: #{custom_model_forward.1} parent=11 // pred_check
          %p942 = pneg %p340
        $region34: #{custom_model_forward.1} parent=11 // pred_check_branch
          %944 = sbr.rel (%p942) target = $region36
        $region35: #{custom_model_forward.1} parent=11 // pred_region
          _
        $region36: #{custom_model_forward.1} parent=11 // pred_fallthru
          _
        // Predicated region
        $region37: #{custom_model_forward.1} parent=11 // pred_check
          %p945 = pneg %p361
        $region38: #{custom_model_forward.1} parent=11 // pred_check_branch
          %947 = sbr.rel (%p945) target = $region40
        $region39: #{custom_model_forward.1} parent=11 // pred_region
          _
        $region40: #{custom_model_forward.1} parent=11 // pred_fallthru
          _
        // Predicated region
        $region41: #{custom_model_forward.1} parent=11 // pred_check
          %p948 = pneg %p382
        $region42: #{custom_model_forward.1} parent=11 // pred_check_branch
          %950 = sbr.rel (%p948) target = $region44
        $region43: #{custom_model_forward.1} parent=11 // pred_region
          _
        $region44: #{custom_model_forward.1} parent=11 // pred_fallthru
          _
        // Predicated region
        $region45: #{custom_model_forward.1} parent=11 // pred_check
          %p951 = pneg %p403
        $region46: #{custom_model_forward.1} parent=11 // pred_check_branch
          %953 = sbr.rel (%p951) target = $region48
        $region47: #{custom_model_forward.1} parent=11 // pred_region
          _
        $region48: #{custom_model_forward.1} parent=11 // pred_fallthru
          _
        // Predicated region
        $region49: #{custom_model_forward.1} parent=11 // pred_check
          %p954 = pneg %p424
        $region50: #{custom_model_forward.1} parent=11 // pred_check_branch
          %956 = sbr.rel (%p954) target = $region52
        $region51: #{custom_model_forward.1} parent=11 // pred_region
          _
        $region52: #{custom_model_forward.1} parent=11 // pred_fallthru
          _
        // Predicated region
        $region53: #{custom_model_forward.1} parent=11 // pred_check
          %p957 = pneg %p445
        $region54: #{custom_model_forward.1} parent=11 // pred_check_branch
          %959 = sbr.rel (%p957) target = $region56
        $region55: #{custom_model_forward.1} parent=11 // pred_region
          _
        $region56: #{custom_model_forward.1} parent=11 // pred_fallthru
          _
        // Predicated region
        $region57: #{custom_model_forward.1} parent=11 // pred_check
          %p960 = pneg %p466
        $region58: #{custom_model_forward.1} parent=11 // pred_check_branch
          %962 = sbr.rel (%p960) target = $region60
        $region59: #{custom_model_forward.1} parent=11 // pred_region
          _
        $region60: #{custom_model_forward.1} parent=11 // pred_fallthru
          _
        // Predicated region
        $region61: #{custom_model_forward.1} parent=11 // pred_check
          %p963 = pneg %p487
        $region62: #{custom_model_forward.1} parent=11 // pred_check_branch
          %965 = sbr.rel (%p963) target = $region64
        $region63: #{custom_model_forward.1} parent=11 // pred_region
          _
        $region64: #{custom_model_forward.1} parent=11 // pred_fallthru
          _
        // Predicated region
        $region65: #{custom_model_forward.1} parent=11 // pred_check
          %p966 = pneg %p508
        $region66: #{custom_model_forward.1} parent=11 // pred_check_branch
          %968 = sbr.rel (%p966) target = $region68
        $region67: #{custom_model_forward.1} parent=11 // pred_region
          _
        $region68: #{custom_model_forward.1} parent=11 // pred_fallthru
          _
        // Predicated region
        $region69: #{custom_model_forward.1} parent=11 // pred_check
          %p969 = pneg %p529
        $region70: #{custom_model_forward.1} parent=11 // pred_check_branch
          %971 = sbr.rel (%p969) target = $region72
        $region71: #{custom_model_forward.1} parent=11 // pred_region
          _
        $region72: #{custom_model_forward.1} parent=11 // pred_fallthru
          _
        // Predicated region
        $region73: #{custom_model_forward.1} parent=11 // pred_check
          %p972 = pneg %p550
        $region74: #{custom_model_forward.1} parent=11 // pred_check_branch
          %974 = sbr.rel (%p972) target = $region76
        $region75: #{custom_model_forward.1} parent=11 // pred_region
          _
        $region76: #{custom_model_forward.1} parent=11 // pred_fallthru
          _
        // Predicated region
        $region77: #{custom_model_forward.1} parent=11 // pred_check
          %p975 = pneg %p571
        $region78: #{custom_model_forward.1} parent=11 // pred_check_branch
          %977 = sbr.rel (%p975) target = $region80
        $region79: #{custom_model_forward.1} parent=11 // pred_region
          _
        $region80: #{custom_model_forward.1} parent=11 // pred_fallthru
          _
        // Predicated region
        $region81: #{custom_model_forward.1} parent=11 // pred_check
          %p978 = pneg %p592
        $region82: #{custom_model_forward.1} parent=11 // pred_check_branch
          %980 = sbr.rel (%p978) target = $region84
        $region83: #{custom_model_forward.1} parent=11 // pred_region
          _
        $region84: #{custom_model_forward.1} parent=11 // pred_fallthru
          _
        // Predicated region
        $region85: #{custom_model_forward.1} parent=11 // pred_check
          %p981 = pneg %p613
        $region86: #{custom_model_forward.1} parent=11 // pred_check_branch
          %983 = sbr.rel (%p981) target = $region88
        $region87: #{custom_model_forward.1} parent=11 // pred_region
          _
        $region88: #{custom_model_forward.1} parent=11 // pred_fallthru
          _
        // Predicated region
        $region89: #{custom_model_forward.1} parent=11 // pred_check
          %p984 = pneg %p634
        $region90: #{custom_model_forward.1} parent=11 // pred_check_branch
          %986 = sbr.rel (%p984) target = $region92
        $region91: #{custom_model_forward.1} parent=11 // pred_region
          _
        $region92: #{custom_model_forward.1} parent=11 // pred_fallthru
          _
        // Predicated region
        $region93: #{custom_model_forward.1} parent=11 // pred_check
          %p987 = pneg %p655
        $region94: #{custom_model_forward.1} parent=11 // pred_check_branch
          %989 = sbr.rel (%p987) target = $region96
        $region95: #{custom_model_forward.1} parent=11 // pred_region
          _
        $region96: #{custom_model_forward.1} parent=11 // pred_fallthru
          _
        // Predicated region
        $region97: #{custom_model_forward.1} parent=11 // pred_check
          %p990 = pneg %p676
        $region98: #{custom_model_forward.1} parent=11 // pred_check_branch
          %992 = sbr.rel (%p990) target = $region100
        $region99: #{custom_model_forward.1} parent=11 // pred_region
          _
        $region100: #{custom_model_forward.1} parent=11 // pred_fallthru
          _
        // Predicated region
        $region101: #{custom_model_forward.1} parent=11 // pred_check
          %p993 = pneg %p697
        $region102: #{custom_model_forward.1} parent=11 // pred_check_branch
          %995 = sbr.rel (%p993) target = $region104
        $region103: #{custom_model_forward.1} parent=11 // pred_region
          _
        $region104: #{custom_model_forward.1} parent=11 // pred_fallthru
          _
        // Predicated region
        $region105: #{custom_model_forward.1} parent=11 // pred_check
          %p996 = pneg %p718
        $region106: #{custom_model_forward.1} parent=11 // pred_check_branch
          %998 = sbr.rel (%p996) target = $region108
        $region107: #{custom_model_forward.1} parent=11 // pred_region
          _
        $region108: #{custom_model_forward.1} parent=11 // pred_fallthru
          _
        // Predicated region
        $region109: #{custom_model_forward.1} parent=11 // pred_check
          %p999 = pneg %p739
        $region110: #{custom_model_forward.1} parent=11 // pred_check_branch
          %1001 = sbr.rel (%p999) target = $region112
        $region111: #{custom_model_forward.1} parent=11 // pred_region
          _
        $region112: #{custom_model_forward.1} parent=11 // pred_fallthru
          _
        // Predicated region
        $region113: #{custom_model_forward.1} parent=11 // pred_check
          %p1002 = pneg %p760
        $region114: #{custom_model_forward.1} parent=11 // pred_check_branch
          %1004 = sbr.rel (%p1002) target = $region116
        $region115: #{custom_model_forward.1} parent=11 // pred_region
          _
        $region116: #{custom_model_forward.1} parent=11 // pred_fallthru
          _
        // Predicated region
        $region117: #{custom_model_forward.1} parent=11 // pred_check
          %p1005 = pneg %p781
        $region118: #{custom_model_forward.1} parent=11 // pred_check_branch
          %1007 = sbr.rel (%p1005) target = $region120
        $region119: #{custom_model_forward.1} parent=11 // pred_region
          _
        $region120: #{custom_model_forward.1} parent=11 // pred_fallthru
          _
        // Predicated region
        $region121: #{custom_model_forward.1} parent=11 // pred_check
          %p1008 = pneg %p802
        $region122: #{custom_model_forward.1} parent=11 // pred_check_branch
          %1010 = sbr.rel (%p1008) target = $region124
        $region123: #{custom_model_forward.1} parent=11 // pred_region
          _
        $region124: #{custom_model_forward.1} parent=11 // pred_fallthru
          _
        // Predicated region
        $region125: #{custom_model_forward.1} parent=11 // pred_check
          %p1011 = pneg %p823
        $region126: #{custom_model_forward.1} parent=11 // pred_check_branch
          %1013 = sbr.rel (%p1011) target = $region128
        $region127: #{custom_model_forward.1} parent=11 // pred_region
          _
        $region128: #{custom_model_forward.1} parent=11 // pred_fallthru
          _
        // Predicated region
        $region129: #{custom_model_forward.1} parent=11 // pred_check
          %p1014 = pneg %p844
        $region130: #{custom_model_forward.1} parent=11 // pred_check_branch
          %1016 = sbr.rel (%p1014) target = $region132
        $region131: #{custom_model_forward.1} parent=11 // pred_region
          _
        $region132: #{custom_model_forward.1} parent=11 // pred_fallthru
          _
        // Predicated region
        $region133: #{custom_model_forward.1} parent=11 // pred_check
          %p1017 = pneg %p865
        $region134: #{custom_model_forward.1} parent=11 // pred_check_branch
          %1019 = sbr.rel (%p1017) target = $region136
        $region135: #{custom_model_forward.1} parent=11 // pred_region
          _
        $region136: #{custom_model_forward.1} parent=11 // pred_fallthru
          _
        // Predicated region
        $region137: #{custom_model_forward.1} parent=11 // pred_check
          %p1020 = pneg %p886
        $region138: #{custom_model_forward.1} parent=11 // pred_check_branch
          %1022 = sbr.rel (%p1020) target = $region140
        $region139: #{custom_model_forward.1} parent=11 // pred_region
          _
        $region140: #{custom_model_forward.1} parent=11 // pred_fallthru
          _
      $region12: #{custom_model_forward.1} parent=5 // pred_fallthru
        _
      %p1023 = scmp.lt.s32.totalorder %s84, 2
      // Predicated region
      $region141: #{custom_model_forward.1} parent=5 // pred_check
        %p1024 = pneg %p1023
      $region142: #{custom_model_forward.1} parent=5 // pred_check_branch
        %1026 = sbr.rel (%p1024) target = $region144
      $region143: #{custom_model_forward.1} parent=5 // pred_region
        // Predicated region
        $region145: #{custom_model_forward.1} parent=143 // pred_check
          %p1027 = pneg %p104
        $region146: #{custom_model_forward.1} parent=143 // pred_check_branch
          %1029 = sbr.rel (%p1027) target = $region148
        $region147: #{custom_model_forward.1} parent=143 // pred_region
          %p1030 = scmp.lt.s32.totalorder %s84, 1
          %s1031 = scalar_select %p1030, %s84, 1
          %s1032 = smul.addr %s1031, 3
          %s1033 = smul.addr %s1032, 8
          %s1034 = scalar_lea.vmem %s1, %s1033
        $region148: #{custom_model_forward.1} parent=143 // pred_fallthru
          _
        // Predicated region
        $region149: #{custom_model_forward.1} parent=143 // pred_check
          %p1035 = pneg %p130
        $region150: #{custom_model_forward.1} parent=143 // pred_check_branch
          %1037 = sbr.rel (%p1035) target = $region152
        $region151: #{custom_model_forward.1} parent=143 // pred_region
          %p1038 = scmp.lt.s32.totalorder %s84, 1
          %s1039 = scalar_select %p1038, %s84, 1
          %s1040 = smul.addr %s1039, 2
          %s1041 = smul.addr %s1040, 8
          %s1042 = scalar_lea.vmem %s3, %s1041
        $region152: #{custom_model_forward.1} parent=143 // pred_fallthru
          _
        // Predicated region
        $region153: #{custom_model_forward.1} parent=143 // pred_check
          %p1043 = pneg %p156
        $region154: #{custom_model_forward.1} parent=143 // pred_check_branch
          %1045 = sbr.rel (%p1043) target = $region156
        $region155: #{custom_model_forward.1} parent=143 // pred_region
          %p1046 = scmp.lt.s32.totalorder %s84, 1
          %s1047 = scalar_select %p1046, %s84, 1
          %s1048 = smul.addr %s1047, 2
          %s1049 = smul.addr %s1048, 8
          %s1050 = scalar_lea.vmem %s5, %s1049
        $region156: #{custom_model_forward.1} parent=143 // pred_fallthru
          _
        // Predicated region
        $region157: #{custom_model_forward.1} parent=143 // pred_check
          %p1051 = pneg %p182
        $region158: #{custom_model_forward.1} parent=143 // pred_check_branch
          %1053 = sbr.rel (%p1051) target = $region160
        $region159: #{custom_model_forward.1} parent=143 // pred_region
          %p1054 = scmp.lt.s32.totalorder %s84, 1
          %s1055 = scalar_select %p1054, %s84, 1
          %s1056 = smul.addr %s1055, 8
          %s1057 = scalar_lea.vmem %s7, %s1056
        $region160: #{custom_model_forward.1} parent=143 // pred_fallthru
          _
        // Predicated region
        $region161: #{custom_model_forward.1} parent=143 // pred_check
          %p1058 = pneg %p208
        $region162: #{custom_model_forward.1} parent=143 // pred_check_branch
          %1060 = sbr.rel (%p1058) target = $region164
        $region163: #{custom_model_forward.1} parent=143 // pred_region
          %p1061 = scmp.lt.s32.totalorder %s84, 1
          %s1062 = scalar_select %p1061, %s84, 1
          %s1063 = smul.addr %s1062, 4
          %s1064 = smul.addr %s1063, 8
          %s1065 = scalar_lea.vmem %s9, %s1064
        $region164: #{custom_model_forward.1} parent=143 // pred_fallthru
          _
      $region144: #{custom_model_forward.1} parent=5 // pred_fallthru
        _
      %p1066 = scmp.le.s32.totalorder 1, %s84
      %p1067 = scmp.lt.s32.totalorder %s84, 3
      %p1068 = pnand %p1066, %p1067
      %p1069 = pneg %p1068
      // Predicated region
      $region165: #{custom_model_forward.1} parent=5 // pred_check
        _
      $region166: #{custom_model_forward.1} parent=5 // pred_check_branch
        %1071 = sbr.rel (%p1068) target = $region168
      $region167: #{custom_model_forward.1} parent=5 // pred_region
        %s1072 = ssub.s32 %s84, 1
        %p1073 = scmp.lt.s32.totalorder %s89, 1
        %s1074 = scalar_select %p1073, %s89, 1
        %s1075 = smul.addr %s1074, 3
        %s1076 = smul.addr %s1075, 8
        %s1077 = scalar_lea.vmem %s1, %s1076
        %p1078 = pneg %p110
        %p1079 = pneg %p107
        %p1080 = scmp.lt.s32.totalorder %s89, 1
        %s1081 = scalar_select %p1080, %s89, 1
        %s1082 = smul.addr %s1081, 2
        %s1083 = smul.addr %s1082, 8
        %s1084 = scalar_lea.vmem %s3, %s1083
        %p1085 = pneg %p136
        %p1086 = pneg %p133
        %p1087 = scmp.lt.s32.totalorder %s89, 1
        %s1088 = scalar_select %p1087, %s89, 1
        %s1089 = smul.addr %s1088, 2
        %s1090 = smul.addr %s1089, 8
        %s1091 = scalar_lea.vmem %s5, %s1090
        %p1092 = pneg %p162
        %p1093 = pneg %p159
        %p1094 = scmp.lt.s32.totalorder %s89, 1
        %s1095 = scalar_select %p1094, %s89, 1
        %s1096 = smul.addr %s1095, 8
        %s1097 = scalar_lea.vmem %s7, %s1096
        %p1098 = pneg %p188
        %p1099 = pneg %p185
        %p1100 = scmp.lt.s32.totalorder %s89, 1
        %s1101 = scalar_select %p1100, %s89, 1
        %s1102 = smul.addr %s1101, 4
        %s1103 = smul.addr %s1102, 8
        %s1104 = scalar_lea.vmem %s9, %s1103
        %p1105 = pneg %p214
        %p1106 = pneg %p211
        %p1107 = pneg %p235
        %p1108 = pneg %p232
        %p1109 = pneg %p256
        %p1110 = pneg %p253
        %p1111 = pneg %p277
        %p1112 = pneg %p274
        %p1113 = pneg %p298
        %p1114 = pneg %p295
        %p1115 = pneg %p319
        %p1116 = pneg %p316
        %p1117 = pneg %p340
        %p1118 = pneg %p337
        %p1119 = pneg %p361
        %p1120 = pneg %p358
        %p1121 = pneg %p382
        %p1122 = pneg %p379
        %p1123 = pneg %p403
        %p1124 = pneg %p400
        %p1125 = pneg %p424
        %p1126 = pneg %p421
        %p1127 = pneg %p445
        %p1128 = pneg %p442
        %p1129 = pneg %p466
        %p1130 = pneg %p463
        %p1131 = pneg %p487
        %p1132 = pneg %p484
        %p1133 = pneg %p508
        %p1134 = pneg %p505
        %p1135 = pneg %p529
        %p1136 = pneg %p526
        %p1137 = pneg %p550
        %p1138 = pneg %p547
        %p1139 = pneg %p571
        %p1140 = pneg %p568
        %p1141 = pneg %p592
        %p1142 = pneg %p589
        %p1143 = pneg %p613
        %p1144 = pneg %p610
        %p1145 = pneg %p634
        %p1146 = pneg %p631
        %p1147 = pneg %p655
        %p1148 = pneg %p652
        %p1149 = pneg %p676
        %p1150 = pneg %p673
        %p1151 = pneg %p697
        %p1152 = pneg %p694
        %p1153 = pneg %p718
        %p1154 = pneg %p715
        %p1155 = pneg %p739
        %p1156 = pneg %p736
        %p1157 = pneg %p760
        %p1158 = pneg %p757
        %p1159 = pneg %p781
        %p1160 = pneg %p778
        %p1161 = pneg %p802
        %p1162 = pneg %p799
        %p1163 = pneg %p823
        %p1164 = pneg %p820
        %p1165 = pneg %p844
        %p1166 = pneg %p841
        %p1167 = pneg %p865
        %p1168 = pneg %p862
        %p1169 = pneg %p886
        %p1170 = pneg %p883
        %p1171 = pneg %p912
        %p1172 = pneg %p909
        %s1173 = sand.u32 %s899, 1
        %s1174 = scalar_lea.sflag [#allocation3], %s1173
        %s1175 = sand.u32 %s899, 1
        %s1176 = scalar_lea.vmem [#allocation2], %s1175
        %p1177 = scmp.lt.s32.totalorder %s89, 1
        %s1178 = scalar_select %p1177, %s89, 1
        %s1179 = smul.addr %s1178, 3
        %s1180 = smul.addr %s1179, 8
        %s1181 = scalar_lea.vmem %s1, %s1180
        %p1182 = scmp.lt.s32.totalorder %s89, 1
        %s1183 = scalar_select %p1182, %s89, 1
        %s1184 = smul.addr %s1183, 2
        %s1185 = smul.addr %s1184, 8
        %s1186 = scalar_lea.vmem %s3, %s1185
        %p1187 = scmp.lt.s32.totalorder %s89, 1
        %s1188 = scalar_select %p1187, %s89, 1
        %s1189 = smul.addr %s1188, 2
        %s1190 = smul.addr %s1189, 8
        %s1191 = scalar_lea.vmem %s5, %s1190
        %p1192 = scmp.lt.s32.totalorder %s89, 1
        %s1193 = scalar_select %p1192, %s89, 1
        %s1194 = smul.addr %s1193, 8
        %s1195 = scalar_lea.vmem %s7, %s1194
        %p1196 = scmp.lt.s32.totalorder %s89, 1
        %s1197 = scalar_select %p1196, %s89, 1
        %s1198 = smul.addr %s1197, 4
        %s1199 = smul.addr %s1198, 8
        %s1200 = scalar_lea.vmem %s9, %s1199
        %v1201 = vlaneseq
        %v1202 = vand.u32 %v1201, 127
        %v1203 = vadd.s32 %v1202, 128
        %vm1204 = vcmp.lt.s32.totalorder %v1202, 249
        %vm1205 = vcmp.lt.s32.totalorder %v1203, 249
        %v1206 = vsel %vm1204, 1, 0
        %v1207 = vsel %vm1205, 1, 0
        %v1208 = vcvt.s32.f32 %v1206
        %v1209 = vcvt.s32.f32 %v1207
        %vm1210 = vcmp.ge.s32.totalorder %v1202, 233
        %vm1211 = vcmp.ge.s32.totalorder %v1203, 233
        %v1212 = vsel %vm1210, 1, 0
        %v1213 = vsel %vm1211, 1, 0
        %v1214 = vcvt.s32.f32 %v1212
        %v1215 = vcvt.s32.f32 %v1213
        %v1216 = vld [vmem:[%s1200] sm:$0xff]
        %v1217 = vld [vmem:[%s1200 + $0x10] sm:$0x3]
        %v1218 = vld [vmem:[%s1200 + $0x18] sm:$0x3]
        %v1219 = vld [vmem:[%s1181] sm:$0xff]
        %v1220 = vld [vmem:[%s1181 + $0x8] sm:$0xff]
        %v1221 = vld [vmem:[%s1181 + $0x10] sm:$0xff]
        %v1222 = vpack.c.bf16 %v1220, %v1219
        %v1223 = vpack.c.bf16 %v1221, %v1221
        %v1224 = vld [vmem:[%s11] sm:$0xf]
        %v1225 = vld [vmem:[%s11 + $0x4] sm:$0xf]
        %v1226 = vld [vmem:[%s11 + $0x8] sm:$0xf]
        %v1227 = vld [vmem:[%s11 + $0xc] sm:$0xf]
        %v1228 = vld [vmem:[%s11 + $0x10] sm:$0xf]
        %v1229 = vld [vmem:[%s11 + $0x14] sm:$0xf]
        %v1230 = vld [vmem:[%s11 + $0x18] sm:$0xf]
        %v1231 = vld [vmem:[%s11 + $0x1c] sm:$0xf]
        %v1232 = vld [vmem:[%s11 + $0x20] sm:$0xf]
        %v1233 = vld [vmem:[%s11 + $0x24] sm:$0xf]
        %v1234 = vld [vmem:[%s11 + $0x28] sm:$0xf]
        %v1235 = vld [vmem:[%s11 + $0x2c] sm:$0xf]
        %v1236 = vld [vmem:[%s11 + $0x30] sm:$0xf]
        %v1237 = vld [vmem:[%s11 + $0x34] sm:$0xf]
        %v1238 = vld [vmem:[%s11 + $0x38] sm:$0xf]
        %v1239 = vld [vmem:[%s11 + $0x3c] sm:$0xf]
        %v1240 = vld [vmem:[%s13] sm:$0x1]
        %v1242 = vperm.slane %v1240, 0
        %v1260 = vunpack.c.l.b16 %v1224
        %v1261 = vunpack.c.l.b16 %v1225
        %v1262 = vunpack.c.l.b16 %v1226
        %v1263 = vunpack.c.l.b16 %v1227
        %v1264 = vunpack.c.l.b16 %v1228
        %v1265 = vunpack.c.l.b16 %v1229
        %v1266 = vunpack.c.l.b16 %v1230
        %v1267 = vunpack.c.l.b16 %v1231
        %v1268 = vunpack.c.l.b16 %v1232
        %v1269 = vunpack.c.l.b16 %v1233
        %v1270 = vunpack.c.l.b16 %v1234
        %v1271 = vunpack.c.l.b16 %v1235
        %v1272 = vunpack.c.l.b16 %v1236
        %v1273 = vunpack.c.l.b16 %v1237
        %v1274 = vunpack.c.l.b16 %v1238
        %v1275 = vunpack.c.l.b16 %v1239
        %v1276 = vpack.c.b16 %v1261, %v1260
        %v1277 = vpack.c.b16 %v1263, %v1262
        %v1278 = vpack.c.b16 %v1265, %v1264
        %v1279 = vpack.c.b16 %v1267, %v1266
        %v1280 = vpack.c.b16 %v1269, %v1268
        %v1281 = vpack.c.b16 %v1271, %v1270
        %v1282 = vpack.c.b16 %v1273, %v1272
        %v1283 = vpack.c.b16 %v1275, %v1274
        %1292 = vmatpush.bf16.msra.mxu0 %v1283
        %1293 = vmatpush.bf16.msra.mxu0 %v1282
        %1294 = vmatpush.bf16.msra.mxu0 %v1281
        %1295 = vmatpush.bf16.msra.mxu0 %v1280
        %1296 = vmatpush.bf16.msra.mxu0 %v1279
        %1297 = vmatpush.bf16.msra.mxu0 %v1278
        %1298 = vmatpush.bf16.msra.mxu0 %v1277
        %1299 = vmatpush.bf16.msra.mxu0 %v1276
        %1300 = vmatmul.bf16.gmra.mxu0 %v1222
        %v1301 = vpop.f32.mrf.mxu0
        %v1302 = vadd.f32 %v1242, %v1301
        %v1303 = vpop.f32.mrf.mxu0
        %v1304 = vadd.f32 %v1242, %v1303
        %1305 = vmatmul.bf16.gmra.mxu0 %v1223
        %v1306 = vpop.f32.mrf.mxu0
        %v1307 = vadd.f32 %v1242, %v1306
        %v1308 = vpop.f32.mrf.mxu0
        %1309 = vdwg.mxu0
        %vm1310 = vcmp.ge.f32.partialorder %v1302, 0.0
        %vm1311 = vcmp.ge.f32.partialorder %v1304, 0.0
        %vm1312 = vcmp.ge.f32.partialorder %v1307, 0.0
        %v1313 = vmul.f32 %v1302, 0.01
        %v1314 = vmul.f32 %v1304, 0.01
        %v1315 = vmul.f32 %v1307, 0.01
        %v1316 = vsel %vm1310, %v1302, %v1313
        %v1317 = vsel %vm1311, %v1304, %v1314
        %v1318 = vsel %vm1312, %v1307, %v1315
        %v1319 = vpack.c.bf16 %v1317, %v1316
        %v1320 = vpack.c.bf16 %v1318, %v1318
        %v1321 = vld [vmem:[%s15] sm:$0xf]
        %v1322 = vld [vmem:[%s15 + $0x4] sm:$0xf]
        %v1323 = vld [vmem:[%s15 + $0x8] sm:$0xf]
        %v1324 = vld [vmem:[%s15 + $0xc] sm:$0xf]
        %v1325 = vld [vmem:[%s15 + $0x10] sm:$0xf]
        %v1326 = vld [vmem:[%s15 + $0x14] sm:$0xf]
        %v1327 = vld [vmem:[%s15 + $0x18] sm:$0xf]
        %v1328 = vld [vmem:[%s15 + $0x1c] sm:$0xf]
        %v1329 = vld [vmem:[%s15 + $0x20] sm:$0xf]
        %v1330 = vld [vmem:[%s15 + $0x24] sm:$0xf]
        %v1331 = vld [vmem:[%s15 + $0x28] sm:$0xf]
        %v1332 = vld [vmem:[%s15 + $0x2c] sm:$0xf]
        %v1333 = vld [vmem:[%s15 + $0x30] sm:$0xf]
        %v1334 = vld [vmem:[%s15 + $0x34] sm:$0xf]
        %v1335 = vld [vmem:[%s15 + $0x38] sm:$0xf]
        %v1336 = vld [vmem:[%s15 + $0x3c] sm:$0xf]
        %v1337 = vld [vmem:[%s17] sm:$0x1]
        %v1339 = vperm.slane %v1337, 0
        %v1357 = vunpack.c.l.b16 %v1321
        %v1358 = vunpack.c.l.b16 %v1322
        %v1359 = vunpack.c.l.b16 %v1323
        %v1360 = vunpack.c.l.b16 %v1324
        %v1361 = vunpack.c.l.b16 %v1325
        %v1362 = vunpack.c.l.b16 %v1326
        %v1363 = vunpack.c.l.b16 %v1327
        %v1364 = vunpack.c.l.b16 %v1328
        %v1365 = vunpack.c.l.b16 %v1329
        %v1366 = vunpack.c.l.b16 %v1330
        %v1367 = vunpack.c.l.b16 %v1331
        %v1368 = vunpack.c.l.b16 %v1332
        %v1369 = vunpack.c.l.b16 %v1333
        %v1370 = vunpack.c.l.b16 %v1334
        %v1371 = vunpack.c.l.b16 %v1335
        %v1372 = vunpack.c.l.b16 %v1336
        %v1373 = vpack.c.b16 %v1358, %v1357
        %v1374 = vpack.c.b16 %v1360, %v1359
        %v1375 = vpack.c.b16 %v1362, %v1361
        %v1376 = vpack.c.b16 %v1364, %v1363
        %v1377 = vpack.c.b16 %v1366, %v1365
        %v1378 = vpack.c.b16 %v1368, %v1367
        %v1379 = vpack.c.b16 %v1370, %v1369
        %v1380 = vpack.c.b16 %v1372, %v1371
        %1389 = vmatpush.bf16.msra.mxu0 %v1380
        %1390 = vmatpush.bf16.msra.mxu0 %v1379
        %1391 = vmatpush.bf16.msra.mxu0 %v1378
        %1392 = vmatpush.bf16.msra.mxu0 %v1377
        %1393 = vmatpush.bf16.msra.mxu0 %v1376
        %1394 = vmatpush.bf16.msra.mxu0 %v1375
        %1395 = vmatpush.bf16.msra.mxu0 %v1374
        %1396 = vmatpush.bf16.msra.mxu0 %v1373
        %1397 = vmatmul.bf16.gmra.mxu0 %v1319
        %v1398 = vpop.f32.mrf.mxu0
        %v1399 = vadd.f32 %v1339, %v1398
        %v1400 = vpop.f32.mrf.mxu0
        %v1401 = vadd.f32 %v1339, %v1400
        %1402 = vmatmul.bf16.gmra.mxu0 %v1320
        %v1403 = vpop.f32.mrf.mxu0
        %v1404 = vadd.f32 %v1339, %v1403
        %v1405 = vpop.f32.mrf.mxu0
        %1406 = vdwg.mxu0
        %vm1407 = vcmp.ge.f32.partialorder %v1399, 0.0
        %vm1408 = vcmp.ge.f32.partialorder %v1401, 0.0
        %vm1409 = vcmp.ge.f32.partialorder %v1404, 0.0
        %v1410 = vmul.f32 %v1399, 0.01
        %v1411 = vmul.f32 %v1401, 0.01
        %v1412 = vmul.f32 %v1404, 0.01
        %v1413 = vsel %vm1407, %v1399, %v1410
        %v1414 = vsel %vm1408, %v1401, %v1411
        %v1415 = vsel %vm1409, %v1404, %v1412
        %1417 = vset.pattern.permute.xlu0 0
        %1418 = vperm.xlu0 %1417, %v1216
        %v1419 = vpop.permute.xlu0 %1418
        %v1421 = vmul.f32 %v1413, %v1419
        %1422 = vset.pattern.permute.xlu0 1
        %1423 = vperm.xlu0 %1422, %v1216
        %v1424 = vpop.permute.xlu0 %1423
        %v1426 = vmul.f32 %v1414, %v1424
        %v1427 = vadd.f32 %v1421, %v1426
        %1428 = vset.pattern.permute.xlu0 2
        %1429 = vperm.xlu0 %1428, %v1216
        %v1430 = vpop.permute.xlu0 %1429
        %v1432 = vmul.f32 %v1415, %v1430
        %v1433 = vadd.f32 %v1427, %v1432
        %v1434 = vld [vmem:[%s1186] sm:$0xff]
        %v1435 = vld [vmem:[%s1186 + $0x8] sm:$0xff]
        %v1436 = vpack.c.bf16 %v1434, %v1434
        %v1437 = vpack.c.bf16 %v1435, %v1435
        %v1438 = vld [vmem:[%s19] sm:$0xf]
        %v1439 = vld [vmem:[%s19 + $0x4] sm:$0xf]
        %v1440 = vld [vmem:[%s19 + $0x8] sm:$0xf]
        %v1441 = vld [vmem:[%s19 + $0xc] sm:$0xf]
        %v1442 = vld [vmem:[%s19 + $0x10] sm:$0xf]
        %v1443 = vld [vmem:[%s19 + $0x14] sm:$0xf]
        %v1444 = vld [vmem:[%s19 + $0x18] sm:$0xf]
        %v1445 = vld [vmem:[%s19 + $0x1c] sm:$0xf]
        %v1446 = vld [vmem:[%s19 + $0x20] sm:$0xf]
        %v1447 = vld [vmem:[%s19 + $0x24] sm:$0xf]
        %v1448 = vld [vmem:[%s19 + $0x28] sm:$0xf]
        %v1449 = vld [vmem:[%s19 + $0x2c] sm:$0xf]
        %v1450 = vld [vmem:[%s19 + $0x30] sm:$0xf]
        %v1451 = vld [vmem:[%s19 + $0x34] sm:$0xf]
        %v1452 = vld [vmem:[%s19 + $0x38] sm:$0xf]
        %v1453 = vld [vmem:[%s19 + $0x3c] sm:$0xf]
        %v1454 = vld [vmem:[%s19 + $0x40] sm:$0xf]
        %v1455 = vld [vmem:[%s19 + $0x44] sm:$0xf]
        %v1456 = vld [vmem:[%s19 + $0x48] sm:$0xf]
        %v1457 = vld [vmem:[%s19 + $0x4c] sm:$0xf]
        %v1458 = vld [vmem:[%s19 + $0x50] sm:$0xf]
        %v1459 = vld [vmem:[%s19 + $0x54] sm:$0xf]
        %v1460 = vld [vmem:[%s19 + $0x58] sm:$0xf]
        %v1461 = vld [vmem:[%s19 + $0x5c] sm:$0xf]
        %v1462 = vld [vmem:[%s19 + $0x60] sm:$0xf]
        %v1463 = vld [vmem:[%s19 + $0x64] sm:$0xf]
        %v1464 = vld [vmem:[%s19 + $0x68] sm:$0xf]
        %v1465 = vld [vmem:[%s19 + $0x6c] sm:$0xf]
        %v1466 = vld [vmem:[%s19 + $0x70] sm:$0xf]
        %v1467 = vld [vmem:[%s19 + $0x74] sm:$0xf]
        %v1468 = vld [vmem:[%s19 + $0x78] sm:$0xf]
        %v1469 = vld [vmem:[%s19 + $0x7c] sm:$0xf]
        %v1470 = vld [vmem:[%s21] sm:$0x1]
        %v1472 = vperm.slane %v1470, 0
        %v1506 = vunpack.c.l.b16 %v1438
        %v1507 = vunpack.c.l.b16 %v1439
        %v1508 = vunpack.c.l.b16 %v1440
        %v1509 = vunpack.c.l.b16 %v1441
        %v1510 = vunpack.c.l.b16 %v1442
        %v1511 = vunpack.c.l.b16 %v1443
        %v1512 = vunpack.c.l.b16 %v1444
        %v1513 = vunpack.c.l.b16 %v1445
        %v1514 = vunpack.c.l.b16 %v1446
        %v1515 = vunpack.c.l.b16 %v1447
        %v1516 = vunpack.c.l.b16 %v1448
        %v1517 = vunpack.c.l.b16 %v1449
        %v1518 = vunpack.c.l.b16 %v1450
        %v1519 = vunpack.c.l.b16 %v1451
        %v1520 = vunpack.c.l.b16 %v1452
        %v1521 = vunpack.c.l.b16 %v1453
        %v1522 = vunpack.c.l.b16 %v1454
        %v1523 = vunpack.c.l.b16 %v1455
        %v1524 = vunpack.c.l.b16 %v1456
        %v1525 = vunpack.c.l.b16 %v1457
        %v1526 = vunpack.c.l.b16 %v1458
        %v1527 = vunpack.c.l.b16 %v1459
        %v1528 = vunpack.c.l.b16 %v1460
        %v1529 = vunpack.c.l.b16 %v1461
        %v1530 = vunpack.c.l.b16 %v1462
        %v1531 = vunpack.c.l.b16 %v1463
        %v1532 = vunpack.c.l.b16 %v1464
        %v1533 = vunpack.c.l.b16 %v1465
        %v1534 = vunpack.c.l.b16 %v1466
        %v1535 = vunpack.c.l.b16 %v1467
        %v1536 = vunpack.c.l.b16 %v1468
        %v1537 = vunpack.c.l.b16 %v1469
        %v1538 = vpack.c.b16 %v1507, %v1506
        %v1539 = vpack.c.b16 %v1509, %v1508
        %v1540 = vpack.c.b16 %v1511, %v1510
        %v1541 = vpack.c.b16 %v1513, %v1512
        %v1542 = vpack.c.b16 %v1515, %v1514
        %v1543 = vpack.c.b16 %v1517, %v1516
        %v1544 = vpack.c.b16 %v1519, %v1518
        %v1545 = vpack.c.b16 %v1521, %v1520
        %v1546 = vpack.c.b16 %v1523, %v1522
        %v1547 = vpack.c.b16 %v1525, %v1524
        %v1548 = vpack.c.b16 %v1527, %v1526
        %v1549 = vpack.c.b16 %v1529, %v1528
        %v1550 = vpack.c.b16 %v1531, %v1530
        %v1551 = vpack.c.b16 %v1533, %v1532
        %v1552 = vpack.c.b16 %v1535, %v1534
        %v1553 = vpack.c.b16 %v1537, %v1536
        %1570 = vmatpush.bf16.msra.mxu0 %v1545
        %1571 = vmatpush.bf16.msra.mxu0 %v1544
        %1572 = vmatpush.bf16.msra.mxu0 %v1543
        %1573 = vmatpush.bf16.msra.mxu0 %v1542
        %1574 = vmatpush.bf16.msra.mxu0 %v1541
        %1575 = vmatpush.bf16.msra.mxu0 %v1540
        %1576 = vmatpush.bf16.msra.mxu0 %v1539
        %1577 = vmatpush.bf16.msra.mxu0 %v1538
        %1578 = vmatmul.bf16.gmra.mxu0 %v1436
        %v1579 = vpop.f32.mrf.mxu0
        %v1580 = vadd.f32 %v1472, %v1579
        %v1581 = vpop.f32.mrf.mxu0
        %1582 = vdwg.mxu0
        %1583 = vmatpush.bf16.msra.mxu0 %v1553
        %1584 = vmatpush.bf16.msra.mxu0 %v1552
        %1585 = vmatpush.bf16.msra.mxu0 %v1551
        %1586 = vmatpush.bf16.msra.mxu0 %v1550
        %1587 = vmatpush.bf16.msra.mxu0 %v1549
        %1588 = vmatpush.bf16.msra.mxu0 %v1548
        %1589 = vmatpush.bf16.msra.mxu0 %v1547
        %1590 = vmatpush.bf16.msra.mxu0 %v1546
        %1591 = vmatmul.bf16.gmra.mxu0 %v1437
        %v1592 = vpop.f32.mrf.mxu0
        %v1593 = vadd.f32 %v1580, %v1592
        %v1594 = vpop.f32.mrf.mxu0
        %1595 = vdwg.mxu0
        %vm1596 = vcmp.ge.f32.partialorder %v1593, 0.0
        %v1597 = vmul.f32 %v1593, 0.01
        %v1598 = vsel %vm1596, %v1593, %v1597
        %v1599 = vpack.c.bf16 %v1598, %v1598
        %v1600 = vld [vmem:[%s23] sm:$0xf]
        %v1601 = vld [vmem:[%s23 + $0x4] sm:$0xf]
        %v1602 = vld [vmem:[%s23 + $0x8] sm:$0xf]
        %v1603 = vld [vmem:[%s23 + $0xc] sm:$0xf]
        %v1604 = vld [vmem:[%s23 + $0x10] sm:$0xf]
        %v1605 = vld [vmem:[%s23 + $0x14] sm:$0xf]
        %v1606 = vld [vmem:[%s23 + $0x18] sm:$0xf]
        %v1607 = vld [vmem:[%s23 + $0x1c] sm:$0xf]
        %v1608 = vld [vmem:[%s23 + $0x20] sm:$0xf]
        %v1609 = vld [vmem:[%s23 + $0x24] sm:$0xf]
        %v1610 = vld [vmem:[%s23 + $0x28] sm:$0xf]
        %v1611 = vld [vmem:[%s23 + $0x2c] sm:$0xf]
        %v1612 = vld [vmem:[%s23 + $0x30] sm:$0xf]
        %v1613 = vld [vmem:[%s23 + $0x34] sm:$0xf]
        %v1614 = vld [vmem:[%s23 + $0x38] sm:$0xf]
        %v1615 = vld [vmem:[%s23 + $0x3c] sm:$0xf]
        %v1616 = vld [vmem:[%s25] sm:$0x1]
        %v1618 = vperm.slane %v1616, 0
        %v1636 = vunpack.c.l.b16 %v1600
        %v1637 = vunpack.c.l.b16 %v1601
        %v1638 = vunpack.c.l.b16 %v1602
        %v1639 = vunpack.c.l.b16 %v1603
        %v1640 = vunpack.c.l.b16 %v1604
        %v1641 = vunpack.c.l.b16 %v1605
        %v1642 = vunpack.c.l.b16 %v1606
        %v1643 = vunpack.c.l.b16 %v1607
        %v1644 = vunpack.c.l.b16 %v1608
        %v1645 = vunpack.c.l.b16 %v1609
        %v1646 = vunpack.c.l.b16 %v1610
        %v1647 = vunpack.c.l.b16 %v1611
        %v1648 = vunpack.c.l.b16 %v1612
        %v1649 = vunpack.c.l.b16 %v1613
        %v1650 = vunpack.c.l.b16 %v1614
        %v1651 = vunpack.c.l.b16 %v1615
        %v1652 = vpack.c.b16 %v1637, %v1636
        %v1653 = vpack.c.b16 %v1639, %v1638
        %v1654 = vpack.c.b16 %v1641, %v1640
        %v1655 = vpack.c.b16 %v1643, %v1642
        %v1656 = vpack.c.b16 %v1645, %v1644
        %v1657 = vpack.c.b16 %v1647, %v1646
        %v1658 = vpack.c.b16 %v1649, %v1648
        %v1659 = vpack.c.b16 %v1651, %v1650
        %1668 = vmatpush.bf16.msra.mxu0 %v1659
        %1669 = vmatpush.bf16.msra.mxu0 %v1658
        %1670 = vmatpush.bf16.msra.mxu0 %v1657
        %1671 = vmatpush.bf16.msra.mxu0 %v1656
        %1672 = vmatpush.bf16.msra.mxu0 %v1655
        %1673 = vmatpush.bf16.msra.mxu0 %v1654
        %1674 = vmatpush.bf16.msra.mxu0 %v1653
        %1675 = vmatpush.bf16.msra.mxu0 %v1652
        %1676 = vmatmul.bf16.gmra.mxu0 %v1599
        %v1677 = vpop.f32.mrf.mxu0
        %v1678 = vadd.f32 %v1618, %v1677
        %v1679 = vpop.f32.mrf.mxu0
        %1680 = vdwg.mxu0
        %vm1681 = vcmp.ge.f32.partialorder %v1678, 0.0
        %v1682 = vmul.f32 %v1678, 0.01
        %v1683 = vsel %vm1681, %v1678, %v1682
        %v1684 = vld [vmem:[%s1191] sm:$0xff]
        %v1685 = vld [vmem:[%s1191 + $0x8] sm:$0xff]
        %v1686 = vpack.c.bf16 %v1433, %v1433
        %v1687 = vld [vmem:[%s27] sm:$0xff]
        %v1688 = vld [vmem:[%s27 + $0x8] sm:$0xff]
        %v1689 = vld [vmem:[%s27 + $0x10] sm:$0xff]
        %v1690 = vld [vmem:[%s27 + $0x18] sm:$0xff]
        %v1691 = vld [vmem:[%s27 + $0x20] sm:$0xff]
        %v1692 = vld [vmem:[%s27 + $0x28] sm:$0xff]
        %v1693 = vld [vmem:[%s27 + $0x30] sm:$0xff]
        %v1694 = vld [vmem:[%s27 + $0x38] sm:$0xff]
        %v1695 = vld [vmem:[%s27 + $0x40] sm:$0xff]
        %v1696 = vld [vmem:[%s27 + $0x48] sm:$0xff]
        %v1697 = vld [vmem:[%s27 + $0x50] sm:$0xff]
        %v1698 = vld [vmem:[%s27 + $0x58] sm:$0xff]
        %v1699 = vld [vmem:[%s27 + $0x60] sm:$0xff]
        %v1700 = vld [vmem:[%s27 + $0x68] sm:$0xff]
        %v1701 = vld [vmem:[%s27 + $0x70] sm:$0xff]
        %v1702 = vld [vmem:[%s27 + $0x78] sm:$0xff]
        %v1703 = vpack.c.bf16 %v1683, %v1683
        %v1704 = vld [vmem:[%s29] sm:$0xff]
        %v1705 = vld [vmem:[%s29 + $0x8] sm:$0xff]
        %v1706 = vld [vmem:[%s29 + $0x10] sm:$0xff]
        %v1707 = vld [vmem:[%s29 + $0x18] sm:$0xff]
        %v1708 = vld [vmem:[%s29 + $0x20] sm:$0xff]
        %v1709 = vld [vmem:[%s29 + $0x28] sm:$0xff]
        %v1710 = vld [vmem:[%s29 + $0x30] sm:$0xff]
        %v1711 = vld [vmem:[%s29 + $0x38] sm:$0xff]
        %v1712 = vld [vmem:[%s29 + $0x40] sm:$0xff]
        %v1713 = vld [vmem:[%s29 + $0x48] sm:$0xff]
        %v1714 = vld [vmem:[%s29 + $0x50] sm:$0xff]
        %v1715 = vld [vmem:[%s29 + $0x58] sm:$0xff]
        %v1716 = vld [vmem:[%s29 + $0x60] sm:$0xff]
        %v1717 = vld [vmem:[%s29 + $0x68] sm:$0xff]
        %v1718 = vld [vmem:[%s29 + $0x70] sm:$0xff]
        %v1719 = vld [vmem:[%s29 + $0x78] sm:$0xff]
        %v1736 = vunpack.c.l.b16 %v1704
        %v1737 = vunpack.c.h.b16 %v1704
        %v1738 = vunpack.c.l.b16 %v1705
        %v1739 = vunpack.c.h.b16 %v1705
        %v1740 = vunpack.c.l.b16 %v1706
        %v1741 = vunpack.c.h.b16 %v1706
        %v1742 = vunpack.c.l.b16 %v1707
        %v1743 = vunpack.c.h.b16 %v1707
        %v1744 = vunpack.c.l.b16 %v1708
        %v1745 = vunpack.c.h.b16 %v1708
        %v1746 = vunpack.c.l.b16 %v1709
        %v1747 = vunpack.c.h.b16 %v1709
        %v1748 = vunpack.c.l.b16 %v1710
        %v1749 = vunpack.c.h.b16 %v1710
        %v1750 = vunpack.c.l.b16 %v1711
        %v1751 = vunpack.c.h.b16 %v1711
        %v1752 = vunpack.c.l.b16 %v1712
        %v1753 = vunpack.c.h.b16 %v1712
        %v1754 = vunpack.c.l.b16 %v1713
        %v1755 = vunpack.c.h.b16 %v1713
        %v1756 = vunpack.c.l.b16 %v1714
        %v1757 = vunpack.c.h.b16 %v1714
        %v1758 = vunpack.c.l.b16 %v1715
        %v1759 = vunpack.c.h.b16 %v1715
        %v1760 = vunpack.c.l.b16 %v1716
        %v1761 = vunpack.c.h.b16 %v1716
        %v1762 = vunpack.c.l.b16 %v1717
        %v1763 = vunpack.c.h.b16 %v1717
        %v1764 = vunpack.c.l.b16 %v1718
        %v1765 = vunpack.c.h.b16 %v1718
        %v1766 = vunpack.c.l.b16 %v1719
        %v1767 = vunpack.c.h.b16 %v1719
        %v1768 = vpack.c.b16 %v1738, %v1736
        %v1769 = vpack.c.b16 %v1739, %v1737
        %v1770 = vpack.c.b16 %v1742, %v1740
        %v1771 = vpack.c.b16 %v1743, %v1741
        %v1772 = vpack.c.b16 %v1746, %v1744
        %v1773 = vpack.c.b16 %v1747, %v1745
        %v1774 = vpack.c.b16 %v1750, %v1748
        %v1775 = vpack.c.b16 %v1751, %v1749
        %v1776 = vpack.c.b16 %v1754, %v1752
        %v1777 = vpack.c.b16 %v1755, %v1753
        %v1778 = vpack.c.b16 %v1758, %v1756
        %v1779 = vpack.c.b16 %v1759, %v1757
        %v1780 = vpack.c.b16 %v1762, %v1760
        %v1781 = vpack.c.b16 %v1763, %v1761
        %v1782 = vpack.c.b16 %v1766, %v1764
        %v1783 = vpack.c.b16 %v1767, %v1765
        %1800 = vmatpush.bf16.msra.mxu0 %v1782
        %1801 = vmatpush.bf16.msra.mxu0 %v1780
        %1802 = vmatpush.bf16.msra.mxu0 %v1778
        %1803 = vmatpush.bf16.msra.mxu0 %v1776
        %1804 = vmatpush.bf16.msra.mxu0 %v1774
        %1805 = vmatpush.bf16.msra.mxu0 %v1772
        %1806 = vmatpush.bf16.msra.mxu0 %v1770
        %1807 = vmatpush.bf16.msra.mxu0 %v1768
        %1808 = vmatmul.bf16.gmra.mxu0 %v1703
        %v1809 = vpop.f32.mrf.mxu0
        %v1810 = vadd.f32 0.0, %v1809
        %v1811 = vpop.f32.mrf.mxu0
        %1812 = vdwg.mxu0
        %1813 = vmatpush.bf16.msra.mxu0 %v1783
        %1814 = vmatpush.bf16.msra.mxu0 %v1781
        %1815 = vmatpush.bf16.msra.mxu0 %v1779
        %1816 = vmatpush.bf16.msra.mxu0 %v1777
        %1817 = vmatpush.bf16.msra.mxu0 %v1775
        %1818 = vmatpush.bf16.msra.mxu0 %v1773
        %1819 = vmatpush.bf16.msra.mxu0 %v1771
        %1820 = vmatpush.bf16.msra.mxu0 %v1769
        %1821 = vmatmul.bf16.gmra.mxu0 %v1703
        %v1822 = vpop.f32.mrf.mxu0
        %v1823 = vadd.f32 0.0, %v1822
        %v1824 = vpop.f32.mrf.mxu0
        %1825 = vdwg.mxu0
        %v1842 = vunpack.c.l.b16 %v1687
        %v1843 = vunpack.c.h.b16 %v1687
        %v1844 = vunpack.c.l.b16 %v1688
        %v1845 = vunpack.c.h.b16 %v1688
        %v1846 = vunpack.c.l.b16 %v1689
        %v1847 = vunpack.c.h.b16 %v1689
        %v1848 = vunpack.c.l.b16 %v1690
        %v1849 = vunpack.c.h.b16 %v1690
        %v1850 = vunpack.c.l.b16 %v1691
        %v1851 = vunpack.c.h.b16 %v1691
        %v1852 = vunpack.c.l.b16 %v1692
        %v1853 = vunpack.c.h.b16 %v1692
        %v1854 = vunpack.c.l.b16 %v1693
        %v1855 = vunpack.c.h.b16 %v1693
        %v1856 = vunpack.c.l.b16 %v1694
        %v1857 = vunpack.c.h.b16 %v1694
        %v1858 = vunpack.c.l.b16 %v1695
        %v1859 = vunpack.c.h.b16 %v1695
        %v1860 = vunpack.c.l.b16 %v1696
        %v1861 = vunpack.c.h.b16 %v1696
        %v1862 = vunpack.c.l.b16 %v1697
        %v1863 = vunpack.c.h.b16 %v1697
        %v1864 = vunpack.c.l.b16 %v1698
        %v1865 = vunpack.c.h.b16 %v1698
        %v1866 = vunpack.c.l.b16 %v1699
        %v1867 = vunpack.c.h.b16 %v1699
        %v1868 = vunpack.c.l.b16 %v1700
        %v1869 = vunpack.c.h.b16 %v1700
        %v1870 = vunpack.c.l.b16 %v1701
        %v1871 = vunpack.c.h.b16 %v1701
        %v1872 = vunpack.c.l.b16 %v1702
        %v1873 = vunpack.c.h.b16 %v1702
        %v1874 = vpack.c.b16 %v1844, %v1842
        %v1875 = vpack.c.b16 %v1845, %v1843
        %v1876 = vpack.c.b16 %v1848, %v1846
        %v1877 = vpack.c.b16 %v1849, %v1847
        %v1878 = vpack.c.b16 %v1852, %v1850
        %v1879 = vpack.c.b16 %v1853, %v1851
        %v1880 = vpack.c.b16 %v1856, %v1854
        %v1881 = vpack.c.b16 %v1857, %v1855
        %v1882 = vpack.c.b16 %v1860, %v1858
        %v1883 = vpack.c.b16 %v1861, %v1859
        %v1884 = vpack.c.b16 %v1864, %v1862
        %v1885 = vpack.c.b16 %v1865, %v1863
        %v1886 = vpack.c.b16 %v1868, %v1866
        %v1887 = vpack.c.b16 %v1869, %v1867
        %v1888 = vpack.c.b16 %v1872, %v1870
        %v1889 = vpack.c.b16 %v1873, %v1871
        %1906 = vmatpush.bf16.msra.mxu0 %v1888
        %1907 = vmatpush.bf16.msra.mxu0 %v1886
        %1908 = vmatpush.bf16.msra.mxu0 %v1884
        %1909 = vmatpush.bf16.msra.mxu0 %v1882
        %1910 = vmatpush.bf16.msra.mxu0 %v1880
        %1911 = vmatpush.bf16.msra.mxu0 %v1878
        %1912 = vmatpush.bf16.msra.mxu0 %v1876
        %1913 = vmatpush.bf16.msra.mxu0 %v1874
        %1914 = vmatmul.bf16.gmra.mxu0 %v1686
        %v1915 = vpop.f32.mrf.mxu0
        %v1916 = vadd.f32 %v1810, %v1915
        %v1917 = vpop.f32.mrf.mxu0
        %1918 = vdwg.mxu0
        %1919 = vmatpush.bf16.msra.mxu0 %v1889
        %1920 = vmatpush.bf16.msra.mxu0 %v1887
        %1921 = vmatpush.bf16.msra.mxu0 %v1885
        %1922 = vmatpush.bf16.msra.mxu0 %v1883
        %1923 = vmatpush.bf16.msra.mxu0 %v1881
        %1924 = vmatpush.bf16.msra.mxu0 %v1879
        %1925 = vmatpush.bf16.msra.mxu0 %v1877
        %1926 = vmatpush.bf16.msra.mxu0 %v1875
        %1927 = vmatmul.bf16.gmra.mxu0 %v1686
        %v1928 = vpop.f32.mrf.mxu0
        %v1929 = vadd.f32 %v1823, %v1928
        %v1930 = vpop.f32.mrf.mxu0
        %1931 = vdwg.mxu0
        %v1932 = vpack.c.bf16 %v1684, %v1684
        %v1933 = vpack.c.bf16 %v1685, %v1685
        %v1934 = vld [vmem:[%s31] sm:$0xff]
        %v1935 = vld [vmem:[%s31 + $0x8] sm:$0xff]
        %v1936 = vld [vmem:[%s31 + $0x10] sm:$0xff]
        %v1937 = vld [vmem:[%s31 + $0x18] sm:$0xff]
        %v1938 = vld [vmem:[%s31 + $0x20] sm:$0xff]
        %v1939 = vld [vmem:[%s31 + $0x28] sm:$0xff]
        %v1940 = vld [vmem:[%s31 + $0x30] sm:$0xff]
        %v1941 = vld [vmem:[%s31 + $0x38] sm:$0xff]
        %v1942 = vld [vmem:[%s31 + $0x40] sm:$0xff]
        %v1943 = vld [vmem:[%s31 + $0x48] sm:$0xff]
        %v1944 = vld [vmem:[%s31 + $0x50] sm:$0xff]
        %v1945 = vld [vmem:[%s31 + $0x58] sm:$0xff]
        %v1946 = vld [vmem:[%s31 + $0x60] sm:$0xff]
        %v1947 = vld [vmem:[%s31 + $0x68] sm:$0xff]
        %v1948 = vld [vmem:[%s31 + $0x70] sm:$0xff]
        %v1949 = vld [vmem:[%s31 + $0x78] sm:$0xff]
        %v1950 = vld [vmem:[%s31 + $0x80] sm:$0xff]
        %v1951 = vld [vmem:[%s31 + $0x88] sm:$0xff]
        %v1952 = vld [vmem:[%s31 + $0x90] sm:$0xff]
        %v1953 = vld [vmem:[%s31 + $0x98] sm:$0xff]
        %v1954 = vld [vmem:[%s31 + $0xa0] sm:$0xff]
        %v1955 = vld [vmem:[%s31 + $0xa8] sm:$0xff]
        %v1956 = vld [vmem:[%s31 + $0xb0] sm:$0xff]
        %v1957 = vld [vmem:[%s31 + $0xb8] sm:$0xff]
        %v1958 = vld [vmem:[%s31 + $0xc0] sm:$0xff]
        %v1959 = vld [vmem:[%s31 + $0xc8] sm:$0xff]
        %v1960 = vld [vmem:[%s31 + $0xd0] sm:$0xff]
        %v1961 = vld [vmem:[%s31 + $0xd8] sm:$0xff]
        %v1962 = vld [vmem:[%s31 + $0xe0] sm:$0xff]
        %v1963 = vld [vmem:[%s31 + $0xe8] sm:$0xff]
        %v1964 = vld [vmem:[%s31 + $0xf0] sm:$0xff]
        %v1965 = vld [vmem:[%s31 + $0xf8] sm:$0xff]
        %v1998 = vunpack.c.l.b16 %v1934
        %v1999 = vunpack.c.h.b16 %v1934
        %v2000 = vunpack.c.l.b16 %v1935
        %v2001 = vunpack.c.h.b16 %v1935
        %v2002 = vunpack.c.l.b16 %v1936
        %v2003 = vunpack.c.h.b16 %v1936
        %v2004 = vunpack.c.l.b16 %v1937
        %v2005 = vunpack.c.h.b16 %v1937
        %v2006 = vunpack.c.l.b16 %v1938
        %v2007 = vunpack.c.h.b16 %v1938
        %v2008 = vunpack.c.l.b16 %v1939
        %v2009 = vunpack.c.h.b16 %v1939
        %v2010 = vunpack.c.l.b16 %v1940
        %v2011 = vunpack.c.h.b16 %v1940
        %v2012 = vunpack.c.l.b16 %v1941
        %v2013 = vunpack.c.h.b16 %v1941
        %v2014 = vunpack.c.l.b16 %v1942
        %v2015 = vunpack.c.h.b16 %v1942
        %v2016 = vunpack.c.l.b16 %v1943
        %v2017 = vunpack.c.h.b16 %v1943
        %v2018 = vunpack.c.l.b16 %v1944
        %v2019 = vunpack.c.h.b16 %v1944
        %v2020 = vunpack.c.l.b16 %v1945
        %v2021 = vunpack.c.h.b16 %v1945
        %v2022 = vunpack.c.l.b16 %v1946
        %v2023 = vunpack.c.h.b16 %v1946
        %v2024 = vunpack.c.l.b16 %v1947
        %v2025 = vunpack.c.h.b16 %v1947
        %v2026 = vunpack.c.l.b16 %v1948
        %v2027 = vunpack.c.h.b16 %v1948
        %v2028 = vunpack.c.l.b16 %v1949
        %v2029 = vunpack.c.h.b16 %v1949
        %v2030 = vunpack.c.l.b16 %v1950
        %v2031 = vunpack.c.h.b16 %v1950
        %v2032 = vunpack.c.l.b16 %v1951
        %v2033 = vunpack.c.h.b16 %v1951
        %v2034 = vunpack.c.l.b16 %v1952
        %v2035 = vunpack.c.h.b16 %v1952
        %v2036 = vunpack.c.l.b16 %v1953
        %v2037 = vunpack.c.h.b16 %v1953
        %v2038 = vunpack.c.l.b16 %v1954
        %v2039 = vunpack.c.h.b16 %v1954
        %v2040 = vunpack.c.l.b16 %v1955
        %v2041 = vunpack.c.h.b16 %v1955
        %v2042 = vunpack.c.l.b16 %v1956
        %v2043 = vunpack.c.h.b16 %v1956
        %v2044 = vunpack.c.l.b16 %v1957
        %v2045 = vunpack.c.h.b16 %v1957
        %v2046 = vunpack.c.l.b16 %v1958
        %v2047 = vunpack.c.h.b16 %v1958
        %v2048 = vunpack.c.l.b16 %v1959
        %v2049 = vunpack.c.h.b16 %v1959
        %v2050 = vunpack.c.l.b16 %v1960
        %v2051 = vunpack.c.h.b16 %v1960
        %v2052 = vunpack.c.l.b16 %v1961
        %v2053 = vunpack.c.h.b16 %v1961
        %v2054 = vunpack.c.l.b16 %v1962
        %v2055 = vunpack.c.h.b16 %v1962
        %v2056 = vunpack.c.l.b16 %v1963
        %v2057 = vunpack.c.h.b16 %v1963
        %v2058 = vunpack.c.l.b16 %v1964
        %v2059 = vunpack.c.h.b16 %v1964
        %v2060 = vunpack.c.l.b16 %v1965
        %v2061 = vunpack.c.h.b16 %v1965
        %v2062 = vpack.c.b16 %v2000, %v1998
        %v2063 = vpack.c.b16 %v2001, %v1999
        %v2064 = vpack.c.b16 %v2004, %v2002
        %v2065 = vpack.c.b16 %v2005, %v2003
        %v2066 = vpack.c.b16 %v2008, %v2006
        %v2067 = vpack.c.b16 %v2009, %v2007
        %v2068 = vpack.c.b16 %v2012, %v2010
        %v2069 = vpack.c.b16 %v2013, %v2011
        %v2070 = vpack.c.b16 %v2016, %v2014
        %v2071 = vpack.c.b16 %v2017, %v2015
        %v2072 = vpack.c.b16 %v2020, %v2018
        %v2073 = vpack.c.b16 %v2021, %v2019
        %v2074 = vpack.c.b16 %v2024, %v2022
        %v2075 = vpack.c.b16 %v2025, %v2023
        %v2076 = vpack.c.b16 %v2028, %v2026
        %v2077 = vpack.c.b16 %v2029, %v2027
        %v2078 = vpack.c.b16 %v2032, %v2030
        %v2079 = vpack.c.b16 %v2033, %v2031
        %v2080 = vpack.c.b16 %v2036, %v2034
        %v2081 = vpack.c.b16 %v2037, %v2035
        %v2082 = vpack.c.b16 %v2040, %v2038
        %v2083 = vpack.c.b16 %v2041, %v2039
        %v2084 = vpack.c.b16 %v2044, %v2042
        %v2085 = vpack.c.b16 %v2045, %v2043
        %v2086 = vpack.c.b16 %v2048, %v2046
        %v2087 = vpack.c.b16 %v2049, %v2047
        %v2088 = vpack.c.b16 %v2052, %v2050
        %v2089 = vpack.c.b16 %v2053, %v2051
        %v2090 = vpack.c.b16 %v2056, %v2054
        %v2091 = vpack.c.b16 %v2057, %v2055
        %v2092 = vpack.c.b16 %v2060, %v2058
        %v2093 = vpack.c.b16 %v2061, %v2059
        %2126 = vmatpush.bf16.msra.mxu0 %v2076
        %2127 = vmatpush.bf16.msra.mxu0 %v2074
        %2128 = vmatpush.bf16.msra.mxu0 %v2072
        %2129 = vmatpush.bf16.msra.mxu0 %v2070
        %2130 = vmatpush.bf16.msra.mxu0 %v2068
        %2131 = vmatpush.bf16.msra.mxu0 %v2066
        %2132 = vmatpush.bf16.msra.mxu0 %v2064
        %2133 = vmatpush.bf16.msra.mxu0 %v2062
        %2134 = vmatmul.bf16.gmra.mxu0 %v1932
        %v2135 = vpop.f32.mrf.mxu0
        %v2136 = vadd.f32 0.0, %v2135
        %v2137 = vpop.f32.mrf.mxu0
        %2138 = vdwg.mxu0
        %2139 = vmatpush.bf16.msra.mxu0 %v2092
        %2140 = vmatpush.bf16.msra.mxu0 %v2090
        %2141 = vmatpush.bf16.msra.mxu0 %v2088
        %2142 = vmatpush.bf16.msra.mxu0 %v2086
        %2143 = vmatpush.bf16.msra.mxu0 %v2084
        %2144 = vmatpush.bf16.msra.mxu0 %v2082
        %2145 = vmatpush.bf16.msra.mxu0 %v2080
        %2146 = vmatpush.bf16.msra.mxu0 %v2078
        %2147 = vmatmul.bf16.gmra.mxu0 %v1933
        %v2148 = vpop.f32.mrf.mxu0
        %v2149 = vadd.f32 %v2136, %v2148
        %v2150 = vpop.f32.mrf.mxu0
        %2151 = vdwg.mxu0
        %2152 = vmatpush.bf16.msra.mxu0 %v2077
        %2153 = vmatpush.bf16.msra.mxu0 %v2075
        %2154 = vmatpush.bf16.msra.mxu0 %v2073
        %2155 = vmatpush.bf16.msra.mxu0 %v2071
        %2156 = vmatpush.bf16.msra.mxu0 %v2069
        %2157 = vmatpush.bf16.msra.mxu0 %v2067
        %2158 = vmatpush.bf16.msra.mxu0 %v2065
        %2159 = vmatpush.bf16.msra.mxu0 %v2063
        %2160 = vmatmul.bf16.gmra.mxu0 %v1932
        %v2161 = vpop.f32.mrf.mxu0
        %v2162 = vadd.f32 0.0, %v2161
        %v2163 = vpop.f32.mrf.mxu0
        %2164 = vdwg.mxu0
        %2165 = vmatpush.bf16.msra.mxu0 %v2093
        %2166 = vmatpush.bf16.msra.mxu0 %v2091
        %2167 = vmatpush.bf16.msra.mxu0 %v2089
        %2168 = vmatpush.bf16.msra.mxu0 %v2087
        %2169 = vmatpush.bf16.msra.mxu0 %v2085
        %2170 = vmatpush.bf16.msra.mxu0 %v2083
        %2171 = vmatpush.bf16.msra.mxu0 %v2081
        %2172 = vmatpush.bf16.msra.mxu0 %v2079
        %2173 = vmatmul.bf16.gmra.mxu0 %v1933
        %v2174 = vpop.f32.mrf.mxu0
        %v2175 = vadd.f32 %v2162, %v2174
        %v2176 = vpop.f32.mrf.mxu0
        %2177 = vdwg.mxu0
        %v2178 = vadd.f32 %v1916, %v2149
        %v2179 = vadd.f32 %v1929, %v2175
        %v2180 = vld [vmem:[%s33] sm:$0x3]
        %v2182 = vperm.slane %v2180, 0
        %v2183 = vperm.slane %v2180, 1
        %v2186 = vadd.f32 %v2178, %v2182
        %v2187 = vadd.f32 %v2179, %v2183
        %vm2188 = vcmp.ge.f32.partialorder %v2186, 0.0
        %vm2189 = vcmp.ge.f32.partialorder %v2187, 0.0
        %v2190 = vmul.f32 %v2186, 0.01
        %v2191 = vmul.f32 %v2187, 0.01
        %v2192 = vsel %vm2188, %v2186, %v2190
        %v2193 = vsel %vm2189, %v2187, %v2191
        %v2194 = vmul.f32 %v1684, %v1214
        %v2195 = vmul.f32 %v1685, %v1215
        %v2196 = vadd.f32 %v2192, %v2194
        %v2197 = vadd.f32 %v2193, %v2195
        %v2198 = vld [vmem:[%s1195] sm:$0xff]
        %v2199 = vld [vmem:[%s35] sm:$0x3]
        %v2200 = vld [vmem:[%s37] sm:$0x3]
        %v2201 = vadd.f32 %v2196, %v2197
        %2202 = vadd.xlane.f32.xlu0 %v2201
        %v2203 = vpop.xlane.xlu0 %2202
        %v2204 = vmul.f32 %v2203, 0.004016064
        %v2205 = vsub.f32 %v2196, %v2204
        %v2206 = vsub.f32 %v2197, %v2204
        %v2207 = vmul.f32 %v2205, %v1208
        %v2208 = vmul.f32 %v2206, %v1209
        %v2209 = vmul.f32 %v2207, %v2207
        %v2210 = vmul.f32 %v2208, %v2208
        %v2211 = vadd.f32 %v2209, %v2210
        %2212 = vadd.xlane.f32.xlu0 %v2211
        %v2213 = vpop.xlane.xlu0 %2212
        %v2214 = vmul.f32 %v2213, 0.004016064
        %v2215 = vadd.f32 %v2214, 1e-05
        %v2216 = vrsqrt.pop %v2215
        %v2217 = vmul.f32 %v2216, %v2215
        %v2218 = vmul.f32 %v2217, %v2216
        %v2219 = vmul.f32 0.5, %v2218
        %v2220 = vsub.f32 1.5, %v2219
        %v2221 = vmul.f32 %v2216, %v2220
        %vm2222 = vweird.f32 %v2215
        %vm2223 = vweird.f32 %v2216
        %vm2224 = vmor %vm2222, %vm2223
        %v2225 = vsel %vm2224, %v2216, %v2221
        %v2226 = vmul.f32 %v2207, %v2225
        %v2227 = vmul.f32 %v2208, %v2225
        %v2229 = vperm.slane %v2199, 0
        %v2230 = vperm.slane %v2199, 1
        %v2233 = vmul.f32 %v2226, %v2229
        %v2234 = vmul.f32 %v2227, %v2230
        %v2236 = vperm.slane %v2200, 0
        %v2237 = vperm.slane %v2200, 1
        %v2240 = vadd.f32 %v2233, %v2236
        %v2241 = vadd.f32 %v2234, %v2237
        %v2242 = vpack.c.bf16 %v2240, %v2240
        %v2243 = vpack.c.bf16 %v2241, %v2241
        %v2244 = vld [vmem:[%s39] sm:$0xff]
        %v2245 = vld [vmem:[%s39 + $0x8] sm:$0xff]
        %v2246 = vld [vmem:[%s39 + $0x10] sm:$0xff]
        %v2247 = vld [vmem:[%s39 + $0x18] sm:$0xff]
        %v2248 = vld [vmem:[%s39 + $0x20] sm:$0xff]
        %v2249 = vld [vmem:[%s39 + $0x28] sm:$0xff]
        %v2250 = vld [vmem:[%s39 + $0x30] sm:$0xff]
        %v2251 = vld [vmem:[%s39 + $0x38] sm:$0xff]
        %v2252 = vld [vmem:[%s39 + $0x40] sm:$0xff]
        %v2253 = vld [vmem:[%s39 + $0x48] sm:$0xff]
        %v2254 = vld [vmem:[%s39 + $0x50] sm:$0xff]
        %v2255 = vld [vmem:[%s39 + $0x58] sm:$0xff]
        %v2256 = vld [vmem:[%s39 + $0x60] sm:$0xff]
        %v2257 = vld [vmem:[%s39 + $0x68] sm:$0xff]
        %v2258 = vld [vmem:[%s39 + $0x70] sm:$0xff]
        %v2259 = vld [vmem:[%s39 + $0x78] sm:$0xff]
        %v2260 = vld [vmem:[%s39 + $0x80] sm:$0xff]
        %v2261 = vld [vmem:[%s39 + $0x88] sm:$0xff]
        %v2262 = vld [vmem:[%s39 + $0x90] sm:$0xff]
        %v2263 = vld [vmem:[%s39 + $0x98] sm:$0xff]
        %v2264 = vld [vmem:[%s39 + $0xa0] sm:$0xff]
        %v2265 = vld [vmem:[%s39 + $0xa8] sm:$0xff]
        %v2266 = vld [vmem:[%s39 + $0xb0] sm:$0xff]
        %v2267 = vld [vmem:[%s39 + $0xb8] sm:$0xff]
        %v2268 = vld [vmem:[%s39 + $0xc0] sm:$0xff]
        %v2269 = vld [vmem:[%s39 + $0xc8] sm:$0xff]
        %v2270 = vld [vmem:[%s39 + $0xd0] sm:$0xff]
        %v2271 = vld [vmem:[%s39 + $0xd8] sm:$0xff]
        %v2272 = vld [vmem:[%s39 + $0xe0] sm:$0xff]
        %v2273 = vld [vmem:[%s39 + $0xe8] sm:$0xff]
        %v2274 = vld [vmem:[%s39 + $0xf0] sm:$0xff]
        %v2275 = vld [vmem:[%s39 + $0xf8] sm:$0xff]
        %v2276 = vld [vmem:[%s39 + $0x100] sm:$0xff]
        %v2277 = vld [vmem:[%s39 + $0x108] sm:$0xff]
        %v2278 = vld [vmem:[%s39 + $0x110] sm:$0xff]
        %v2279 = vld [vmem:[%s39 + $0x118] sm:$0xff]
        %v2280 = vld [vmem:[%s39 + $0x120] sm:$0xff]
        %v2281 = vld [vmem:[%s39 + $0x128] sm:$0xff]
        %v2282 = vld [vmem:[%s39 + $0x130] sm:$0xff]
        %v2283 = vld [vmem:[%s39 + $0x138] sm:$0xff]
        %v2284 = vld [vmem:[%s39 + $0x140] sm:$0xff]
        %v2285 = vld [vmem:[%s39 + $0x148] sm:$0xff]
        %v2286 = vld [vmem:[%s39 + $0x150] sm:$0xff]
        %v2287 = vld [vmem:[%s39 + $0x158] sm:$0xff]
        %v2288 = vld [vmem:[%s39 + $0x160] sm:$0xff]
        %v2289 = vld [vmem:[%s39 + $0x168] sm:$0xff]
        %v2290 = vld [vmem:[%s39 + $0x170] sm:$0xff]
        %v2291 = vld [vmem:[%s39 + $0x178] sm:$0xff]
        %v2292 = vld [vmem:[%s39 + $0x180] sm:$0xff]
        %v2293 = vld [vmem:[%s39 + $0x188] sm:$0xff]
        %v2294 = vld [vmem:[%s39 + $0x190] sm:$0xff]
        %v2295 = vld [vmem:[%s39 + $0x198] sm:$0xff]
        %v2296 = vld [vmem:[%s39 + $0x1a0] sm:$0xff]
        %v2297 = vld [vmem:[%s39 + $0x1a8] sm:$0xff]
        %v2298 = vld [vmem:[%s39 + $0x1b0] sm:$0xff]
        %v2299 = vld [vmem:[%s39 + $0x1b8] sm:$0xff]
        %v2300 = vld [vmem:[%s39 + $0x1c0] sm:$0xff]
        %v2301 = vld [vmem:[%s39 + $0x1c8] sm:$0xff]
        %v2302 = vld [vmem:[%s39 + $0x1d0] sm:$0xff]
        %v2303 = vld [vmem:[%s39 + $0x1d8] sm:$0xff]
        %v2304 = vld [vmem:[%s39 + $0x1e0] sm:$0xff]
        %v2305 = vld [vmem:[%s39 + $0x1e8] sm:$0xff]
        %v2306 = vld [vmem:[%s39 + $0x1f0] sm:$0xff]
        %v2307 = vld [vmem:[%s39 + $0x1f8] sm:$0xff]
        %v2308 = vld [vmem:[%s39 + $0x200] sm:$0xff]
        %v2309 = vld [vmem:[%s39 + $0x208] sm:$0xff]
        %v2310 = vld [vmem:[%s39 + $0x210] sm:$0xff]
        %v2311 = vld [vmem:[%s39 + $0x218] sm:$0xff]
        %v2312 = vld [vmem:[%s39 + $0x220] sm:$0xff]
        %v2313 = vld [vmem:[%s39 + $0x228] sm:$0xff]
        %v2314 = vld [vmem:[%s39 + $0x230] sm:$0xff]
        %v2315 = vld [vmem:[%s39 + $0x238] sm:$0xff]
        %v2316 = vld [vmem:[%s39 + $0x240] sm:$0xff]
        %v2317 = vld [vmem:[%s39 + $0x248] sm:$0xff]
        %v2318 = vld [vmem:[%s39 + $0x250] sm:$0xff]
        %v2319 = vld [vmem:[%s39 + $0x258] sm:$0xff]
        %v2320 = vld [vmem:[%s39 + $0x260] sm:$0xff]
        %v2321 = vld [vmem:[%s39 + $0x268] sm:$0xff]
        %v2322 = vld [vmem:[%s39 + $0x270] sm:$0xff]
        %v2323 = vld [vmem:[%s39 + $0x278] sm:$0xff]
        %v2324 = vld [vmem:[%s39 + $0x280] sm:$0xff]
        %v2325 = vld [vmem:[%s39 + $0x288] sm:$0xff]
        %v2326 = vld [vmem:[%s39 + $0x290] sm:$0xff]
        %v2327 = vld [vmem:[%s39 + $0x298] sm:$0xff]
        %v2328 = vld [vmem:[%s39 + $0x2a0] sm:$0xff]
        %v2329 = vld [vmem:[%s39 + $0x2a8] sm:$0xff]
        %v2330 = vld [vmem:[%s39 + $0x2b0] sm:$0xff]
        %v2331 = vld [vmem:[%s39 + $0x2b8] sm:$0xff]
        %v2332 = vld [vmem:[%s39 + $0x2c0] sm:$0xff]
        %v2333 = vld [vmem:[%s39 + $0x2c8] sm:$0xff]
        %v2334 = vld [vmem:[%s39 + $0x2d0] sm:$0xff]
        %v2335 = vld [vmem:[%s39 + $0x2d8] sm:$0xff]
        %v2336 = vld [vmem:[%s39 + $0x2e0] sm:$0xff]
        %v2337 = vld [vmem:[%s39 + $0x2e8] sm:$0xff]
        %v2338 = vld [vmem:[%s39 + $0x2f0] sm:$0xff]
        %v2339 = vld [vmem:[%s39 + $0x2f8] sm:$0xff]
        %v2340 = vld [vmem:[%s41] sm:$0x3f]
        %v2342 = vperm.slane %v2340, 0
        %v2343 = vperm.slane %v2340, 1
        %v2344 = vperm.slane %v2340, 2
        %v2345 = vperm.slane %v2340, 3
        %v2346 = vperm.slane %v2340, 4
        %v2347 = vperm.slane %v2340, 5
        %v2450 = vunpack.c.l.b16 %v2244
        %v2451 = vunpack.c.h.b16 %v2244
        %v2452 = vunpack.c.l.b16 %v2245
        %v2453 = vunpack.c.h.b16 %v2245
        %v2454 = vunpack.c.l.b16 %v2246
        %v2455 = vunpack.c.h.b16 %v2246
        %v2456 = vunpack.c.l.b16 %v2247
        %v2457 = vunpack.c.h.b16 %v2247
        %v2458 = vunpack.c.l.b16 %v2248
        %v2459 = vunpack.c.h.b16 %v2248
        %v2460 = vunpack.c.l.b16 %v2249
        %v2461 = vunpack.c.h.b16 %v2249
        %v2462 = vunpack.c.l.b16 %v2250
        %v2463 = vunpack.c.h.b16 %v2250
        %v2464 = vunpack.c.l.b16 %v2251
        %v2465 = vunpack.c.h.b16 %v2251
        %v2466 = vunpack.c.l.b16 %v2252
        %v2467 = vunpack.c.h.b16 %v2252
        %v2468 = vunpack.c.l.b16 %v2253
        %v2469 = vunpack.c.h.b16 %v2253
        %v2470 = vunpack.c.l.b16 %v2254
        %v2471 = vunpack.c.h.b16 %v2254
        %v2472 = vunpack.c.l.b16 %v2255
        %v2473 = vunpack.c.h.b16 %v2255
        %v2474 = vunpack.c.l.b16 %v2256
        %v2475 = vunpack.c.h.b16 %v2256
        %v2476 = vunpack.c.l.b16 %v2257
        %v2477 = vunpack.c.h.b16 %v2257
        %v2478 = vunpack.c.l.b16 %v2258
        %v2479 = vunpack.c.h.b16 %v2258
        %v2480 = vunpack.c.l.b16 %v2259
        %v2481 = vunpack.c.h.b16 %v2259
        %v2482 = vunpack.c.l.b16 %v2260
        %v2483 = vunpack.c.h.b16 %v2260
        %v2484 = vunpack.c.l.b16 %v2261
        %v2485 = vunpack.c.h.b16 %v2261
        %v2486 = vunpack.c.l.b16 %v2262
        %v2487 = vunpack.c.h.b16 %v2262
        %v2488 = vunpack.c.l.b16 %v2263
        %v2489 = vunpack.c.h.b16 %v2263
        %v2490 = vunpack.c.l.b16 %v2264
        %v2491 = vunpack.c.h.b16 %v2264
        %v2492 = vunpack.c.l.b16 %v2265
        %v2493 = vunpack.c.h.b16 %v2265
        %v2494 = vunpack.c.l.b16 %v2266
        %v2495 = vunpack.c.h.b16 %v2266
        %v2496 = vunpack.c.l.b16 %v2267
        %v2497 = vunpack.c.h.b16 %v2267
        %v2498 = vunpack.c.l.b16 %v2268
        %v2499 = vunpack.c.h.b16 %v2268
        %v2500 = vunpack.c.l.b16 %v2269
        %v2501 = vunpack.c.h.b16 %v2269
        %v2502 = vunpack.c.l.b16 %v2270
        %v2503 = vunpack.c.h.b16 %v2270
        %v2504 = vunpack.c.l.b16 %v2271
        %v2505 = vunpack.c.h.b16 %v2271
        %v2506 = vunpack.c.l.b16 %v2272
        %v2507 = vunpack.c.h.b16 %v2272
        %v2508 = vunpack.c.l.b16 %v2273
        %v2509 = vunpack.c.h.b16 %v2273
        %v2510 = vunpack.c.l.b16 %v2274
        %v2511 = vunpack.c.h.b16 %v2274
        %v2512 = vunpack.c.l.b16 %v2275
        %v2513 = vunpack.c.h.b16 %v2275
        %v2514 = vunpack.c.l.b16 %v2276
        %v2515 = vunpack.c.h.b16 %v2276
        %v2516 = vunpack.c.l.b16 %v2277
        %v2517 = vunpack.c.h.b16 %v2277
        %v2518 = vunpack.c.l.b16 %v2278
        %v2519 = vunpack.c.h.b16 %v2278
        %v2520 = vunpack.c.l.b16 %v2279
        %v2521 = vunpack.c.h.b16 %v2279
        %v2522 = vunpack.c.l.b16 %v2280
        %v2523 = vunpack.c.h.b16 %v2280
        %v2524 = vunpack.c.l.b16 %v2281
        %v2525 = vunpack.c.h.b16 %v2281
        %v2526 = vunpack.c.l.b16 %v2282
        %v2527 = vunpack.c.h.b16 %v2282
        %v2528 = vunpack.c.l.b16 %v2283
        %v2529 = vunpack.c.h.b16 %v2283
        %v2530 = vunpack.c.l.b16 %v2284
        %v2531 = vunpack.c.h.b16 %v2284
        %v2532 = vunpack.c.l.b16 %v2285
        %v2533 = vunpack.c.h.b16 %v2285
        %v2534 = vunpack.c.l.b16 %v2286
        %v2535 = vunpack.c.h.b16 %v2286
        %v2536 = vunpack.c.l.b16 %v2287
        %v2537 = vunpack.c.h.b16 %v2287
        %v2538 = vunpack.c.l.b16 %v2288
        %v2539 = vunpack.c.h.b16 %v2288
        %v2540 = vunpack.c.l.b16 %v2289
        %v2541 = vunpack.c.h.b16 %v2289
        %v2542 = vunpack.c.l.b16 %v2290
        %v2543 = vunpack.c.h.b16 %v2290
        %v2544 = vunpack.c.l.b16 %v2291
        %v2545 = vunpack.c.h.b16 %v2291
        %v2546 = vunpack.c.l.b16 %v2292
        %v2547 = vunpack.c.h.b16 %v2292
        %v2548 = vunpack.c.l.b16 %v2293
        %v2549 = vunpack.c.h.b16 %v2293
        %v2550 = vunpack.c.l.b16 %v2294
        %v2551 = vunpack.c.h.b16 %v2294
        %v2552 = vunpack.c.l.b16 %v2295
        %v2553 = vunpack.c.h.b16 %v2295
        %v2554 = vunpack.c.l.b16 %v2296
        %v2555 = vunpack.c.h.b16 %v2296
        %v2556 = vunpack.c.l.b16 %v2297
        %v2557 = vunpack.c.h.b16 %v2297
        %v2558 = vunpack.c.l.b16 %v2298
        %v2559 = vunpack.c.h.b16 %v2298
        %v2560 = vunpack.c.l.b16 %v2299
        %v2561 = vunpack.c.h.b16 %v2299
        %v2562 = vunpack.c.l.b16 %v2300
        %v2563 = vunpack.c.h.b16 %v2300
        %v2564 = vunpack.c.l.b16 %v2301
        %v2565 = vunpack.c.h.b16 %v2301
        %v2566 = vunpack.c.l.b16 %v2302
        %v2567 = vunpack.c.h.b16 %v2302
        %v2568 = vunpack.c.l.b16 %v2303
        %v2569 = vunpack.c.h.b16 %v2303
        %v2570 = vunpack.c.l.b16 %v2304
        %v2571 = vunpack.c.h.b16 %v2304
        %v2572 = vunpack.c.l.b16 %v2305
        %v2573 = vunpack.c.h.b16 %v2305
        %v2574 = vunpack.c.l.b16 %v2306
        %v2575 = vunpack.c.h.b16 %v2306
        %v2576 = vunpack.c.l.b16 %v2307
        %v2577 = vunpack.c.h.b16 %v2307
        %v2578 = vunpack.c.l.b16 %v2308
        %v2579 = vunpack.c.h.b16 %v2308
        %v2580 = vunpack.c.l.b16 %v2309
        %v2581 = vunpack.c.h.b16 %v2309
        %v2582 = vunpack.c.l.b16 %v2310
        %v2583 = vunpack.c.h.b16 %v2310
        %v2584 = vunpack.c.l.b16 %v2311
        %v2585 = vunpack.c.h.b16 %v2311
        %v2586 = vunpack.c.l.b16 %v2312
        %v2587 = vunpack.c.h.b16 %v2312
        %v2588 = vunpack.c.l.b16 %v2313
        %v2589 = vunpack.c.h.b16 %v2313
        %v2590 = vunpack.c.l.b16 %v2314
        %v2591 = vunpack.c.h.b16 %v2314
        %v2592 = vunpack.c.l.b16 %v2315
        %v2593 = vunpack.c.h.b16 %v2315
        %v2594 = vunpack.c.l.b16 %v2316
        %v2595 = vunpack.c.h.b16 %v2316
        %v2596 = vunpack.c.l.b16 %v2317
        %v2597 = vunpack.c.h.b16 %v2317
        %v2598 = vunpack.c.l.b16 %v2318
        %v2599 = vunpack.c.h.b16 %v2318
        %v2600 = vunpack.c.l.b16 %v2319
        %v2601 = vunpack.c.h.b16 %v2319
        %v2602 = vunpack.c.l.b16 %v2320
        %v2603 = vunpack.c.h.b16 %v2320
        %v2604 = vunpack.c.l.b16 %v2321
        %v2605 = vunpack.c.h.b16 %v2321
        %v2606 = vunpack.c.l.b16 %v2322
        %v2607 = vunpack.c.h.b16 %v2322
        %v2608 = vunpack.c.l.b16 %v2323
        %v2609 = vunpack.c.h.b16 %v2323
        %v2610 = vunpack.c.l.b16 %v2324
        %v2611 = vunpack.c.h.b16 %v2324
        %v2612 = vunpack.c.l.b16 %v2325
        %v2613 = vunpack.c.h.b16 %v2325
        %v2614 = vunpack.c.l.b16 %v2326
        %v2615 = vunpack.c.h.b16 %v2326
        %v2616 = vunpack.c.l.b16 %v2327
        %v2617 = vunpack.c.h.b16 %v2327
        %v2618 = vunpack.c.l.b16 %v2328
        %v2619 = vunpack.c.h.b16 %v2328
        %v2620 = vunpack.c.l.b16 %v2329
        %v2621 = vunpack.c.h.b16 %v2329
        %v2622 = vunpack.c.l.b16 %v2330
        %v2623 = vunpack.c.h.b16 %v2330
        %v2624 = vunpack.c.l.b16 %v2331
        %v2625 = vunpack.c.h.b16 %v2331
        %v2626 = vunpack.c.l.b16 %v2332
        %v2627 = vunpack.c.h.b16 %v2332
        %v2628 = vunpack.c.l.b16 %v2333
        %v2629 = vunpack.c.h.b16 %v2333
        %v2630 = vunpack.c.l.b16 %v2334
        %v2631 = vunpack.c.h.b16 %v2334
        %v2632 = vunpack.c.l.b16 %v2335
        %v2633 = vunpack.c.h.b16 %v2335
        %v2634 = vunpack.c.l.b16 %v2336
        %v2635 = vunpack.c.h.b16 %v2336
        %v2636 = vunpack.c.l.b16 %v2337
        %v2637 = vunpack.c.h.b16 %v2337
        %v2638 = vunpack.c.l.b16 %v2338
        %v2639 = vunpack.c.h.b16 %v2338
        %v2640 = vunpack.c.l.b16 %v2339
        %v2641 = vunpack.c.h.b16 %v2339
        %v2642 = vpack.c.b16 %v2456, %v2450
        %v2643 = vpack.c.b16 %v2457, %v2451
        %v2644 = vpack.c.b16 %v2458, %v2452
        %v2645 = vpack.c.b16 %v2459, %v2453
        %v2646 = vpack.c.b16 %v2460, %v2454
        %v2647 = vpack.c.b16 %v2461, %v2455
        %v2648 = vpack.c.b16 %v2468, %v2462
        %v2649 = vpack.c.b16 %v2469, %v2463
        %v2650 = vpack.c.b16 %v2470, %v2464
        %v2651 = vpack.c.b16 %v2471, %v2465
        %v2652 = vpack.c.b16 %v2472, %v2466
        %v2653 = vpack.c.b16 %v2473, %v2467
        %v2654 = vpack.c.b16 %v2480, %v2474
        %v2655 = vpack.c.b16 %v2481, %v2475
        %v2656 = vpack.c.b16 %v2482, %v2476
        %v2657 = vpack.c.b16 %v2483, %v2477
        %v2658 = vpack.c.b16 %v2484, %v2478
        %v2659 = vpack.c.b16 %v2485, %v2479
        %v2660 = vpack.c.b16 %v2492, %v2486
        %v2661 = vpack.c.b16 %v2493, %v2487
        %v2662 = vpack.c.b16 %v2494, %v2488
        %v2663 = vpack.c.b16 %v2495, %v2489
        %v2664 = vpack.c.b16 %v2496, %v2490
        %v2665 = vpack.c.b16 %v2497, %v2491
        %v2666 = vpack.c.b16 %v2504, %v2498
        %v2667 = vpack.c.b16 %v2505, %v2499
        %v2668 = vpack.c.b16 %v2506, %v2500
        %v2669 = vpack.c.b16 %v2507, %v2501
        %v2670 = vpack.c.b16 %v2508, %v2502
        %v2671 = vpack.c.b16 %v2509, %v2503
        %v2672 = vpack.c.b16 %v2516, %v2510
        %v2673 = vpack.c.b16 %v2517, %v2511
        %v2674 = vpack.c.b16 %v2518, %v2512
        %v2675 = vpack.c.b16 %v2519, %v2513
        %v2676 = vpack.c.b16 %v2520, %v2514
        %v2677 = vpack.c.b16 %v2521, %v2515
        %v2678 = vpack.c.b16 %v2528, %v2522
        %v2679 = vpack.c.b16 %v2529, %v2523
        %v2680 = vpack.c.b16 %v2530, %v2524
        %v2681 = vpack.c.b16 %v2531, %v2525
        %v2682 = vpack.c.b16 %v2532, %v2526
        %v2683 = vpack.c.b16 %v2533, %v2527
        %v2684 = vpack.c.b16 %v2540, %v2534
        %v2685 = vpack.c.b16 %v2541, %v2535
        %v2686 = vpack.c.b16 %v2542, %v2536
        %v2687 = vpack.c.b16 %v2543, %v2537
        %v2688 = vpack.c.b16 %v2544, %v2538
        %v2689 = vpack.c.b16 %v2545, %v2539
        %v2690 = vpack.c.b16 %v2552, %v2546
        %v2691 = vpack.c.b16 %v2553, %v2547
        %v2692 = vpack.c.b16 %v2554, %v2548
        %v2693 = vpack.c.b16 %v2555, %v2549
        %v2694 = vpack.c.b16 %v2556, %v2550
        %v2695 = vpack.c.b16 %v2557, %v2551
        %v2696 = vpack.c.b16 %v2564, %v2558
        %v2697 = vpack.c.b16 %v2565, %v2559
        %v2698 = vpack.c.b16 %v2566, %v2560
        %v2699 = vpack.c.b16 %v2567, %v2561
        %v2700 = vpack.c.b16 %v2568, %v2562
        %v2701 = vpack.c.b16 %v2569, %v2563
        %v2702 = vpack.c.b16 %v2576, %v2570
        %v2703 = vpack.c.b16 %v2577, %v2571
        %v2704 = vpack.c.b16 %v2578, %v2572
        %v2705 = vpack.c.b16 %v2579, %v2573
        %v2706 = vpack.c.b16 %v2580, %v2574
        %v2707 = vpack.c.b16 %v2581, %v2575
        %v2708 = vpack.c.b16 %v2588, %v2582
        %v2709 = vpack.c.b16 %v2589, %v2583
        %v2710 = vpack.c.b16 %v2590, %v2584
        %v2711 = vpack.c.b16 %v2591, %v2585
        %v2712 = vpack.c.b16 %v2592, %v2586
        %v2713 = vpack.c.b16 %v2593, %v2587
        %v2714 = vpack.c.b16 %v2600, %v2594
        %v2715 = vpack.c.b16 %v2601, %v2595
        %v2716 = vpack.c.b16 %v2602, %v2596
        %v2717 = vpack.c.b16 %v2603, %v2597
        %v2718 = vpack.c.b16 %v2604, %v2598
        %v2719 = vpack.c.b16 %v2605, %v2599
        %v2720 = vpack.c.b16 %v2612, %v2606
        %v2721 = vpack.c.b16 %v2613, %v2607
        %v2722 = vpack.c.b16 %v2614, %v2608
        %v2723 = vpack.c.b16 %v2615, %v2609
        %v2724 = vpack.c.b16 %v2616, %v2610
        %v2725 = vpack.c.b16 %v2617, %v2611
        %v2726 = vpack.c.b16 %v2624, %v2618
        %v2727 = vpack.c.b16 %v2625, %v2619
        %v2728 = vpack.c.b16 %v2626, %v2620
        %v2729 = vpack.c.b16 %v2627, %v2621
        %v2730 = vpack.c.b16 %v2628, %v2622
        %v2731 = vpack.c.b16 %v2629, %v2623
        %v2732 = vpack.c.b16 %v2636, %v2630
        %v2733 = vpack.c.b16 %v2637, %v2631
        %v2734 = vpack.c.b16 %v2638, %v2632
        %v2735 = vpack.c.b16 %v2639, %v2633
        %v2736 = vpack.c.b16 %v2640, %v2634
        %v2737 = vpack.c.b16 %v2641, %v2635
        %2834 = vmatpush.bf16.msra.mxu0 %v2684
        %2835 = vmatpush.bf16.msra.mxu0 %v2678
        %2836 = vmatpush.bf16.msra.mxu0 %v2672
        %2837 = vmatpush.bf16.msra.mxu0 %v2666
        %2838 = vmatpush.bf16.msra.mxu0 %v2660
        %2839 = vmatpush.bf16.msra.mxu0 %v2654
        %2840 = vmatpush.bf16.msra.mxu0 %v2648
        %2841 = vmatpush.bf16.msra.mxu0 %v2642
        %2842 = vmatmul.bf16.gmra.mxu0 %v2242
        %v2843 = vpop.f32.mrf.mxu0
        %v2844 = vadd.f32 %v2342, %v2843
        %v2845 = vpop.f32.mrf.mxu0
        %2846 = vdwg.mxu0
        %2847 = vmatpush.bf16.msra.mxu0 %v2732
        %2848 = vmatpush.bf16.msra.mxu0 %v2726
        %2849 = vmatpush.bf16.msra.mxu0 %v2720
        %2850 = vmatpush.bf16.msra.mxu0 %v2714
        %2851 = vmatpush.bf16.msra.mxu0 %v2708
        %2852 = vmatpush.bf16.msra.mxu0 %v2702
        %2853 = vmatpush.bf16.msra.mxu0 %v2696
        %2854 = vmatpush.bf16.msra.mxu0 %v2690
        %2855 = vmatmul.bf16.gmra.mxu0 %v2243
        %v2856 = vpop.f32.mrf.mxu0
        %v2857 = vadd.f32 %v2844, %v2856
        %v2858 = vpop.f32.mrf.mxu0
        %2859 = vdwg.mxu0
        %2860 = vmatpush.bf16.msra.mxu0 %v2685
        %2861 = vmatpush.bf16.msra.mxu0 %v2679
        %2862 = vmatpush.bf16.msra.mxu0 %v2673
        %2863 = vmatpush.bf16.msra.mxu0 %v2667
        %2864 = vmatpush.bf16.msra.mxu0 %v2661
        %2865 = vmatpush.bf16.msra.mxu0 %v2655
        %2866 = vmatpush.bf16.msra.mxu0 %v2649
        %2867 = vmatpush.bf16.msra.mxu0 %v2643
        %2868 = vmatmul.bf16.gmra.mxu0 %v2242
        %v2869 = vpop.f32.mrf.mxu0
        %v2870 = vadd.f32 %v2343, %v2869
        %v2871 = vpop.f32.mrf.mxu0
        %2872 = vdwg.mxu0
        %2873 = vmatpush.bf16.msra.mxu0 %v2733
        %2874 = vmatpush.bf16.msra.mxu0 %v2727
        %2875 = vmatpush.bf16.msra.mxu0 %v2721
        %2876 = vmatpush.bf16.msra.mxu0 %v2715
        %2877 = vmatpush.bf16.msra.mxu0 %v2709
        %2878 = vmatpush.bf16.msra.mxu0 %v2703
        %2879 = vmatpush.bf16.msra.mxu0 %v2697
        %2880 = vmatpush.bf16.msra.mxu0 %v2691
        %2881 = vmatmul.bf16.gmra.mxu0 %v2243
        %v2882 = vpop.f32.mrf.mxu0
        %v2883 = vadd.f32 %v2870, %v2882
        %v2884 = vpop.f32.mrf.mxu0
        %2885 = vdwg.mxu0
        %2886 = vmatpush.bf16.msra.mxu0 %v2686
        %2887 = vmatpush.bf16.msra.mxu0 %v2680
        %2888 = vmatpush.bf16.msra.mxu0 %v2674
        %2889 = vmatpush.bf16.msra.mxu0 %v2668
        %2890 = vmatpush.bf16.msra.mxu0 %v2662
        %2891 = vmatpush.bf16.msra.mxu0 %v2656
        %2892 = vmatpush.bf16.msra.mxu0 %v2650
        %2893 = vmatpush.bf16.msra.mxu0 %v2644
        %2894 = vmatmul.bf16.gmra.mxu0 %v2242
        %v2895 = vpop.f32.mrf.mxu0
        %v2896 = vadd.f32 %v2344, %v2895
        %v2897 = vpop.f32.mrf.mxu0
        %2898 = vdwg.mxu0
        %2899 = vmatpush.bf16.msra.mxu0 %v2734
        %2900 = vmatpush.bf16.msra.mxu0 %v2728
        %2901 = vmatpush.bf16.msra.mxu0 %v2722
        %2902 = vmatpush.bf16.msra.mxu0 %v2716
        %2903 = vmatpush.bf16.msra.mxu0 %v2710
        %2904 = vmatpush.bf16.msra.mxu0 %v2704
        %2905 = vmatpush.bf16.msra.mxu0 %v2698
        %2906 = vmatpush.bf16.msra.mxu0 %v2692
        %2907 = vmatmul.bf16.gmra.mxu0 %v2243
        %v2908 = vpop.f32.mrf.mxu0
        %v2909 = vadd.f32 %v2896, %v2908
        %v2910 = vpop.f32.mrf.mxu0
        %2911 = vdwg.mxu0
        %2912 = vmatpush.bf16.msra.mxu0 %v2687
        %2913 = vmatpush.bf16.msra.mxu0 %v2681
        %2914 = vmatpush.bf16.msra.mxu0 %v2675
        %2915 = vmatpush.bf16.msra.mxu0 %v2669
        %2916 = vmatpush.bf16.msra.mxu0 %v2663
        %2917 = vmatpush.bf16.msra.mxu0 %v2657
        %2918 = vmatpush.bf16.msra.mxu0 %v2651
        %2919 = vmatpush.bf16.msra.mxu0 %v2645
        %2920 = vmatmul.bf16.gmra.mxu0 %v2242
        %v2921 = vpop.f32.mrf.mxu0
        %v2922 = vadd.f32 %v2345, %v2921
        %v2923 = vpop.f32.mrf.mxu0
        %2924 = vdwg.mxu0
        %2925 = vmatpush.bf16.msra.mxu0 %v2735
        %2926 = vmatpush.bf16.msra.mxu0 %v2729
        %2927 = vmatpush.bf16.msra.mxu0 %v2723
        %2928 = vmatpush.bf16.msra.mxu0 %v2717
        %2929 = vmatpush.bf16.msra.mxu0 %v2711
        %2930 = vmatpush.bf16.msra.mxu0 %v2705
        %2931 = vmatpush.bf16.msra.mxu0 %v2699
        %2932 = vmatpush.bf16.msra.mxu0 %v2693
        %2933 = vmatmul.bf16.gmra.mxu0 %v2243
        %v2934 = vpop.f32.mrf.mxu0
        %v2935 = vadd.f32 %v2922, %v2934
        %v2936 = vpop.f32.mrf.mxu0
        %2937 = vdwg.mxu0
        %2938 = vmatpush.bf16.msra.mxu0 %v2688
        %2939 = vmatpush.bf16.msra.mxu0 %v2682
        %2940 = vmatpush.bf16.msra.mxu0 %v2676
        %2941 = vmatpush.bf16.msra.mxu0 %v2670
        %2942 = vmatpush.bf16.msra.mxu0 %v2664
        %2943 = vmatpush.bf16.msra.mxu0 %v2658
        %2944 = vmatpush.bf16.msra.mxu0 %v2652
        %2945 = vmatpush.bf16.msra.mxu0 %v2646
        %2946 = vmatmul.bf16.gmra.mxu0 %v2242
        %v2947 = vpop.f32.mrf.mxu0
        %v2948 = vadd.f32 %v2346, %v2947
        %v2949 = vpop.f32.mrf.mxu0
        %2950 = vdwg.mxu0
        %2951 = vmatpush.bf16.msra.mxu0 %v2736
        %2952 = vmatpush.bf16.msra.mxu0 %v2730
        %2953 = vmatpush.bf16.msra.mxu0 %v2724
        %2954 = vmatpush.bf16.msra.mxu0 %v2718
        %2955 = vmatpush.bf16.msra.mxu0 %v2712
        %2956 = vmatpush.bf16.msra.mxu0 %v2706
        %2957 = vmatpush.bf16.msra.mxu0 %v2700
        %2958 = vmatpush.bf16.msra.mxu0 %v2694
        %2959 = vmatmul.bf16.gmra.mxu0 %v2243
        %v2960 = vpop.f32.mrf.mxu0
        %v2961 = vadd.f32 %v2948, %v2960
        %v2962 = vpop.f32.mrf.mxu0
        %2963 = vdwg.mxu0
        %2964 = vmatpush.bf16.msra.mxu0 %v2689
        %2965 = vmatpush.bf16.msra.mxu0 %v2683
        %2966 = vmatpush.bf16.msra.mxu0 %v2677
        %2967 = vmatpush.bf16.msra.mxu0 %v2671
        %2968 = vmatpush.bf16.msra.mxu0 %v2665
        %2969 = vmatpush.bf16.msra.mxu0 %v2659
        %2970 = vmatpush.bf16.msra.mxu0 %v2653
        %2971 = vmatpush.bf16.msra.mxu0 %v2647
        %2972 = vmatmul.bf16.gmra.mxu0 %v2242
        %v2973 = vpop.f32.mrf.mxu0
        %v2974 = vadd.f32 %v2347, %v2973
        %v2975 = vpop.f32.mrf.mxu0
        %2976 = vdwg.mxu0
        %2977 = vmatpush.bf16.msra.mxu0 %v2737
        %2978 = vmatpush.bf16.msra.mxu0 %v2731
        %2979 = vmatpush.bf16.msra.mxu0 %v2725
        %2980 = vmatpush.bf16.msra.mxu0 %v2719
        %2981 = vmatpush.bf16.msra.mxu0 %v2713
        %2982 = vmatpush.bf16.msra.mxu0 %v2707
        %2983 = vmatpush.bf16.msra.mxu0 %v2701
        %2984 = vmatpush.bf16.msra.mxu0 %v2695
        %2985 = vmatmul.bf16.gmra.mxu0 %v2243
        %v2986 = vpop.f32.mrf.mxu0
        %v2987 = vadd.f32 %v2974, %v2986
        %v2988 = vpop.f32.mrf.mxu0
        %2989 = vdwg.mxu0
        %v2990 = vmul.f32 %v2857, 0.12700012
        %vm2991 = vcmask 523264
        %v2993 = vsel %vm2991, %v2990, 0
        %v2996 = vsel %vm2991, %v2909, 0
        %2998 = vmatpush.xpose.msra.mxu0 0.0
        %2999 = vmatpush.xpose.msra.mxu0 0.0
        %3000 = vmatpush.xpose.msra.mxu0 0.0
        %3001 = vmatpush.xpose.msra.mxu0 0.0
        %3002 = vmatpush.xpose.msra.mxu0 0.0
        %3003 = vmatpush.xpose.msra.mxu0 0.0
        %3004 = vmatpush.xpose.msra.mxu0 0.0
        %3005 = vmatpush.xpose.msra.mxu0 0.0
        %3006 = vmatpush.xpose.msra.mxu0 0.0
        %3007 = vmatpush.xpose.msra.mxu0 0.0
        %3008 = vmatpush.xpose.msra.mxu0 0.0
        %3009 = vmatpush.xpose.msra.mxu0 0.0
        %3010 = vmatpush.xpose.msra.mxu0 0.0
        %3011 = vmatpush.xpose.msra.mxu0 0.0
        %3012 = vmatpush.xpose.msra.mxu0 0.0
        %3013 = vmatpush.xpose.msra.mxu0 %v2996
        %3014 = vmatmul.f32.gmra.mxu0 %v2993
        %v3015 = vpop.f32.mrf.mxu0
        %v3016 = vadd.f32 0.0, %v3015
        %3017 = vdwg.mxu0
        %v3018 = vmul.f32 %v3016, %v2198
        %vm3019 = vcmask 64512
        %v3020 = vsel %vm3019, %v3018, -inf
        %3021 = vmax.xlane.f32.xlu0 %v3020
        %v3022 = vpop.xlane.xlu0 %3021
        %v3023 = vsub.f32 %v3018, %v3022
        %v3024 = vmul.f32 %v3023, 1.442695
        %v3025 = vpow.pop %v3024
        %v3026 = vsel %vm3019, %v3025, 0.0
        %3027 = vadd.xlane.f32.xlu0 %v3026
        %v3028 = vpop.xlane.xlu0 %3027
        %v3029 = vrcp.pop %v3028
        %v3030 = vmul.f32 %v3025, %v3029
        %v3032 = vsel %vm3019, %v3030, 0
        %3034 = vmatpush.msra.mxu0 0.0
        %3035 = vmatpush.msra.mxu0 0.0
        %3036 = vmatpush.msra.mxu0 0.0
        %3037 = vmatpush.msra.mxu0 0.0
        %3038 = vmatpush.msra.mxu0 0.0
        %3039 = vmatpush.msra.mxu0 0.0
        %3040 = vmatpush.msra.mxu0 0.0
        %3041 = vmatpush.msra.mxu0 0.0
        %3042 = vmatpush.msra.mxu0 0.0
        %3043 = vmatpush.msra.mxu0 0.0
        %3044 = vmatpush.msra.mxu0 0.0
        %3045 = vmatpush.msra.mxu0 0.0
        %3046 = vmatpush.msra.mxu0 0.0
        %3047 = vmatpush.msra.mxu0 0.0
        %3048 = vmatpush.msra.mxu0 0.0
        %3049 = vmatpush.msra.mxu0 %v2961
        %3050 = vmatmul.f32.gmra.mxu0 %v3032
        %v3051 = vpop.f32.mrf.mxu0
        %v3052 = vadd.f32 0.0, %v3051
        %3053 = vdwg.mxu0
        %3054 = vrot.lane.b32.xlu0 %v2990, 64
        %v3055 = vpop.permute.xlu0 %3054
        %3056 = vrot.lane.b32.xlu0 %v2909, 64
        %v3057 = vpop.permute.xlu0 %3056
        %v3058 = vsel %vm2991, %v3055, 0
        %v3060 = vsel %vm2991, %v3057, 0
        %3062 = vmatpush.xpose.msra.mxu0 0.0
        %3063 = vmatpush.xpose.msra.mxu0 0.0
        %3064 = vmatpush.xpose.msra.mxu0 0.0
        %3065 = vmatpush.xpose.msra.mxu0 0.0
        %3066 = vmatpush.xpose.msra.mxu0 0.0
        %3067 = vmatpush.xpose.msra.mxu0 0.0
        %3068 = vmatpush.xpose.msra.mxu0 0.0
        %3069 = vmatpush.xpose.msra.mxu0 0.0
        %3070 = vmatpush.xpose.msra.mxu0 0.0
        %3071 = vmatpush.xpose.msra.mxu0 0.0
        %3072 = vmatpush.xpose.msra.mxu0 0.0
        %3073 = vmatpush.xpose.msra.mxu0 0.0
        %3074 = vmatpush.xpose.msra.mxu0 0.0
        %3075 = vmatpush.xpose.msra.mxu0 0.0
        %3076 = vmatpush.xpose.msra.mxu0 0.0
        %3077 = vmatpush.xpose.msra.mxu0 %v3060
        %3078 = vmatmul.f32.gmra.mxu0 %v3058
        %v3079 = vpop.f32.mrf.mxu0
        %v3080 = vadd.f32 0.0, %v3079
        %3081 = vdwg.mxu0
        %v3082 = vmul.f32 %v3080, %v2198
        %v3083 = vsel %vm3019, %v3082, -inf
        %3084 = vmax.xlane.f32.xlu0 %v3083
        %v3085 = vpop.xlane.xlu0 %3084
        %v3086 = vsub.f32 %v3082, %v3085
        %v3087 = vmul.f32 %v3086, 1.442695
        %v3088 = vpow.pop %v3087
        %v3089 = vsel %vm3019, %v3088, 0.0
        %3090 = vadd.xlane.f32.xlu0 %v3089
        %v3091 = vpop.xlane.xlu0 %3090
        %v3092 = vrcp.pop %v3091
        %v3093 = vmul.f32 %v3088, %v3092
        %3095 = vrot.lane.b32.xlu0 %v2961, 64
        %v3096 = vpop.permute.xlu0 %3095
        %v3099 = vsel %vm3019, %v3093, 0
        %3101 = vmatpush.msra.mxu0 0.0
        %3102 = vmatpush.msra.mxu0 0.0
        %3103 = vmatpush.msra.mxu0 0.0
        %3104 = vmatpush.msra.mxu0 0.0
        %3105 = vmatpush.msra.mxu0 0.0
        %3106 = vmatpush.msra.mxu0 0.0
        %3107 = vmatpush.msra.mxu0 0.0
        %3108 = vmatpush.msra.mxu0 0.0
        %3109 = vmatpush.msra.mxu0 0.0
        %3110 = vmatpush.msra.mxu0 0.0
        %3111 = vmatpush.msra.mxu0 0.0
        %3112 = vmatpush.msra.mxu0 0.0
        %3113 = vmatpush.msra.mxu0 0.0
        %3114 = vmatpush.msra.mxu0 0.0
        %3115 = vmatpush.msra.mxu0 0.0
        %3116 = vmatpush.msra.mxu0 %v3096
        %3117 = vmatmul.f32.gmra.mxu0 %v3099
        %v3118 = vpop.f32.mrf.mxu0
        %v3119 = vadd.f32 0.0, %v3118
        %3120 = vdwg.mxu0
        %v3121 = vmul.f32 %v2883, 0.12700012
        %v3123 = vsel %vm2991, %v3121, 0
        %v3126 = vsel %vm2991, %v2935, 0
        %3128 = vmatpush.xpose.msra.mxu0 0.0
        %3129 = vmatpush.xpose.msra.mxu0 0.0
        %3130 = vmatpush.xpose.msra.mxu0 0.0
        %3131 = vmatpush.xpose.msra.mxu0 0.0
        %3132 = vmatpush.xpose.msra.mxu0 0.0
        %3133 = vmatpush.xpose.msra.mxu0 0.0
        %3134 = vmatpush.xpose.msra.mxu0 0.0
        %3135 = vmatpush.xpose.msra.mxu0 0.0
        %3136 = vmatpush.xpose.msra.mxu0 0.0
        %3137 = vmatpush.xpose.msra.mxu0 0.0
        %3138 = vmatpush.xpose.msra.mxu0 0.0
        %3139 = vmatpush.xpose.msra.mxu0 0.0
        %3140 = vmatpush.xpose.msra.mxu0 0.0
        %3141 = vmatpush.xpose.msra.mxu0 0.0
        %3142 = vmatpush.xpose.msra.mxu0 0.0
        %3143 = vmatpush.xpose.msra.mxu0 %v3126
        %3144 = vmatmul.f32.gmra.mxu0 %v3123
        %v3145 = vpop.f32.mrf.mxu0
        %v3146 = vadd.f32 0.0, %v3145
        %3147 = vdwg.mxu0
        %v3148 = vmul.f32 %v3146, %v2198
        %v3149 = vsel %vm3019, %v3148, -inf
        %3150 = vmax.xlane.f32.xlu0 %v3149
        %v3151 = vpop.xlane.xlu0 %3150
        %v3152 = vsub.f32 %v3148, %v3151
        %v3153 = vmul.f32 %v3152, 1.442695
        %v3154 = vpow.pop %v3153
        %v3155 = vsel %vm3019, %v3154, 0.0
        %3156 = vadd.xlane.f32.xlu0 %v3155
        %v3157 = vpop.xlane.xlu0 %3156
        %v3158 = vrcp.pop %v3157
        %v3159 = vmul.f32 %v3154, %v3158
        %v3161 = vsel %vm3019, %v3159, 0
        %3163 = vmatpush.msra.mxu0 0.0
        %3164 = vmatpush.msra.mxu0 0.0
        %3165 = vmatpush.msra.mxu0 0.0
        %3166 = vmatpush.msra.mxu0 0.0
        %3167 = vmatpush.msra.mxu0 0.0
        %3168 = vmatpush.msra.mxu0 0.0
        %3169 = vmatpush.msra.mxu0 0.0
        %3170 = vmatpush.msra.mxu0 0.0
        %3171 = vmatpush.msra.mxu0 0.0
        %3172 = vmatpush.msra.mxu0 0.0
        %3173 = vmatpush.msra.mxu0 0.0
        %3174 = vmatpush.msra.mxu0 0.0
        %3175 = vmatpush.msra.mxu0 0.0
        %3176 = vmatpush.msra.mxu0 0.0
        %3177 = vmatpush.msra.mxu0 0.0
        %3178 = vmatpush.msra.mxu0 %v2987
        %3179 = vmatmul.f32.gmra.mxu0 %v3161
        %v3180 = vpop.f32.mrf.mxu0
        %v3181 = vadd.f32 0.0, %v3180
        %3182 = vdwg.mxu0
        %3183 = vrot.lane.b32.xlu0 %v3121, 64
        %v3184 = vpop.permute.xlu0 %3183
        %3185 = vrot.lane.b32.xlu0 %v2935, 64
        %v3186 = vpop.permute.xlu0 %3185
        %v3187 = vsel %vm2991, %v3184, 0
        %v3189 = vsel %vm2991, %v3186, 0
        %3191 = vmatpush.xpose.msra.mxu0 0.0
        %3192 = vmatpush.xpose.msra.mxu0 0.0
        %3193 = vmatpush.xpose.msra.mxu0 0.0
        %3194 = vmatpush.xpose.msra.mxu0 0.0
        %3195 = vmatpush.xpose.msra.mxu0 0.0
        %3196 = vmatpush.xpose.msra.mxu0 0.0
        %3197 = vmatpush.xpose.msra.mxu0 0.0
        %3198 = vmatpush.xpose.msra.mxu0 0.0
        %3199 = vmatpush.xpose.msra.mxu0 0.0
        %3200 = vmatpush.xpose.msra.mxu0 0.0
        %3201 = vmatpush.xpose.msra.mxu0 0.0
        %3202 = vmatpush.xpose.msra.mxu0 0.0
        %3203 = vmatpush.xpose.msra.mxu0 0.0
        %3204 = vmatpush.xpose.msra.mxu0 0.0
        %3205 = vmatpush.xpose.msra.mxu0 0.0
        %3206 = vmatpush.xpose.msra.mxu0 %v3189
        %3207 = vmatmul.f32.gmra.mxu0 %v3187
        %v3208 = vpop.f32.mrf.mxu0
        %v3209 = vadd.f32 0.0, %v3208
        %3210 = vdwg.mxu0
        %v3211 = vmul.f32 %v3209, %v2198
        %v3212 = vsel %vm3019, %v3211, -inf
        %3213 = vmax.xlane.f32.xlu0 %v3212
        %v3214 = vpop.xlane.xlu0 %3213
        %v3215 = vsub.f32 %v3211, %v3214
        %v3216 = vmul.f32 %v3215, 1.442695
        %v3217 = vpow.pop %v3216
        %v3218 = vsel %vm3019, %v3217, 0.0
        %3219 = vadd.xlane.f32.xlu0 %v3218
        %v3220 = vpop.xlane.xlu0 %3219
        %v3221 = vrcp.pop %v3220
        %v3222 = vmul.f32 %v3217, %v3221
        %3224 = vrot.lane.b32.xlu0 %v2987, 64
        %v3225 = vpop.permute.xlu0 %3224
        %v3228 = vsel %vm3019, %v3222, 0
        %3230 = vmatpush.msra.mxu0 0.0
        %3231 = vmatpush.msra.mxu0 0.0
        %3232 = vmatpush.msra.mxu0 0.0
        %3233 = vmatpush.msra.mxu0 0.0
        %3234 = vmatpush.msra.mxu0 0.0
        %3235 = vmatpush.msra.mxu0 0.0
        %3236 = vmatpush.msra.mxu0 0.0
        %3237 = vmatpush.msra.mxu0 0.0
        %3238 = vmatpush.msra.mxu0 0.0
        %3239 = vmatpush.msra.mxu0 0.0
        %3240 = vmatpush.msra.mxu0 0.0
        %3241 = vmatpush.msra.mxu0 0.0
        %3242 = vmatpush.msra.mxu0 0.0
        %3243 = vmatpush.msra.mxu0 0.0
        %3244 = vmatpush.msra.mxu0 0.0
        %3245 = vmatpush.msra.mxu0 %v3225
        %3246 = vmatmul.f32.gmra.mxu0 %v3228
        %v3247 = vpop.f32.mrf.mxu0
        %v3248 = vadd.f32 0.0, %v3247
        %3249 = vdwg.mxu0
        %3251 = vrot.lane.b32.xlu0 %v3119, 64
        %v3252 = vpop.permute.xlu0 %3251
        %3255 = vrot.lane.b32.xlu0 %v3248, 64
        %v3256 = vpop.permute.xlu0 %3255
        %v3258 = vsel %vm2991, %v3052, %v3252
        %v3259 = vsel %vm2991, %v3181, %v3256
        %v3260 = vpack.c.bf16 %v3258, %v3258
        %v3261 = vpack.c.bf16 %v3259, %v3259
        %v3262 = vld [vmem:[%s43] sm:$0xff]
        %v3263 = vld [vmem:[%s43 + $0x8] sm:$0xff]
        %v3264 = vld [vmem:[%s43 + $0x10] sm:$0xff]
        %v3265 = vld [vmem:[%s43 + $0x18] sm:$0xff]
        %v3266 = vld [vmem:[%s43 + $0x20] sm:$0xff]
        %v3267 = vld [vmem:[%s43 + $0x28] sm:$0xff]
        %v3268 = vld [vmem:[%s43 + $0x30] sm:$0xff]
        %v3269 = vld [vmem:[%s43 + $0x38] sm:$0xff]
        %v3270 = vld [vmem:[%s43 + $0x40] sm:$0xff]
        %v3271 = vld [vmem:[%s43 + $0x48] sm:$0xff]
        %v3272 = vld [vmem:[%s43 + $0x50] sm:$0xff]
        %v3273 = vld [vmem:[%s43 + $0x58] sm:$0xff]
        %v3274 = vld [vmem:[%s43 + $0x60] sm:$0xff]
        %v3275 = vld [vmem:[%s43 + $0x68] sm:$0xff]
        %v3276 = vld [vmem:[%s43 + $0x70] sm:$0xff]
        %v3277 = vld [vmem:[%s43 + $0x78] sm:$0xff]
        %v3278 = vld [vmem:[%s43 + $0x80] sm:$0xff]
        %v3279 = vld [vmem:[%s43 + $0x88] sm:$0xff]
        %v3280 = vld [vmem:[%s43 + $0x90] sm:$0xff]
        %v3281 = vld [vmem:[%s43 + $0x98] sm:$0xff]
        %v3282 = vld [vmem:[%s43 + $0xa0] sm:$0xff]
        %v3283 = vld [vmem:[%s43 + $0xa8] sm:$0xff]
        %v3284 = vld [vmem:[%s43 + $0xb0] sm:$0xff]
        %v3285 = vld [vmem:[%s43 + $0xb8] sm:$0xff]
        %v3286 = vld [vmem:[%s43 + $0xc0] sm:$0xff]
        %v3287 = vld [vmem:[%s43 + $0xc8] sm:$0xff]
        %v3288 = vld [vmem:[%s43 + $0xd0] sm:$0xff]
        %v3289 = vld [vmem:[%s43 + $0xd8] sm:$0xff]
        %v3290 = vld [vmem:[%s43 + $0xe0] sm:$0xff]
        %v3291 = vld [vmem:[%s43 + $0xe8] sm:$0xff]
        %v3292 = vld [vmem:[%s43 + $0xf0] sm:$0xff]
        %v3293 = vld [vmem:[%s43 + $0xf8] sm:$0xff]
        %v3326 = vunpack.c.l.b16 %v3262
        %v3327 = vunpack.c.h.b16 %v3262
        %v3328 = vunpack.c.l.b16 %v3263
        %v3329 = vunpack.c.h.b16 %v3263
        %v3330 = vunpack.c.l.b16 %v3264
        %v3331 = vunpack.c.h.b16 %v3264
        %v3332 = vunpack.c.l.b16 %v3265
        %v3333 = vunpack.c.h.b16 %v3265
        %v3334 = vunpack.c.l.b16 %v3266
        %v3335 = vunpack.c.h.b16 %v3266
        %v3336 = vunpack.c.l.b16 %v3267
        %v3337 = vunpack.c.h.b16 %v3267
        %v3338 = vunpack.c.l.b16 %v3268
        %v3339 = vunpack.c.h.b16 %v3268
        %v3340 = vunpack.c.l.b16 %v3269
        %v3341 = vunpack.c.h.b16 %v3269
        %v3342 = vunpack.c.l.b16 %v3270
        %v3343 = vunpack.c.h.b16 %v3270
        %v3344 = vunpack.c.l.b16 %v3271
        %v3345 = vunpack.c.h.b16 %v3271
        %v3346 = vunpack.c.l.b16 %v3272
        %v3347 = vunpack.c.h.b16 %v3272
        %v3348 = vunpack.c.l.b16 %v3273
        %v3349 = vunpack.c.h.b16 %v3273
        %v3350 = vunpack.c.l.b16 %v3274
        %v3351 = vunpack.c.h.b16 %v3274
        %v3352 = vunpack.c.l.b16 %v3275
        %v3353 = vunpack.c.h.b16 %v3275
        %v3354 = vunpack.c.l.b16 %v3276
        %v3355 = vunpack.c.h.b16 %v3276
        %v3356 = vunpack.c.l.b16 %v3277
        %v3357 = vunpack.c.h.b16 %v3277
        %v3358 = vunpack.c.l.b16 %v3278
        %v3359 = vunpack.c.h.b16 %v3278
        %v3360 = vunpack.c.l.b16 %v3279
        %v3361 = vunpack.c.h.b16 %v3279
        %v3362 = vunpack.c.l.b16 %v3280
        %v3363 = vunpack.c.h.b16 %v3280
        %v3364 = vunpack.c.l.b16 %v3281
        %v3365 = vunpack.c.h.b16 %v3281
        %v3366 = vunpack.c.l.b16 %v3282
        %v3367 = vunpack.c.h.b16 %v3282
        %v3368 = vunpack.c.l.b16 %v3283
        %v3369 = vunpack.c.h.b16 %v3283
        %v3370 = vunpack.c.l.b16 %v3284
        %v3371 = vunpack.c.h.b16 %v3284
        %v3372 = vunpack.c.l.b16 %v3285
        %v3373 = vunpack.c.h.b16 %v3285
        %v3374 = vunpack.c.l.b16 %v3286
        %v3375 = vunpack.c.h.b16 %v3286
        %v3376 = vunpack.c.l.b16 %v3287
        %v3377 = vunpack.c.h.b16 %v3287
        %v3378 = vunpack.c.l.b16 %v3288
        %v3379 = vunpack.c.h.b16 %v3288
        %v3380 = vunpack.c.l.b16 %v3289
        %v3381 = vunpack.c.h.b16 %v3289
        %v3382 = vunpack.c.l.b16 %v3290
        %v3383 = vunpack.c.h.b16 %v3290
        %v3384 = vunpack.c.l.b16 %v3291
        %v3385 = vunpack.c.h.b16 %v3291
        %v3386 = vunpack.c.l.b16 %v3292
        %v3387 = vunpack.c.h.b16 %v3292
        %v3388 = vunpack.c.l.b16 %v3293
        %v3389 = vunpack.c.h.b16 %v3293
        %v3390 = vpack.c.b16 %v3328, %v3326
        %v3391 = vpack.c.b16 %v3329, %v3327
        %v3392 = vpack.c.b16 %v3332, %v3330
        %v3393 = vpack.c.b16 %v3333, %v3331
        %v3394 = vpack.c.b16 %v3336, %v3334
        %v3395 = vpack.c.b16 %v3337, %v3335
        %v3396 = vpack.c.b16 %v3340, %v3338
        %v3397 = vpack.c.b16 %v3341, %v3339
        %v3398 = vpack.c.b16 %v3344, %v3342
        %v3399 = vpack.c.b16 %v3345, %v3343
        %v3400 = vpack.c.b16 %v3348, %v3346
        %v3401 = vpack.c.b16 %v3349, %v3347
        %v3402 = vpack.c.b16 %v3352, %v3350
        %v3403 = vpack.c.b16 %v3353, %v3351
        %v3404 = vpack.c.b16 %v3356, %v3354
        %v3405 = vpack.c.b16 %v3357, %v3355
        %v3406 = vpack.c.b16 %v3360, %v3358
        %v3407 = vpack.c.b16 %v3361, %v3359
        %v3408 = vpack.c.b16 %v3364, %v3362
        %v3409 = vpack.c.b16 %v3365, %v3363
        %v3410 = vpack.c.b16 %v3368, %v3366
        %v3411 = vpack.c.b16 %v3369, %v3367
        %v3412 = vpack.c.b16 %v3372, %v3370
        %v3413 = vpack.c.b16 %v3373, %v3371
        %v3414 = vpack.c.b16 %v3376, %v3374
        %v3415 = vpack.c.b16 %v3377, %v3375
        %v3416 = vpack.c.b16 %v3380, %v3378
        %v3417 = vpack.c.b16 %v3381, %v3379
        %v3418 = vpack.c.b16 %v3384, %v3382
        %v3419 = vpack.c.b16 %v3385, %v3383
        %v3420 = vpack.c.b16 %v3388, %v3386
        %v3421 = vpack.c.b16 %v3389, %v3387
        %3454 = vmatpush.bf16.msra.mxu0 %v3404
        %3455 = vmatpush.bf16.msra.mxu0 %v3402
        %3456 = vmatpush.bf16.msra.mxu0 %v3400
        %3457 = vmatpush.bf16.msra.mxu0 %v3398
        %3458 = vmatpush.bf16.msra.mxu0 %v3396
        %3459 = vmatpush.bf16.msra.mxu0 %v3394
        %3460 = vmatpush.bf16.msra.mxu0 %v3392
        %3461 = vmatpush.bf16.msra.mxu0 %v3390
        %3462 = vmatmul.bf16.gmra.mxu0 %v3260
        %v3463 = vpop.f32.mrf.mxu0
        %v3464 = vadd.f32 0.0, %v3463
        %v3465 = vpop.f32.mrf.mxu0
        %3466 = vdwg.mxu0
        %3467 = vmatpush.bf16.msra.mxu0 %v3420
        %3468 = vmatpush.bf16.msra.mxu0 %v3418
        %3469 = vmatpush.bf16.msra.mxu0 %v3416
        %3470 = vmatpush.bf16.msra.mxu0 %v3414
        %3471 = vmatpush.bf16.msra.mxu0 %v3412
        %3472 = vmatpush.bf16.msra.mxu0 %v3410
        %3473 = vmatpush.bf16.msra.mxu0 %v3408
        %3474 = vmatpush.bf16.msra.mxu0 %v3406
        %3475 = vmatmul.bf16.gmra.mxu0 %v3261
        %v3476 = vpop.f32.mrf.mxu0
        %v3477 = vadd.f32 %v3464, %v3476
        %v3478 = vpop.f32.mrf.mxu0
        %3479 = vdwg.mxu0
        %3480 = vmatpush.bf16.msra.mxu0 %v3405
        %3481 = vmatpush.bf16.msra.mxu0 %v3403
        %3482 = vmatpush.bf16.msra.mxu0 %v3401
        %3483 = vmatpush.bf16.msra.mxu0 %v3399
        %3484 = vmatpush.bf16.msra.mxu0 %v3397
        %3485 = vmatpush.bf16.msra.mxu0 %v3395
        %3486 = vmatpush.bf16.msra.mxu0 %v3393
        %3487 = vmatpush.bf16.msra.mxu0 %v3391
        %3488 = vmatmul.bf16.gmra.mxu0 %v3260
        %v3489 = vpop.f32.mrf.mxu0
        %v3490 = vadd.f32 0.0, %v3489
        %v3491 = vpop.f32.mrf.mxu0
        %3492 = vdwg.mxu0
        %3493 = vmatpush.bf16.msra.mxu0 %v3421
        %3494 = vmatpush.bf16.msra.mxu0 %v3419
        %3495 = vmatpush.bf16.msra.mxu0 %v3417
        %3496 = vmatpush.bf16.msra.mxu0 %v3415
        %3497 = vmatpush.bf16.msra.mxu0 %v3413
        %3498 = vmatpush.bf16.msra.mxu0 %v3411
        %3499 = vmatpush.bf16.msra.mxu0 %v3409
        %3500 = vmatpush.bf16.msra.mxu0 %v3407
        %3501 = vmatmul.bf16.gmra.mxu0 %v3261
        %v3502 = vpop.f32.mrf.mxu0
        %v3503 = vadd.f32 %v3490, %v3502
        %v3504 = vpop.f32.mrf.mxu0
        %3505 = vdwg.mxu0
        %v3506 = vadd.f32 %v2196, %v3477
        %v3507 = vadd.f32 %v2197, %v3503
        %v3508 = vld [vmem:[%s45] sm:$0x3]
        %v3510 = vperm.slane %v3508, 0
        %v3511 = vperm.slane %v3508, 1
        %v3514 = vadd.f32 %v3506, %v3510
        %v3515 = vadd.f32 %v3507, %v3511
        %v3516 = vld [vmem:[%s47] sm:$0x3]
        %v3517 = vld [vmem:[%s49] sm:$0x3]
        %v3518 = vadd.f32 %v3514, %v3515
        %3519 = vadd.xlane.f32.xlu0 %v3518
        %v3520 = vpop.xlane.xlu0 %3519
        %v3521 = vmul.f32 %v3520, 0.004016064
        %v3522 = vsub.f32 %v3514, %v3521
        %v3523 = vsub.f32 %v3515, %v3521
        %v3524 = vmul.f32 %v3522, %v1208
        %v3525 = vmul.f32 %v3523, %v1209
        %v3526 = vmul.f32 %v3524, %v3524
        %v3527 = vmul.f32 %v3525, %v3525
        %v3528 = vadd.f32 %v3526, %v3527
        %3529 = vadd.xlane.f32.xlu0 %v3528
        %v3530 = vpop.xlane.xlu0 %3529
        %v3531 = vmul.f32 %v3530, 0.004016064
        %v3532 = vadd.f32 %v3531, 1e-05
        %v3533 = vrsqrt.pop %v3532
        %v3534 = vmul.f32 %v3533, %v3532
        %v3535 = vmul.f32 %v3534, %v3533
        %v3536 = vmul.f32 0.5, %v3535
        %v3537 = vsub.f32 1.5, %v3536
        %v3538 = vmul.f32 %v3533, %v3537
        %vm3539 = vweird.f32 %v3532
        %vm3540 = vweird.f32 %v3533
        %vm3541 = vmor %vm3539, %vm3540
        %v3542 = vsel %vm3541, %v3533, %v3538
        %v3543 = vmul.f32 %v3524, %v3542
        %v3544 = vmul.f32 %v3525, %v3542
        %v3546 = vperm.slane %v3516, 0
        %v3547 = vperm.slane %v3516, 1
        %v3550 = vmul.f32 %v3543, %v3546
        %v3551 = vmul.f32 %v3544, %v3547
        %v3553 = vperm.slane %v3517, 0
        %v3554 = vperm.slane %v3517, 1
        %v3557 = vadd.f32 %v3550, %v3553
        %v3558 = vadd.f32 %v3551, %v3554
        %v3559 = vpack.c.bf16 %v3557, %v3557
        %v3560 = vpack.c.bf16 %v3558, %v3558
        %v3561 = vld [vmem:[%s51] sm:$0xf]
        %v3562 = vld [vmem:[%s51 + $0x4] sm:$0xf]
        %v3563 = vld [vmem:[%s51 + $0x8] sm:$0xf]
        %v3564 = vld [vmem:[%s51 + $0xc] sm:$0xf]
        %v3565 = vld [vmem:[%s51 + $0x10] sm:$0xf]
        %v3566 = vld [vmem:[%s51 + $0x14] sm:$0xf]
        %v3567 = vld [vmem:[%s51 + $0x18] sm:$0xf]
        %v3568 = vld [vmem:[%s51 + $0x1c] sm:$0xf]
        %v3569 = vld [vmem:[%s51 + $0x20] sm:$0xf]
        %v3570 = vld [vmem:[%s51 + $0x24] sm:$0xf]
        %v3571 = vld [vmem:[%s51 + $0x28] sm:$0xf]
        %v3572 = vld [vmem:[%s51 + $0x2c] sm:$0xf]
        %v3573 = vld [vmem:[%s51 + $0x30] sm:$0xf]
        %v3574 = vld [vmem:[%s51 + $0x34] sm:$0xf]
        %v3575 = vld [vmem:[%s51 + $0x38] sm:$0xf]
        %v3576 = vld [vmem:[%s51 + $0x3c] sm:$0xf]
        %v3577 = vld [vmem:[%s51 + $0x40] sm:$0xf]
        %v3578 = vld [vmem:[%s51 + $0x44] sm:$0xf]
        %v3579 = vld [vmem:[%s51 + $0x48] sm:$0xf]
        %v3580 = vld [vmem:[%s51 + $0x4c] sm:$0xf]
        %v3581 = vld [vmem:[%s51 + $0x50] sm:$0xf]
        %v3582 = vld [vmem:[%s51 + $0x54] sm:$0xf]
        %v3583 = vld [vmem:[%s51 + $0x58] sm:$0xf]
        %v3584 = vld [vmem:[%s51 + $0x5c] sm:$0xf]
        %v3585 = vld [vmem:[%s51 + $0x60] sm:$0xf]
        %v3586 = vld [vmem:[%s51 + $0x64] sm:$0xf]
        %v3587 = vld [vmem:[%s51 + $0x68] sm:$0xf]
        %v3588 = vld [vmem:[%s51 + $0x6c] sm:$0xf]
        %v3589 = vld [vmem:[%s51 + $0x70] sm:$0xf]
        %v3590 = vld [vmem:[%s51 + $0x74] sm:$0xf]
        %v3591 = vld [vmem:[%s51 + $0x78] sm:$0xf]
        %v3592 = vld [vmem:[%s51 + $0x7c] sm:$0xf]
        %v3593 = vld [vmem:[%s53] sm:$0x1]
        %v3595 = vperm.slane %v3593, 0
        %v3629 = vunpack.c.l.b16 %v3561
        %v3630 = vunpack.c.l.b16 %v3562
        %v3631 = vunpack.c.l.b16 %v3563
        %v3632 = vunpack.c.l.b16 %v3564
        %v3633 = vunpack.c.l.b16 %v3565
        %v3634 = vunpack.c.l.b16 %v3566
        %v3635 = vunpack.c.l.b16 %v3567
        %v3636 = vunpack.c.l.b16 %v3568
        %v3637 = vunpack.c.l.b16 %v3569
        %v3638 = vunpack.c.l.b16 %v3570
        %v3639 = vunpack.c.l.b16 %v3571
        %v3640 = vunpack.c.l.b16 %v3572
        %v3641 = vunpack.c.l.b16 %v3573
        %v3642 = vunpack.c.l.b16 %v3574
        %v3643 = vunpack.c.l.b16 %v3575
        %v3644 = vunpack.c.l.b16 %v3576
        %v3645 = vunpack.c.l.b16 %v3577
        %v3646 = vunpack.c.l.b16 %v3578
        %v3647 = vunpack.c.l.b16 %v3579
        %v3648 = vunpack.c.l.b16 %v3580
        %v3649 = vunpack.c.l.b16 %v3581
        %v3650 = vunpack.c.l.b16 %v3582
        %v3651 = vunpack.c.l.b16 %v3583
        %v3652 = vunpack.c.l.b16 %v3584
        %v3653 = vunpack.c.l.b16 %v3585
        %v3654 = vunpack.c.l.b16 %v3586
        %v3655 = vunpack.c.l.b16 %v3587
        %v3656 = vunpack.c.l.b16 %v3588
        %v3657 = vunpack.c.l.b16 %v3589
        %v3658 = vunpack.c.l.b16 %v3590
        %v3659 = vunpack.c.l.b16 %v3591
        %v3660 = vunpack.c.l.b16 %v3592
        %v3661 = vpack.c.b16 %v3630, %v3629
        %v3662 = vpack.c.b16 %v3632, %v3631
        %v3663 = vpack.c.b16 %v3634, %v3633
        %v3664 = vpack.c.b16 %v3636, %v3635
        %v3665 = vpack.c.b16 %v3638, %v3637
        %v3666 = vpack.c.b16 %v3640, %v3639
        %v3667 = vpack.c.b16 %v3642, %v3641
        %v3668 = vpack.c.b16 %v3644, %v3643
        %v3669 = vpack.c.b16 %v3646, %v3645
        %v3670 = vpack.c.b16 %v3648, %v3647
        %v3671 = vpack.c.b16 %v3650, %v3649
        %v3672 = vpack.c.b16 %v3652, %v3651
        %v3673 = vpack.c.b16 %v3654, %v3653
        %v3674 = vpack.c.b16 %v3656, %v3655
        %v3675 = vpack.c.b16 %v3658, %v3657
        %v3676 = vpack.c.b16 %v3660, %v3659
        %3693 = vmatpush.bf16.msra.mxu0 %v3668
        %3694 = vmatpush.bf16.msra.mxu0 %v3667
        %3695 = vmatpush.bf16.msra.mxu0 %v3666
        %3696 = vmatpush.bf16.msra.mxu0 %v3665
        %3697 = vmatpush.bf16.msra.mxu0 %v3664
        %3698 = vmatpush.bf16.msra.mxu0 %v3663
        %3699 = vmatpush.bf16.msra.mxu0 %v3662
        %3700 = vmatpush.bf16.msra.mxu0 %v3661
        %3701 = vmatmul.bf16.gmra.mxu0 %v3559
        %v3702 = vpop.f32.mrf.mxu0
        %v3703 = vadd.f32 %v3595, %v3702
        %v3704 = vpop.f32.mrf.mxu0
        %3705 = vdwg.mxu0
        %3706 = vmatpush.bf16.msra.mxu0 %v3676
        %3707 = vmatpush.bf16.msra.mxu0 %v3675
        %3708 = vmatpush.bf16.msra.mxu0 %v3674
        %3709 = vmatpush.bf16.msra.mxu0 %v3673
        %3710 = vmatpush.bf16.msra.mxu0 %v3672
        %3711 = vmatpush.bf16.msra.mxu0 %v3671
        %3712 = vmatpush.bf16.msra.mxu0 %v3670
        %3713 = vmatpush.bf16.msra.mxu0 %v3669
        %3714 = vmatmul.bf16.gmra.mxu0 %v3560
        %v3715 = vpop.f32.mrf.mxu0
        %v3716 = vadd.f32 %v3703, %v3715
        %v3717 = vpop.f32.mrf.mxu0
        %3718 = vdwg.mxu0
        %v3719 = vmul.f32 %v3716, 0.5
        %v3720 = vmul.f32 %v3716, 0.70710677
        %v3721 = vmul.f32 %v3720, %v3720
        %v3722 = vmin.f32 16.0, %v3721
        %v3723 = vmul.f32 %v3722, 2.1237322e-06
        %v3724 = vadd.f32 %v3723, 0.00028619796
        %v3725 = vmul.f32 %v3722, %v3724
        %v3726 = vadd.f32 %v3725, 0.0036580483
        %v3727 = vmul.f32 %v3722, %v3726
        %v3728 = vadd.f32 %v3727, 0.05243302
        %v3729 = vmul.f32 %v3722, %v3728
        %v3730 = vadd.f32 %v3729, 0.18741608
        %v3731 = vmul.f32 %v3722, %v3730
        %v3732 = vadd.f32 %v3731, 1.1283791
        %v3733 = vmul.f32 %v3720, %v3732
        %v3734 = vmul.f32 %v3722, 3.8918573e-05
        %v3735 = vadd.f32 %v3734, 0.001143296
        %v3736 = vmul.f32 %v3722, %v3735
        %v3737 = vadd.f32 %v3736, 0.014752088
        %v3738 = vmul.f32 %v3722, %v3737
        %v3739 = vadd.f32 %v3738, 0.112945676
        %v3740 = vmul.f32 %v3722, %v3739
        %v3741 = vadd.f32 %v3740, 0.4994258
        %v3742 = vmul.f32 %v3722, %v3741
        %v3743 = vadd.f32 %v3742, 1.0
        %v3744 = vrcp.pop %v3743
        %v3745 = vmul.f32 %v3743, %v3744
        %v3746 = vsub.f32 1.0, %v3745
        %v3747 = vmul.f32 %v3744, %v3746
        %v3748 = vadd.f32 %v3744, %v3747
        %vm3749 = vweird.f32 %v3743
        %vm3750 = vweird.f32 %v3744
        %vm3751 = vmor %vm3749, %vm3750
        %v3752 = vsel %vm3751, %v3744, %v3748
        %v3753 = vand.u32 2147483647, %v3743
        %vm3754 = vcmp.eq.f32.partialorder %v3753, 8.507059e+37
        %v3755 = vand.u32 %v3743, 2147483648
        %v3756 = vor.u32 1.1754944e-38, %v3755
        %v3757 = vsel %vm3754, %v3756, %v3752
        %v3758 = vmul.f32 %v3733, %v3757
        %v3759 = vmin.f32 %v3758, 1.0
        %v3760 = vmax.f32 %v3759, -1.0
        %v3761 = vadd.f32 %v3760, 1.0
        %v3762 = vmul.f32 %v3719, %v3761
        %v3763 = vpack.c.bf16 %v3762, %v3762
        %v3764 = vld [vmem:[%s55] sm:$0xff]
        %v3765 = vld [vmem:[%s55 + $0x8] sm:$0xff]
        %v3766 = vld [vmem:[%s55 + $0x10] sm:$0xff]
        %v3767 = vld [vmem:[%s55 + $0x18] sm:$0xff]
        %v3768 = vld [vmem:[%s55 + $0x20] sm:$0xff]
        %v3769 = vld [vmem:[%s55 + $0x28] sm:$0xff]
        %v3770 = vld [vmem:[%s55 + $0x30] sm:$0xff]
        %v3771 = vld [vmem:[%s55 + $0x38] sm:$0xff]
        %v3772 = vld [vmem:[%s55 + $0x40] sm:$0xff]
        %v3773 = vld [vmem:[%s55 + $0x48] sm:$0xff]
        %v3774 = vld [vmem:[%s55 + $0x50] sm:$0xff]
        %v3775 = vld [vmem:[%s55 + $0x58] sm:$0xff]
        %v3776 = vld [vmem:[%s55 + $0x60] sm:$0xff]
        %v3777 = vld [vmem:[%s55 + $0x68] sm:$0xff]
        %v3778 = vld [vmem:[%s55 + $0x70] sm:$0xff]
        %v3779 = vld [vmem:[%s55 + $0x78] sm:$0xff]
        %v3796 = vunpack.c.l.b16 %v3764
        %v3797 = vunpack.c.h.b16 %v3764
        %v3798 = vunpack.c.l.b16 %v3765
        %v3799 = vunpack.c.h.b16 %v3765
        %v3800 = vunpack.c.l.b16 %v3766
        %v3801 = vunpack.c.h.b16 %v3766
        %v3802 = vunpack.c.l.b16 %v3767
        %v3803 = vunpack.c.h.b16 %v3767
        %v3804 = vunpack.c.l.b16 %v3768
        %v3805 = vunpack.c.h.b16 %v3768
        %v3806 = vunpack.c.l.b16 %v3769
        %v3807 = vunpack.c.h.b16 %v3769
        %v3808 = vunpack.c.l.b16 %v3770
        %v3809 = vunpack.c.h.b16 %v3770
        %v3810 = vunpack.c.l.b16 %v3771
        %v3811 = vunpack.c.h.b16 %v3771
        %v3812 = vunpack.c.l.b16 %v3772
        %v3813 = vunpack.c.h.b16 %v3772
        %v3814 = vunpack.c.l.b16 %v3773
        %v3815 = vunpack.c.h.b16 %v3773
        %v3816 = vunpack.c.l.b16 %v3774
        %v3817 = vunpack.c.h.b16 %v3774
        %v3818 = vunpack.c.l.b16 %v3775
        %v3819 = vunpack.c.h.b16 %v3775
        %v3820 = vunpack.c.l.b16 %v3776
        %v3821 = vunpack.c.h.b16 %v3776
        %v3822 = vunpack.c.l.b16 %v3777
        %v3823 = vunpack.c.h.b16 %v3777
        %v3824 = vunpack.c.l.b16 %v3778
        %v3825 = vunpack.c.h.b16 %v3778
        %v3826 = vunpack.c.l.b16 %v3779
        %v3827 = vunpack.c.h.b16 %v3779
        %v3828 = vpack.c.b16 %v3798, %v3796
        %v3829 = vpack.c.b16 %v3799, %v3797
        %v3830 = vpack.c.b16 %v3802, %v3800
        %v3831 = vpack.c.b16 %v3803, %v3801
        %v3832 = vpack.c.b16 %v3806, %v3804
        %v3833 = vpack.c.b16 %v3807, %v3805
        %v3834 = vpack.c.b16 %v3810, %v3808
        %v3835 = vpack.c.b16 %v3811, %v3809
        %v3836 = vpack.c.b16 %v3814, %v3812
        %v3837 = vpack.c.b16 %v3815, %v3813
        %v3838 = vpack.c.b16 %v3818, %v3816
        %v3839 = vpack.c.b16 %v3819, %v3817
        %v3840 = vpack.c.b16 %v3822, %v3820
        %v3841 = vpack.c.b16 %v3823, %v3821
        %v3842 = vpack.c.b16 %v3826, %v3824
        %v3843 = vpack.c.b16 %v3827, %v3825
        %3860 = vmatpush.bf16.msra.mxu0 %v3842
        %3861 = vmatpush.bf16.msra.mxu0 %v3840
        %3862 = vmatpush.bf16.msra.mxu0 %v3838
        %3863 = vmatpush.bf16.msra.mxu0 %v3836
        %3864 = vmatpush.bf16.msra.mxu0 %v3834
        %3865 = vmatpush.bf16.msra.mxu0 %v3832
        %3866 = vmatpush.bf16.msra.mxu0 %v3830
        %3867 = vmatpush.bf16.msra.mxu0 %v3828
        %3868 = vmatmul.bf16.gmra.mxu0 %v3763
        %v3869 = vpop.f32.mrf.mxu0
        %v3870 = vadd.f32 0.0, %v3869
        %v3871 = vpop.f32.mrf.mxu0
        %3872 = vdwg.mxu0
        %3873 = vmatpush.bf16.msra.mxu0 %v3843
        %3874 = vmatpush.bf16.msra.mxu0 %v3841
        %3875 = vmatpush.bf16.msra.mxu0 %v3839
        %3876 = vmatpush.bf16.msra.mxu0 %v3837
        %3877 = vmatpush.bf16.msra.mxu0 %v3835
        %3878 = vmatpush.bf16.msra.mxu0 %v3833
        %3879 = vmatpush.bf16.msra.mxu0 %v3831
        %3880 = vmatpush.bf16.msra.mxu0 %v3829
        %3881 = vmatmul.bf16.gmra.mxu0 %v3763
        %v3882 = vpop.f32.mrf.mxu0
        %v3883 = vadd.f32 0.0, %v3882
        %v3884 = vpop.f32.mrf.mxu0
        %3885 = vdwg.mxu0
        %v3886 = vadd.f32 %v3514, %v3870
        %v3887 = vadd.f32 %v3515, %v3883
        %v3888 = vld [vmem:[%s57] sm:$0x3]
        %v3890 = vperm.slane %v3888, 0
        %v3891 = vperm.slane %v3888, 1
        %v3894 = vadd.f32 %v3886, %v3890
        %v3895 = vadd.f32 %v3887, %v3891
        %s3896 = scalar_lea.vmem %s35, 2
        %v3897 = vld [vmem:[%s3896] sm:$0x3]
        %s3898 = scalar_lea.vmem %s37, 2
        %v3899 = vld [vmem:[%s3898] sm:$0x3]
        %v3900 = vadd.f32 %v3894, %v3895
        %3901 = vadd.xlane.f32.xlu0 %v3900
        %v3902 = vpop.xlane.xlu0 %3901
        %v3903 = vmul.f32 %v3902, 0.004016064
        %v3904 = vsub.f32 %v3894, %v3903
        %v3905 = vsub.f32 %v3895, %v3903
        %v3906 = vmul.f32 %v3904, %v1208
        %v3907 = vmul.f32 %v3905, %v1209
        %v3908 = vmul.f32 %v3906, %v3906
        %v3909 = vmul.f32 %v3907, %v3907
        %v3910 = vadd.f32 %v3908, %v3909
        %3911 = vadd.xlane.f32.xlu0 %v3910
        %v3912 = vpop.xlane.xlu0 %3911
        %v3913 = vmul.f32 %v3912, 0.004016064
        %v3914 = vadd.f32 %v3913, 1e-05
        %v3915 = vrsqrt.pop %v3914
        %v3916 = vmul.f32 %v3915, %v3914
        %v3917 = vmul.f32 %v3916, %v3915
        %v3918 = vmul.f32 0.5, %v3917
        %v3919 = vsub.f32 1.5, %v3918
        %v3920 = vmul.f32 %v3915, %v3919
        %vm3921 = vweird.f32 %v3914
        %vm3922 = vweird.f32 %v3915
        %vm3923 = vmor %vm3921, %vm3922
        %v3924 = vsel %vm3923, %v3915, %v3920
        %v3925 = vmul.f32 %v3906, %v3924
        %v3926 = vmul.f32 %v3907, %v3924
        %v3928 = vperm.slane %v3897, 0
        %v3929 = vperm.slane %v3897, 1
        %v3932 = vmul.f32 %v3925, %v3928
        %v3933 = vmul.f32 %v3926, %v3929
        %v3935 = vperm.slane %v3899, 0
        %v3936 = vperm.slane %v3899, 1
        %v3939 = vadd.f32 %v3932, %v3935
        %v3940 = vadd.f32 %v3933, %v3936
        %v3941 = vpack.c.bf16 %v3939, %v3939
        %v3942 = vpack.c.bf16 %v3940, %v3940
        %s3943 = scalar_lea.vmem %s39, 768
        %v3944 = vld [vmem:[%s3943] sm:$0xff]
        %v3945 = vld [vmem:[%s3943 + $0x8] sm:$0xff]
        %v3946 = vld [vmem:[%s3943 + $0x10] sm:$0xff]
        %v3947 = vld [vmem:[%s3943 + $0x18] sm:$0xff]
        %v3948 = vld [vmem:[%s3943 + $0x20] sm:$0xff]
        %v3949 = vld [vmem:[%s3943 + $0x28] sm:$0xff]
        %v3950 = vld [vmem:[%s3943 + $0x30] sm:$0xff]
        %v3951 = vld [vmem:[%s3943 + $0x38] sm:$0xff]
        %v3952 = vld [vmem:[%s3943 + $0x40] sm:$0xff]
        %v3953 = vld [vmem:[%s3943 + $0x48] sm:$0xff]
        %v3954 = vld [vmem:[%s3943 + $0x50] sm:$0xff]
        %v3955 = vld [vmem:[%s3943 + $0x58] sm:$0xff]
        %v3956 = vld [vmem:[%s3943 + $0x60] sm:$0xff]
        %v3957 = vld [vmem:[%s3943 + $0x68] sm:$0xff]
        %v3958 = vld [vmem:[%s3943 + $0x70] sm:$0xff]
        %v3959 = vld [vmem:[%s3943 + $0x78] sm:$0xff]
        %v3960 = vld [vmem:[%s3943 + $0x80] sm:$0xff]
        %v3961 = vld [vmem:[%s3943 + $0x88] sm:$0xff]
        %v3962 = vld [vmem:[%s3943 + $0x90] sm:$0xff]
        %v3963 = vld [vmem:[%s3943 + $0x98] sm:$0xff]
        %v3964 = vld [vmem:[%s3943 + $0xa0] sm:$0xff]
        %v3965 = vld [vmem:[%s3943 + $0xa8] sm:$0xff]
        %v3966 = vld [vmem:[%s3943 + $0xb0] sm:$0xff]
        %v3967 = vld [vmem:[%s3943 + $0xb8] sm:$0xff]
        %v3968 = vld [vmem:[%s3943 + $0xc0] sm:$0xff]
        %v3969 = vld [vmem:[%s3943 + $0xc8] sm:$0xff]
        %v3970 = vld [vmem:[%s3943 + $0xd0] sm:$0xff]
        %v3971 = vld [vmem:[%s3943 + $0xd8] sm:$0xff]
        %v3972 = vld [vmem:[%s3943 + $0xe0] sm:$0xff]
        %v3973 = vld [vmem:[%s3943 + $0xe8] sm:$0xff]
        %v3974 = vld [vmem:[%s3943 + $0xf0] sm:$0xff]
        %v3975 = vld [vmem:[%s3943 + $0xf8] sm:$0xff]
        %v3976 = vld [vmem:[%s3943 + $0x100] sm:$0xff]
        %v3977 = vld [vmem:[%s3943 + $0x108] sm:$0xff]
        %v3978 = vld [vmem:[%s3943 + $0x110] sm:$0xff]
        %v3979 = vld [vmem:[%s3943 + $0x118] sm:$0xff]
        %v3980 = vld [vmem:[%s3943 + $0x120] sm:$0xff]
        %v3981 = vld [vmem:[%s3943 + $0x128] sm:$0xff]
        %v3982 = vld [vmem:[%s3943 + $0x130] sm:$0xff]
        %v3983 = vld [vmem:[%s3943 + $0x138] sm:$0xff]
        %v3984 = vld [vmem:[%s3943 + $0x140] sm:$0xff]
        %v3985 = vld [vmem:[%s3943 + $0x148] sm:$0xff]
        %v3986 = vld [vmem:[%s3943 + $0x150] sm:$0xff]
        %v3987 = vld [vmem:[%s3943 + $0x158] sm:$0xff]
        %v3988 = vld [vmem:[%s3943 + $0x160] sm:$0xff]
        %v3989 = vld [vmem:[%s3943 + $0x168] sm:$0xff]
        %v3990 = vld [vmem:[%s3943 + $0x170] sm:$0xff]
        %v3991 = vld [vmem:[%s3943 + $0x178] sm:$0xff]
        %v3992 = vld [vmem:[%s3943 + $0x180] sm:$0xff]
        %v3993 = vld [vmem:[%s3943 + $0x188] sm:$0xff]
        %v3994 = vld [vmem:[%s3943 + $0x190] sm:$0xff]
        %v3995 = vld [vmem:[%s3943 + $0x198] sm:$0xff]
        %v3996 = vld [vmem:[%s3943 + $0x1a0] sm:$0xff]
        %v3997 = vld [vmem:[%s3943 + $0x1a8] sm:$0xff]
        %v3998 = vld [vmem:[%s3943 + $0x1b0] sm:$0xff]
        %v3999 = vld [vmem:[%s3943 + $0x1b8] sm:$0xff]
        %v4000 = vld [vmem:[%s3943 + $0x1c0] sm:$0xff]
        %v4001 = vld [vmem:[%s3943 + $0x1c8] sm:$0xff]
        %v4002 = vld [vmem:[%s3943 + $0x1d0] sm:$0xff]
        %v4003 = vld [vmem:[%s3943 + $0x1d8] sm:$0xff]
        %v4004 = vld [vmem:[%s3943 + $0x1e0] sm:$0xff]
        %v4005 = vld [vmem:[%s3943 + $0x1e8] sm:$0xff]
        %v4006 = vld [vmem:[%s3943 + $0x1f0] sm:$0xff]
        %v4007 = vld [vmem:[%s3943 + $0x1f8] sm:$0xff]
        %v4008 = vld [vmem:[%s3943 + $0x200] sm:$0xff]
        %v4009 = vld [vmem:[%s3943 + $0x208] sm:$0xff]
        %v4010 = vld [vmem:[%s3943 + $0x210] sm:$0xff]
        %v4011 = vld [vmem:[%s3943 + $0x218] sm:$0xff]
        %v4012 = vld [vmem:[%s3943 + $0x220] sm:$0xff]
        %v4013 = vld [vmem:[%s3943 + $0x228] sm:$0xff]
        %v4014 = vld [vmem:[%s3943 + $0x230] sm:$0xff]
        %v4015 = vld [vmem:[%s3943 + $0x238] sm:$0xff]
        %v4016 = vld [vmem:[%s3943 + $0x240] sm:$0xff]
        %v4017 = vld [vmem:[%s3943 + $0x248] sm:$0xff]
        %v4018 = vld [vmem:[%s3943 + $0x250] sm:$0xff]
        %v4019 = vld [vmem:[%s3943 + $0x258] sm:$0xff]
        %v4020 = vld [vmem:[%s3943 + $0x260] sm:$0xff]
        %v4021 = vld [vmem:[%s3943 + $0x268] sm:$0xff]
        %v4022 = vld [vmem:[%s3943 + $0x270] sm:$0xff]
        %v4023 = vld [vmem:[%s3943 + $0x278] sm:$0xff]
        %v4024 = vld [vmem:[%s3943 + $0x280] sm:$0xff]
        %v4025 = vld [vmem:[%s3943 + $0x288] sm:$0xff]
        %v4026 = vld [vmem:[%s3943 + $0x290] sm:$0xff]
        %v4027 = vld [vmem:[%s3943 + $0x298] sm:$0xff]
        %v4028 = vld [vmem:[%s3943 + $0x2a0] sm:$0xff]
        %v4029 = vld [vmem:[%s3943 + $0x2a8] sm:$0xff]
        %v4030 = vld [vmem:[%s3943 + $0x2b0] sm:$0xff]
        %v4031 = vld [vmem:[%s3943 + $0x2b8] sm:$0xff]
        %v4032 = vld [vmem:[%s3943 + $0x2c0] sm:$0xff]
        %v4033 = vld [vmem:[%s3943 + $0x2c8] sm:$0xff]
        %v4034 = vld [vmem:[%s3943 + $0x2d0] sm:$0xff]
        %v4035 = vld [vmem:[%s3943 + $0x2d8] sm:$0xff]
        %v4036 = vld [vmem:[%s3943 + $0x2e0] sm:$0xff]
        %v4037 = vld [vmem:[%s3943 + $0x2e8] sm:$0xff]
        %v4038 = vld [vmem:[%s3943 + $0x2f0] sm:$0xff]
        %v4039 = vld [vmem:[%s3943 + $0x2f8] sm:$0xff]
        %s4040 = scalar_lea.vmem %s41, 6
        %v4041 = vld [vmem:[%s4040] sm:$0x3f]
        %v4043 = vperm.slane %v4041, 0
        %v4044 = vperm.slane %v4041, 1
        %v4045 = vperm.slane %v4041, 2
        %v4046 = vperm.slane %v4041, 3
        %v4047 = vperm.slane %v4041, 4
        %v4048 = vperm.slane %v4041, 5
        %v4151 = vunpack.c.l.b16 %v3944
        %v4152 = vunpack.c.h.b16 %v3944
        %v4153 = vunpack.c.l.b16 %v3945
        %v4154 = vunpack.c.h.b16 %v3945
        %v4155 = vunpack.c.l.b16 %v3946
        %v4156 = vunpack.c.h.b16 %v3946
        %v4157 = vunpack.c.l.b16 %v3947
        %v4158 = vunpack.c.h.b16 %v3947
        %v4159 = vunpack.c.l.b16 %v3948
        %v4160 = vunpack.c.h.b16 %v3948
        %v4161 = vunpack.c.l.b16 %v3949
        %v4162 = vunpack.c.h.b16 %v3949
        %v4163 = vunpack.c.l.b16 %v3950
        %v4164 = vunpack.c.h.b16 %v3950
        %v4165 = vunpack.c.l.b16 %v3951
        %v4166 = vunpack.c.h.b16 %v3951
        %v4167 = vunpack.c.l.b16 %v3952
        %v4168 = vunpack.c.h.b16 %v3952
        %v4169 = vunpack.c.l.b16 %v3953
        %v4170 = vunpack.c.h.b16 %v3953
        %v4171 = vunpack.c.l.b16 %v3954
        %v4172 = vunpack.c.h.b16 %v3954
        %v4173 = vunpack.c.l.b16 %v3955
        %v4174 = vunpack.c.h.b16 %v3955
        %v4175 = vunpack.c.l.b16 %v3956
        %v4176 = vunpack.c.h.b16 %v3956
        %v4177 = vunpack.c.l.b16 %v3957
        %v4178 = vunpack.c.h.b16 %v3957
        %v4179 = vunpack.c.l.b16 %v3958
        %v4180 = vunpack.c.h.b16 %v3958
        %v4181 = vunpack.c.l.b16 %v3959
        %v4182 = vunpack.c.h.b16 %v3959
        %v4183 = vunpack.c.l.b16 %v3960
        %v4184 = vunpack.c.h.b16 %v3960
        %v4185 = vunpack.c.l.b16 %v3961
        %v4186 = vunpack.c.h.b16 %v3961
        %v4187 = vunpack.c.l.b16 %v3962
        %v4188 = vunpack.c.h.b16 %v3962
        %v4189 = vunpack.c.l.b16 %v3963
        %v4190 = vunpack.c.h.b16 %v3963
        %v4191 = vunpack.c.l.b16 %v3964
        %v4192 = vunpack.c.h.b16 %v3964
        %v4193 = vunpack.c.l.b16 %v3965
        %v4194 = vunpack.c.h.b16 %v3965
        %v4195 = vunpack.c.l.b16 %v3966
        %v4196 = vunpack.c.h.b16 %v3966
        %v4197 = vunpack.c.l.b16 %v3967
        %v4198 = vunpack.c.h.b16 %v3967
        %v4199 = vunpack.c.l.b16 %v3968
        %v4200 = vunpack.c.h.b16 %v3968
        %v4201 = vunpack.c.l.b16 %v3969
        %v4202 = vunpack.c.h.b16 %v3969
        %v4203 = vunpack.c.l.b16 %v3970
        %v4204 = vunpack.c.h.b16 %v3970
        %v4205 = vunpack.c.l.b16 %v3971
        %v4206 = vunpack.c.h.b16 %v3971
        %v4207 = vunpack.c.l.b16 %v3972
        %v4208 = vunpack.c.h.b16 %v3972
        %v4209 = vunpack.c.l.b16 %v3973
        %v4210 = vunpack.c.h.b16 %v3973
        %v4211 = vunpack.c.l.b16 %v3974
        %v4212 = vunpack.c.h.b16 %v3974
        %v4213 = vunpack.c.l.b16 %v3975
        %v4214 = vunpack.c.h.b16 %v3975
        %v4215 = vunpack.c.l.b16 %v3976
        %v4216 = vunpack.c.h.b16 %v3976
        %v4217 = vunpack.c.l.b16 %v3977
        %v4218 = vunpack.c.h.b16 %v3977
        %v4219 = vunpack.c.l.b16 %v3978
        %v4220 = vunpack.c.h.b16 %v3978
        %v4221 = vunpack.c.l.b16 %v3979
        %v4222 = vunpack.c.h.b16 %v3979
        %v4223 = vunpack.c.l.b16 %v3980
        %v4224 = vunpack.c.h.b16 %v3980
        %v4225 = vunpack.c.l.b16 %v3981
        %v4226 = vunpack.c.h.b16 %v3981
        %v4227 = vunpack.c.l.b16 %v3982
        %v4228 = vunpack.c.h.b16 %v3982
        %v4229 = vunpack.c.l.b16 %v3983
        %v4230 = vunpack.c.h.b16 %v3983
        %v4231 = vunpack.c.l.b16 %v3984
        %v4232 = vunpack.c.h.b16 %v3984
        %v4233 = vunpack.c.l.b16 %v3985
        %v4234 = vunpack.c.h.b16 %v3985
        %v4235 = vunpack.c.l.b16 %v3986
        %v4236 = vunpack.c.h.b16 %v3986
        %v4237 = vunpack.c.l.b16 %v3987
        %v4238 = vunpack.c.h.b16 %v3987
        %v4239 = vunpack.c.l.b16 %v3988
        %v4240 = vunpack.c.h.b16 %v3988
        %v4241 = vunpack.c.l.b16 %v3989
        %v4242 = vunpack.c.h.b16 %v3989
        %v4243 = vunpack.c.l.b16 %v3990
        %v4244 = vunpack.c.h.b16 %v3990
        %v4245 = vunpack.c.l.b16 %v3991
        %v4246 = vunpack.c.h.b16 %v3991
        %v4247 = vunpack.c.l.b16 %v3992
        %v4248 = vunpack.c.h.b16 %v3992
        %v4249 = vunpack.c.l.b16 %v3993
        %v4250 = vunpack.c.h.b16 %v3993
        %v4251 = vunpack.c.l.b16 %v3994
        %v4252 = vunpack.c.h.b16 %v3994
        %v4253 = vunpack.c.l.b16 %v3995
        %v4254 = vunpack.c.h.b16 %v3995
        %v4255 = vunpack.c.l.b16 %v3996
        %v4256 = vunpack.c.h.b16 %v3996
        %v4257 = vunpack.c.l.b16 %v3997
        %v4258 = vunpack.c.h.b16 %v3997
        %v4259 = vunpack.c.l.b16 %v3998
        %v4260 = vunpack.c.h.b16 %v3998
        %v4261 = vunpack.c.l.b16 %v3999
        %v4262 = vunpack.c.h.b16 %v3999
        %v4263 = vunpack.c.l.b16 %v4000
        %v4264 = vunpack.c.h.b16 %v4000
        %v4265 = vunpack.c.l.b16 %v4001
        %v4266 = vunpack.c.h.b16 %v4001
        %v4267 = vunpack.c.l.b16 %v4002
        %v4268 = vunpack.c.h.b16 %v4002
        %v4269 = vunpack.c.l.b16 %v4003
        %v4270 = vunpack.c.h.b16 %v4003
        %v4271 = vunpack.c.l.b16 %v4004
        %v4272 = vunpack.c.h.b16 %v4004
        %v4273 = vunpack.c.l.b16 %v4005
        %v4274 = vunpack.c.h.b16 %v4005
        %v4275 = vunpack.c.l.b16 %v4006
        %v4276 = vunpack.c.h.b16 %v4006
        %v4277 = vunpack.c.l.b16 %v4007
        %v4278 = vunpack.c.h.b16 %v4007
        %v4279 = vunpack.c.l.b16 %v4008
        %v4280 = vunpack.c.h.b16 %v4008
        %v4281 = vunpack.c.l.b16 %v4009
        %v4282 = vunpack.c.h.b16 %v4009
        %v4283 = vunpack.c.l.b16 %v4010
        %v4284 = vunpack.c.h.b16 %v4010
        %v4285 = vunpack.c.l.b16 %v4011
        %v4286 = vunpack.c.h.b16 %v4011
        %v4287 = vunpack.c.l.b16 %v4012
        %v4288 = vunpack.c.h.b16 %v4012
        %v4289 = vunpack.c.l.b16 %v4013
        %v4290 = vunpack.c.h.b16 %v4013
        %v4291 = vunpack.c.l.b16 %v4014
        %v4292 = vunpack.c.h.b16 %v4014
        %v4293 = vunpack.c.l.b16 %v4015
        %v4294 = vunpack.c.h.b16 %v4015
        %v4295 = vunpack.c.l.b16 %v4016
        %v4296 = vunpack.c.h.b16 %v4016
        %v4297 = vunpack.c.l.b16 %v4017
        %v4298 = vunpack.c.h.b16 %v4017
        %v4299 = vunpack.c.l.b16 %v4018
        %v4300 = vunpack.c.h.b16 %v4018
        %v4301 = vunpack.c.l.b16 %v4019
        %v4302 = vunpack.c.h.b16 %v4019
        %v4303 = vunpack.c.l.b16 %v4020
        %v4304 = vunpack.c.h.b16 %v4020
        %v4305 = vunpack.c.l.b16 %v4021
        %v4306 = vunpack.c.h.b16 %v4021
        %v4307 = vunpack.c.l.b16 %v4022
        %v4308 = vunpack.c.h.b16 %v4022
        %v4309 = vunpack.c.l.b16 %v4023
        %v4310 = vunpack.c.h.b16 %v4023
        %v4311 = vunpack.c.l.b16 %v4024
        %v4312 = vunpack.c.h.b16 %v4024
        %v4313 = vunpack.c.l.b16 %v4025
        %v4314 = vunpack.c.h.b16 %v4025
        %v4315 = vunpack.c.l.b16 %v4026
        %v4316 = vunpack.c.h.b16 %v4026
        %v4317 = vunpack.c.l.b16 %v4027
        %v4318 = vunpack.c.h.b16 %v4027
        %v4319 = vunpack.c.l.b16 %v4028
        %v4320 = vunpack.c.h.b16 %v4028
        %v4321 = vunpack.c.l.b16 %v4029
        %v4322 = vunpack.c.h.b16 %v4029
        %v4323 = vunpack.c.l.b16 %v4030
        %v4324 = vunpack.c.h.b16 %v4030
        %v4325 = vunpack.c.l.b16 %v4031
        %v4326 = vunpack.c.h.b16 %v4031
        %v4327 = vunpack.c.l.b16 %v4032
        %v4328 = vunpack.c.h.b16 %v4032
        %v4329 = vunpack.c.l.b16 %v4033
        %v4330 = vunpack.c.h.b16 %v4033
        %v4331 = vunpack.c.l.b16 %v4034
        %v4332 = vunpack.c.h.b16 %v4034
        %v4333 = vunpack.c.l.b16 %v4035
        %v4334 = vunpack.c.h.b16 %v4035
        %v4335 = vunpack.c.l.b16 %v4036
        %v4336 = vunpack.c.h.b16 %v4036
        %v4337 = vunpack.c.l.b16 %v4037
        %v4338 = vunpack.c.h.b16 %v4037
        %v4339 = vunpack.c.l.b16 %v4038
        %v4340 = vunpack.c.h.b16 %v4038
        %v4341 = vunpack.c.l.b16 %v4039
        %v4342 = vunpack.c.h.b16 %v4039
        %v4343 = vpack.c.b16 %v4157, %v4151
        %v4344 = vpack.c.b16 %v4158, %v4152
        %v4345 = vpack.c.b16 %v4159, %v4153
        %v4346 = vpack.c.b16 %v4160, %v4154
        %v4347 = vpack.c.b16 %v4161, %v4155
        %v4348 = vpack.c.b16 %v4162, %v4156
        %v4349 = vpack.c.b16 %v4169, %v4163
        %v4350 = vpack.c.b16 %v4170, %v4164
        %v4351 = vpack.c.b16 %v4171, %v4165
        %v4352 = vpack.c.b16 %v4172, %v4166
        %v4353 = vpack.c.b16 %v4173, %v4167
        %v4354 = vpack.c.b16 %v4174, %v4168
        %v4355 = vpack.c.b16 %v4181, %v4175
        %v4356 = vpack.c.b16 %v4182, %v4176
        %v4357 = vpack.c.b16 %v4183, %v4177
        %v4358 = vpack.c.b16 %v4184, %v4178
        %v4359 = vpack.c.b16 %v4185, %v4179
        %v4360 = vpack.c.b16 %v4186, %v4180
        %v4361 = vpack.c.b16 %v4193, %v4187
        %v4362 = vpack.c.b16 %v4194, %v4188
        %v4363 = vpack.c.b16 %v4195, %v4189
        %v4364 = vpack.c.b16 %v4196, %v4190
        %v4365 = vpack.c.b16 %v4197, %v4191
        %v4366 = vpack.c.b16 %v4198, %v4192
        %v4367 = vpack.c.b16 %v4205, %v4199
        %v4368 = vpack.c.b16 %v4206, %v4200
        %v4369 = vpack.c.b16 %v4207, %v4201
        %v4370 = vpack.c.b16 %v4208, %v4202
        %v4371 = vpack.c.b16 %v4209, %v4203
        %v4372 = vpack.c.b16 %v4210, %v4204
        %v4373 = vpack.c.b16 %v4217, %v4211
        %v4374 = vpack.c.b16 %v4218, %v4212
        %v4375 = vpack.c.b16 %v4219, %v4213
        %v4376 = vpack.c.b16 %v4220, %v4214
        %v4377 = vpack.c.b16 %v4221, %v4215
        %v4378 = vpack.c.b16 %v4222, %v4216
        %v4379 = vpack.c.b16 %v4229, %v4223
        %v4380 = vpack.c.b16 %v4230, %v4224
        %v4381 = vpack.c.b16 %v4231, %v4225
        %v4382 = vpack.c.b16 %v4232, %v4226
        %v4383 = vpack.c.b16 %v4233, %v4227
        %v4384 = vpack.c.b16 %v4234, %v4228
        %v4385 = vpack.c.b16 %v4241, %v4235
        %v4386 = vpack.c.b16 %v4242, %v4236
        %v4387 = vpack.c.b16 %v4243, %v4237
        %v4388 = vpack.c.b16 %v4244, %v4238
        %v4389 = vpack.c.b16 %v4245, %v4239
        %v4390 = vpack.c.b16 %v4246, %v4240
        %v4391 = vpack.c.b16 %v4253, %v4247
        %v4392 = vpack.c.b16 %v4254, %v4248
        %v4393 = vpack.c.b16 %v4255, %v4249
        %v4394 = vpack.c.b16 %v4256, %v4250
        %v4395 = vpack.c.b16 %v4257, %v4251
        %v4396 = vpack.c.b16 %v4258, %v4252
        %v4397 = vpack.c.b16 %v4265, %v4259
        %v4398 = vpack.c.b16 %v4266, %v4260
        %v4399 = vpack.c.b16 %v4267, %v4261
        %v4400 = vpack.c.b16 %v4268, %v4262
        %v4401 = vpack.c.b16 %v4269, %v4263
        %v4402 = vpack.c.b16 %v4270, %v4264
        %v4403 = vpack.c.b16 %v4277, %v4271
        %v4404 = vpack.c.b16 %v4278, %v4272
        %v4405 = vpack.c.b16 %v4279, %v4273
        %v4406 = vpack.c.b16 %v4280, %v4274
        %v4407 = vpack.c.b16 %v4281, %v4275
        %v4408 = vpack.c.b16 %v4282, %v4276
        %v4409 = vpack.c.b16 %v4289, %v4283
        %v4410 = vpack.c.b16 %v4290, %v4284
        %v4411 = vpack.c.b16 %v4291, %v4285
        %v4412 = vpack.c.b16 %v4292, %v4286
        %v4413 = vpack.c.b16 %v4293, %v4287
        %v4414 = vpack.c.b16 %v4294, %v4288
        %v4415 = vpack.c.b16 %v4301, %v4295
        %v4416 = vpack.c.b16 %v4302, %v4296
        %v4417 = vpack.c.b16 %v4303, %v4297
        %v4418 = vpack.c.b16 %v4304, %v4298
        %v4419 = vpack.c.b16 %v4305, %v4299
        %v4420 = vpack.c.b16 %v4306, %v4300
        %v4421 = vpack.c.b16 %v4313, %v4307
        %v4422 = vpack.c.b16 %v4314, %v4308
        %v4423 = vpack.c.b16 %v4315, %v4309
        %v4424 = vpack.c.b16 %v4316, %v4310
        %v4425 = vpack.c.b16 %v4317, %v4311
        %v4426 = vpack.c.b16 %v4318, %v4312
        %v4427 = vpack.c.b16 %v4325, %v4319
        %v4428 = vpack.c.b16 %v4326, %v4320
        %v4429 = vpack.c.b16 %v4327, %v4321
        %v4430 = vpack.c.b16 %v4328, %v4322
        %v4431 = vpack.c.b16 %v4329, %v4323
        %v4432 = vpack.c.b16 %v4330, %v4324
        %v4433 = vpack.c.b16 %v4337, %v4331
        %v4434 = vpack.c.b16 %v4338, %v4332
        %v4435 = vpack.c.b16 %v4339, %v4333
        %v4436 = vpack.c.b16 %v4340, %v4334
        %v4437 = vpack.c.b16 %v4341, %v4335
        %v4438 = vpack.c.b16 %v4342, %v4336
        %4535 = vmatpush.bf16.msra.mxu0 %v4385
        %4536 = vmatpush.bf16.msra.mxu0 %v4379
        %4537 = vmatpush.bf16.msra.mxu0 %v4373
        %4538 = vmatpush.bf16.msra.mxu0 %v4367
        %4539 = vmatpush.bf16.msra.mxu0 %v4361
        %4540 = vmatpush.bf16.msra.mxu0 %v4355
        %4541 = vmatpush.bf16.msra.mxu0 %v4349
        %4542 = vmatpush.bf16.msra.mxu0 %v4343
        %4543 = vmatmul.bf16.gmra.mxu0 %v3941
        %v4544 = vpop.f32.mrf.mxu0
        %v4545 = vadd.f32 %v4043, %v4544
        %v4546 = vpop.f32.mrf.mxu0
        %4547 = vdwg.mxu0
        %4548 = vmatpush.bf16.msra.mxu0 %v4433
        %4549 = vmatpush.bf16.msra.mxu0 %v4427
        %4550 = vmatpush.bf16.msra.mxu0 %v4421
        %4551 = vmatpush.bf16.msra.mxu0 %v4415
        %4552 = vmatpush.bf16.msra.mxu0 %v4409
        %4553 = vmatpush.bf16.msra.mxu0 %v4403
        %4554 = vmatpush.bf16.msra.mxu0 %v4397
        %4555 = vmatpush.bf16.msra.mxu0 %v4391
        %4556 = vmatmul.bf16.gmra.mxu0 %v3942
        %v4557 = vpop.f32.mrf.mxu0
        %v4558 = vadd.f32 %v4545, %v4557
        %v4559 = vpop.f32.mrf.mxu0
        %4560 = vdwg.mxu0
        %4561 = vmatpush.bf16.msra.mxu0 %v4386
        %4562 = vmatpush.bf16.msra.mxu0 %v4380
        %4563 = vmatpush.bf16.msra.mxu0 %v4374
        %4564 = vmatpush.bf16.msra.mxu0 %v4368
        %4565 = vmatpush.bf16.msra.mxu0 %v4362
        %4566 = vmatpush.bf16.msra.mxu0 %v4356
        %4567 = vmatpush.bf16.msra.mxu0 %v4350
        %4568 = vmatpush.bf16.msra.mxu0 %v4344
        %4569 = vmatmul.bf16.gmra.mxu0 %v3941
        %v4570 = vpop.f32.mrf.mxu0
        %v4571 = vadd.f32 %v4044, %v4570
        %v4572 = vpop.f32.mrf.mxu0
        %4573 = vdwg.mxu0
        %4574 = vmatpush.bf16.msra.mxu0 %v4434
        %4575 = vmatpush.bf16.msra.mxu0 %v4428
        %4576 = vmatpush.bf16.msra.mxu0 %v4422
        %4577 = vmatpush.bf16.msra.mxu0 %v4416
        %4578 = vmatpush.bf16.msra.mxu0 %v4410
        %4579 = vmatpush.bf16.msra.mxu0 %v4404
        %4580 = vmatpush.bf16.msra.mxu0 %v4398
        %4581 = vmatpush.bf16.msra.mxu0 %v4392
        %4582 = vmatmul.bf16.gmra.mxu0 %v3942
        %v4583 = vpop.f32.mrf.mxu0
        %v4584 = vadd.f32 %v4571, %v4583
        %v4585 = vpop.f32.mrf.mxu0
        %4586 = vdwg.mxu0
        %4587 = vmatpush.bf16.msra.mxu0 %v4387
        %4588 = vmatpush.bf16.msra.mxu0 %v4381
        %4589 = vmatpush.bf16.msra.mxu0 %v4375
        %4590 = vmatpush.bf16.msra.mxu0 %v4369
        %4591 = vmatpush.bf16.msra.mxu0 %v4363
        %4592 = vmatpush.bf16.msra.mxu0 %v4357
        %4593 = vmatpush.bf16.msra.mxu0 %v4351
        %4594 = vmatpush.bf16.msra.mxu0 %v4345
        %4595 = vmatmul.bf16.gmra.mxu0 %v3941
        %v4596 = vpop.f32.mrf.mxu0
        %v4597 = vadd.f32 %v4045, %v4596
        %v4598 = vpop.f32.mrf.mxu0
        %4599 = vdwg.mxu0
        %4600 = vmatpush.bf16.msra.mxu0 %v4435
        %4601 = vmatpush.bf16.msra.mxu0 %v4429
        %4602 = vmatpush.bf16.msra.mxu0 %v4423
        %4603 = vmatpush.bf16.msra.mxu0 %v4417
        %4604 = vmatpush.bf16.msra.mxu0 %v4411
        %4605 = vmatpush.bf16.msra.mxu0 %v4405
        %4606 = vmatpush.bf16.msra.mxu0 %v4399
        %4607 = vmatpush.bf16.msra.mxu0 %v4393
        %4608 = vmatmul.bf16.gmra.mxu0 %v3942
        %v4609 = vpop.f32.mrf.mxu0
        %v4610 = vadd.f32 %v4597, %v4609
        %v4611 = vpop.f32.mrf.mxu0
        %4612 = vdwg.mxu0
        %4613 = vmatpush.bf16.msra.mxu0 %v4388
        %4614 = vmatpush.bf16.msra.mxu0 %v4382
        %4615 = vmatpush.bf16.msra.mxu0 %v4376
        %4616 = vmatpush.bf16.msra.mxu0 %v4370
        %4617 = vmatpush.bf16.msra.mxu0 %v4364
        %4618 = vmatpush.bf16.msra.mxu0 %v4358
        %4619 = vmatpush.bf16.msra.mxu0 %v4352
        %4620 = vmatpush.bf16.msra.mxu0 %v4346
        %4621 = vmatmul.bf16.gmra.mxu0 %v3941
        %v4622 = vpop.f32.mrf.mxu0
        %v4623 = vadd.f32 %v4046, %v4622
        %v4624 = vpop.f32.mrf.mxu0
        %4625 = vdwg.mxu0
        %4626 = vmatpush.bf16.msra.mxu0 %v4436
        %4627 = vmatpush.bf16.msra.mxu0 %v4430
        %4628 = vmatpush.bf16.msra.mxu0 %v4424
        %4629 = vmatpush.bf16.msra.mxu0 %v4418
        %4630 = vmatpush.bf16.msra.mxu0 %v4412
        %4631 = vmatpush.bf16.msra.mxu0 %v4406
        %4632 = vmatpush.bf16.msra.mxu0 %v4400
        %4633 = vmatpush.bf16.msra.mxu0 %v4394
        %4634 = vmatmul.bf16.gmra.mxu0 %v3942
        %v4635 = vpop.f32.mrf.mxu0
        %v4636 = vadd.f32 %v4623, %v4635
        %v4637 = vpop.f32.mrf.mxu0
        %4638 = vdwg.mxu0
        %4639 = vmatpush.bf16.msra.mxu0 %v4389
        %4640 = vmatpush.bf16.msra.mxu0 %v4383
        %4641 = vmatpush.bf16.msra.mxu0 %v4377
        %4642 = vmatpush.bf16.msra.mxu0 %v4371
        %4643 = vmatpush.bf16.msra.mxu0 %v4365
        %4644 = vmatpush.bf16.msra.mxu0 %v4359
        %4645 = vmatpush.bf16.msra.mxu0 %v4353
        %4646 = vmatpush.bf16.msra.mxu0 %v4347
        %4647 = vmatmul.bf16.gmra.mxu0 %v3941
        %v4648 = vpop.f32.mrf.mxu0
        %v4649 = vadd.f32 %v4047, %v4648
        %v4650 = vpop.f32.mrf.mxu0
        %4651 = vdwg.mxu0
        %4652 = vmatpush.bf16.msra.mxu0 %v4437
        %4653 = vmatpush.bf16.msra.mxu0 %v4431
        %4654 = vmatpush.bf16.msra.mxu0 %v4425
        %4655 = vmatpush.bf16.msra.mxu0 %v4419
        %4656 = vmatpush.bf16.msra.mxu0 %v4413
        %4657 = vmatpush.bf16.msra.mxu0 %v4407
        %4658 = vmatpush.bf16.msra.mxu0 %v4401
        %4659 = vmatpush.bf16.msra.mxu0 %v4395
        %4660 = vmatmul.bf16.gmra.mxu0 %v3942
        %v4661 = vpop.f32.mrf.mxu0
        %v4662 = vadd.f32 %v4649, %v4661
        %v4663 = vpop.f32.mrf.mxu0
        %4664 = vdwg.mxu0
        %4665 = vmatpush.bf16.msra.mxu0 %v4390
        %4666 = vmatpush.bf16.msra.mxu0 %v4384
        %4667 = vmatpush.bf16.msra.mxu0 %v4378
        %4668 = vmatpush.bf16.msra.mxu0 %v4372
        %4669 = vmatpush.bf16.msra.mxu0 %v4366
        %4670 = vmatpush.bf16.msra.mxu0 %v4360
        %4671 = vmatpush.bf16.msra.mxu0 %v4354
        %4672 = vmatpush.bf16.msra.mxu0 %v4348
        %4673 = vmatmul.bf16.gmra.mxu0 %v3941
        %v4674 = vpop.f32.mrf.mxu0
        %v4675 = vadd.f32 %v4048, %v4674
        %v4676 = vpop.f32.mrf.mxu0
        %4677 = vdwg.mxu0
        %4678 = vmatpush.bf16.msra.mxu0 %v4438
        %4679 = vmatpush.bf16.msra.mxu0 %v4432
        %4680 = vmatpush.bf16.msra.mxu0 %v4426
        %4681 = vmatpush.bf16.msra.mxu0 %v4420
        %4682 = vmatpush.bf16.msra.mxu0 %v4414
        %4683 = vmatpush.bf16.msra.mxu0 %v4408
        %4684 = vmatpush.bf16.msra.mxu0 %v4402
        %4685 = vmatpush.bf16.msra.mxu0 %v4396
        %4686 = vmatmul.bf16.gmra.mxu0 %v3942
        %v4687 = vpop.f32.mrf.mxu0
        %v4688 = vadd.f32 %v4675, %v4687
        %v4689 = vpop.f32.mrf.mxu0
        %4690 = vdwg.mxu0
        %v4691 = vmul.f32 %v4558, 0.12700012
        %v4693 = vsel %vm2991, %v4691, 0
        %v4696 = vsel %vm2991, %v4610, 0
        %4698 = vmatpush.xpose.msra.mxu0 0.0
        %4699 = vmatpush.xpose.msra.mxu0 0.0
        %4700 = vmatpush.xpose.msra.mxu0 0.0
        %4701 = vmatpush.xpose.msra.mxu0 0.0
        %4702 = vmatpush.xpose.msra.mxu0 0.0
        %4703 = vmatpush.xpose.msra.mxu0 0.0
        %4704 = vmatpush.xpose.msra.mxu0 0.0
        %4705 = vmatpush.xpose.msra.mxu0 0.0
        %4706 = vmatpush.xpose.msra.mxu0 0.0
        %4707 = vmatpush.xpose.msra.mxu0 0.0
        %4708 = vmatpush.xpose.msra.mxu0 0.0
        %4709 = vmatpush.xpose.msra.mxu0 0.0
        %4710 = vmatpush.xpose.msra.mxu0 0.0
        %4711 = vmatpush.xpose.msra.mxu0 0.0
        %4712 = vmatpush.xpose.msra.mxu0 0.0
        %4713 = vmatpush.xpose.msra.mxu0 %v4696
        %4714 = vmatmul.f32.gmra.mxu0 %v4693
        %v4715 = vpop.f32.mrf.mxu0
        %v4716 = vadd.f32 0.0, %v4715
        %4717 = vdwg.mxu0
        %v4718 = vmul.f32 %v4716, %v2198
        %v4719 = vsel %vm3019, %v4718, -inf
        %4720 = vmax.xlane.f32.xlu0 %v4719
        %v4721 = vpop.xlane.xlu0 %4720
        %v4722 = vsub.f32 %v4718, %v4721
        %v4723 = vmul.f32 %v4722, 1.442695
        %v4724 = vpow.pop %v4723
        %v4725 = vsel %vm3019, %v4724, 0.0
        %4726 = vadd.xlane.f32.xlu0 %v4725
        %v4727 = vpop.xlane.xlu0 %4726
        %v4728 = vrcp.pop %v4727
        %v4729 = vmul.f32 %v4724, %v4728
        %v4731 = vsel %vm3019, %v4729, 0
        %4733 = vmatpush.msra.mxu0 0.0
        %4734 = vmatpush.msra.mxu0 0.0
        %4735 = vmatpush.msra.mxu0 0.0
        %4736 = vmatpush.msra.mxu0 0.0
        %4737 = vmatpush.msra.mxu0 0.0
        %4738 = vmatpush.msra.mxu0 0.0
        %4739 = vmatpush.msra.mxu0 0.0
        %4740 = vmatpush.msra.mxu0 0.0
        %4741 = vmatpush.msra.mxu0 0.0
        %4742 = vmatpush.msra.mxu0 0.0
        %4743 = vmatpush.msra.mxu0 0.0
        %4744 = vmatpush.msra.mxu0 0.0
        %4745 = vmatpush.msra.mxu0 0.0
        %4746 = vmatpush.msra.mxu0 0.0
        %4747 = vmatpush.msra.mxu0 0.0
        %4748 = vmatpush.msra.mxu0 %v4662
        %4749 = vmatmul.f32.gmra.mxu0 %v4731
        %v4750 = vpop.f32.mrf.mxu0
        %v4751 = vadd.f32 0.0, %v4750
        %4752 = vdwg.mxu0
        %4753 = vrot.lane.b32.xlu0 %v4691, 64
        %v4754 = vpop.permute.xlu0 %4753
        %4755 = vrot.lane.b32.xlu0 %v4610, 64
        %v4756 = vpop.permute.xlu0 %4755
        %v4757 = vsel %vm2991, %v4754, 0
        %v4759 = vsel %vm2991, %v4756, 0
        %4761 = vmatpush.xpose.msra.mxu0 0.0
        %4762 = vmatpush.xpose.msra.mxu0 0.0
        %4763 = vmatpush.xpose.msra.mxu0 0.0
        %4764 = vmatpush.xpose.msra.mxu0 0.0
        %4765 = vmatpush.xpose.msra.mxu0 0.0
        %4766 = vmatpush.xpose.msra.mxu0 0.0
        %4767 = vmatpush.xpose.msra.mxu0 0.0
        %4768 = vmatpush.xpose.msra.mxu0 0.0
        %4769 = vmatpush.xpose.msra.mxu0 0.0
        %4770 = vmatpush.xpose.msra.mxu0 0.0
        %4771 = vmatpush.xpose.msra.mxu0 0.0
        %4772 = vmatpush.xpose.msra.mxu0 0.0
        %4773 = vmatpush.xpose.msra.mxu0 0.0
        %4774 = vmatpush.xpose.msra.mxu0 0.0
        %4775 = vmatpush.xpose.msra.mxu0 0.0
        %4776 = vmatpush.xpose.msra.mxu0 %v4759
        %4777 = vmatmul.f32.gmra.mxu0 %v4757
        %v4778 = vpop.f32.mrf.mxu0
        %v4779 = vadd.f32 0.0, %v4778
        %4780 = vdwg.mxu0
        %v4781 = vmul.f32 %v4779, %v2198
        %v4782 = vsel %vm3019, %v4781, -inf
        %4783 = vmax.xlane.f32.xlu0 %v4782
        %v4784 = vpop.xlane.xlu0 %4783
        %v4785 = vsub.f32 %v4781, %v4784
        %v4786 = vmul.f32 %v4785, 1.442695
        %v4787 = vpow.pop %v4786
        %v4788 = vsel %vm3019, %v4787, 0.0
        %4789 = vadd.xlane.f32.xlu0 %v4788
        %v4790 = vpop.xlane.xlu0 %4789
        %v4791 = vrcp.pop %v4790
        %v4792 = vmul.f32 %v4787, %v4791
        %4794 = vrot.lane.b32.xlu0 %v4662, 64
        %v4795 = vpop.permute.xlu0 %4794
        %v4798 = vsel %vm3019, %v4792, 0
        %4800 = vmatpush.msra.mxu0 0.0
        %4801 = vmatpush.msra.mxu0 0.0
        %4802 = vmatpush.msra.mxu0 0.0
        %4803 = vmatpush.msra.mxu0 0.0
        %4804 = vmatpush.msra.mxu0 0.0
        %4805 = vmatpush.msra.mxu0 0.0
        %4806 = vmatpush.msra.mxu0 0.0
        %4807 = vmatpush.msra.mxu0 0.0
        %4808 = vmatpush.msra.mxu0 0.0
        %4809 = vmatpush.msra.mxu0 0.0
        %4810 = vmatpush.msra.mxu0 0.0
        %4811 = vmatpush.msra.mxu0 0.0
        %4812 = vmatpush.msra.mxu0 0.0
        %4813 = vmatpush.msra.mxu0 0.0
        %4814 = vmatpush.msra.mxu0 0.0
        %4815 = vmatpush.msra.mxu0 %v4795
        %4816 = vmatmul.f32.gmra.mxu0 %v4798
        %v4817 = vpop.f32.mrf.mxu0
        %v4818 = vadd.f32 0.0, %v4817
        %4819 = vdwg.mxu0
        %v4820 = vmul.f32 %v4584, 0.12700012
        %v4822 = vsel %vm2991, %v4820, 0
        %v4825 = vsel %vm2991, %v4636, 0
        %4827 = vmatpush.xpose.msra.mxu0 0.0
        %4828 = vmatpush.xpose.msra.mxu0 0.0
        %4829 = vmatpush.xpose.msra.mxu0 0.0
        %4830 = vmatpush.xpose.msra.mxu0 0.0
        %4831 = vmatpush.xpose.msra.mxu0 0.0
        %4832 = vmatpush.xpose.msra.mxu0 0.0
        %4833 = vmatpush.xpose.msra.mxu0 0.0
        %4834 = vmatpush.xpose.msra.mxu0 0.0
        %4835 = vmatpush.xpose.msra.mxu0 0.0
        %4836 = vmatpush.xpose.msra.mxu0 0.0
        %4837 = vmatpush.xpose.msra.mxu0 0.0
        %4838 = vmatpush.xpose.msra.mxu0 0.0
        %4839 = vmatpush.xpose.msra.mxu0 0.0
        %4840 = vmatpush.xpose.msra.mxu0 0.0
        %4841 = vmatpush.xpose.msra.mxu0 0.0
        %4842 = vmatpush.xpose.msra.mxu0 %v4825
        %4843 = vmatmul.f32.gmra.mxu0 %v4822
        %v4844 = vpop.f32.mrf.mxu0
        %v4845 = vadd.f32 0.0, %v4844
        %4846 = vdwg.mxu0
        %v4847 = vmul.f32 %v4845, %v2198
        %v4848 = vsel %vm3019, %v4847, -inf
        %4849 = vmax.xlane.f32.xlu0 %v4848
        %v4850 = vpop.xlane.xlu0 %4849
        %v4851 = vsub.f32 %v4847, %v4850
        %v4852 = vmul.f32 %v4851, 1.442695
        %v4853 = vpow.pop %v4852
        %v4854 = vsel %vm3019, %v4853, 0.0
        %4855 = vadd.xlane.f32.xlu0 %v4854
        %v4856 = vpop.xlane.xlu0 %4855
        %v4857 = vrcp.pop %v4856
        %v4858 = vmul.f32 %v4853, %v4857
        %v4860 = vsel %vm3019, %v4858, 0
        %4862 = vmatpush.msra.mxu0 0.0
        %4863 = vmatpush.msra.mxu0 0.0
        %4864 = vmatpush.msra.mxu0 0.0
        %4865 = vmatpush.msra.mxu0 0.0
        %4866 = vmatpush.msra.mxu0 0.0
        %4867 = vmatpush.msra.mxu0 0.0
        %4868 = vmatpush.msra.mxu0 0.0
        %4869 = vmatpush.msra.mxu0 0.0
        %4870 = vmatpush.msra.mxu0 0.0
        %4871 = vmatpush.msra.mxu0 0.0
        %4872 = vmatpush.msra.mxu0 0.0
        %4873 = vmatpush.msra.mxu0 0.0
        %4874 = vmatpush.msra.mxu0 0.0
        %4875 = vmatpush.msra.mxu0 0.0
        %4876 = vmatpush.msra.mxu0 0.0
        %4877 = vmatpush.msra.mxu0 %v4688
        %4878 = vmatmul.f32.gmra.mxu0 %v4860
        %v4879 = vpop.f32.mrf.mxu0
        %v4880 = vadd.f32 0.0, %v4879
        %4881 = vdwg.mxu0
        %4882 = vrot.lane.b32.xlu0 %v4820, 64
        %v4883 = vpop.permute.xlu0 %4882
        %4884 = vrot.lane.b32.xlu0 %v4636, 64
        %v4885 = vpop.permute.xlu0 %4884
        %v4886 = vsel %vm2991, %v4883, 0
        %v4888 = vsel %vm2991, %v4885, 0
        %4890 = vmatpush.xpose.msra.mxu0 0.0
        %4891 = vmatpush.xpose.msra.mxu0 0.0
        %4892 = vmatpush.xpose.msra.mxu0 0.0
        %4893 = vmatpush.xpose.msra.mxu0 0.0
        %4894 = vmatpush.xpose.msra.mxu0 0.0
        %4895 = vmatpush.xpose.msra.mxu0 0.0
        %4896 = vmatpush.xpose.msra.mxu0 0.0
        %4897 = vmatpush.xpose.msra.mxu0 0.0
        %4898 = vmatpush.xpose.msra.mxu0 0.0
        %4899 = vmatpush.xpose.msra.mxu0 0.0
        %4900 = vmatpush.xpose.msra.mxu0 0.0
        %4901 = vmatpush.xpose.msra.mxu0 0.0
        %4902 = vmatpush.xpose.msra.mxu0 0.0
        %4903 = vmatpush.xpose.msra.mxu0 0.0
        %4904 = vmatpush.xpose.msra.mxu0 0.0
        %4905 = vmatpush.xpose.msra.mxu0 %v4888
        %4906 = vmatmul.f32.gmra.mxu0 %v4886
        %v4907 = vpop.f32.mrf.mxu0
        %v4908 = vadd.f32 0.0, %v4907
        %4909 = vdwg.mxu0
        %v4910 = vmul.f32 %v4908, %v2198
        %v4911 = vsel %vm3019, %v4910, -inf
        %4912 = vmax.xlane.f32.xlu0 %v4911
        %v4913 = vpop.xlane.xlu0 %4912
        %v4914 = vsub.f32 %v4910, %v4913
        %v4915 = vmul.f32 %v4914, 1.442695
        %v4916 = vpow.pop %v4915
        %v4917 = vsel %vm3019, %v4916, 0.0
        %4918 = vadd.xlane.f32.xlu0 %v4917
        %v4919 = vpop.xlane.xlu0 %4918
        %v4920 = vrcp.pop %v4919
        %v4921 = vmul.f32 %v4916, %v4920
        %4923 = vrot.lane.b32.xlu0 %v4688, 64
        %v4924 = vpop.permute.xlu0 %4923
        %v4927 = vsel %vm3019, %v4921, 0
        %4929 = vmatpush.msra.mxu0 0.0
        %4930 = vmatpush.msra.mxu0 0.0
        %4931 = vmatpush.msra.mxu0 0.0
        %4932 = vmatpush.msra.mxu0 0.0
        %4933 = vmatpush.msra.mxu0 0.0
        %4934 = vmatpush.msra.mxu0 0.0
        %4935 = vmatpush.msra.mxu0 0.0
        %4936 = vmatpush.msra.mxu0 0.0
        %4937 = vmatpush.msra.mxu0 0.0
        %4938 = vmatpush.msra.mxu0 0.0
        %4939 = vmatpush.msra.mxu0 0.0
        %4940 = vmatpush.msra.mxu0 0.0
        %4941 = vmatpush.msra.mxu0 0.0
        %4942 = vmatpush.msra.mxu0 0.0
        %4943 = vmatpush.msra.mxu0 0.0
        %4944 = vmatpush.msra.mxu0 %v4924
        %4945 = vmatmul.f32.gmra.mxu0 %v4927
        %v4946 = vpop.f32.mrf.mxu0
        %v4947 = vadd.f32 0.0, %v4946
        %4948 = vdwg.mxu0
        %4950 = vrot.lane.b32.xlu0 %v4818, 64
        %v4951 = vpop.permute.xlu0 %4950
        %4954 = vrot.lane.b32.xlu0 %v4947, 64
        %v4955 = vpop.permute.xlu0 %4954
        %v4957 = vsel %vm2991, %v4751, %v4951
        %v4958 = vsel %vm2991, %v4880, %v4955
        %v4959 = vpack.c.bf16 %v4957, %v4957
        %v4960 = vpack.c.bf16 %v4958, %v4958
        %s4961 = scalar_lea.vmem %s43, 256
        %v4962 = vld [vmem:[%s4961] sm:$0xff]
        %v4963 = vld [vmem:[%s4961 + $0x8] sm:$0xff]
        %v4964 = vld [vmem:[%s4961 + $0x10] sm:$0xff]
        %v4965 = vld [vmem:[%s4961 + $0x18] sm:$0xff]
        %v4966 = vld [vmem:[%s4961 + $0x20] sm:$0xff]
        %v4967 = vld [vmem:[%s4961 + $0x28] sm:$0xff]
        %v4968 = vld [vmem:[%s4961 + $0x30] sm:$0xff]
        %v4969 = vld [vmem:[%s4961 + $0x38] sm:$0xff]
        %v4970 = vld [vmem:[%s4961 + $0x40] sm:$0xff]
        %v4971 = vld [vmem:[%s4961 + $0x48] sm:$0xff]
        %v4972 = vld [vmem:[%s4961 + $0x50] sm:$0xff]
        %v4973 = vld [vmem:[%s4961 + $0x58] sm:$0xff]
        %v4974 = vld [vmem:[%s4961 + $0x60] sm:$0xff]
        %v4975 = vld [vmem:[%s4961 + $0x68] sm:$0xff]
        %v4976 = vld [vmem:[%s4961 + $0x70] sm:$0xff]
        %v4977 = vld [vmem:[%s4961 + $0x78] sm:$0xff]
        %v4978 = vld [vmem:[%s4961 + $0x80] sm:$0xff]
        %v4979 = vld [vmem:[%s4961 + $0x88] sm:$0xff]
        %v4980 = vld [vmem:[%s4961 + $0x90] sm:$0xff]
        %v4981 = vld [vmem:[%s4961 + $0x98] sm:$0xff]
        %v4982 = vld [vmem:[%s4961 + $0xa0] sm:$0xff]
        %v4983 = vld [vmem:[%s4961 + $0xa8] sm:$0xff]
        %v4984 = vld [vmem:[%s4961 + $0xb0] sm:$0xff]
        %v4985 = vld [vmem:[%s4961 + $0xb8] sm:$0xff]
        %v4986 = vld [vmem:[%s4961 + $0xc0] sm:$0xff]
        %v4987 = vld [vmem:[%s4961 + $0xc8] sm:$0xff]
        %v4988 = vld [vmem:[%s4961 + $0xd0] sm:$0xff]
        %v4989 = vld [vmem:[%s4961 + $0xd8] sm:$0xff]
        %v4990 = vld [vmem:[%s4961 + $0xe0] sm:$0xff]
        %v4991 = vld [vmem:[%s4961 + $0xe8] sm:$0xff]
        %v4992 = vld [vmem:[%s4961 + $0xf0] sm:$0xff]
        %v4993 = vld [vmem:[%s4961 + $0xf8] sm:$0xff]
        %v5026 = vunpack.c.l.b16 %v4962
        %v5027 = vunpack.c.h.b16 %v4962
        %v5028 = vunpack.c.l.b16 %v4963
        %v5029 = vunpack.c.h.b16 %v4963
        %v5030 = vunpack.c.l.b16 %v4964
        %v5031 = vunpack.c.h.b16 %v4964
        %v5032 = vunpack.c.l.b16 %v4965
        %v5033 = vunpack.c.h.b16 %v4965
        %v5034 = vunpack.c.l.b16 %v4966
        %v5035 = vunpack.c.h.b16 %v4966
        %v5036 = vunpack.c.l.b16 %v4967
        %v5037 = vunpack.c.h.b16 %v4967
        %v5038 = vunpack.c.l.b16 %v4968
        %v5039 = vunpack.c.h.b16 %v4968
        %v5040 = vunpack.c.l.b16 %v4969
        %v5041 = vunpack.c.h.b16 %v4969
        %v5042 = vunpack.c.l.b16 %v4970
        %v5043 = vunpack.c.h.b16 %v4970
        %v5044 = vunpack.c.l.b16 %v4971
        %v5045 = vunpack.c.h.b16 %v4971
        %v5046 = vunpack.c.l.b16 %v4972
        %v5047 = vunpack.c.h.b16 %v4972
        %v5048 = vunpack.c.l.b16 %v4973
        %v5049 = vunpack.c.h.b16 %v4973
        %v5050 = vunpack.c.l.b16 %v4974
        %v5051 = vunpack.c.h.b16 %v4974
        %v5052 = vunpack.c.l.b16 %v4975
        %v5053 = vunpack.c.h.b16 %v4975
        %v5054 = vunpack.c.l.b16 %v4976
        %v5055 = vunpack.c.h.b16 %v4976
        %v5056 = vunpack.c.l.b16 %v4977
        %v5057 = vunpack.c.h.b16 %v4977
        %v5058 = vunpack.c.l.b16 %v4978
        %v5059 = vunpack.c.h.b16 %v4978
        %v5060 = vunpack.c.l.b16 %v4979
        %v5061 = vunpack.c.h.b16 %v4979
        %v5062 = vunpack.c.l.b16 %v4980
        %v5063 = vunpack.c.h.b16 %v4980
        %v5064 = vunpack.c.l.b16 %v4981
        %v5065 = vunpack.c.h.b16 %v4981
        %v5066 = vunpack.c.l.b16 %v4982
        %v5067 = vunpack.c.h.b16 %v4982
        %v5068 = vunpack.c.l.b16 %v4983
        %v5069 = vunpack.c.h.b16 %v4983
        %v5070 = vunpack.c.l.b16 %v4984
        %v5071 = vunpack.c.h.b16 %v4984
        %v5072 = vunpack.c.l.b16 %v4985
        %v5073 = vunpack.c.h.b16 %v4985
        %v5074 = vunpack.c.l.b16 %v4986
        %v5075 = vunpack.c.h.b16 %v4986
        %v5076 = vunpack.c.l.b16 %v4987
        %v5077 = vunpack.c.h.b16 %v4987
        %v5078 = vunpack.c.l.b16 %v4988
        %v5079 = vunpack.c.h.b16 %v4988
        %v5080 = vunpack.c.l.b16 %v4989
        %v5081 = vunpack.c.h.b16 %v4989
        %v5082 = vunpack.c.l.b16 %v4990
        %v5083 = vunpack.c.h.b16 %v4990
        %v5084 = vunpack.c.l.b16 %v4991
        %v5085 = vunpack.c.h.b16 %v4991
        %v5086 = vunpack.c.l.b16 %v4992
        %v5087 = vunpack.c.h.b16 %v4992
        %v5088 = vunpack.c.l.b16 %v4993
        %v5089 = vunpack.c.h.b16 %v4993
        %v5090 = vpack.c.b16 %v5028, %v5026
        %v5091 = vpack.c.b16 %v5029, %v5027
        %v5092 = vpack.c.b16 %v5032, %v5030
        %v5093 = vpack.c.b16 %v5033, %v5031
        %v5094 = vpack.c.b16 %v5036, %v5034
        %v5095 = vpack.c.b16 %v5037, %v5035
        %v5096 = vpack.c.b16 %v5040, %v5038
        %v5097 = vpack.c.b16 %v5041, %v5039
        %v5098 = vpack.c.b16 %v5044, %v5042
        %v5099 = vpack.c.b16 %v5045, %v5043
        %v5100 = vpack.c.b16 %v5048, %v5046
        %v5101 = vpack.c.b16 %v5049, %v5047
        %v5102 = vpack.c.b16 %v5052, %v5050
        %v5103 = vpack.c.b16 %v5053, %v5051
        %v5104 = vpack.c.b16 %v5056, %v5054
        %v5105 = vpack.c.b16 %v5057, %v5055
        %v5106 = vpack.c.b16 %v5060, %v5058
        %v5107 = vpack.c.b16 %v5061, %v5059
        %v5108 = vpack.c.b16 %v5064, %v5062
        %v5109 = vpack.c.b16 %v5065, %v5063
        %v5110 = vpack.c.b16 %v5068, %v5066
        %v5111 = vpack.c.b16 %v5069, %v5067
        %v5112 = vpack.c.b16 %v5072, %v5070
        %v5113 = vpack.c.b16 %v5073, %v5071
        %v5114 = vpack.c.b16 %v5076, %v5074
        %v5115 = vpack.c.b16 %v5077, %v5075
        %v5116 = vpack.c.b16 %v5080, %v5078
        %v5117 = vpack.c.b16 %v5081, %v5079
        %v5118 = vpack.c.b16 %v5084, %v5082
        %v5119 = vpack.c.b16 %v5085, %v5083
        %v5120 = vpack.c.b16 %v5088, %v5086
        %v5121 = vpack.c.b16 %v5089, %v5087
        %5154 = vmatpush.bf16.msra.mxu0 %v5104
        %5155 = vmatpush.bf16.msra.mxu0 %v5102
        %5156 = vmatpush.bf16.msra.mxu0 %v5100
        %5157 = vmatpush.bf16.msra.mxu0 %v5098
        %5158 = vmatpush.bf16.msra.mxu0 %v5096
        %5159 = vmatpush.bf16.msra.mxu0 %v5094
        %5160 = vmatpush.bf16.msra.mxu0 %v5092
        %5161 = vmatpush.bf16.msra.mxu0 %v5090
        %5162 = vmatmul.bf16.gmra.mxu0 %v4959
        %v5163 = vpop.f32.mrf.mxu0
        %v5164 = vadd.f32 0.0, %v5163
        %v5165 = vpop.f32.mrf.mxu0
        %5166 = vdwg.mxu0
        %5167 = vmatpush.bf16.msra.mxu0 %v5120
        %5168 = vmatpush.bf16.msra.mxu0 %v5118
        %5169 = vmatpush.bf16.msra.mxu0 %v5116
        %5170 = vmatpush.bf16.msra.mxu0 %v5114
        %5171 = vmatpush.bf16.msra.mxu0 %v5112
        %5172 = vmatpush.bf16.msra.mxu0 %v5110
        %5173 = vmatpush.bf16.msra.mxu0 %v5108
        %5174 = vmatpush.bf16.msra.mxu0 %v5106
        %5175 = vmatmul.bf16.gmra.mxu0 %v4960
        %v5176 = vpop.f32.mrf.mxu0
        %v5177 = vadd.f32 %v5164, %v5176
        %v5178 = vpop.f32.mrf.mxu0
        %5179 = vdwg.mxu0
        %5180 = vmatpush.bf16.msra.mxu0 %v5105
        %5181 = vmatpush.bf16.msra.mxu0 %v5103
        %5182 = vmatpush.bf16.msra.mxu0 %v5101
        %5183 = vmatpush.bf16.msra.mxu0 %v5099
        %5184 = vmatpush.bf16.msra.mxu0 %v5097
        %5185 = vmatpush.bf16.msra.mxu0 %v5095
        %5186 = vmatpush.bf16.msra.mxu0 %v5093
        %5187 = vmatpush.bf16.msra.mxu0 %v5091
        %5188 = vmatmul.bf16.gmra.mxu0 %v4959
        %v5189 = vpop.f32.mrf.mxu0
        %v5190 = vadd.f32 0.0, %v5189
        %v5191 = vpop.f32.mrf.mxu0
        %5192 = vdwg.mxu0
        %5193 = vmatpush.bf16.msra.mxu0 %v5121
        %5194 = vmatpush.bf16.msra.mxu0 %v5119
        %5195 = vmatpush.bf16.msra.mxu0 %v5117
        %5196 = vmatpush.bf16.msra.mxu0 %v5115
        %5197 = vmatpush.bf16.msra.mxu0 %v5113
        %5198 = vmatpush.bf16.msra.mxu0 %v5111
        %5199 = vmatpush.bf16.msra.mxu0 %v5109
        %5200 = vmatpush.bf16.msra.mxu0 %v5107
        %5201 = vmatmul.bf16.gmra.mxu0 %v4960
        %v5202 = vpop.f32.mrf.mxu0
        %v5203 = vadd.f32 %v5190, %v5202
        %v5204 = vpop.f32.mrf.mxu0
        %5205 = vdwg.mxu0
        %v5206 = vadd.f32 %v3894, %v5177
        %v5207 = vadd.f32 %v3895, %v5203
        %s5208 = scalar_lea.vmem %s45, 2
        %v5209 = vld [vmem:[%s5208] sm:$0x3]
        %v5211 = vperm.slane %v5209, 0
        %v5212 = vperm.slane %v5209, 1
        %v5215 = vadd.f32 %v5206, %v5211
        %v5216 = vadd.f32 %v5207, %v5212
        %s5217 = scalar_lea.vmem %s47, 2
        %v5218 = vld [vmem:[%s5217] sm:$0x3]
        %s5219 = scalar_lea.vmem %s49, 2
        %v5220 = vld [vmem:[%s5219] sm:$0x3]
        %v5221 = vadd.f32 %v5215, %v5216
        %5222 = vadd.xlane.f32.xlu0 %v5221
        %v5223 = vpop.xlane.xlu0 %5222
        %v5224 = vmul.f32 %v5223, 0.004016064
        %v5225 = vsub.f32 %v5215, %v5224
        %v5226 = vsub.f32 %v5216, %v5224
        %v5227 = vmul.f32 %v5225, %v1208
        %v5228 = vmul.f32 %v5226, %v1209
        %v5229 = vmul.f32 %v5227, %v5227
        %v5230 = vmul.f32 %v5228, %v5228
        %v5231 = vadd.f32 %v5229, %v5230
        %5232 = vadd.xlane.f32.xlu0 %v5231
        %v5233 = vpop.xlane.xlu0 %5232
        %v5234 = vmul.f32 %v5233, 0.004016064
        %v5235 = vadd.f32 %v5234, 1e-05
        %v5236 = vrsqrt.pop %v5235
        %v5237 = vmul.f32 %v5236, %v5235
        %v5238 = vmul.f32 %v5237, %v5236
        %v5239 = vmul.f32 0.5, %v5238
        %v5240 = vsub.f32 1.5, %v5239
        %v5241 = vmul.f32 %v5236, %v5240
        %vm5242 = vweird.f32 %v5235
        %vm5243 = vweird.f32 %v5236
        %vm5244 = vmor %vm5242, %vm5243
        %v5245 = vsel %vm5244, %v5236, %v5241
        %v5246 = vmul.f32 %v5227, %v5245
        %v5247 = vmul.f32 %v5228, %v5245
        %v5249 = vperm.slane %v5218, 0
        %v5250 = vperm.slane %v5218, 1
        %v5253 = vmul.f32 %v5246, %v5249
        %v5254 = vmul.f32 %v5247, %v5250
        %v5256 = vperm.slane %v5220, 0
        %v5257 = vperm.slane %v5220, 1
        %v5260 = vadd.f32 %v5253, %v5256
        %v5261 = vadd.f32 %v5254, %v5257
        %v5262 = vpack.c.bf16 %v5260, %v5260
        %v5263 = vpack.c.bf16 %v5261, %v5261
        %s5264 = scalar_lea.vmem %s51, 128
        %v5265 = vld [vmem:[%s5264] sm:$0xf]
        %v5266 = vld [vmem:[%s5264 + $0x4] sm:$0xf]
        %v5267 = vld [vmem:[%s5264 + $0x8] sm:$0xf]
        %v5268 = vld [vmem:[%s5264 + $0xc] sm:$0xf]
        %v5269 = vld [vmem:[%s5264 + $0x10] sm:$0xf]
        %v5270 = vld [vmem:[%s5264 + $0x14] sm:$0xf]
        %v5271 = vld [vmem:[%s5264 + $0x18] sm:$0xf]
        %v5272 = vld [vmem:[%s5264 + $0x1c] sm:$0xf]
        %v5273 = vld [vmem:[%s5264 + $0x20] sm:$0xf]
        %v5274 = vld [vmem:[%s5264 + $0x24] sm:$0xf]
        %v5275 = vld [vmem:[%s5264 + $0x28] sm:$0xf]
        %v5276 = vld [vmem:[%s5264 + $0x2c] sm:$0xf]
        %v5277 = vld [vmem:[%s5264 + $0x30] sm:$0xf]
        %v5278 = vld [vmem:[%s5264 + $0x34] sm:$0xf]
        %v5279 = vld [vmem:[%s5264 + $0x38] sm:$0xf]
        %v5280 = vld [vmem:[%s5264 + $0x3c] sm:$0xf]
        %v5281 = vld [vmem:[%s5264 + $0x40] sm:$0xf]
        %v5282 = vld [vmem:[%s5264 + $0x44] sm:$0xf]
        %v5283 = vld [vmem:[%s5264 + $0x48] sm:$0xf]
        %v5284 = vld [vmem:[%s5264 + $0x4c] sm:$0xf]
        %v5285 = vld [vmem:[%s5264 + $0x50] sm:$0xf]
        %v5286 = vld [vmem:[%s5264 + $0x54] sm:$0xf]
        %v5287 = vld [vmem:[%s5264 + $0x58] sm:$0xf]
        %v5288 = vld [vmem:[%s5264 + $0x5c] sm:$0xf]
        %v5289 = vld [vmem:[%s5264 + $0x60] sm:$0xf]
        %v5290 = vld [vmem:[%s5264 + $0x64] sm:$0xf]
        %v5291 = vld [vmem:[%s5264 + $0x68] sm:$0xf]
        %v5292 = vld [vmem:[%s5264 + $0x6c] sm:$0xf]
        %v5293 = vld [vmem:[%s5264 + $0x70] sm:$0xf]
        %v5294 = vld [vmem:[%s5264 + $0x74] sm:$0xf]
        %v5295 = vld [vmem:[%s5264 + $0x78] sm:$0xf]
        %v5296 = vld [vmem:[%s5264 + $0x7c] sm:$0xf]
        %s5297 = scalar_lea.vmem %s53, 1
        %v5298 = vld [vmem:[%s5297] sm:$0x1]
        %v5300 = vperm.slane %v5298, 0
        %v5334 = vunpack.c.l.b16 %v5265
        %v5335 = vunpack.c.l.b16 %v5266
        %v5336 = vunpack.c.l.b16 %v5267
        %v5337 = vunpack.c.l.b16 %v5268
        %v5338 = vunpack.c.l.b16 %v5269
        %v5339 = vunpack.c.l.b16 %v5270
        %v5340 = vunpack.c.l.b16 %v5271
        %v5341 = vunpack.c.l.b16 %v5272
        %v5342 = vunpack.c.l.b16 %v5273
        %v5343 = vunpack.c.l.b16 %v5274
        %v5344 = vunpack.c.l.b16 %v5275
        %v5345 = vunpack.c.l.b16 %v5276
        %v5346 = vunpack.c.l.b16 %v5277
        %v5347 = vunpack.c.l.b16 %v5278
        %v5348 = vunpack.c.l.b16 %v5279
        %v5349 = vunpack.c.l.b16 %v5280
        %v5350 = vunpack.c.l.b16 %v5281
        %v5351 = vunpack.c.l.b16 %v5282
        %v5352 = vunpack.c.l.b16 %v5283
        %v5353 = vunpack.c.l.b16 %v5284
        %v5354 = vunpack.c.l.b16 %v5285
        %v5355 = vunpack.c.l.b16 %v5286
        %v5356 = vunpack.c.l.b16 %v5287
        %v5357 = vunpack.c.l.b16 %v5288
        %v5358 = vunpack.c.l.b16 %v5289
        %v5359 = vunpack.c.l.b16 %v5290
        %v5360 = vunpack.c.l.b16 %v5291
        %v5361 = vunpack.c.l.b16 %v5292
        %v5362 = vunpack.c.l.b16 %v5293
        %v5363 = vunpack.c.l.b16 %v5294
        %v5364 = vunpack.c.l.b16 %v5295
        %v5365 = vunpack.c.l.b16 %v5296
        %v5366 = vpack.c.b16 %v5335, %v5334
        %v5367 = vpack.c.b16 %v5337, %v5336
        %v5368 = vpack.c.b16 %v5339, %v5338
        %v5369 = vpack.c.b16 %v5341, %v5340
        %v5370 = vpack.c.b16 %v5343, %v5342
        %v5371 = vpack.c.b16 %v5345, %v5344
        %v5372 = vpack.c.b16 %v5347, %v5346
        %v5373 = vpack.c.b16 %v5349, %v5348
        %v5374 = vpack.c.b16 %v5351, %v5350
        %v5375 = vpack.c.b16 %v5353, %v5352
        %v5376 = vpack.c.b16 %v5355, %v5354
        %v5377 = vpack.c.b16 %v5357, %v5356
        %v5378 = vpack.c.b16 %v5359, %v5358
        %v5379 = vpack.c.b16 %v5361, %v5360
        %v5380 = vpack.c.b16 %v5363, %v5362
        %v5381 = vpack.c.b16 %v5365, %v5364
        %5398 = vmatpush.bf16.msra.mxu0 %v5373
        %5399 = vmatpush.bf16.msra.mxu0 %v5372
        %5400 = vmatpush.bf16.msra.mxu0 %v5371
        %5401 = vmatpush.bf16.msra.mxu0 %v5370
        %5402 = vmatpush.bf16.msra.mxu0 %v5369
        %5403 = vmatpush.bf16.msra.mxu0 %v5368
        %5404 = vmatpush.bf16.msra.mxu0 %v5367
        %5405 = vmatpush.bf16.msra.mxu0 %v5366
        %5406 = vmatmul.bf16.gmra.mxu0 %v5262
        %v5407 = vpop.f32.mrf.mxu0
        %v5408 = vadd.f32 %v5300, %v5407
        %v5409 = vpop.f32.mrf.mxu0
        %5410 = vdwg.mxu0
        %5411 = vmatpush.bf16.msra.mxu0 %v5381
        %5412 = vmatpush.bf16.msra.mxu0 %v5380
        %5413 = vmatpush.bf16.msra.mxu0 %v5379
        %5414 = vmatpush.bf16.msra.mxu0 %v5378
        %5415 = vmatpush.bf16.msra.mxu0 %v5377
        %5416 = vmatpush.bf16.msra.mxu0 %v5376
        %5417 = vmatpush.bf16.msra.mxu0 %v5375
        %5418 = vmatpush.bf16.msra.mxu0 %v5374
        %5419 = vmatmul.bf16.gmra.mxu0 %v5263
        %v5420 = vpop.f32.mrf.mxu0
        %v5421 = vadd.f32 %v5408, %v5420
        %v5422 = vpop.f32.mrf.mxu0
        %5423 = vdwg.mxu0
        %v5424 = vmul.f32 %v5421, 0.5
        %v5425 = vmul.f32 %v5421, 0.70710677
        %v5426 = vmul.f32 %v5425, %v5425
        %v5427 = vmin.f32 16.0, %v5426
        %v5428 = vmul.f32 %v5427, 2.1237322e-06
        %v5429 = vadd.f32 %v5428, 0.00028619796
        %v5430 = vmul.f32 %v5427, %v5429
        %v5431 = vadd.f32 %v5430, 0.0036580483
        %v5432 = vmul.f32 %v5427, %v5431
        %v5433 = vadd.f32 %v5432, 0.05243302
        %v5434 = vmul.f32 %v5427, %v5433
        %v5435 = vadd.f32 %v5434, 0.18741608
        %v5436 = vmul.f32 %v5427, %v5435
        %v5437 = vadd.f32 %v5436, 1.1283791
        %v5438 = vmul.f32 %v5425, %v5437
        %v5439 = vmul.f32 %v5427, 3.8918573e-05
        %v5440 = vadd.f32 %v5439, 0.001143296
        %v5441 = vmul.f32 %v5427, %v5440
        %v5442 = vadd.f32 %v5441, 0.014752088
        %v5443 = vmul.f32 %v5427, %v5442
        %v5444 = vadd.f32 %v5443, 0.112945676
        %v5445 = vmul.f32 %v5427, %v5444
        %v5446 = vadd.f32 %v5445, 0.4994258
        %v5447 = vmul.f32 %v5427, %v5446
        %v5448 = vadd.f32 %v5447, 1.0
        %v5449 = vrcp.pop %v5448
        %v5450 = vmul.f32 %v5448, %v5449
        %v5451 = vsub.f32 1.0, %v5450
        %v5452 = vmul.f32 %v5449, %v5451
        %v5453 = vadd.f32 %v5449, %v5452
        %vm5454 = vweird.f32 %v5448
        %vm5455 = vweird.f32 %v5449
        %vm5456 = vmor %vm5454, %vm5455
        %v5457 = vsel %vm5456, %v5449, %v5453
        %v5458 = vand.u32 2147483647, %v5448
        %vm5459 = vcmp.eq.f32.partialorder %v5458, 8.507059e+37
        %v5460 = vand.u32 %v5448, 2147483648
        %v5461 = vor.u32 1.1754944e-38, %v5460
        %v5462 = vsel %vm5459, %v5461, %v5457
        %v5463 = vmul.f32 %v5438, %v5462
        %v5464 = vmin.f32 %v5463, 1.0
        %v5465 = vmax.f32 %v5464, -1.0
        %v5466 = vadd.f32 %v5465, 1.0
        %v5467 = vmul.f32 %v5424, %v5466
        %v5468 = vpack.c.bf16 %v5467, %v5467
        %s5469 = scalar_lea.vmem %s55, 128
        %v5470 = vld [vmem:[%s5469] sm:$0xff]
        %v5471 = vld [vmem:[%s5469 + $0x8] sm:$0xff]
        %v5472 = vld [vmem:[%s5469 + $0x10] sm:$0xff]
        %v5473 = vld [vmem:[%s5469 + $0x18] sm:$0xff]
        %v5474 = vld [vmem:[%s5469 + $0x20] sm:$0xff]
        %v5475 = vld [vmem:[%s5469 + $0x28] sm:$0xff]
        %v5476 = vld [vmem:[%s5469 + $0x30] sm:$0xff]
        %v5477 = vld [vmem:[%s5469 + $0x38] sm:$0xff]
        %v5478 = vld [vmem:[%s5469 + $0x40] sm:$0xff]
        %v5479 = vld [vmem:[%s5469 + $0x48] sm:$0xff]
        %v5480 = vld [vmem:[%s5469 + $0x50] sm:$0xff]
        %v5481 = vld [vmem:[%s5469 + $0x58] sm:$0xff]
        %v5482 = vld [vmem:[%s5469 + $0x60] sm:$0xff]
        %v5483 = vld [vmem:[%s5469 + $0x68] sm:$0xff]
        %v5484 = vld [vmem:[%s5469 + $0x70] sm:$0xff]
        %v5485 = vld [vmem:[%s5469 + $0x78] sm:$0xff]
        %v5502 = vunpack.c.l.b16 %v5470
        %v5503 = vunpack.c.h.b16 %v5470
        %v5504 = vunpack.c.l.b16 %v5471
        %v5505 = vunpack.c.h.b16 %v5471
        %v5506 = vunpack.c.l.b16 %v5472
        %v5507 = vunpack.c.h.b16 %v5472
        %v5508 = vunpack.c.l.b16 %v5473
        %v5509 = vunpack.c.h.b16 %v5473
        %v5510 = vunpack.c.l.b16 %v5474
        %v5511 = vunpack.c.h.b16 %v5474
        %v5512 = vunpack.c.l.b16 %v5475
        %v5513 = vunpack.c.h.b16 %v5475
        %v5514 = vunpack.c.l.b16 %v5476
        %v5515 = vunpack.c.h.b16 %v5476
        %v5516 = vunpack.c.l.b16 %v5477
        %v5517 = vunpack.c.h.b16 %v5477
        %v5518 = vunpack.c.l.b16 %v5478
        %v5519 = vunpack.c.h.b16 %v5478
        %v5520 = vunpack.c.l.b16 %v5479
        %v5521 = vunpack.c.h.b16 %v5479
        %v5522 = vunpack.c.l.b16 %v5480
        %v5523 = vunpack.c.h.b16 %v5480
        %v5524 = vunpack.c.l.b16 %v5481
        %v5525 = vunpack.c.h.b16 %v5481
        %v5526 = vunpack.c.l.b16 %v5482
        %v5527 = vunpack.c.h.b16 %v5482
        %v5528 = vunpack.c.l.b16 %v5483
        %v5529 = vunpack.c.h.b16 %v5483
        %v5530 = vunpack.c.l.b16 %v5484
        %v5531 = vunpack.c.h.b16 %v5484
        %v5532 = vunpack.c.l.b16 %v5485
        %v5533 = vunpack.c.h.b16 %v5485
        %v5534 = vpack.c.b16 %v5504, %v5502
        %v5535 = vpack.c.b16 %v5505, %v5503
        %v5536 = vpack.c.b16 %v5508, %v5506
        %v5537 = vpack.c.b16 %v5509, %v5507
        %v5538 = vpack.c.b16 %v5512, %v5510
        %v5539 = vpack.c.b16 %v5513, %v5511
        %v5540 = vpack.c.b16 %v5516, %v5514
        %v5541 = vpack.c.b16 %v5517, %v5515
        %v5542 = vpack.c.b16 %v5520, %v5518
        %v5543 = vpack.c.b16 %v5521, %v5519
        %v5544 = vpack.c.b16 %v5524, %v5522
        %v5545 = vpack.c.b16 %v5525, %v5523
        %v5546 = vpack.c.b16 %v5528, %v5526
        %v5547 = vpack.c.b16 %v5529, %v5527
        %v5548 = vpack.c.b16 %v5532, %v5530
        %v5549 = vpack.c.b16 %v5533, %v5531
        %5566 = vmatpush.bf16.msra.mxu0 %v5548
        %5567 = vmatpush.bf16.msra.mxu0 %v5546
        %5568 = vmatpush.bf16.msra.mxu0 %v5544
        %5569 = vmatpush.bf16.msra.mxu0 %v5542
        %5570 = vmatpush.bf16.msra.mxu0 %v5540
        %5571 = vmatpush.bf16.msra.mxu0 %v5538
        %5572 = vmatpush.bf16.msra.mxu0 %v5536
        %5573 = vmatpush.bf16.msra.mxu0 %v5534
        %5574 = vmatmul.bf16.gmra.mxu0 %v5468
        %v5575 = vpop.f32.mrf.mxu0
        %v5576 = vadd.f32 0.0, %v5575
        %v5577 = vpop.f32.mrf.mxu0
        %5578 = vdwg.mxu0
        %5579 = vmatpush.bf16.msra.mxu0 %v5549
        %5580 = vmatpush.bf16.msra.mxu0 %v5547
        %5581 = vmatpush.bf16.msra.mxu0 %v5545
        %5582 = vmatpush.bf16.msra.mxu0 %v5543
        %5583 = vmatpush.bf16.msra.mxu0 %v5541
        %5584 = vmatpush.bf16.msra.mxu0 %v5539
        %5585 = vmatpush.bf16.msra.mxu0 %v5537
        %5586 = vmatpush.bf16.msra.mxu0 %v5535
        %5587 = vmatmul.bf16.gmra.mxu0 %v5468
        %v5588 = vpop.f32.mrf.mxu0
        %v5589 = vadd.f32 0.0, %v5588
        %v5590 = vpop.f32.mrf.mxu0
        %5591 = vdwg.mxu0
        %v5592 = vadd.f32 %v5215, %v5576
        %v5593 = vadd.f32 %v5216, %v5589
        %s5594 = scalar_lea.vmem %s57, 2
        %v5595 = vld [vmem:[%s5594] sm:$0x3]
        %v5597 = vperm.slane %v5595, 0
        %v5598 = vperm.slane %v5595, 1
        %v5601 = vadd.f32 %v5592, %v5597
        %v5602 = vadd.f32 %v5593, %v5598
        %v5603 = vld [vmem:[%s59] sm:$0x3]
        %v5604 = vld [vmem:[%s61] sm:$0x3]
        %vm5605 = vcmask 1040384
        %v5606 = vsel %vm5605, %v5601, 0.0
        %v5607 = vsel %vm5605, %v5602, 0.0
        %v5608 = vadd.f32 %v5606, %v5607
        %5609 = vadd.xlane.f32.xlu0 %v5608
        %v5610 = vpop.xlane.xlu0 %5609
        %v5611 = vmul.f32 %v5610, 0.004016064
        %v5612 = vsub.f32 %v5601, %v5611
        %v5613 = vsub.f32 %v5602, %v5611
        %v5614 = vmul.f32 %v5612, %v1208
        %v5615 = vmul.f32 %v5613, %v1209
        %v5616 = vmul.f32 %v5614, %v5614
        %v5617 = vmul.f32 %v5615, %v5615
        %v5618 = vsel %vm5605, %v5616, 0.0
        %v5619 = vsel %vm5605, %v5617, 0.0
        %v5620 = vadd.f32 %v5618, %v5619
        %5621 = vadd.xlane.f32.xlu0 %v5620
        %v5622 = vpop.xlane.xlu0 %5621
        %v5623 = vmul.f32 %v5622, 0.004016064
        %v5624 = vadd.f32 %v5623, 1e-05
        %v5625 = vrsqrt.pop %v5624
        %v5626 = vmul.f32 %v5625, %v5624
        %v5627 = vmul.f32 %v5626, %v5625
        %v5628 = vmul.f32 0.5, %v5627
        %v5629 = vsub.f32 1.5, %v5628
        %v5630 = vmul.f32 %v5625, %v5629
        %vm5631 = vweird.f32 %v5624
        %vm5632 = vweird.f32 %v5625
        %vm5633 = vmor %vm5631, %vm5632
        %v5634 = vsel %vm5633, %v5625, %v5630
        %v5635 = vmul.f32 %v5614, %v5634
        %v5636 = vmul.f32 %v5615, %v5634
        %v5638 = vperm.slane %v5603, 0
        %v5639 = vperm.slane %v5603, 1
        %v5642 = vmul.f32 %v5635, %v5638
        %v5643 = vmul.f32 %v5636, %v5639
        %v5645 = vperm.slane %v5604, 0
        %v5646 = vperm.slane %v5604, 1
        %v5649 = vadd.f32 %v5642, %v5645
        %v5650 = vadd.f32 %v5643, %v5646
        %v5651 = vadd.f32 %v5649, %v1217
        %v5652 = vadd.f32 %v5650, %v1218
        %v5653 = vpack.c.bf16 %v5651, %v5651
        %v5654 = vpack.c.bf16 %v5652, %v5652
        %v5655 = vld [vmem:[%s63] sm:$0xff]
        %v5656 = vld [vmem:[%s63 + $0x8] sm:$0xff]
        %v5657 = vld [vmem:[%s63 + $0x10] sm:$0xff]
        %v5658 = vld [vmem:[%s63 + $0x18] sm:$0xff]
        %v5659 = vld [vmem:[%s63 + $0x20] sm:$0xff]
        %v5660 = vld [vmem:[%s63 + $0x28] sm:$0xff]
        %v5661 = vld [vmem:[%s63 + $0x30] sm:$0xff]
        %v5662 = vld [vmem:[%s63 + $0x38] sm:$0xff]
        %v5663 = vld [vmem:[%s63 + $0x40] sm:$0xff]
        %v5664 = vld [vmem:[%s63 + $0x48] sm:$0xff]
        %v5665 = vld [vmem:[%s63 + $0x50] sm:$0xff]
        %v5666 = vld [vmem:[%s63 + $0x58] sm:$0xff]
        %v5667 = vld [vmem:[%s63 + $0x60] sm:$0xff]
        %v5668 = vld [vmem:[%s63 + $0x68] sm:$0xff]
        %v5669 = vld [vmem:[%s63 + $0x70] sm:$0xff]
        %v5670 = vld [vmem:[%s63 + $0x78] sm:$0xff]
        %v5671 = vld [vmem:[%s63 + $0x80] sm:$0xff]
        %v5672 = vld [vmem:[%s63 + $0x88] sm:$0xff]
        %v5673 = vld [vmem:[%s63 + $0x90] sm:$0xff]
        %v5674 = vld [vmem:[%s63 + $0x98] sm:$0xff]
        %v5675 = vld [vmem:[%s63 + $0xa0] sm:$0xff]
        %v5676 = vld [vmem:[%s63 + $0xa8] sm:$0xff]
        %v5677 = vld [vmem:[%s63 + $0xb0] sm:$0xff]
        %v5678 = vld [vmem:[%s63 + $0xb8] sm:$0xff]
        %v5679 = vld [vmem:[%s63 + $0xc0] sm:$0xff]
        %v5680 = vld [vmem:[%s63 + $0xc8] sm:$0xff]
        %v5681 = vld [vmem:[%s63 + $0xd0] sm:$0xff]
        %v5682 = vld [vmem:[%s63 + $0xd8] sm:$0xff]
        %v5683 = vld [vmem:[%s63 + $0xe0] sm:$0xff]
        %v5684 = vld [vmem:[%s63 + $0xe8] sm:$0xff]
        %v5685 = vld [vmem:[%s63 + $0xf0] sm:$0xff]
        %v5686 = vld [vmem:[%s63 + $0xf8] sm:$0xff]
        %v5687 = vld [vmem:[%s65] sm:$0x3]
        %v5720 = vunpack.c.l.b16 %v5655
        %v5721 = vunpack.c.h.b16 %v5655
        %v5722 = vunpack.c.l.b16 %v5656
        %v5723 = vunpack.c.h.b16 %v5656
        %v5724 = vunpack.c.l.b16 %v5657
        %v5725 = vunpack.c.h.b16 %v5657
        %v5726 = vunpack.c.l.b16 %v5658
        %v5727 = vunpack.c.h.b16 %v5658
        %v5728 = vunpack.c.l.b16 %v5659
        %v5729 = vunpack.c.h.b16 %v5659
        %v5730 = vunpack.c.l.b16 %v5660
        %v5731 = vunpack.c.h.b16 %v5660
        %v5732 = vunpack.c.l.b16 %v5661
        %v5733 = vunpack.c.h.b16 %v5661
        %v5734 = vunpack.c.l.b16 %v5662
        %v5735 = vunpack.c.h.b16 %v5662
        %v5736 = vunpack.c.l.b16 %v5663
        %v5737 = vunpack.c.h.b16 %v5663
        %v5738 = vunpack.c.l.b16 %v5664
        %v5739 = vunpack.c.h.b16 %v5664
        %v5740 = vunpack.c.l.b16 %v5665
        %v5741 = vunpack.c.h.b16 %v5665
        %v5742 = vunpack.c.l.b16 %v5666
        %v5743 = vunpack.c.h.b16 %v5666
        %v5744 = vunpack.c.l.b16 %v5667
        %v5745 = vunpack.c.h.b16 %v5667
        %v5746 = vunpack.c.l.b16 %v5668
        %v5747 = vunpack.c.h.b16 %v5668
        %v5748 = vunpack.c.l.b16 %v5669
        %v5749 = vunpack.c.h.b16 %v5669
        %v5750 = vunpack.c.l.b16 %v5670
        %v5751 = vunpack.c.h.b16 %v5670
        %v5752 = vunpack.c.l.b16 %v5671
        %v5753 = vunpack.c.h.b16 %v5671
        %v5754 = vunpack.c.l.b16 %v5672
        %v5755 = vunpack.c.h.b16 %v5672
        %v5756 = vunpack.c.l.b16 %v5673
        %v5757 = vunpack.c.h.b16 %v5673
        %v5758 = vunpack.c.l.b16 %v5674
        %v5759 = vunpack.c.h.b16 %v5674
        %v5760 = vunpack.c.l.b16 %v5675
        %v5761 = vunpack.c.h.b16 %v5675
        %v5762 = vunpack.c.l.b16 %v5676
        %v5763 = vunpack.c.h.b16 %v5676
        %v5764 = vunpack.c.l.b16 %v5677
        %v5765 = vunpack.c.h.b16 %v5677
        %v5766 = vunpack.c.l.b16 %v5678
        %v5767 = vunpack.c.h.b16 %v5678
        %v5768 = vunpack.c.l.b16 %v5679
        %v5769 = vunpack.c.h.b16 %v5679
        %v5770 = vunpack.c.l.b16 %v5680
        %v5771 = vunpack.c.h.b16 %v5680
        %v5772 = vunpack.c.l.b16 %v5681
        %v5773 = vunpack.c.h.b16 %v5681
        %v5774 = vunpack.c.l.b16 %v5682
        %v5775 = vunpack.c.h.b16 %v5682
        %v5776 = vunpack.c.l.b16 %v5683
        %v5777 = vunpack.c.h.b16 %v5683
        %v5778 = vunpack.c.l.b16 %v5684
        %v5779 = vunpack.c.h.b16 %v5684
        %v5780 = vunpack.c.l.b16 %v5685
        %v5781 = vunpack.c.h.b16 %v5685
        %v5782 = vunpack.c.l.b16 %v5686
        %v5783 = vunpack.c.h.b16 %v5686
        %v5784 = vpack.c.b16 %v5722, %v5720
        %v5785 = vpack.c.b16 %v5723, %v5721
        %v5786 = vpack.c.b16 %v5726, %v5724
        %v5787 = vpack.c.b16 %v5727, %v5725
        %v5788 = vpack.c.b16 %v5730, %v5728
        %v5789 = vpack.c.b16 %v5731, %v5729
        %v5790 = vpack.c.b16 %v5734, %v5732
        %v5791 = vpack.c.b16 %v5735, %v5733
        %v5792 = vpack.c.b16 %v5738, %v5736
        %v5793 = vpack.c.b16 %v5739, %v5737
        %v5794 = vpack.c.b16 %v5742, %v5740
        %v5795 = vpack.c.b16 %v5743, %v5741
        %v5796 = vpack.c.b16 %v5746, %v5744
        %v5797 = vpack.c.b16 %v5747, %v5745
        %v5798 = vpack.c.b16 %v5750, %v5748
        %v5799 = vpack.c.b16 %v5751, %v5749
        %v5800 = vpack.c.b16 %v5754, %v5752
        %v5801 = vpack.c.b16 %v5755, %v5753
        %v5802 = vpack.c.b16 %v5758, %v5756
        %v5803 = vpack.c.b16 %v5759, %v5757
        %v5804 = vpack.c.b16 %v5762, %v5760
        %v5805 = vpack.c.b16 %v5763, %v5761
        %v5806 = vpack.c.b16 %v5766, %v5764
        %v5807 = vpack.c.b16 %v5767, %v5765
        %v5808 = vpack.c.b16 %v5770, %v5768
        %v5809 = vpack.c.b16 %v5771, %v5769
        %v5810 = vpack.c.b16 %v5774, %v5772
        %v5811 = vpack.c.b16 %v5775, %v5773
        %v5812 = vpack.c.b16 %v5778, %v5776
        %v5813 = vpack.c.b16 %v5779, %v5777
        %v5814 = vpack.c.b16 %v5782, %v5780
        %v5815 = vpack.c.b16 %v5783, %v5781
        %v5849 = vperm.slane %v5687, 0
        %v5850 = vperm.slane %v5687, 1
        %5853 = vmatpush.bf16.msra.mxu0 %v5798
        %5854 = vmatpush.bf16.msra.mxu0 %v5796
        %5855 = vmatpush.bf16.msra.mxu0 %v5794
        %5856 = vmatpush.bf16.msra.mxu0 %v5792
        %5857 = vmatpush.bf16.msra.mxu0 %v5790
        %5858 = vmatpush.bf16.msra.mxu0 %v5788
        %5859 = vmatpush.bf16.msra.mxu0 %v5786
        %5860 = vmatpush.bf16.msra.mxu0 %v5784
        %5861 = vmatmul.bf16.gmra.mxu0 %v5653
        %v5862 = vpop.f32.mrf.mxu0
        %v5863 = vadd.f32 %v5849, %v5862
        %v5864 = vpop.f32.mrf.mxu0
        %5865 = vdwg.mxu0
        %5866 = vmatpush.bf16.msra.mxu0 %v5814
        %5867 = vmatpush.bf16.msra.mxu0 %v5812
        %5868 = vmatpush.bf16.msra.mxu0 %v5810
        %5869 = vmatpush.bf16.msra.mxu0 %v5808
        %5870 = vmatpush.bf16.msra.mxu0 %v5806
        %5871 = vmatpush.bf16.msra.mxu0 %v5804
        %5872 = vmatpush.bf16.msra.mxu0 %v5802
        %5873 = vmatpush.bf16.msra.mxu0 %v5800
        %5874 = vmatmul.bf16.gmra.mxu0 %v5654
        %v5875 = vpop.f32.mrf.mxu0
        %v5876 = vadd.f32 %v5863, %v5875
        %v5877 = vpop.f32.mrf.mxu0
        %5878 = vdwg.mxu0
        %5879 = vmatpush.bf16.msra.mxu0 %v5799
        %5880 = vmatpush.bf16.msra.mxu0 %v5797
        %5881 = vmatpush.bf16.msra.mxu0 %v5795
        %5882 = vmatpush.bf16.msra.mxu0 %v5793
        %5883 = vmatpush.bf16.msra.mxu0 %v5791
        %5884 = vmatpush.bf16.msra.mxu0 %v5789
        %5885 = vmatpush.bf16.msra.mxu0 %v5787
        %5886 = vmatpush.bf16.msra.mxu0 %v5785
        %5887 = vmatmul.bf16.gmra.mxu0 %v5653
        %v5888 = vpop.f32.mrf.mxu0
        %v5889 = vadd.f32 %v5850, %v5888
        %v5890 = vpop.f32.mrf.mxu0
        %5891 = vdwg.mxu0
        %5892 = vmatpush.bf16.msra.mxu0 %v5815
        %5893 = vmatpush.bf16.msra.mxu0 %v5813
        %5894 = vmatpush.bf16.msra.mxu0 %v5811
        %5895 = vmatpush.bf16.msra.mxu0 %v5809
        %5896 = vmatpush.bf16.msra.mxu0 %v5807
        %5897 = vmatpush.bf16.msra.mxu0 %v5805
        %5898 = vmatpush.bf16.msra.mxu0 %v5803
        %5899 = vmatpush.bf16.msra.mxu0 %v5801
        %5900 = vmatmul.bf16.gmra.mxu0 %v5654
        %v5901 = vpop.f32.mrf.mxu0
        %v5902 = vadd.f32 %v5889, %v5901
        %v5903 = vpop.f32.mrf.mxu0
        %5904 = vdwg.mxu0
        %v5905 = vtanh.pop %v5876
        %v5906 = vtanh.pop %v5902
        %v5907 = vpack.c.bf16 %v5905, %v5905
        %v5908 = vpack.c.bf16 %v5906, %v5906
        %v5909 = vld [vmem:[%s67] sm:$0xff]
        %v5910 = vld [vmem:[%s67 + $0x8] sm:$0xff]
        %v5911 = vld [vmem:[%s67 + $0x10] sm:$0xff]
        %v5912 = vld [vmem:[%s67 + $0x18] sm:$0xff]
        %v5913 = vld [vmem:[%s67 + $0x20] sm:$0xff]
        %v5914 = vld [vmem:[%s67 + $0x28] sm:$0xff]
        %v5915 = vld [vmem:[%s67 + $0x30] sm:$0xff]
        %v5916 = vld [vmem:[%s67 + $0x38] sm:$0xff]
        %v5917 = vld [vmem:[%s67 + $0x40] sm:$0xff]
        %v5918 = vld [vmem:[%s67 + $0x48] sm:$0xff]
        %v5919 = vld [vmem:[%s67 + $0x50] sm:$0xff]
        %v5920 = vld [vmem:[%s67 + $0x58] sm:$0xff]
        %v5921 = vld [vmem:[%s67 + $0x60] sm:$0xff]
        %v5922 = vld [vmem:[%s67 + $0x68] sm:$0xff]
        %v5923 = vld [vmem:[%s67 + $0x70] sm:$0xff]
        %v5924 = vld [vmem:[%s67 + $0x78] sm:$0xff]
        %v5925 = vld [vmem:[%s67 + $0x80] sm:$0xff]
        %v5926 = vld [vmem:[%s67 + $0x88] sm:$0xff]
        %v5927 = vld [vmem:[%s67 + $0x90] sm:$0xff]
        %v5928 = vld [vmem:[%s67 + $0x98] sm:$0xff]
        %v5929 = vld [vmem:[%s67 + $0xa0] sm:$0xff]
        %v5930 = vld [vmem:[%s67 + $0xa8] sm:$0xff]
        %v5931 = vld [vmem:[%s67 + $0xb0] sm:$0xff]
        %v5932 = vld [vmem:[%s67 + $0xb8] sm:$0xff]
        %v5933 = vld [vmem:[%s67 + $0xc0] sm:$0xff]
        %v5934 = vld [vmem:[%s67 + $0xc8] sm:$0xff]
        %v5935 = vld [vmem:[%s67 + $0xd0] sm:$0xff]
        %v5936 = vld [vmem:[%s67 + $0xd8] sm:$0xff]
        %v5937 = vld [vmem:[%s67 + $0xe0] sm:$0xff]
        %v5938 = vld [vmem:[%s67 + $0xe8] sm:$0xff]
        %v5939 = vld [vmem:[%s67 + $0xf0] sm:$0xff]
        %v5940 = vld [vmem:[%s67 + $0xf8] sm:$0xff]
        %v5941 = vld [vmem:[%s69] sm:$0x3]
        %v5974 = vunpack.c.l.b16 %v5909
        %v5975 = vunpack.c.h.b16 %v5909
        %v5976 = vunpack.c.l.b16 %v5910
        %v5977 = vunpack.c.h.b16 %v5910
        %v5978 = vunpack.c.l.b16 %v5911
        %v5979 = vunpack.c.h.b16 %v5911
        %v5980 = vunpack.c.l.b16 %v5912
        %v5981 = vunpack.c.h.b16 %v5912
        %v5982 = vunpack.c.l.b16 %v5913
        %v5983 = vunpack.c.h.b16 %v5913
        %v5984 = vunpack.c.l.b16 %v5914
        %v5985 = vunpack.c.h.b16 %v5914
        %v5986 = vunpack.c.l.b16 %v5915
        %v5987 = vunpack.c.h.b16 %v5915
        %v5988 = vunpack.c.l.b16 %v5916
        %v5989 = vunpack.c.h.b16 %v5916
        %v5990 = vunpack.c.l.b16 %v5917
        %v5991 = vunpack.c.h.b16 %v5917
        %v5992 = vunpack.c.l.b16 %v5918
        %v5993 = vunpack.c.h.b16 %v5918
        %v5994 = vunpack.c.l.b16 %v5919
        %v5995 = vunpack.c.h.b16 %v5919
        %v5996 = vunpack.c.l.b16 %v5920
        %v5997 = vunpack.c.h.b16 %v5920
        %v5998 = vunpack.c.l.b16 %v5921
        %v5999 = vunpack.c.h.b16 %v5921
        %v6000 = vunpack.c.l.b16 %v5922
        %v6001 = vunpack.c.h.b16 %v5922
        %v6002 = vunpack.c.l.b16 %v5923
        %v6003 = vunpack.c.h.b16 %v5923
        %v6004 = vunpack.c.l.b16 %v5924
        %v6005 = vunpack.c.h.b16 %v5924
        %v6006 = vunpack.c.l.b16 %v5925
        %v6007 = vunpack.c.h.b16 %v5925
        %v6008 = vunpack.c.l.b16 %v5926
        %v6009 = vunpack.c.h.b16 %v5926
        %v6010 = vunpack.c.l.b16 %v5927
        %v6011 = vunpack.c.h.b16 %v5927
        %v6012 = vunpack.c.l.b16 %v5928
        %v6013 = vunpack.c.h.b16 %v5928
        %v6014 = vunpack.c.l.b16 %v5929
        %v6015 = vunpack.c.h.b16 %v5929
        %v6016 = vunpack.c.l.b16 %v5930
        %v6017 = vunpack.c.h.b16 %v5930
        %v6018 = vunpack.c.l.b16 %v5931
        %v6019 = vunpack.c.h.b16 %v5931
        %v6020 = vunpack.c.l.b16 %v5932
        %v6021 = vunpack.c.h.b16 %v5932
        %v6022 = vunpack.c.l.b16 %v5933
        %v6023 = vunpack.c.h.b16 %v5933
        %v6024 = vunpack.c.l.b16 %v5934
        %v6025 = vunpack.c.h.b16 %v5934
        %v6026 = vunpack.c.l.b16 %v5935
        %v6027 = vunpack.c.h.b16 %v5935
        %v6028 = vunpack.c.l.b16 %v5936
        %v6029 = vunpack.c.h.b16 %v5936
        %v6030 = vunpack.c.l.b16 %v5937
        %v6031 = vunpack.c.h.b16 %v5937
        %v6032 = vunpack.c.l.b16 %v5938
        %v6033 = vunpack.c.h.b16 %v5938
        %v6034 = vunpack.c.l.b16 %v5939
        %v6035 = vunpack.c.h.b16 %v5939
        %v6036 = vunpack.c.l.b16 %v5940
        %v6037 = vunpack.c.h.b16 %v5940
        %v6038 = vpack.c.b16 %v5976, %v5974
        %v6039 = vpack.c.b16 %v5977, %v5975
        %v6040 = vpack.c.b16 %v5980, %v5978
        %v6041 = vpack.c.b16 %v5981, %v5979
        %v6042 = vpack.c.b16 %v5984, %v5982
        %v6043 = vpack.c.b16 %v5985, %v5983
        %v6044 = vpack.c.b16 %v5988, %v5986
        %v6045 = vpack.c.b16 %v5989, %v5987
        %v6046 = vpack.c.b16 %v5992, %v5990
        %v6047 = vpack.c.b16 %v5993, %v5991
        %v6048 = vpack.c.b16 %v5996, %v5994
        %v6049 = vpack.c.b16 %v5997, %v5995
        %v6050 = vpack.c.b16 %v6000, %v5998
        %v6051 = vpack.c.b16 %v6001, %v5999
        %v6052 = vpack.c.b16 %v6004, %v6002
        %v6053 = vpack.c.b16 %v6005, %v6003
        %v6054 = vpack.c.b16 %v6008, %v6006
        %v6055 = vpack.c.b16 %v6009, %v6007
        %v6056 = vpack.c.b16 %v6012, %v6010
        %v6057 = vpack.c.b16 %v6013, %v6011
        %v6058 = vpack.c.b16 %v6016, %v6014
        %v6059 = vpack.c.b16 %v6017, %v6015
        %v6060 = vpack.c.b16 %v6020, %v6018
        %v6061 = vpack.c.b16 %v6021, %v6019
        %v6062 = vpack.c.b16 %v6024, %v6022
        %v6063 = vpack.c.b16 %v6025, %v6023
        %v6064 = vpack.c.b16 %v6028, %v6026
        %v6065 = vpack.c.b16 %v6029, %v6027
        %v6066 = vpack.c.b16 %v6032, %v6030
        %v6067 = vpack.c.b16 %v6033, %v6031
        %v6068 = vpack.c.b16 %v6036, %v6034
        %v6069 = vpack.c.b16 %v6037, %v6035
        %v6103 = vperm.slane %v5941, 0
        %v6104 = vperm.slane %v5941, 1
        %6107 = vmatpush.bf16.msra.mxu0 %v6052
        %6108 = vmatpush.bf16.msra.mxu0 %v6050
        %6109 = vmatpush.bf16.msra.mxu0 %v6048
        %6110 = vmatpush.bf16.msra.mxu0 %v6046
        %6111 = vmatpush.bf16.msra.mxu0 %v6044
        %6112 = vmatpush.bf16.msra.mxu0 %v6042
        %6113 = vmatpush.bf16.msra.mxu0 %v6040
        %6114 = vmatpush.bf16.msra.mxu0 %v6038
        %6115 = vmatmul.bf16.gmra.mxu0 %v5907
        %v6116 = vpop.f32.mrf.mxu0
        %v6117 = vadd.f32 %v6103, %v6116
        %v6118 = vpop.f32.mrf.mxu0
        %6119 = vdwg.mxu0
        %6120 = vmatpush.bf16.msra.mxu0 %v6068
        %6121 = vmatpush.bf16.msra.mxu0 %v6066
        %6122 = vmatpush.bf16.msra.mxu0 %v6064
        %6123 = vmatpush.bf16.msra.mxu0 %v6062
        %6124 = vmatpush.bf16.msra.mxu0 %v6060
        %6125 = vmatpush.bf16.msra.mxu0 %v6058
        %6126 = vmatpush.bf16.msra.mxu0 %v6056
        %6127 = vmatpush.bf16.msra.mxu0 %v6054
        %6128 = vmatmul.bf16.gmra.mxu0 %v5908
        %v6129 = vpop.f32.mrf.mxu0
        %v6130 = vadd.f32 %v6117, %v6129
        %v6131 = vpop.f32.mrf.mxu0
        %6132 = vdwg.mxu0
        %6133 = vmatpush.bf16.msra.mxu0 %v6053
        %6134 = vmatpush.bf16.msra.mxu0 %v6051
        %6135 = vmatpush.bf16.msra.mxu0 %v6049
        %6136 = vmatpush.bf16.msra.mxu0 %v6047
        %6137 = vmatpush.bf16.msra.mxu0 %v6045
        %6138 = vmatpush.bf16.msra.mxu0 %v6043
        %6139 = vmatpush.bf16.msra.mxu0 %v6041
        %6140 = vmatpush.bf16.msra.mxu0 %v6039
        %6141 = vmatmul.bf16.gmra.mxu0 %v5907
        %v6142 = vpop.f32.mrf.mxu0
        %v6143 = vadd.f32 %v6104, %v6142
        %v6144 = vpop.f32.mrf.mxu0
        %6145 = vdwg.mxu0
        %6146 = vmatpush.bf16.msra.mxu0 %v6069
        %6147 = vmatpush.bf16.msra.mxu0 %v6067
        %6148 = vmatpush.bf16.msra.mxu0 %v6065
        %6149 = vmatpush.bf16.msra.mxu0 %v6063
        %6150 = vmatpush.bf16.msra.mxu0 %v6061
        %6151 = vmatpush.bf16.msra.mxu0 %v6059
        %6152 = vmatpush.bf16.msra.mxu0 %v6057
        %6153 = vmatpush.bf16.msra.mxu0 %v6055
        %6154 = vmatmul.bf16.gmra.mxu0 %v5908
        %v6155 = vpop.f32.mrf.mxu0
        %v6156 = vadd.f32 %v6143, %v6155
        %v6157 = vpop.f32.mrf.mxu0
        %6158 = vdwg.mxu0
        %v6159 = vtanh.pop %v6130
        %v6160 = vtanh.pop %v6156
        %v6161 = vpack.c.bf16 %v6159, %v6159
        %v6162 = vpack.c.bf16 %v6160, %v6160
        %v6163 = vld [vmem:[%s71] sm:$0xf]
        %v6164 = vld [vmem:[%s71 + $0x4] sm:$0xf]
        %v6165 = vld [vmem:[%s71 + $0x8] sm:$0xf]
        %v6166 = vld [vmem:[%s71 + $0xc] sm:$0xf]
        %v6167 = vld [vmem:[%s71 + $0x10] sm:$0xf]
        %v6168 = vld [vmem:[%s71 + $0x14] sm:$0xf]
        %v6169 = vld [vmem:[%s71 + $0x18] sm:$0xf]
        %v6170 = vld [vmem:[%s71 + $0x1c] sm:$0xf]
        %v6171 = vld [vmem:[%s71 + $0x20] sm:$0xf]
        %v6172 = vld [vmem:[%s71 + $0x24] sm:$0xf]
        %v6173 = vld [vmem:[%s71 + $0x28] sm:$0xf]
        %v6174 = vld [vmem:[%s71 + $0x2c] sm:$0xf]
        %v6175 = vld [vmem:[%s71 + $0x30] sm:$0xf]
        %v6176 = vld [vmem:[%s71 + $0x34] sm:$0xf]
        %v6177 = vld [vmem:[%s71 + $0x38] sm:$0xf]
        %v6178 = vld [vmem:[%s71 + $0x3c] sm:$0xf]
        %v6179 = vld [vmem:[%s71 + $0x40] sm:$0xf]
        %v6180 = vld [vmem:[%s71 + $0x44] sm:$0xf]
        %v6181 = vld [vmem:[%s71 + $0x48] sm:$0xf]
        %v6182 = vld [vmem:[%s71 + $0x4c] sm:$0xf]
        %v6183 = vld [vmem:[%s71 + $0x50] sm:$0xf]
        %v6184 = vld [vmem:[%s71 + $0x54] sm:$0xf]
        %v6185 = vld [vmem:[%s71 + $0x58] sm:$0xf]
        %v6186 = vld [vmem:[%s71 + $0x5c] sm:$0xf]
        %v6187 = vld [vmem:[%s71 + $0x60] sm:$0xf]
        %v6188 = vld [vmem:[%s71 + $0x64] sm:$0xf]
        %v6189 = vld [vmem:[%s71 + $0x68] sm:$0xf]
        %v6190 = vld [vmem:[%s71 + $0x6c] sm:$0xf]
        %v6191 = vld [vmem:[%s71 + $0x70] sm:$0xf]
        %v6192 = vld [vmem:[%s71 + $0x74] sm:$0xf]
        %v6193 = vld [vmem:[%s71 + $0x78] sm:$0xf]
        %v6194 = vld [vmem:[%s71 + $0x7c] sm:$0xf]
        %v6195 = vld [vmem:[%s73] sm:$0x1]
        %v6228 = vunpack.c.l.b16 %v6163
        %v6229 = vunpack.c.l.b16 %v6164
        %v6230 = vunpack.c.l.b16 %v6165
        %v6231 = vunpack.c.l.b16 %v6166
        %v6232 = vunpack.c.l.b16 %v6167
        %v6233 = vunpack.c.l.b16 %v6168
        %v6234 = vunpack.c.l.b16 %v6169
        %v6235 = vunpack.c.l.b16 %v6170
        %v6236 = vunpack.c.l.b16 %v6171
        %v6237 = vunpack.c.l.b16 %v6172
        %v6238 = vunpack.c.l.b16 %v6173
        %v6239 = vunpack.c.l.b16 %v6174
        %v6240 = vunpack.c.l.b16 %v6175
        %v6241 = vunpack.c.l.b16 %v6176
        %v6242 = vunpack.c.l.b16 %v6177
        %v6243 = vunpack.c.l.b16 %v6178
        %v6244 = vunpack.c.l.b16 %v6179
        %v6245 = vunpack.c.l.b16 %v6180
        %v6246 = vunpack.c.l.b16 %v6181
        %v6247 = vunpack.c.l.b16 %v6182
        %v6248 = vunpack.c.l.b16 %v6183
        %v6249 = vunpack.c.l.b16 %v6184
        %v6250 = vunpack.c.l.b16 %v6185
        %v6251 = vunpack.c.l.b16 %v6186
        %v6252 = vunpack.c.l.b16 %v6187
        %v6253 = vunpack.c.l.b16 %v6188
        %v6254 = vunpack.c.l.b16 %v6189
        %v6255 = vunpack.c.l.b16 %v6190
        %v6256 = vunpack.c.l.b16 %v6191
        %v6257 = vunpack.c.l.b16 %v6192
        %v6258 = vunpack.c.l.b16 %v6193
        %v6259 = vunpack.c.l.b16 %v6194
        %v6260 = vpack.c.b16 %v6229, %v6228
        %v6261 = vpack.c.b16 %v6231, %v6230
        %v6262 = vpack.c.b16 %v6233, %v6232
        %v6263 = vpack.c.b16 %v6235, %v6234
        %v6264 = vpack.c.b16 %v6237, %v6236
        %v6265 = vpack.c.b16 %v6239, %v6238
        %v6266 = vpack.c.b16 %v6241, %v6240
        %v6267 = vpack.c.b16 %v6243, %v6242
        %v6268 = vpack.c.b16 %v6245, %v6244
        %v6269 = vpack.c.b16 %v6247, %v6246
        %v6270 = vpack.c.b16 %v6249, %v6248
        %v6271 = vpack.c.b16 %v6251, %v6250
        %v6272 = vpack.c.b16 %v6253, %v6252
        %v6273 = vpack.c.b16 %v6255, %v6254
        %v6274 = vpack.c.b16 %v6257, %v6256
        %v6275 = vpack.c.b16 %v6259, %v6258
        %6292 = vmatpush.bf16.msra.mxu0 %v6267
        %6293 = vmatpush.bf16.msra.mxu0 %v6266
        %6294 = vmatpush.bf16.msra.mxu0 %v6265
        %6295 = vmatpush.bf16.msra.mxu0 %v6264
        %6296 = vmatpush.bf16.msra.mxu0 %v6263
        %6297 = vmatpush.bf16.msra.mxu0 %v6262
        %6298 = vmatpush.bf16.msra.mxu0 %v6261
        %6299 = vmatpush.bf16.msra.mxu0 %v6260
        %6300 = vmatmul.bf16.gmra.mxu0 %v6161
        %v6301 = vpop.f32.mrf.mxu0
        %v6302 = vadd.f32 %v6195, %v6301
        %v6303 = vpop.f32.mrf.mxu0
        %6304 = vdwg.mxu0
        %6305 = vmatpush.bf16.msra.mxu0 %v6275
        %6306 = vmatpush.bf16.msra.mxu0 %v6274
        %6307 = vmatpush.bf16.msra.mxu0 %v6273
        %6308 = vmatpush.bf16.msra.mxu0 %v6272
        %6309 = vmatpush.bf16.msra.mxu0 %v6271
        %6310 = vmatpush.bf16.msra.mxu0 %v6270
        %6311 = vmatpush.bf16.msra.mxu0 %v6269
        %6312 = vmatpush.bf16.msra.mxu0 %v6268
        %6313 = vmatmul.bf16.gmra.mxu0 %v6162
        %v6314 = vpop.f32.mrf.mxu0
        %v6315 = vadd.f32 %v6302, %v6314
        %v6316 = vpop.f32.mrf.mxu0
        %6317 = vdwg.mxu0
        %v6319 = vrot.slane %v1217, 1
        %v6321 = vadd.f32 %v6315, %v6319
        %6322 = vst [vmem:[%s1176] sm:$0x1] %v6321
        %s6323 = sand.u32 %s899, 1
        %s6324 = scalar_lea.sflag [#allocation3], %s6323
        %s6325 = sand.u32 %s899, 1
        %s6326 = scalar_lea.vmem [#allocation2], %s6325
        // Predicated region
        $region169: #{custom_model_forward.1} parent=167 // pred_check
          %p6327 = pneg %p909
        $region170: #{custom_model_forward.1} parent=167 // pred_check_branch
          %6329 = sbr.rel (%p6327) target = $region172
        $region171: #{custom_model_forward.1} parent=167 // pred_region
          %6331 = vsyncadd %s6324, 0
          %s6332 = scalar_lea.hbm %s75, %s89
          %s6334 = sshll.u32 %s6326, 4
          %s6335 = int_to_ptr.vmem [resolvable:$true] %s6334
          %s6336 = sshll.u32 %s6332, 4
          %s6337 = int_to_ptr.hbm [resolvable:$true] %s6336
          %6339 = dma.vmem_to_hbm [thread:$0]  %s6335, 16, %s6337, %s6324
        $region172: #{custom_model_forward.1} parent=167 // pred_fallthru
          _
      $region168: #{custom_model_forward.1} parent=5 // pred_fallthru
        _
      %p6340 = scmp.le.s32.totalorder 2, %s84
      // Predicated region
      $region173: #{custom_model_forward.1} parent=5 // pred_check
        %p6341 = pneg %p6340
      $region174: #{custom_model_forward.1} parent=5 // pred_check_branch
        %6343 = sbr.rel (%p6341) target = $region176
      $region175: #{custom_model_forward.1} parent=5 // pred_region
        %s6344 = ssub.s32 %s84, 2
        // Predicated region
        $region177: #{custom_model_forward.1} parent=175 // pred_check
          %p6345 = pneg %p915
        $region178: #{custom_model_forward.1} parent=175 // pred_check_branch
          %6347 = sbr.rel (%p6345) target = $region180
        $region179: #{custom_model_forward.1} parent=175 // pred_region
          %s6348 = sand.u32 %s900, 1
          %s6349 = scalar_lea.sflag [#allocation3], %s6348
          %s6350 = sand.u32 %s900, 1
          %s6351 = scalar_lea.vmem [#allocation2], %s6350
          %6353 = dma.done %s6349, 16
        $region180: #{custom_model_forward.1} parent=175 // pred_fallthru
          _
      $region176: #{custom_model_forward.1} parent=5 // pred_fallthru
        _
    $region6: #{custom_model_forward.1} parent=1 // loop_footer
      %s88 = sadd.s32 1, %s84
    $region7: #{custom_model_forward.1} parent=1 // loop_footer_branch
      %83 = sbr.rel target = $region3
    $region8: #{custom_model_forward.1} parent=1 // loop_exit
      _
    %6354 = vsyncpa [#allocation3], 1
    %s6355 = scalar_lea.sflag [#allocation3], 1
    %6356 = vsyncpa %s6355, 1

</llo_original>
